<compile_context>
chip_gen: v6e
topology: v6e:2x2x1
jax: 0.10.0
libtpu: 0.0.40
codegen_flags: <defaults>
</compile_context>

<pallas_src>
import functools

import jax
import jax.numpy as jnp
import numpy as np
from jax.experimental import pallas as pl
from jax.experimental.pallas import tpu as pltpu

_TILE_M = 512                      # row tile for the fused matmul kernels
_VMEM_LIMIT = 48 * 1024 * 1024     # explicit scoped-VMEM limit (fits v5e/v6e/v7x)
_BN_EPS = 1e-5


def _round_up(x, m):
    return (x + m - 1) // m * m


# ---------------------------------------------------------------------------
# Pallas kernels
# ---------------------------------------------------------------------------

def _matmul_kernel(*refs, n_src, compute_stats, post_act):
    """One M-tile of  y = post_act( sum_j A_j @ W_j + b )  (+ BN partial stats).

    A_j are bf16 im2col row-tiles (skip connections arrive as separate K-slices so
    the channel concat never materializes), W_j are resident bf16 weight matrices,
    b is a f32 bias row.  Stats (sum, sumsq per column, padding rows masked) are
    accumulated in f32 before the bf16 downcast of y.
    """
    a_refs = refs[:n_src]
    w_refs = refs[n_src:2 * n_src]
    b_ref = refs[2 * n_src]
    idx = 2 * n_src + 1

    acc = jnp.dot(a_refs[0][...], w_refs[0][...], preferred_element_type=jnp.float32)
    for j in range(1, n_src):
        acc = acc + jnp.dot(a_refs[j][...], w_refs[j][...],
                            preferred_element_type=jnp.float32)
    acc = acc + b_ref[...]

    if compute_stats:
        valid_ref = refs[idx]            # (tm, 1) f32: 1 for real rows, 0 for pad rows
        y_ref = refs[idx + 1]
        stats_ref = refs[idx + 2]        # block (1, 2, n_pad)
        accv = acc * valid_ref[...]
        row_sum = jnp.sum(accv, axis=0, keepdims=True)
        row_sq = jnp.sum(accv * acc, axis=0, keepdims=True)
        stats_ref[0] = jnp.concatenate([row_sum, row_sq], axis=0)
    else:
        y_ref = refs[idx]

    if post_act == "tanh":
        acc = jnp.tanh(acc)
    y_ref[...] = acc.astype(y_ref.dtype)


def _shift_kernel(f_ref, l_ref, out_ref):
    """InnerShiftTriple core (one batch element per grid step).

    f_ref: (1, nm, ch) bf16 "former" features at masked positions.
    l_ref: (1, nn, ch) bf16 "latter" features at non-masked positions.
    For each masked row, pick the non-masked row with maximal cosine similarity
    (first index on ties, matching torch.max) and paste that latter feature.
    """
    fm = f_ref[0].astype(jnp.float32)
    ln = l_ref[0].astype(jnp.float32)
    # eps inside rsqrt guards all-zero post-ReLU vectors (reference would NaN here)
    fm_n = fm * jax.lax.rsqrt(jnp.sum(fm * fm, axis=1, keepdims=True) + 1e-8)
    ln_n = ln * jax.lax.rsqrt(jnp.sum(ln * ln, axis=1, keepdims=True) + 1e-8)
    cos = jax.lax.dot_general(fm_n.astype(jnp.bfloat16), ln_n.astype(jnp.bfloat16),
                              (((1,), (1,)), ((), ())),
                              preferred_element_type=jnp.float32)        # (nm, nn)
    nm, nn = cos.shape
    jidx = jax.lax.broadcasted_iota(jnp.int32, (nm, nn), 1)
    best = jnp.min(jnp.where(cos >= jnp.max(cos, axis=1, keepdims=True), jidx, nn),
                   axis=1, keepdims=True)                                # first argmax
    onehot = (jidx == best).astype(jnp.bfloat16)
    out_ref[0] = jnp.dot(onehot, l_ref[0],
                         preferred_element_type=jnp.float32).astype(out_ref.dtype)


# ---------------------------------------------------------------------------
# Fused matmul wrapper (M-tiled, pipelined, lane-dense N)
# ---------------------------------------------------------------------------

def _fused_matmul(a_list, w_list, bias_row, *, compute_stats, post_act=None,
                  out_dtype=jnp.bfloat16):
    m = a_list[0].shape[0]
    n = w_list[0].shape[1]
    n_pad = _round_up(n, 128)                    # lane-dense output columns
    tm = min(_TILE_M, _round_up(m, 16))
    m_pad = _round_up(m, tm)
    grid = m_pad // tm
    n_src = len(a_list)

    a_ops = [jnp.pad(a.astype(jnp.bfloat16), ((0, m_pad - m), (0, 0))) for a in a_list]
    w_ops = [jnp.pad(w.astype(jnp.bfloat16), ((0, 0), (0, n_pad - n))) for w in w_list]
    b_op = jnp.pad(jnp.reshape(bias_row, (1, n)).astype(jnp.float32),
                   ((0, 0), (0, n_pad - n)))

    in_ops = list(a_ops) + list(w_ops) + [b_op]
    in_specs = ([pl.BlockSpec((tm, a.shape[1]), lambda i: (i, 0)) for a in a_ops]
                + [pl.BlockSpec(w.shape, lambda i: (0, 0)) for w in w_ops]
                + [pl.BlockSpec((1, n_pad), lambda i: (0, 0))])

    out_shape = [jax.ShapeDtypeStruct((m_pad, n_pad), out_dtype)]
    out_specs = [pl.BlockSpec((tm, n_pad), lambda i: (i, 0))]
    if compute_stats:
        valid = (jnp.arange(m_pad, dtype=jnp.int32) < m).astype(jnp.float32)
        in_ops.append(valid.reshape(m_pad, 1))
        in_specs.append(pl.BlockSpec((tm, 1), lambda i: (i, 0)))
        out_shape.append(jax.ShapeDtypeStruct((grid, 2, n_pad), jnp.float32))
        out_specs.append(pl.BlockSpec((1, 2, n_pad), lambda i: (i, 0, 0)))

    kernel = functools.partial(_matmul_kernel, n_src=n_src,
                               compute_stats=compute_stats, post_act=post_act)
    outs = pl.pallas_call(
        kernel,
        out_shape=tuple(out_shape),
        grid=(grid,),
        in_specs=in_specs,
        out_specs=tuple(out_specs),
        compiler_params=pltpu.CompilerParams(
            dimension_semantics=("parallel",),
            vmem_limit_bytes=_VMEM_LIMIT),
    )(*in_ops)

    y = outs[0][:m, :n]
    return y, (outs[1] if compute_stats else None)


# ---------------------------------------------------------------------------
# BatchNorm helpers (deferred normalization, exact batch statistics)
# ---------------------------------------------------------------------------

def _finalize_bn(stats, n_real, count, groups):
    tot = jnp.sum(stats, axis=0)                 # (2, n_pad): [sum; sumsq]
    s = tot[0, :n_real]
    q = tot[1, :n_real]
    if groups > 1:                               # pool the 4 sub-pixel phases
        c = n_real // groups
        s = jnp.sum(s.reshape(groups, c), axis=0)
        q = jnp.sum(q.reshape(groups, c), axis=0)
        count = count * groups
    mean = s / count
    var = jnp.maximum(q / count - mean * mean, 0.0)
    return mean, jax.lax.rsqrt(var + _BN_EPS)


def _norm(y, bn):
    mean, inv_std = bn
    return (y.astype(jnp.float32) - mean) * inv_std


def _leaky(x):
    return jnp.where(x >= 0, x, 0.2 * x)


def _relu(x):
    return jnp.maximum(x, 0.0)


# ---------------------------------------------------------------------------
# Conv / ConvTranspose wrappers
# ---------------------------------------------------------------------------

def _im2col(x, kh, kw, stride, pad):
    """Patch matrix with feature order (ki, kj, cin); x is NHWC (bf16)."""
    n, h, w, c = x.shape
    ho = (h + 2 * pad - kh) // stride + 1
    wo = (w + 2 * pad - kw) // stride + 1
    xp = jnp.pad(x, ((0, 0), (pad, pad), (pad, pad), (0, 0)))
    cols = []
    for ki in range(kh):
        for kj in range(kw):
            cols.append(xp[:, ki:ki + (ho - 1) * stride + 1:stride,
                           kj:kj + (wo - 1) * stride + 1:stride, :])
    a = jnp.concatenate(cols, axis=-1).reshape(n * ho * wo, kh * kw * c)
    return a, n, ho, wo


def conv_fwd(x_act, w_oihw, bias, *, stats, stride=2):
    """nn.Conv2d(k=4, stride=2, padding=1); x_act is the already-activated map."""
    cout, cin, kh, kw = w_oihw.shape
    a, nb, ho, wo = _im2col(x_act.astype(jnp.bfloat16), kh, kw, stride, 1)
    wmat = jnp.transpose(w_oihw, (2, 3, 1, 0)).reshape(kh * kw * cin, cout)
    y2d, st = _fused_matmul([a], [wmat], bias, compute_stats=stats)
    y = y2d.reshape(nb, ho, wo, cout)
    if st is None:
        return y, None
    return y, _finalize_bn(st, cout, nb * ho * wo, 1)


# kernel-tap index for (output phase di, window offset a) of a k4 s2 p1 conv-transpose
_KIDX = ((3, 1), (2, 0))


def _convt_weight_matrix(w_iohw):
    """Pack ConvTranspose2d(k4,s2,p1) weights (Cin, Cout, 4, 4) into (9*Cin, 4*Cout).

    Column (di*2+dj)*Cout + co holds sub-pixel phase (di, dj) of channel co; rows
    follow the 3x3 window (r, s, cin) of the 1-padded input.
    """
    cin, cout = w_iohw.shape[0], w_iohw.shape[1]
    wm = jnp.zeros((9 * cin, 4 * cout), w_iohw.dtype)
    for di in range(2):
        for dj in range(2):
            for a in range(2):
                for b in range(2):
                    r, s = di + a, dj + b
                    kh, kw = _KIDX[di][a], _KIDX[dj][b]
                    wm = wm.at[(r * 3 + s) * cin:(r * 3 + s + 1) * cin,
                               (di * 2 + dj) * cout:(di * 2 + dj + 1) * cout
                               ].set(w_iohw[:, :, kh, kw])
    return wm


def convt_fwd(x_act_list, w_iohw, bias, *, stats, post_act=None,
              out_dtype=jnp.bfloat16):
    """nn.ConvTranspose2d(k=4, s=2, p=1) over the (implicit) channel concat of
    x_act_list, as K-split matmuls of the 4-phase sub-pixel decomposition."""
    cin, cout = w_iohw.shape[0], w_iohw.shape[1]
    offs = np.cumsum([0] + [int(x.shape[-1]) for x in x_act_list])
    assert offs[-1] == cin, (offs, cin)
    a_list, w_list = [], []
    for j, xj in enumerate(x_act_list):
        a, nb, ho, wo = _im2col(xj.astype(jnp.bfloat16), 3, 3, 1, 1)
        a_list.append(a)
        w_list.append(_convt_weight_matrix(w_iohw[offs[j]:offs[j + 1]]))
    bias4 = jnp.tile(jnp.reshape(bias, (1, cout)), (1, 4))
    y2d, st = _fused_matmul(a_list, w_list, bias4, compute_stats=stats,
                            post_act=post_act, out_dtype=out_dtype)
    y = y2d.reshape(nb, ho, wo, 2, 2, cout)
    y = jnp.transpose(y, (0, 1, 3, 2, 4, 5)).reshape(nb, 2 * ho, 2 * wo, cout)
    if st is None:
        return y, None
    return y, _finalize_bn(st, 4 * cout, nb * ho * wo, 4)


# ---------------------------------------------------------------------------
# InnerShiftTriple (forward)
# ---------------------------------------------------------------------------

def inner_shift(former_f32, latter_f32, mask_idx, non_idx):
    """Shift-masked third of InnerShiftTriple's output (zeros outside the mask)."""
    n, h, w, ch = former_f32.shape
    hw = h * w
    nm = int(mask_idx.shape[0])
    nn = int(non_idx.shape[0])
    f = former_f32.reshape(n, hw, ch)[:, mask_idx, :].astype(jnp.bfloat16)
    l = latter_f32.reshape(n, hw, ch)[:, non_idx, :].astype(jnp.bfloat16)
    pasted = pl.pallas_call(
        _shift_kernel,
        out_shape=jax.ShapeDtypeStruct((n, nm, ch), jnp.bfloat16),
        grid=(n,),
        in_specs=[pl.BlockSpec((1, nm, ch), lambda b: (b, 0, 0)),
                  pl.BlockSpec((1, nn, ch), lambda b: (b, 0, 0))],
        out_specs=pl.BlockSpec((1, nm, ch), lambda b: (b, 0, 0)),
        compiler_params=pltpu.CompilerParams(
            dimension_semantics=("parallel",),
            vmem_limit_bytes=_VMEM_LIMIT),
    )(f, l)
    shifted = jnp.zeros((n, hw, ch), jnp.bfloat16).at[:, mask_idx, :].set(pasted)
    return shifted.reshape(n, h, w, ch)


# ---------------------------------------------------------------------------
# Model: parameters + forward
# ---------------------------------------------------------------------------

def init_params(key, input_nc, output_nc, ngf):
    """Deterministic synthetic parameters matching the torch module's shapes.
    BatchNorm layers are fresh (gamma=1, beta=0) and use batch statistics."""
    shapes = {
        # Conv2d:          (Cout, Cin)
        "conv1": (ngf, input_nc),
        "conv2": (ngf * 2, ngf),
        "conv3": (ngf * 4, ngf * 2),
        "conv4": (ngf * 8, ngf * 4),
        "conv5": (ngf * 8, ngf * 8),
        # ConvTranspose2d: (Cin, Cout)
        "convt5": (ngf * 8, ngf * 8),
        "convt4": (ngf * 16, ngf * 4),
        "convt3": (ngf * 12, ngf * 2),
        "convt2": (ngf * 4, ngf),
        "convt1": (ngf * 2, output_nc),
    }
    params = {}
    for name, (d0, d1) in shapes.items():
        key, kw_, kb_ = jax.random.split(key, 3)
        params[name + "_w"] = 0.05 * jax.random.normal(kw_, (d0, d1, 4, 4), jnp.float32)
        bias_dim = d1 if name.startswith("convt") else d0
        params[name + "_b"] = 0.01 * jax.random.normal(kb_, (bias_dim,), jnp.float32)
    return params


def build_shift_indices(feat_mask_2d):
    """Static masked / non-masked flat indices from the feature-resolution mask
    (equivalent to util.cal_feat_mask / cal_flag_given_mask_thred, layer_to_last=3)."""
    flag = np.asarray(feat_mask_2d, np.float32).reshape(-1)
    mask_idx = np.nonzero(flag == 1)[0].astype(np.int32)
    non_idx = np.nonzero(flag == 0)[0].astype(np.int32)
    return mask_idx, non_idx


def make_forward(mask_idx, non_idx):
    mask_idx = np.asarray(mask_idx)
    non_idx = np.asarray(non_idx)

    @jax.jit
    def forward(x_nchw, params):
        x0 = jnp.transpose(x_nchw, (0, 2, 3, 1)).astype(jnp.float32)   # NCHW -> NHWC

        # ------------- encoder -------------
        r1, _ = conv_fwd(x0, params["conv1_w"], params["conv1_b"], stats=False)
        r2, bn2 = conv_fwd(_leaky(r1.astype(jnp.float32)),
                           params["conv2_w"], params["conv2_b"], stats=True)
        d2 = _norm(r2, bn2)
        r3, bn3 = conv_fwd(_leaky(d2), params["conv3_w"], params["conv3_b"], stats=True)
        d3 = _norm(r3, bn3)
        r4, bn4 = conv_fwd(_leaky(d3), params["conv4_w"], params["conv4_b"], stats=True)
        d4 = _norm(r4, bn4)
        r5, _ = conv_fwd(_leaky(d4), params["conv5_w"], params["conv5_b"], stats=False)

        # ------------- decoder with fused skips -------------
        ru5, bnu5 = convt_fwd([_relu(r5.astype(jnp.float32))],
                              params["convt5_w"], params["convt5_b"], stats=True)
        u5 = _norm(ru5, bnu5)
        ru4, bnu4 = convt_fwd([_relu(u5), _relu(d4)],
                              params["convt4_w"], params["convt4_b"], stats=True)
        u4 = _norm(ru4, bnu4)

        # InnerCos is the identity in the forward pass.  InnerShiftTriple sees the
        # uprelu'd [u4, d3] and emits [relu(u4), relu(d3), shifted].
        shifted = inner_shift(_relu(u4), _relu(d3), mask_idx, non_idx)
        ru3, bnu3 = convt_fwd([_relu(u4), _relu(d3), shifted],
                              params["convt3_w"], params["convt3_b"], stats=True)
        u3 = _norm(ru3, bnu3)

        ru2, bnu2 = convt_fwd([_relu(u3), _relu(d2)],
                              params["convt2_w"], params["convt2_b"], stats=True)
        u2 = _norm(ru2, bnu2)
        y, _ = convt_fwd([_relu(u2), _relu(r1.astype(jnp.float32))],
                         params["convt1_w"], params["convt1_b"],
                         stats=False, post_act="tanh", out_dtype=jnp.float32)
        return jnp.transpose(y, (0, 3, 1, 2))                          # NHWC -> NCHW

    return forward


# ---------------------------------------------------------------------------
# main
# ---------------------------------------------------------------------------

if __name__ == "__main__":
    key = jax.random.PRNGKey(0)
    key, xkey = jax.random.split(key)

    # Small config: num_downs=5 is the minimum, which requires >=32x32 input.
    batch, input_nc, output_nc, ngf, spatial = 2, 4, 3, 8, 32
    x = jax.random.normal(xkey, (batch, input_nc, spatial, spatial), jnp.float32)
    params = init_params(key, input_nc, output_nc, ngf)

    # Mask: 16x16 hole in the centre of the 32x32 image.  At the shift layer
    # (1/8 resolution, layer_to_last=3) that is the centre 2x2 of a 4x4 grid.
    feat_mask = np.zeros((spatial // 8, spatial // 8), np.float32)
    feat_mask[1:3, 1:3] = 1.0
    mask_idx, non_idx = build_shift_indices(feat_mask)

    forward = make_forward(mask_idx, non_idx)
    out = forward(x, params)
    out = jax.block_until_ready(out)

    assert out.shape == (batch, output_nc, spatial, spatial), out.shape
    assert bool(jnp.all(jnp.isfinite(out))), "non-finite output"
    assert bool(jnp.all(jnp.abs(out) <= 1.0 + 1e-6)), "tanh range violated"
    print("KERNEL_OK")
</pallas_src>

<mosaic_0001>
module attributes {stable_mosaic.version = 11 : i64} {
  func.func @_matmul_kernel(%arg0: i32, %arg1: memref<512x64xbf16, #tpu.memory_space<vmem>>, %arg2: memref<64x128xbf16, #tpu.memory_space<vmem>>, %arg3: memref<1x128xf32, #tpu.memory_space<vmem>>, %arg4: memref<512x128xbf16, #tpu.memory_space<vmem>>) attributes {dimension_semantics = [#tpu.dimension_semantics<parallel>], iteration_bounds = array<i64: 1>, scalar_prefetch = 0 : i64, scratch_operands = 0 : i64, tpu.core_type = #tpu.core_type<tc>, window_params = [{transform_indices = @transform_0, window_bounds = array<i64: 512, 64>}, {pipeline_mode = #tpu.pipeline_mode<synchronous>, transform_indices = @transform_1, window_bounds = array<i64: 64, 128>}, {pipeline_mode = #tpu.pipeline_mode<synchronous>, transform_indices = @transform_2, window_bounds = array<i64: 1, 128>}, {transform_indices = @transform_3, window_bounds = array<i64: 512, 128>}]} {
    %c0 = arith.constant 0 : index
    %c0_0 = arith.constant 0 : index
    %0 = vector.load %arg1[%c0, %c0_0] : memref<512x64xbf16, #tpu.memory_space<vmem>>, vector<512x64xbf16>
    %c0_1 = arith.constant 0 : index
    %c0_2 = arith.constant 0 : index
    %1 = vector.load %arg2[%c0_1, %c0_2] : memref<64x128xbf16, #tpu.memory_space<vmem>>, vector<64x128xbf16>
    %cst = arith.constant dense<0.000000e+00> : vector<512x128xf32>
    %2 = tpu.matmul %0, %1, %cst {dimension_numbers = #tpu.dot_dimension_numbers<[1], [0], [0], [1], [0, 0, 1, 1], [], []>} : vector<512x64xbf16>, vector<64x128xbf16>, vector<512x128xf32> -> vector<512x128xf32>
    %c0_3 = arith.constant 0 : index
    %c0_4 = arith.constant 0 : index
    %3 = vector.load %arg3[%c0_3, %c0_4] : memref<1x128xf32, #tpu.memory_space<vmem>>, vector<1x128xf32>
    %4 = vector.broadcast %3 : vector<1x128xf32> to vector<512x128xf32>
    %5 = arith.addf %2, %4 : vector<512x128xf32>
    %6 = arith.truncf %5 : vector<512x128xf32> to vector<512x128xbf16>
    %c0_5 = arith.constant 0 : index
    %c0_6 = arith.constant 0 : index
    %7 = vector.load %arg4[%c0_5, %c0_6] : memref<512x128xbf16, #tpu.memory_space<vmem>>, vector<512x128xbf16>
    tpu.vector_store %arg4[%c0_5, %c0_6], %6 {strides = array<i32>} : memref<512x128xbf16, #tpu.memory_space<vmem>>, vector<512x128xbf16>,
    return
  }
  func.func @transform_0(%arg0: i32) -> (i32, i32) {
    %c0_i32 = arith.constant 0 : i32
    %c0_i32_0 = arith.constant 0 : i32
    return %arg0, %c0_i32 : i32, i32
  }
  func.func @transform_1(%arg0: i32) -> (i32, i32) {
    %c0_i32 = arith.constant 0 : i32
    %c0_i32_0 = arith.constant 0 : i32
    %c0_i32_1 = arith.constant 0 : i32
    return %c0_i32, %c0_i32_0 : i32, i32
  }
  func.func @transform_2(%arg0: i32) -> (i32, i32) {
    %c0_i32 = arith.constant 0 : i32
    %c0_i32_0 = arith.constant 0 : i32
    %c0_i32_1 = arith.constant 0 : i32
    return %c0_i32, %c0_i32_0 : i32, i32
  }
  func.func @transform_3(%arg0: i32) -> (i32, i32) {
    %c0_i32 = arith.constant 0 : i32
    %c0_i32_0 = arith.constant 0 : i32
    return %arg0, %c0_i32 : i32, i32
  }
}

module attributes {stable_mosaic.version = 11 : i64} {
  func.func @_matmul_kernel(%arg0: i32, %arg1: memref<128x128xbf16, #tpu.memory_space<vmem>>, %arg2: memref<128x128xbf16, #tpu.memory_space<vmem>>, %arg3: memref<1x128xf32, #tpu.memory_space<vmem>>, %arg4: memref<128x1xf32, #tpu.memory_space<vmem>>, %arg5: memref<128x128xbf16, #tpu.memory_space<vmem>>, %arg6: memref<1x2x128xf32, #tpu.memory_space<vmem>>) attributes {dimension_semantics = [#tpu.dimension_semantics<parallel>], iteration_bounds = array<i64: 1>, scalar_prefetch = 0 : i64, scratch_operands = 0 : i64, tpu.core_type = #tpu.core_type<tc>, window_params = [{transform_indices = @transform_0, window_bounds = array<i64: 128, 128>}, {pipeline_mode = #tpu.pipeline_mode<synchronous>, transform_indices = @transform_1, window_bounds = array<i64: 128, 128>}, {pipeline_mode = #tpu.pipeline_mode<synchronous>, transform_indices = @transform_2, window_bounds = array<i64: 1, 128>}, {transform_indices = @transform_3, window_bounds = array<i64: 128, 1>}, {transform_indices = @transform_4, window_bounds = array<i64: 128, 128>}, {transform_indices = @transform_5, window_bounds = array<i64: 1, 2, 128>}]} {
    %c0 = arith.constant 0 : index
    %c0_0 = arith.constant 0 : index
    %0 = vector.load %arg1[%c0, %c0_0] : memref<128x128xbf16, #tpu.memory_space<vmem>>, vector<128x128xbf16>
    %c0_1 = arith.constant 0 : index
    %c0_2 = arith.constant 0 : index
    %1 = vector.load %arg2[%c0_1, %c0_2] : memref<128x128xbf16, #tpu.memory_space<vmem>>, vector<128x128xbf16>
    %cst = arith.constant dense<0.000000e+00> : vector<128x128xf32>
    %2 = tpu.matmul %0, %1, %cst {dimension_numbers = #tpu.dot_dimension_numbers<[1], [0], [0], [1], [0, 0, 1, 1], [], []>} : vector<128x128xbf16>, vector<128x128xbf16>, vector<128x128xf32> -> vector<128x128xf32>
    %c0_3 = arith.constant 0 : index
    %c0_4 = arith.constant 0 : index
    %3 = vector.load %arg3[%c0_3, %c0_4] : memref<1x128xf32, #tpu.memory_space<vmem>>, vector<1x128xf32>
    %4 = vector.broadcast %3 : vector<1x128xf32> to vector<128x128xf32>
    %5 = arith.addf %2, %4 : vector<128x128xf32>
    %c0_5 = arith.constant 0 : index
    %c0_6 = arith.constant 0 : index
    %6 = vector.load %arg4[%c0_5, %c0_6] : memref<128x1xf32, #tpu.memory_space<vmem>>, vector<128x1xf32>
    %7 = vector.broadcast %6 : vector<128x1xf32> to vector<128x128xf32>
    %8 = arith.mulf %5, %7 : vector<128x128xf32>
    %cst_7 = arith.constant dense<0.000000e+00> : vector<128xf32>
    %9 = vector.multi_reduction <add>, %8, %cst_7 [0] : vector<128x128xf32> to vector<128xf32>
    %10 = vector.shape_cast %9 : vector<128xf32> to vector<1x128xf32>
    %11 = arith.mulf %8, %5 : vector<128x128xf32>
    %cst_8 = arith.constant dense<0.000000e+00> : vector<128xf32>
    %12 = vector.multi_reduction <add>, %11, %cst_8 [0] : vector<128x128xf32> to vector<128xf32>
    %13 = vector.shape_cast %12 : vector<128xf32> to vector<1x128xf32>
    %14 = tpu.concatenate %10, %13 in 0 : vector<1x128xf32>, vector<1x128xf32> -> vector<2x128xf32>
    %c0_9 = arith.constant 0 : index
    %c0_10 = arith.constant 0 : index
    %c0_11 = arith.constant 0 : index
    %15 = vector.load %arg6[%c0_9, %c0_10, %c0_11] : memref<1x2x128xf32, #tpu.memory_space<vmem>>, vector<1x2x128xf32>
    %16 = vector.shape_cast %15 : vector<1x2x128xf32> to vector<2x128xf32>
    %17 = vector.shape_cast %14 : vector<2x128xf32> to vector<1x2x128xf32>
    tpu.vector_store %arg6[%c0_9, %c0_10, %c0_11], %17 {strides = array<i32>} : memref<1x2x128xf32, #tpu.memory_space<vmem>>, vector<1x2x128xf32>,
    %18 = arith.truncf %5 : vector<128x128xf32> to vector<128x128xbf16>
    %c0_12 = arith.constant 0 : index
    %c0_13 = arith.constant 0 : index
    %19 = vector.load %arg5[%c0_12, %c0_13] : memref<128x128xbf16, #tpu.memory_space<vmem>>, vector<128x128xbf16>
    tpu.vector_store %arg5[%c0_12, %c0_13], %18 {strides = array<i32>} : memref<128x128xbf16, #tpu.memory_space<vmem>>, vector<128x128xbf16>,
    return
  }
  func.func @transform_0(%arg0: i32) -> (i32, i32) {
    %c0_i32 = arith.constant 0 : i32
    %c0_i32_0 = arith.constant 0 : i32
    return %arg0, %c0_i32 : i32, i32
  }
  func.func @transform_1(%arg0: i32) -> (i32, i32) {
    %c0_i32 = arith.constant 0 : i32
    %c0_i32_0 = arith.constant 0 : i32
    %c0_i32_1 = arith.constant 0 : i32
    return %c0_i32, %c0_i32_0 : i32, i32
  }
  func.func @transform_2(%arg0: i32) -> (i32, i32) {
    %c0_i32 = arith.constant 0 : i32
    %c0_i32_0 = arith.constant 0 : i32
    %c0_i32_1 = arith.constant 0 : i32
    return %c0_i32, %c0_i32_0 : i32, i32
  }
  func.func @transform_3(%arg0: i32) -> (i32, i32) {
    %c0_i32 = arith.constant 0 : i32
    %c0_i32_0 = arith.constant 0 : i32
    return %arg0, %c0_i32 : i32, i32
  }
  func.func @transform_4(%arg0: i32) -> (i32, i32) {
    %c0_i32 = arith.constant 0 : i32
    %c0_i32_0 = arith.constant 0 : i32
    return %arg0, %c0_i32 : i32, i32
  }
  func.func @transform_5(%arg0: i32) -> (i32, i32, i32) {
    %c0_i32 = arith.constant 0 : i32
    %c0_i32_0 = arith.constant 0 : i32
    %c0_i32_1 = arith.constant 0 : i32
    return %arg0, %c0_i32, %c0_i32_0 : i32, i32, i32
  }
}

module attributes {stable_mosaic.version = 11 : i64} {
  func.func @_matmul_kernel(%arg0: i32, %arg1: memref<32x256xbf16, #tpu.memory_space<vmem>>, %arg2: memref<256x128xbf16, #tpu.memory_space<vmem>>, %arg3: memref<1x128xf32, #tpu.memory_space<vmem>>, %arg4: memref<32x1xf32, #tpu.memory_space<vmem>>, %arg5: memref<32x128xbf16, #tpu.memory_space<vmem>>, %arg6: memref<1x2x128xf32, #tpu.memory_space<vmem>>) attributes {dimension_semantics = [#tpu.dimension_semantics<parallel>], iteration_bounds = array<i64: 1>, scalar_prefetch = 0 : i64, scratch_operands = 0 : i64, tpu.core_type = #tpu.core_type<tc>, window_params = [{transform_indices = @transform_0, window_bounds = array<i64: 32, 256>}, {pipeline_mode = #tpu.pipeline_mode<synchronous>, transform_indices = @transform_1, window_bounds = array<i64: 256, 128>}, {pipeline_mode = #tpu.pipeline_mode<synchronous>, transform_indices = @transform_2, window_bounds = array<i64: 1, 128>}, {transform_indices = @transform_3, window_bounds = array<i64: 32, 1>}, {transform_indices = @transform_4, window_bounds = array<i64: 32, 128>}, {transform_indices = @transform_5, window_bounds = array<i64: 1, 2, 128>}]} {
    %c0 = arith.constant 0 : index
    %c0_0 = arith.constant 0 : index
    %0 = vector.load %arg1[%c0, %c0_0] : memref<32x256xbf16, #tpu.memory_space<vmem>>, vector<32x256xbf16>
    %c0_1 = arith.constant 0 : index
    %c0_2 = arith.constant 0 : index
    %1 = vector.load %arg2[%c0_1, %c0_2] : memref<256x128xbf16, #tpu.memory_space<vmem>>, vector<256x128xbf16>
    %cst = arith.constant dense<0.000000e+00> : vector<32x128xf32>
    %2 = tpu.matmul %0, %1, %cst {dimension_numbers = #tpu.dot_dimension_numbers<[1], [0], [0], [1], [0, 0, 1, 1], [], []>} : vector<32x256xbf16>, vector<256x128xbf16>, vector<32x128xf32> -> vector<32x128xf32>
    %c0_3 = arith.constant 0 : index
    %c0_4 = arith.constant 0 : index
    %3 = vector.load %arg3[%c0_3, %c0_4] : memref<1x128xf32, #tpu.memory_space<vmem>>, vector<1x128xf32>
    %4 = vector.broadcast %3 : vector<1x128xf32> to vector<32x128xf32>
    %5 = arith.addf %2, %4 : vector<32x128xf32>
    %c0_5 = arith.constant 0 : index
    %c0_6 = arith.constant 0 : index
    %6 = vector.load %arg4[%c0_5, %c0_6] : memref<32x1xf32, #tpu.memory_space<vmem>>, vector<32x1xf32>
    %7 = vector.broadcast %6 : vector<32x1xf32> to vector<32x128xf32>
    %8 = arith.mulf %5, %7 : vector<32x128xf32>
    %cst_7 = arith.constant dense<0.000000e+00> : vector<128xf32>
    %9 = vector.multi_reduction <add>, %8, %cst_7 [0] : vector<32x128xf32> to vector<128xf32>
    %10 = vector.shape_cast %9 : vector<128xf32> to vector<1x128xf32>
    %11 = arith.mulf %8, %5 : vector<32x128xf32>
    %cst_8 = arith.constant dense<0.000000e+00> : vector<128xf32>
    %12 = vector.multi_reduction <add>, %11, %cst_8 [0] : vector<32x128xf32> to vector<128xf32>
    %13 = vector.shape_cast %12 : vector<128xf32> to vector<1x128xf32>
    %14 = tpu.concatenate %10, %13 in 0 : vector<1x128xf32>, vector<1x128xf32> -> vector<2x128xf32>
    %c0_9 = arith.constant 0 : index
    %c0_10 = arith.constant 0 : index
    %c0_11 = arith.constant 0 : index
    %15 = vector.load %arg6[%c0_9, %c0_10, %c0_11] : memref<1x2x128xf32, #tpu.memory_space<vmem>>, vector<1x2x128xf32>
    %16 = vector.shape_cast %15 : vector<1x2x128xf32> to vector<2x128xf32>
    %17 = vector.shape_cast %14 : vector<2x128xf32> to vector<1x2x128xf32>
    tpu.vector_store %arg6[%c0_9, %c0_10, %c0_11], %17 {strides = array<i32>} : memref<1x2x128xf32, #tpu.memory_space<vmem>>, vector<1x2x128xf32>,
    %18 = arith.truncf %5 : vector<32x128xf32> to vector<32x128xbf16>
    %c0_12 = arith.constant 0 : index
    %c0_13 = arith.constant 0 : index
    %19 = vector.load %arg5[%c0_12, %c0_13] : memref<32x128xbf16, #tpu.memory_space<vmem>>, vector<32x128xbf16>
    tpu.vector_store %arg5[%c0_12, %c0_13], %18 {strides = array<i32>} : memref<32x128xbf16, #tpu.memory_space<vmem>>, vector<32x128xbf16>,
    return
  }
  func.func @transform_0(%arg0: i32) -> (i32, i32) {
    %c0_i32 = arith.constant 0 : i32
    %c0_i32_0 = arith.constant 0 : i32
    return %arg0, %c0_i32 : i32, i32
  }
  func.func @transform_1(%arg0: i32) -> (i32, i32) {
    %c0_i32 = arith.constant 0 : i32
    %c0_i32_0 = arith.constant 0 : i32
    %c0_i32_1 = arith.constant 0 : i32
    return %c0_i32, %c0_i32_0 : i32, i32
  }
  func.func @transform_2(%arg0: i32) -> (i32, i32) {
    %c0_i32 = arith.constant 0 : i32
    %c0_i32_0 = arith.constant 0 : i32
    %c0_i32_1 = arith.constant 0 : i32
    return %c0_i32, %c0_i32_0 : i32, i32
  }
  func.func @transform_3(%arg0: i32) -> (i32, i32) {
    %c0_i32 = arith.constant 0 : i32
    %c0_i32_0 = arith.constant 0 : i32
    return %arg0, %c0_i32 : i32, i32
  }
  func.func @transform_4(%arg0: i32) -> (i32, i32) {
    %c0_i32 = arith.constant 0 : i32
    %c0_i32_0 = arith.constant 0 : i32
    return %arg0, %c0_i32 : i32, i32
  }
  func.func @transform_5(%arg0: i32) -> (i32, i32, i32) {
    %c0_i32 = arith.constant 0 : i32
    %c0_i32_0 = arith.constant 0 : i32
    %c0_i32_1 = arith.constant 0 : i32
    return %arg0, %c0_i32, %c0_i32_0 : i32, i32, i32
  }
}

module attributes {stable_mosaic.version = 11 : i64} {
  func.func @_matmul_kernel(%arg0: i32, %arg1: memref<16x512xbf16, #tpu.memory_space<vmem>>, %arg2: memref<512x128xbf16, #tpu.memory_space<vmem>>, %arg3: memref<1x128xf32, #tpu.memory_space<vmem>>, %arg4: memref<16x1xf32, #tpu.memory_space<vmem>>, %arg5: memref<16x128xbf16, #tpu.memory_space<vmem>>, %arg6: memref<1x2x128xf32, #tpu.memory_space<vmem>>) attributes {dimension_semantics = [#tpu.dimension_semantics<parallel>], iteration_bounds = array<i64: 1>, scalar_prefetch = 0 : i64, scratch_operands = 0 : i64, tpu.core_type = #tpu.core_type<tc>, window_params = [{transform_indices = @transform_0, window_bounds = array<i64: 16, 512>}, {pipeline_mode = #tpu.pipeline_mode<synchronous>, transform_indices = @transform_1, window_bounds = array<i64: 512, 128>}, {pipeline_mode = #tpu.pipeline_mode<synchronous>, transform_indices = @transform_2, window_bounds = array<i64: 1, 128>}, {transform_indices = @transform_3, window_bounds = array<i64: 16, 1>}, {transform_indices = @transform_4, window_bounds = array<i64: 16, 128>}, {transform_indices = @transform_5, window_bounds = array<i64: 1, 2, 128>}]} {
    %c0 = arith.constant 0 : index
    %c0_0 = arith.constant 0 : index
    %0 = vector.load %arg1[%c0, %c0_0] : memref<16x512xbf16, #tpu.memory_space<vmem>>, vector<16x512xbf16>
    %c0_1 = arith.constant 0 : index
    %c0_2 = arith.constant 0 : index
    %1 = vector.load %arg2[%c0_1, %c0_2] : memref<512x128xbf16, #tpu.memory_space<vmem>>, vector<512x128xbf16>
    %cst = arith.constant dense<0.000000e+00> : vector<16x128xf32>
    %2 = tpu.matmul %0, %1, %cst {dimension_numbers = #tpu.dot_dimension_numbers<[1], [0], [0], [1], [0, 0, 1, 1], [], []>} : vector<16x512xbf16>, vector<512x128xbf16>, vector<16x128xf32> -> vector<16x128xf32>
    %c0_3 = arith.constant 0 : index
    %c0_4 = arith.constant 0 : index
    %3 = vector.load %arg3[%c0_3, %c0_4] : memref<1x128xf32, #tpu.memory_space<vmem>>, vector<1x128xf32>
    %4 = vector.broadcast %3 : vector<1x128xf32> to vector<16x128xf32>
    %5 = arith.addf %2, %4 : vector<16x128xf32>
    %c0_5 = arith.constant 0 : index
    %c0_6 = arith.constant 0 : index
    %6 = vector.load %arg4[%c0_5, %c0_6] : memref<16x1xf32, #tpu.memory_space<vmem>>, vector<16x1xf32>
    %7 = vector.broadcast %6 : vector<16x1xf32> to vector<16x128xf32>
    %8 = arith.mulf %5, %7 : vector<16x128xf32>
    %cst_7 = arith.constant dense<0.000000e+00> : vector<128xf32>
    %9 = vector.multi_reduction <add>, %8, %cst_7 [0] : vector<16x128xf32> to vector<128xf32>
    %10 = vector.shape_cast %9 : vector<128xf32> to vector<1x128xf32>
    %11 = arith.mulf %8, %5 : vector<16x128xf32>
    %cst_8 = arith.constant dense<0.000000e+00> : vector<128xf32>
    %12 = vector.multi_reduction <add>, %11, %cst_8 [0] : vector<16x128xf32> to vector<128xf32>
    %13 = vector.shape_cast %12 : vector<128xf32> to vector<1x128xf32>
    %14 = tpu.concatenate %10, %13 in 0 : vector<1x128xf32>, vector<1x128xf32> -> vector<2x128xf32>
    %c0_9 = arith.constant 0 : index
    %c0_10 = arith.constant 0 : index
    %c0_11 = arith.constant 0 : index
    %15 = vector.load %arg6[%c0_9, %c0_10, %c0_11] : memref<1x2x128xf32, #tpu.memory_space<vmem>>, vector<1x2x128xf32>
    %16 = vector.shape_cast %15 : vector<1x2x128xf32> to vector<2x128xf32>
    %17 = vector.shape_cast %14 : vector<2x128xf32> to vector<1x2x128xf32>
    tpu.vector_store %arg6[%c0_9, %c0_10, %c0_11], %17 {strides = array<i32>} : memref<1x2x128xf32, #tpu.memory_space<vmem>>, vector<1x2x128xf32>,
    %18 = arith.truncf %5 : vector<16x128xf32> to vector<16x128xbf16>
    %c0_12 = arith.constant 0 : index
    %c0_13 = arith.constant 0 : index
    %19 = vector.load %arg5[%c0_12, %c0_13] : memref<16x128xbf16, #tpu.memory_space<vmem>>, vector<16x128xbf16>
    tpu.vector_store %arg5[%c0_12, %c0_13], %18 {strides = array<i32>} : memref<16x128xbf16, #tpu.memory_space<vmem>>, vector<16x128xbf16>,
    return
  }
  func.func @transform_0(%arg0: i32) -> (i32, i32) {
    %c0_i32 = arith.constant 0 : i32
    %c0_i32_0 = arith.constant 0 : i32
    return %arg0, %c0_i32 : i32, i32
  }
  func.func @transform_1(%arg0: i32) -> (i32, i32) {
    %c0_i32 = arith.constant 0 : i32
    %c0_i32_0 = arith.constant 0 : i32
    %c0_i32_1 = arith.constant 0 : i32
    return %c0_i32, %c0_i32_0 : i32, i32
  }
  func.func @transform_2(%arg0: i32) -> (i32, i32) {
    %c0_i32 = arith.constant 0 : i32
    %c0_i32_0 = arith.constant 0 : i32
    %c0_i32_1 = arith.constant 0 : i32
    return %c0_i32, %c0_i32_0 : i32, i32
  }
  func.func @transform_3(%arg0: i32) -> (i32, i32) {
    %c0_i32 = arith.constant 0 : i32
    %c0_i32_0 = arith.constant 0 : i32
    return %arg0, %c0_i32 : i32, i32
  }
  func.func @transform_4(%arg0: i32) -> (i32, i32) {
    %c0_i32 = arith.constant 0 : i32
    %c0_i32_0 = arith.constant 0 : i32
    return %arg0, %c0_i32 : i32, i32
  }
  func.func @transform_5(%arg0: i32) -> (i32, i32, i32) {
    %c0_i32 = arith.constant 0 : i32
    %c0_i32_0 = arith.constant 0 : i32
    %c0_i32_1 = arith.constant 0 : i32
    return %arg0, %c0_i32, %c0_i32_0 : i32, i32, i32
  }
}

module attributes {stable_mosaic.version = 11 : i64} {
  func.func @_matmul_kernel(%arg0: i32, %arg1: memref<16x1024xbf16, #tpu.memory_space<vmem>>, %arg2: memref<1024x128xbf16, #tpu.memory_space<vmem>>, %arg3: memref<1x128xf32, #tpu.memory_space<vmem>>, %arg4: memref<16x128xbf16, #tpu.memory_space<vmem>>) attributes {dimension_semantics = [#tpu.dimension_semantics<parallel>], iteration_bounds = array<i64: 1>, scalar_prefetch = 0 : i64, scratch_operands = 0 : i64, tpu.core_type = #tpu.core_type<tc>, window_params = [{transform_indices = @transform_0, window_bounds = array<i64: 16, 1024>}, {pipeline_mode = #tpu.pipeline_mode<synchronous>, transform_indices = @transform_1, window_bounds = array<i64: 1024, 128>}, {pipeline_mode = #tpu.pipeline_mode<synchronous>, transform_indices = @transform_2, window_bounds = array<i64: 1, 128>}, {transform_indices = @transform_3, window_bounds = array<i64: 16, 128>}]} {
    %c0 = arith.constant 0 : index
    %c0_0 = arith.constant 0 : index
    %0 = vector.load %arg1[%c0, %c0_0] : memref<16x1024xbf16, #tpu.memory_space<vmem>>, vector<16x1024xbf16>
    %c0_1 = arith.constant 0 : index
    %c0_2 = arith.constant 0 : index
    %1 = vector.load %arg2[%c0_1, %c0_2] : memref<1024x128xbf16, #tpu.memory_space<vmem>>, vector<1024x128xbf16>
    %cst = arith.constant dense<0.000000e+00> : vector<16x128xf32>
    %2 = tpu.matmul %0, %1, %cst {dimension_numbers = #tpu.dot_dimension_numbers<[1], [0], [0], [1], [0, 0, 1, 1], [], []>} : vector<16x1024xbf16>, vector<1024x128xbf16>, vector<16x128xf32> -> vector<16x128xf32>
    %c0_3 = arith.constant 0 : index
    %c0_4 = arith.constant 0 : index
    %3 = vector.load %arg3[%c0_3, %c0_4] : memref<1x128xf32, #tpu.memory_space<vmem>>, vector<1x128xf32>
    %4 = vector.broadcast %3 : vector<1x128xf32> to vector<16x128xf32>
    %5 = arith.addf %2, %4 : vector<16x128xf32>
    %6 = arith.truncf %5 : vector<16x128xf32> to vector<16x128xbf16>
    %c0_5 = arith.constant 0 : index
    %c0_6 = arith.constant 0 : index
    %7 = vector.load %arg4[%c0_5, %c0_6] : memref<16x128xbf16, #tpu.memory_space<vmem>>, vector<16x128xbf16>
    tpu.vector_store %arg4[%c0_5, %c0_6], %6 {strides = array<i32>} : memref<16x128xbf16, #tpu.memory_space<vmem>>, vector<16x128xbf16>,
    return
  }
  func.func @transform_0(%arg0: i32) -> (i32, i32) {
    %c0_i32 = arith.constant 0 : i32
    %c0_i32_0 = arith.constant 0 : i32
    return %arg0, %c0_i32 : i32, i32
  }
  func.func @transform_1(%arg0: i32) -> (i32, i32) {
    %c0_i32 = arith.constant 0 : i32
    %c0_i32_0 = arith.constant 0 : i32
    %c0_i32_1 = arith.constant 0 : i32
    return %c0_i32, %c0_i32_0 : i32, i32
  }
  func.func @transform_2(%arg0: i32) -> (i32, i32) {
    %c0_i32 = arith.constant 0 : i32
    %c0_i32_0 = arith.constant 0 : i32
    %c0_i32_1 = arith.constant 0 : i32
    return %c0_i32, %c0_i32_0 : i32, i32
  }
  func.func @transform_3(%arg0: i32) -> (i32, i32) {
    %c0_i32 = arith.constant 0 : i32
    %c0_i32_0 = arith.constant 0 : i32
    return %arg0, %c0_i32 : i32, i32
  }
}

module attributes {stable_mosaic.version = 11 : i64} {
  func.func @_matmul_kernel(%arg0: i32, %arg1: memref<16x576xbf16, #tpu.memory_space<vmem>>, %arg2: memref<576x256xbf16, #tpu.memory_space<vmem>>, %arg3: memref<1x256xf32, #tpu.memory_space<vmem>>, %arg4: memref<16x1xf32, #tpu.memory_space<vmem>>, %arg5: memref<16x256xbf16, #tpu.memory_space<vmem>>, %arg6: memref<1x2x256xf32, #tpu.memory_space<vmem>>) attributes {dimension_semantics = [#tpu.dimension_semantics<parallel>], iteration_bounds = array<i64: 1>, scalar_prefetch = 0 : i64, scratch_operands = 0 : i64, tpu.core_type = #tpu.core_type<tc>, window_params = [{transform_indices = @transform_0, window_bounds = array<i64: 16, 576>}, {pipeline_mode = #tpu.pipeline_mode<synchronous>, transform_indices = @transform_1, window_bounds = array<i64: 576, 256>}, {pipeline_mode = #tpu.pipeline_mode<synchronous>, transform_indices = @transform_2, window_bounds = array<i64: 1, 256>}, {transform_indices = @transform_3, window_bounds = array<i64: 16, 1>}, {transform_indices = @transform_4, window_bounds = array<i64: 16, 256>}, {transform_indices = @transform_5, window_bounds = array<i64: 1, 2, 256>}]} {
    %c0 = arith.constant 0 : index
    %c0_0 = arith.constant 0 : index
    %0 = vector.load %arg1[%c0, %c0_0] : memref<16x576xbf16, #tpu.memory_space<vmem>>, vector<16x576xbf16>
    %c0_1 = arith.constant 0 : index
    %c0_2 = arith.constant 0 : index
    %1 = vector.load %arg2[%c0_1, %c0_2] : memref<576x256xbf16, #tpu.memory_space<vmem>>, vector<576x256xbf16>
    %cst = arith.constant dense<0.000000e+00> : vector<16x256xf32>
    %2 = tpu.matmul %0, %1, %cst {dimension_numbers = #tpu.dot_dimension_numbers<[1], [0], [0], [1], [0, 0, 1, 1], [], []>} : vector<16x576xbf16>, vector<576x256xbf16>, vector<16x256xf32> -> vector<16x256xf32>
    %c0_3 = arith.constant 0 : index
    %c0_4 = arith.constant 0 : index
    %3 = vector.load %arg3[%c0_3, %c0_4] : memref<1x256xf32, #tpu.memory_space<vmem>>, vector<1x256xf32>
    %4 = vector.broadcast %3 : vector<1x256xf32> to vector<16x256xf32>
    %5 = arith.addf %2, %4 : vector<16x256xf32>
    %c0_5 = arith.constant 0 : index
    %c0_6 = arith.constant 0 : index
    %6 = vector.load %arg4[%c0_5, %c0_6] : memref<16x1xf32, #tpu.memory_space<vmem>>, vector<16x1xf32>
    %7 = vector.broadcast %6 : vector<16x1xf32> to vector<16x256xf32>
    %8 = arith.mulf %5, %7 : vector<16x256xf32>
    %cst_7 = arith.constant dense<0.000000e+00> : vector<256xf32>
    %9 = vector.multi_reduction <add>, %8, %cst_7 [0] : vector<16x256xf32> to vector<256xf32>
    %10 = vector.shape_cast %9 : vector<256xf32> to vector<1x256xf32>
    %11 = arith.mulf %8, %5 : vector<16x256xf32>
    %cst_8 = arith.constant dense<0.000000e+00> : vector<256xf32>
    %12 = vector.multi_reduction <add>, %11, %cst_8 [0] : vector<16x256xf32> to vector<256xf32>
    %13 = vector.shape_cast %12 : vector<256xf32> to vector<1x256xf32>
    %14 = tpu.concatenate %10, %13 in 0 : vector<1x256xf32>, vector<1x256xf32> -> vector<2x256xf32>
    %c0_9 = arith.constant 0 : index
    %c0_10 = arith.constant 0 : index
    %c0_11 = arith.constant 0 : index
    %15 = vector.load %arg6[%c0_9, %c0_10, %c0_11] : memref<1x2x256xf32, #tpu.memory_space<vmem>>, vector<1x2x256xf32>
    %16 = vector.shape_cast %15 : vector<1x2x256xf32> to vector<2x256xf32>
    %17 = vector.shape_cast %14 : vector<2x256xf32> to vector<1x2x256xf32>
    tpu.vector_store %arg6[%c0_9, %c0_10, %c0_11], %17 {strides = array<i32>} : memref<1x2x256xf32, #tpu.memory_space<vmem>>, vector<1x2x256xf32>,
    %18 = arith.truncf %5 : vector<16x256xf32> to vector<16x256xbf16>
    %c0_12 = arith.constant 0 : index
    %c0_13 = arith.constant 0 : index
    %19 = vector.load %arg5[%c0_12, %c0_13] : memref<16x256xbf16, #tpu.memory_space<vmem>>, vector<16x256xbf16>
    tpu.vector_store %arg5[%c0_12, %c0_13], %18 {strides = array<i32>} : memref<16x256xbf16, #tpu.memory_space<vmem>>, vector<16x256xbf16>,
    return
  }
  func.func @transform_0(%arg0: i32) -> (i32, i32) {
    %c0_i32 = arith.constant 0 : i32
    %c0_i32_0 = arith.constant 0 : i32
    return %arg0, %c0_i32 : i32, i32
  }
  func.func @transform_1(%arg0: i32) -> (i32, i32) {
    %c0_i32 = arith.constant 0 : i32
    %c0_i32_0 = arith.constant 0 : i32
    %c0_i32_1 = arith.constant 0 : i32
    return %c0_i32, %c0_i32_0 : i32, i32
  }
  func.func @transform_2(%arg0: i32) -> (i32, i32) {
    %c0_i32 = arith.constant 0 : i32
    %c0_i32_0 = arith.constant 0 : i32
    %c0_i32_1 = arith.constant 0 : i32
    return %c0_i32, %c0_i32_0 : i32, i32
  }
  func.func @transform_3(%arg0: i32) -> (i32, i32) {
    %c0_i32 = arith.constant 0 : i32
    %c0_i32_0 = arith.constant 0 : i32
    return %arg0, %c0_i32 : i32, i32
  }
  func.func @transform_4(%arg0: i32) -> (i32, i32) {
    %c0_i32 = arith.constant 0 : i32
    %c0_i32_0 = arith.constant 0 : i32
    return %arg0, %c0_i32 : i32, i32
  }
  func.func @transform_5(%arg0: i32) -> (i32, i32, i32) {
    %c0_i32 = arith.constant 0 : i32
    %c0_i32_0 = arith.constant 0 : i32
    %c0_i32_1 = arith.constant 0 : i32
    return %arg0, %c0_i32, %c0_i32_0 : i32, i32, i32
  }
}

module attributes {stable_mosaic.version = 11 : i64} {
  func.func @_matmul_kernel(%arg0: i32, %arg1: memref<16x576xbf16, #tpu.memory_space<vmem>>, %arg2: memref<16x576xbf16, #tpu.memory_space<vmem>>, %arg3: memref<576x128xbf16, #tpu.memory_space<vmem>>, %arg4: memref<576x128xbf16, #tpu.memory_space<vmem>>, %arg5: memref<1x128xf32, #tpu.memory_space<vmem>>, %arg6: memref<16x1xf32, #tpu.memory_space<vmem>>, %arg7: memref<16x128xbf16, #tpu.memory_space<vmem>>, %arg8: memref<1x2x128xf32, #tpu.memory_space<vmem>>) attributes {dimension_semantics = [#tpu.dimension_semantics<parallel>], iteration_bounds = array<i64: 1>, scalar_prefetch = 0 : i64, scratch_operands = 0 : i64, tpu.core_type = #tpu.core_type<tc>, window_params = [{transform_indices = @transform_0, window_bounds = array<i64: 16, 576>}, {transform_indices = @transform_1, window_bounds = array<i64: 16, 576>}, {pipeline_mode = #tpu.pipeline_mode<synchronous>, transform_indices = @transform_2, window_bounds = array<i64: 576, 128>}, {pipeline_mode = #tpu.pipeline_mode<synchronous>, transform_indices = @transform_3, window_bounds = array<i64: 576, 128>}, {pipeline_mode = #tpu.pipeline_mode<synchronous>, transform_indices = @transform_4, window_bounds = array<i64: 1, 128>}, {transform_indices = @transform_5, window_bounds = array<i64: 16, 1>}, {transform_indices = @transform_6, window_bounds = array<i64: 16, 128>}, {transform_indices = @transform_7, window_bounds = array<i64: 1, 2, 128>}]} {
    %c0 = arith.constant 0 : index
    %c0_0 = arith.constant 0 : index
    %0 = vector.load %arg1[%c0, %c0_0] : memref<16x576xbf16, #tpu.memory_space<vmem>>, vector<16x576xbf16>
    %c0_1 = arith.constant 0 : index
    %c0_2 = arith.constant 0 : index
    %1 = vector.load %arg3[%c0_1, %c0_2] : memref<576x128xbf16, #tpu.memory_space<vmem>>, vector<576x128xbf16>
    %cst = arith.constant dense<0.000000e+00> : vector<16x128xf32>
    %2 = tpu.matmul %0, %1, %cst {dimension_numbers = #tpu.dot_dimension_numbers<[1], [0], [0], [1], [0, 0, 1, 1], [], []>} : vector<16x576xbf16>, vector<576x128xbf16>, vector<16x128xf32> -> vector<16x128xf32>
    %c0_3 = arith.constant 0 : index
    %c0_4 = arith.constant 0 : index
    %3 = vector.load %arg2[%c0_3, %c0_4] : memref<16x576xbf16, #tpu.memory_space<vmem>>, vector<16x576xbf16>
    %c0_5 = arith.constant 0 : index
    %c0_6 = arith.constant 0 : index
    %4 = vector.load %arg4[%c0_5, %c0_6] : memref<576x128xbf16, #tpu.memory_space<vmem>>, vector<576x128xbf16>
    %cst_7 = arith.constant dense<0.000000e+00> : vector<16x128xf32>
    %5 = tpu.matmul %3, %4, %cst_7 {dimension_numbers = #tpu.dot_dimension_numbers<[1], [0], [0], [1], [0, 0, 1, 1], [], []>} : vector<16x576xbf16>, vector<576x128xbf16>, vector<16x128xf32> -> vector<16x128xf32>
    %6 = arith.addf %2, %5 : vector<16x128xf32>
    %c0_8 = arith.constant 0 : index
    %c0_9 = arith.constant 0 : index
    %7 = vector.load %arg5[%c0_8, %c0_9] : memref<1x128xf32, #tpu.memory_space<vmem>>, vector<1x128xf32>
    %8 = vector.broadcast %7 : vector<1x128xf32> to vector<16x128xf32>
    %9 = arith.addf %6, %8 : vector<16x128xf32>
    %c0_10 = arith.constant 0 : index
    %c0_11 = arith.constant 0 : index
    %10 = vector.load %arg6[%c0_10, %c0_11] : memref<16x1xf32, #tpu.memory_space<vmem>>, vector<16x1xf32>
    %11 = vector.broadcast %10 : vector<16x1xf32> to vector<16x128xf32>
    %12 = arith.mulf %9, %11 : vector<16x128xf32>
    %cst_12 = arith.constant dense<0.000000e+00> : vector<128xf32>
    %13 = vector.multi_reduction <add>, %12, %cst_12 [0] : vector<16x128xf32> to vector<128xf32>
    %14 = vector.shape_cast %13 : vector<128xf32> to vector<1x128xf32>
    %15 = arith.mulf %12, %9 : vector<16x128xf32>
    %cst_13 = arith.constant dense<0.000000e+00> : vector<128xf32>
    %16 = vector.multi_reduction <add>, %15, %cst_13 [0] : vector<16x128xf32> to vector<128xf32>
    %17 = vector.shape_cast %16 : vector<128xf32> to vector<1x128xf32>
    %18 = tpu.concatenate %14, %17 in 0 : vector<1x128xf32>, vector<1x128xf32> -> vector<2x128xf32>
    %c0_14 = arith.constant 0 : index
    %c0_15 = arith.constant 0 : index
    %c0_16 = arith.constant 0 : index
    %19 = vector.load %arg8[%c0_14, %c0_15, %c0_16] : memref<1x2x128xf32, #tpu.memory_space<vmem>>, vector<1x2x128xf32>
    %20 = vector.shape_cast %19 : vector<1x2x128xf32> to vector<2x128xf32>
    %21 = vector.shape_cast %18 : vector<2x128xf32> to vector<1x2x128xf32>
    tpu.vector_store %arg8[%c0_14, %c0_15, %c0_16], %21 {strides = array<i32>} : memref<1x2x128xf32, #tpu.memory_space<vmem>>, vector<1x2x128xf32>,
    %22 = arith.truncf %9 : vector<16x128xf32> to vector<16x128xbf16>
    %c0_17 = arith.constant 0 : index
    %c0_18 = arith.constant 0 : index
    %23 = vector.load %arg7[%c0_17, %c0_18] : memref<16x128xbf16, #tpu.memory_space<vmem>>, vector<16x128xbf16>
    tpu.vector_store %arg7[%c0_17, %c0_18], %22 {strides = array<i32>} : memref<16x128xbf16, #tpu.memory_space<vmem>>, vector<16x128xbf16>,
    return
  }
  func.func @transform_0(%arg0: i32) -> (i32, i32) {
    %c0_i32 = arith.constant 0 : i32
    %c0_i32_0 = arith.constant 0 : i32
    return %arg0, %c0_i32 : i32, i32
  }
  func.func @transform_1(%arg0: i32) -> (i32, i32) {
    %c0_i32 = arith.constant 0 : i32
    %c0_i32_0 = arith.constant 0 : i32
    return %arg0, %c0_i32 : i32, i32
  }
  func.func @transform_2(%arg0: i32) -> (i32, i32) {
    %c0_i32 = arith.constant 0 : i32
    %c0_i32_0 = arith.constant 0 : i32
    %c0_i32_1 = arith.constant 0 : i32
    return %c0_i32, %c0_i32_0 : i32, i32
  }
  func.func @transform_3(%arg0: i32) -> (i32, i32) {
    %c0_i32 = arith.constant 0 : i32
    %c0_i32_0 = arith.constant 0 : i32
    %c0_i32_1 = arith.constant 0 : i32
    return %c0_i32, %c0_i32_0 : i32, i32
  }
  func.func @transform_4(%arg0: i32) -> (i32, i32) {
    %c0_i32 = arith.constant 0 : i32
    %c0_i32_0 = arith.constant 0 : i32
    %c0_i32_1 = arith.constant 0 : i32
    return %c0_i32, %c0_i32_0 : i32, i32
  }
  func.func @transform_5(%arg0: i32) -> (i32, i32) {
    %c0_i32 = arith.constant 0 : i32
    %c0_i32_0 = arith.constant 0 : i32
    return %arg0, %c0_i32 : i32, i32
  }
  func.func @transform_6(%arg0: i32) -> (i32, i32) {
    %c0_i32 = arith.constant 0 : i32
    %c0_i32_0 = arith.constant 0 : i32
    return %arg0, %c0_i32 : i32, i32
  }
  func.func @transform_7(%arg0: i32) -> (i32, i32, i32) {
    %c0_i32 = arith.constant 0 : i32
    %c0_i32_0 = arith.constant 0 : i32
    %c0_i32_1 = arith.constant 0 : i32
    return %arg0, %c0_i32, %c0_i32_0 : i32, i32, i32
  }
}

module attributes {stable_mosaic.version = 11 : i64} {
  func.func @_shift_kernel(%arg0: i32, %arg1: memref<1x4x32xbf16, #tpu.memory_space<vmem>>, %arg2: memref<1x12x32xbf16, #tpu.memory_space<vmem>>, %arg3: memref<1x4x32xbf16, #tpu.memory_space<vmem>>) attributes {dimension_semantics = [#tpu.dimension_semantics<parallel>], iteration_bounds = array<i64: 2>, scalar_prefetch = 0 : i64, scratch_operands = 0 : i64, tpu.core_type = #tpu.core_type<tc>, window_params = [{transform_indices = @transform_0, window_bounds = array<i64: 1, 4, 32>}, {transform_indices = @transform_1, window_bounds = array<i64: 1, 12, 32>}, {transform_indices = @transform_2, window_bounds = array<i64: 1, 4, 32>}]} {
    %c0 = arith.constant 0 : index
    %c0_0 = arith.constant 0 : index
    %c0_1 = arith.constant 0 : index
    %0 = vector.load %arg1[%c0, %c0_0, %c0_1] : memref<1x4x32xbf16, #tpu.memory_space<vmem>>, vector<1x4x32xbf16>
    %1 = vector.shape_cast %0 : vector<1x4x32xbf16> to vector<4x32xbf16>
    %2 = arith.extf %1 : vector<4x32xbf16> to vector<4x32xf32>
    %c0_2 = arith.constant 0 : index
    %c0_3 = arith.constant 0 : index
    %c0_4 = arith.constant 0 : index
    %3 = vector.load %arg2[%c0_2, %c0_3, %c0_4] : memref<1x12x32xbf16, #tpu.memory_space<vmem>>, vector<1x12x32xbf16>
    %4 = vector.shape_cast %3 : vector<1x12x32xbf16> to vector<12x32xbf16>
    %5 = arith.extf %4 : vector<12x32xbf16> to vector<12x32xf32>
    %6 = arith.mulf %2, %2 : vector<4x32xf32>
    %cst = arith.constant dense<0.000000e+00> : vector<4xf32>
    %7 = vector.multi_reduction <add>, %6, %cst [1] : vector<4x32xf32> to vector<4xf32>
    %8 = vector.shape_cast %7 : vector<4xf32> to vector<4x1xf32>
    %cst_5 = arith.constant 9.99999993E-9 : f32
    %9 = vector.broadcast %cst_5 : f32 to vector<4x1xf32>
    %10 = arith.addf %8, %9 : vector<4x1xf32>
    %11 = math.rsqrt %10 : vector<4x1xf32>
    %12 = vector.broadcast %11 : vector<4x1xf32> to vector<4x32xf32>
    %13 = arith.mulf %2, %12 : vector<4x32xf32>
    %14 = arith.mulf %5, %5 : vector<12x32xf32>
    %cst_6 = arith.constant dense<0.000000e+00> : vector<12xf32>
    %15 = vector.multi_reduction <add>, %14, %cst_6 [1] : vector<12x32xf32> to vector<12xf32>
    %16 = vector.shape_cast %15 : vector<12xf32> to vector<12x1xf32>
    %cst_7 = arith.constant 9.99999993E-9 : f32
    %17 = vector.broadcast %cst_7 : f32 to vector<12x1xf32>
    %18 = arith.addf %16, %17 : vector<12x1xf32>
    %19 = math.rsqrt %18 : vector<12x1xf32>
    %20 = vector.broadcast %19 : vector<12x1xf32> to vector<12x32xf32>
    %21 = arith.mulf %5, %20 : vector<12x32xf32>
    %22 = arith.truncf %13 : vector<4x32xf32> to vector<4x32xbf16>
    %23 = arith.truncf %21 : vector<12x32xf32> to vector<12x32xbf16>
    %cst_8 = arith.constant dense<0.000000e+00> : vector<4x12xf32>
    %24 = tpu.matmul %22, %23, %cst_8 {dimension_numbers = #tpu.dot_dimension_numbers<[1], [1], [0], [0], [0, 0, 1, 0], [], []>} : vector<4x32xbf16>, vector<12x32xbf16>, vector<4x12xf32> -> vector<4x12xf32>
    %25 = tpu.iota {dimensions = array<i32: 1>} : vector<4x12xi32>
    %cst_9 = arith.constant dense<0xFF800000> : vector<4xf32>
    %26 = vector.multi_reduction <maximumf>, %24, %cst_9 [1] : vector<4x12xf32> to vector<4xf32>
    %27 = vector.shape_cast %26 : vector<4xf32> to vector<4x1xf32>
    %28 = vector.broadcast %27 : vector<4x1xf32> to vector<4x12xf32>
    %29 = arith.cmpf oge, %24, %28 : vector<4x12xf32>
    %c12_i32 = arith.constant 12 : i32
    %30 = vector.broadcast %c12_i32 : i32 to vector<4x12xi32>
    %31 = arith.select %29, %25, %30 : vector<4x12xi1>, vector<4x12xi32>
    %cst_10 = arith.constant dense<2147483647> : vector<4xi32>
    %32 = vector.multi_reduction <minsi>, %31, %cst_10 [1] : vector<4x12xi32> to vector<4xi32>
    %33 = vector.shape_cast %32 : vector<4xi32> to vector<4x1xi32>
    %34 = vector.broadcast %33 : vector<4x1xi32> to vector<4x12xi32>
    %35 = arith.cmpi eq, %25, %34 : vector<4x12xi32>
    %36 = arith.extui %35 : vector<4x12xi1> to vector<4x12xi32>
    %37 = arith.sitofp %36 : vector<4x12xi32> to vector<4x12xf32>
    %38 = arith.truncf %37 : vector<4x12xf32> to vector<4x12xbf16>
    %c0_11 = arith.constant 0 : index
    %c0_12 = arith.constant 0 : index
    %c0_13 = arith.constant 0 : index
    %39 = vector.load %arg2[%c0_11, %c0_12, %c0_13] : memref<1x12x32xbf16, #tpu.memory_space<vmem>>, vector<1x12x32xbf16>
    %40 = vector.shape_cast %39 : vector<1x12x32xbf16> to vector<12x32xbf16>
    %cst_14 = arith.constant dense<0.000000e+00> : vector<4x32xf32>
    %41 = tpu.matmul %38, %40, %cst_14 {dimension_numbers = #tpu.dot_dimension_numbers<[1], [0], [0], [1], [0, 0, 1, 1], [], []>} : vector<4x12xbf16>, vector<12x32xbf16>, vector<4x32xf32> -> vector<4x32xf32>
    %42 = arith.truncf %41 : vector<4x32xf32> to vector<4x32xbf16>
    %c0_15 = arith.constant 0 : index
    %c0_16 = arith.constant 0 : index
    %c0_17 = arith.constant 0 : index
    %43 = vector.load %arg3[%c0_15, %c0_16, %c0_17] : memref<1x4x32xbf16, #tpu.memory_space<vmem>>, vector<1x4x32xbf16>
    %44 = vector.shape_cast %43 : vector<1x4x32xbf16> to vector<4x32xbf16>
    %45 = vector.shape_cast %42 : vector<4x32xbf16> to vector<1x4x32xbf16>
    tpu.vector_store %arg3[%c0_15, %c0_16, %c0_17], %45 {strides = array<i32>} : memref<1x4x32xbf16, #tpu.memory_space<vmem>>, vector<1x4x32xbf16>,
    return
  }
  func.func @transform_0(%arg0: i32) -> (i32, i32, i32) {
    %c0_i32 = arith.constant 0 : i32
    %c0_i32_0 = arith.constant 0 : i32
    %c0_i32_1 = arith.constant 0 : i32
    return %arg0, %c0_i32, %c0_i32_0 : i32, i32, i32
  }
  func.func @transform_1(%arg0: i32) -> (i32, i32, i32) {
    %c0_i32 = arith.constant 0 : i32
    %c0_i32_0 = arith.constant 0 : i32
    %c0_i32_1 = arith.constant 0 : i32
    return %arg0, %c0_i32, %c0_i32_0 : i32, i32, i32
  }
  func.func @transform_2(%arg0: i32) -> (i32, i32, i32) {
    %c0_i32 = arith.constant 0 : i32
    %c0_i32_0 = arith.constant 0 : i32
    %c0_i32_1 = arith.constant 0 : i32
    return %arg0, %c0_i32, %c0_i32_0 : i32, i32, i32
  }
}

module attributes {stable_mosaic.version = 11 : i64} {
  func.func @_matmul_kernel(%arg0: i32, %arg1: memref<32x288xbf16, #tpu.memory_space<vmem>>, %arg2: memref<32x288xbf16, #tpu.memory_space<vmem>>, %arg3: memref<32x288xbf16, #tpu.memory_space<vmem>>, %arg4: memref<288x128xbf16, #tpu.memory_space<vmem>>, %arg5: memref<288x128xbf16, #tpu.memory_space<vmem>>, %arg6: memref<288x128xbf16, #tpu.memory_space<vmem>>, %arg7: memref<1x128xf32, #tpu.memory_space<vmem>>, %arg8: memref<32x1xf32, #tpu.memory_space<vmem>>, %arg9: memref<32x128xbf16, #tpu.memory_space<vmem>>, %arg10: memref<1x2x128xf32, #tpu.memory_space<vmem>>) attributes {dimension_semantics = [#tpu.dimension_semantics<parallel>], iteration_bounds = array<i64: 1>, scalar_prefetch = 0 : i64, scratch_operands = 0 : i64, tpu.core_type = #tpu.core_type<tc>, window_params = [{transform_indices = @transform_0, window_bounds = array<i64: 32, 288>}, {transform_indices = @transform_1, window_bounds = array<i64: 32, 288>}, {transform_indices = @transform_2, window_bounds = array<i64: 32, 288>}, {pipeline_mode = #tpu.pipeline_mode<synchronous>, transform_indices = @transform_3, window_bounds = array<i64: 288, 128>}, {pipeline_mode = #tpu.pipeline_mode<synchronous>, transform_indices = @transform_4, window_bounds = array<i64: 288, 128>}, {pipeline_mode = #tpu.pipeline_mode<synchronous>, transform_indices = @transform_5, window_bounds = array<i64: 288, 128>}, {pipeline_mode = #tpu.pipeline_mode<synchronous>, transform_indices = @transform_6, window_bounds = array<i64: 1, 128>}, {transform_indices = @transform_7, window_bounds = array<i64: 32, 1>}, {transform_indices = @transform_8, window_bounds = array<i64: 32, 128>}, {transform_indices = @transform_9, window_bounds = array<i64: 1, 2, 128>}]} {
    %c0 = arith.constant 0 : index
    %c0_0 = arith.constant 0 : index
    %0 = vector.load %arg1[%c0, %c0_0] : memref<32x288xbf16, #tpu.memory_space<vmem>>, vector<32x288xbf16>
    %c0_1 = arith.constant 0 : index
    %c0_2 = arith.constant 0 : index
    %1 = vector.load %arg4[%c0_1, %c0_2] : memref<288x128xbf16, #tpu.memory_space<vmem>>, vector<288x128xbf16>
    %cst = arith.constant dense<0.000000e+00> : vector<32x128xf32>
    %2 = tpu.matmul %0, %1, %cst {dimension_numbers = #tpu.dot_dimension_numbers<[1], [0], [0], [1], [0, 0, 1, 1], [], []>} : vector<32x288xbf16>, vector<288x128xbf16>, vector<32x128xf32> -> vector<32x128xf32>
    %c0_3 = arith.constant 0 : index
    %c0_4 = arith.constant 0 : index
    %3 = vector.load %arg2[%c0_3, %c0_4] : memref<32x288xbf16, #tpu.memory_space<vmem>>, vector<32x288xbf16>
    %c0_5 = arith.constant 0 : index
    %c0_6 = arith.constant 0 : index
    %4 = vector.load %arg5[%c0_5, %c0_6] : memref<288x128xbf16, #tpu.memory_space<vmem>>, vector<288x128xbf16>
    %cst_7 = arith.constant dense<0.000000e+00> : vector<32x128xf32>
    %5 = tpu.matmul %3, %4, %cst_7 {dimension_numbers = #tpu.dot_dimension_numbers<[1], [0], [0], [1], [0, 0, 1, 1], [], []>} : vector<32x288xbf16>, vector<288x128xbf16>, vector<32x128xf32> -> vector<32x128xf32>
    %6 = arith.addf %2, %5 : vector<32x128xf32>
    %c0_8 = arith.constant 0 : index
    %c0_9 = arith.constant 0 : index
    %7 = vector.load %arg3[%c0_8, %c0_9] : memref<32x288xbf16, #tpu.memory_space<vmem>>, vector<32x288xbf16>
    %c0_10 = arith.constant 0 : index
    %c0_11 = arith.constant 0 : index
    %8 = vector.load %arg6[%c0_10, %c0_11] : memref<288x128xbf16, #tpu.memory_space<vmem>>, vector<288x128xbf16>
    %cst_12 = arith.constant dense<0.000000e+00> : vector<32x128xf32>
    %9 = tpu.matmul %7, %8, %cst_12 {dimension_numbers = #tpu.dot_dimension_numbers<[1], [0], [0], [1], [0, 0, 1, 1], [], []>} : vector<32x288xbf16>, vector<288x128xbf16>, vector<32x128xf32> -> vector<32x128xf32>
    %10 = arith.addf %6, %9 : vector<32x128xf32>
    %c0_13 = arith.constant 0 : index
    %c0_14 = arith.constant 0 : index
    %11 = vector.load %arg7[%c0_13, %c0_14] : memref<1x128xf32, #tpu.memory_space<vmem>>, vector<1x128xf32>
    %12 = vector.broadcast %11 : vector<1x128xf32> to vector<32x128xf32>
    %13 = arith.addf %10, %12 : vector<32x128xf32>
    %c0_15 = arith.constant 0 : index
    %c0_16 = arith.constant 0 : index
    %14 = vector.load %arg8[%c0_15, %c0_16] : memref<32x1xf32, #tpu.memory_space<vmem>>, vector<32x1xf32>
    %15 = vector.broadcast %14 : vector<32x1xf32> to vector<32x128xf32>
    %16 = arith.mulf %13, %15 : vector<32x128xf32>
    %cst_17 = arith.constant dense<0.000000e+00> : vector<128xf32>
    %17 = vector.multi_reduction <add>, %16, %cst_17 [0] : vector<32x128xf32> to vector<128xf32>
    %18 = vector.shape_cast %17 : vector<128xf32> to vector<1x128xf32>
    %19 = arith.mulf %16, %13 : vector<32x128xf32>
    %cst_18 = arith.constant dense<0.000000e+00> : vector<128xf32>
    %20 = vector.multi_reduction <add>, %19, %cst_18 [0] : vector<32x128xf32> to vector<128xf32>
    %21 = vector.shape_cast %20 : vector<128xf32> to vector<1x128xf32>
    %22 = tpu.concatenate %18, %21 in 0 : vector<1x128xf32>, vector<1x128xf32> -> vector<2x128xf32>
    %c0_19 = arith.constant 0 : index
    %c0_20 = arith.constant 0 : index
    %c0_21 = arith.constant 0 : index
    %23 = vector.load %arg10[%c0_19, %c0_20, %c0_21] : memref<1x2x128xf32, #tpu.memory_space<vmem>>, vector<1x2x128xf32>
    %24 = vector.shape_cast %23 : vector<1x2x128xf32> to vector<2x128xf32>
    %25 = vector.shape_cast %22 : vector<2x128xf32> to vector<1x2x128xf32>
    tpu.vector_store %arg10[%c0_19, %c0_20, %c0_21], %25 {strides = array<i32>} : memref<1x2x128xf32, #tpu.memory_space<vmem>>, vector<1x2x128xf32>,
    %26 = arith.truncf %13 : vector<32x128xf32> to vector<32x128xbf16>
    %c0_22 = arith.constant 0 : index
    %c0_23 = arith.constant 0 : index
    %27 = vector.load %arg9[%c0_22, %c0_23] : memref<32x128xbf16, #tpu.memory_space<vmem>>, vector<32x128xbf16>
    tpu.vector_store %arg9[%c0_22, %c0_23], %26 {strides = array<i32>} : memref<32x128xbf16, #tpu.memory_space<vmem>>, vector<32x128xbf16>,
    return
  }
  func.func @transform_0(%arg0: i32) -> (i32, i32) {
    %c0_i32 = arith.constant 0 : i32
    %c0_i32_0 = arith.constant 0 : i32
    return %arg0, %c0_i32 : i32, i32
  }
  func.func @transform_1(%arg0: i32) -> (i32, i32) {
    %c0_i32 = arith.constant 0 : i32
    %c0_i32_0 = arith.constant 0 : i32
    return %arg0, %c0_i32 : i32, i32
  }
  func.func @transform_2(%arg0: i32) -> (i32, i32) {
    %c0_i32 = arith.constant 0 : i32
    %c0_i32_0 = arith.constant 0 : i32
    return %arg0, %c0_i32 : i32, i32
  }
  func.func @transform_3(%arg0: i32) -> (i32, i32) {
    %c0_i32 = arith.constant 0 : i32
    %c0_i32_0 = arith.constant 0 : i32
    %c0_i32_1 = arith.constant 0 : i32
    return %c0_i32, %c0_i32_0 : i32, i32
  }
  func.func @transform_4(%arg0: i32) -> (i32, i32) {
    %c0_i32 = arith.constant 0 : i32
    %c0_i32_0 = arith.constant 0 : i32
    %c0_i32_1 = arith.constant 0 : i32
    return %c0_i32, %c0_i32_0 : i32, i32
  }
  func.func @transform_5(%arg0: i32) -> (i32, i32) {
    %c0_i32 = arith.constant 0 : i32
    %c0_i32_0 = arith.constant 0 : i32
    %c0_i32_1 = arith.constant 0 : i32
    return %c0_i32, %c0_i32_0 : i32, i32
  }
  func.func @transform_6(%arg0: i32) -> (i32, i32) {
    %c0_i32 = arith.constant 0 : i32
    %c0_i32_0 = arith.constant 0 : i32
    %c0_i32_1 = arith.constant 0 : i32
    return %c0_i32, %c0_i32_0 : i32, i32
  }
  func.func @transform_7(%arg0: i32) -> (i32, i32) {
    %c0_i32 = arith.constant 0 : i32
    %c0_i32_0 = arith.constant 0 : i32
    return %arg0, %c0_i32 : i32, i32
  }
  func.func @transform_8(%arg0: i32) -> (i32, i32) {
    %c0_i32 = arith.constant 0 : i32
    %c0_i32_0 = arith.constant 0 : i32
    return %arg0, %c0_i32 : i32, i32
  }
  func.func @transform_9(%arg0: i32) -> (i32, i32, i32) {
    %c0_i32 = arith.constant 0 : i32
    %c0_i32_0 = arith.constant 0 : i32
    %c0_i32_1 = arith.constant 0 : i32
    return %arg0, %c0_i32, %c0_i32_0 : i32, i32, i32
  }
}

module attributes {stable_mosaic.version = 11 : i64} {
  func.func @_matmul_kernel(%arg0: i32, %arg1: memref<128x144xbf16, #tpu.memory_space<vmem>>, %arg2: memref<128x144xbf16, #tpu.memory_space<vmem>>, %arg3: memref<144x128xbf16, #tpu.memory_space<vmem>>, %arg4: memref<144x128xbf16, #tpu.memory_space<vmem>>, %arg5: memref<1x128xf32, #tpu.memory_space<vmem>>, %arg6: memref<128x1xf32, #tpu.memory_space<vmem>>, %arg7: memref<128x128xbf16, #tpu.memory_space<vmem>>, %arg8: memref<1x2x128xf32, #tpu.memory_space<vmem>>) attributes {dimension_semantics = [#tpu.dimension_semantics<parallel>], iteration_bounds = array<i64: 1>, scalar_prefetch = 0 : i64, scratch_operands = 0 : i64, tpu.core_type = #tpu.core_type<tc>, window_params = [{transform_indices = @transform_0, window_bounds = array<i64: 128, 144>}, {transform_indices = @transform_1, window_bounds = array<i64: 128, 144>}, {pipeline_mode = #tpu.pipeline_mode<synchronous>, transform_indices = @transform_2, window_bounds = array<i64: 144, 128>}, {pipeline_mode = #tpu.pipeline_mode<synchronous>, transform_indices = @transform_3, window_bounds = array<i64: 144, 128>}, {pipeline_mode = #tpu.pipeline_mode<synchronous>, transform_indices = @transform_4, window_bounds = array<i64: 1, 128>}, {transform_indices = @transform_5, window_bounds = array<i64: 128, 1>}, {transform_indices = @transform_6, window_bounds = array<i64: 128, 128>}, {transform_indices = @transform_7, window_bounds = array<i64: 1, 2, 128>}]} {
    %c0 = arith.constant 0 : index
    %c0_0 = arith.constant 0 : index
    %0 = vector.load %arg1[%c0, %c0_0] : memref<128x144xbf16, #tpu.memory_space<vmem>>, vector<128x144xbf16>
    %c0_1 = arith.constant 0 : index
    %c0_2 = arith.constant 0 : index
    %1 = vector.load %arg3[%c0_1, %c0_2] : memref<144x128xbf16, #tpu.memory_space<vmem>>, vector<144x128xbf16>
    %cst = arith.constant dense<0.000000e+00> : vector<128x128xf32>
    %2 = tpu.matmul %0, %1, %cst {dimension_numbers = #tpu.dot_dimension_numbers<[1], [0], [0], [1], [0, 0, 1, 1], [], []>} : vector<128x144xbf16>, vector<144x128xbf16>, vector<128x128xf32> -> vector<128x128xf32>
    %c0_3 = arith.constant 0 : index
    %c0_4 = arith.constant 0 : index
    %3 = vector.load %arg2[%c0_3, %c0_4] : memref<128x144xbf16, #tpu.memory_space<vmem>>, vector<128x144xbf16>
    %c0_5 = arith.constant 0 : index
    %c0_6 = arith.constant 0 : index
    %4 = vector.load %arg4[%c0_5, %c0_6] : memref<144x128xbf16, #tpu.memory_space<vmem>>, vector<144x128xbf16>
    %cst_7 = arith.constant dense<0.000000e+00> : vector<128x128xf32>
    %5 = tpu.matmul %3, %4, %cst_7 {dimension_numbers = #tpu.dot_dimension_numbers<[1], [0], [0], [1], [0, 0, 1, 1], [], []>} : vector<128x144xbf16>, vector<144x128xbf16>, vector<128x128xf32> -> vector<128x128xf32>
    %6 = arith.addf %2, %5 : vector<128x128xf32>
    %c0_8 = arith.constant 0 : index
    %c0_9 = arith.constant 0 : index
    %7 = vector.load %arg5[%c0_8, %c0_9] : memref<1x128xf32, #tpu.memory_space<vmem>>, vector<1x128xf32>
    %8 = vector.broadcast %7 : vector<1x128xf32> to vector<128x128xf32>
    %9 = arith.addf %6, %8 : vector<128x128xf32>
    %c0_10 = arith.constant 0 : index
    %c0_11 = arith.constant 0 : index
    %10 = vector.load %arg6[%c0_10, %c0_11] : memref<128x1xf32, #tpu.memory_space<vmem>>, vector<128x1xf32>
    %11 = vector.broadcast %10 : vector<128x1xf32> to vector<128x128xf32>
    %12 = arith.mulf %9, %11 : vector<128x128xf32>
    %cst_12 = arith.constant dense<0.000000e+00> : vector<128xf32>
    %13 = vector.multi_reduction <add>, %12, %cst_12 [0] : vector<128x128xf32> to vector<128xf32>
    %14 = vector.shape_cast %13 : vector<128xf32> to vector<1x128xf32>
    %15 = arith.mulf %12, %9 : vector<128x128xf32>
    %cst_13 = arith.constant dense<0.000000e+00> : vector<128xf32>
    %16 = vector.multi_reduction <add>, %15, %cst_13 [0] : vector<128x128xf32> to vector<128xf32>
    %17 = vector.shape_cast %16 : vector<128xf32> to vector<1x128xf32>
    %18 = tpu.concatenate %14, %17 in 0 : vector<1x128xf32>, vector<1x128xf32> -> vector<2x128xf32>
    %c0_14 = arith.constant 0 : index
    %c0_15 = arith.constant 0 : index
    %c0_16 = arith.constant 0 : index
    %19 = vector.load %arg8[%c0_14, %c0_15, %c0_16] : memref<1x2x128xf32, #tpu.memory_space<vmem>>, vector<1x2x128xf32>
    %20 = vector.shape_cast %19 : vector<1x2x128xf32> to vector<2x128xf32>
    %21 = vector.shape_cast %18 : vector<2x128xf32> to vector<1x2x128xf32>
    tpu.vector_store %arg8[%c0_14, %c0_15, %c0_16], %21 {strides = array<i32>} : memref<1x2x128xf32, #tpu.memory_space<vmem>>, vector<1x2x128xf32>,
    %22 = arith.truncf %9 : vector<128x128xf32> to vector<128x128xbf16>
    %c0_17 = arith.constant 0 : index
    %c0_18 = arith.constant 0 : index
    %23 = vector.load %arg7[%c0_17, %c0_18] : memref<128x128xbf16, #tpu.memory_space<vmem>>, vector<128x128xbf16>
    tpu.vector_store %arg7[%c0_17, %c0_18], %22 {strides = array<i32>} : memref<128x128xbf16, #tpu.memory_space<vmem>>, vector<128x128xbf16>,
    return
  }
  func.func @transform_0(%arg0: i32) -> (i32, i32) {
    %c0_i32 = arith.constant 0 : i32
    %c0_i32_0 = arith.constant 0 : i32
    return %arg0, %c0_i32 : i32, i32
  }
  func.func @transform_1(%arg0: i32) -> (i32, i32) {
    %c0_i32 = arith.constant 0 : i32
    %c0_i32_0 = arith.constant 0 : i32
    return %arg0, %c0_i32 : i32, i32
  }
  func.func @transform_2(%arg0: i32) -> (i32, i32) {
    %c0_i32 = arith.constant 0 : i32
    %c0_i32_0 = arith.constant 0 : i32
    %c0_i32_1 = arith.constant 0 : i32
    return %c0_i32, %c0_i32_0 : i32, i32
  }
  func.func @transform_3(%arg0: i32) -> (i32, i32) {
    %c0_i32 = arith.constant 0 : i32
    %c0_i32_0 = arith.constant 0 : i32
    %c0_i32_1 = arith.constant 0 : i32
    return %c0_i32, %c0_i32_0 : i32, i32
  }
  func.func @transform_4(%arg0: i32) -> (i32, i32) {
    %c0_i32 = arith.constant 0 : i32
    %c0_i32_0 = arith.constant 0 : i32
    %c0_i32_1 = arith.constant 0 : i32
    return %c0_i32, %c0_i32_0 : i32, i32
  }
  func.func @transform_5(%arg0: i32) -> (i32, i32) {
    %c0_i32 = arith.constant 0 : i32
    %c0_i32_0 = arith.constant 0 : i32
    return %arg0, %c0_i32 : i32, i32
  }
  func.func @transform_6(%arg0: i32) -> (i32, i32) {
    %c0_i32 = arith.constant 0 : i32
    %c0_i32_0 = arith.constant 0 : i32
    return %arg0, %c0_i32 : i32, i32
  }
  func.func @transform_7(%arg0: i32) -> (i32, i32, i32) {
    %c0_i32 = arith.constant 0 : i32
    %c0_i32_0 = arith.constant 0 : i32
    %c0_i32_1 = arith.constant 0 : i32
    return %arg0, %c0_i32, %c0_i32_0 : i32, i32, i32
  }
}

module attributes {stable_mosaic.version = 11 : i64} {
  func.func @_matmul_kernel(%arg0: i32, %arg1: memref<512x72xbf16, #tpu.memory_space<vmem>>, %arg2: memref<512x72xbf16, #tpu.memory_space<vmem>>, %arg3: memref<72x128xbf16, #tpu.memory_space<vmem>>, %arg4: memref<72x128xbf16, #tpu.memory_space<vmem>>, %arg5: memref<1x128xf32, #tpu.memory_space<vmem>>, %arg6: memref<512x128xf32, #tpu.memory_space<vmem>>) attributes {dimension_semantics = [#tpu.dimension_semantics<parallel>], iteration_bounds = array<i64: 1>, scalar_prefetch = 0 : i64, scratch_operands = 0 : i64, tpu.core_type = #tpu.core_type<tc>, window_params = [{transform_indices = @transform_0, window_bounds = array<i64: 512, 72>}, {transform_indices = @transform_1, window_bounds = array<i64: 512, 72>}, {pipeline_mode = #tpu.pipeline_mode<synchronous>, transform_indices = @transform_2, window_bounds = array<i64: 72, 128>}, {pipeline_mode = #tpu.pipeline_mode<synchronous>, transform_indices = @transform_3, window_bounds = array<i64: 72, 128>}, {pipeline_mode = #tpu.pipeline_mode<synchronous>, transform_indices = @transform_4, window_bounds = array<i64: 1, 128>}, {transform_indices = @transform_5, window_bounds = array<i64: 512, 128>}]} {
    %c0 = arith.constant 0 : index
    %c0_0 = arith.constant 0 : index
    %0 = vector.load %arg1[%c0, %c0_0] : memref<512x72xbf16, #tpu.memory_space<vmem>>, vector<512x72xbf16>
    %c0_1 = arith.constant 0 : index
    %c0_2 = arith.constant 0 : index
    %1 = vector.load %arg3[%c0_1, %c0_2] : memref<72x128xbf16, #tpu.memory_space<vmem>>, vector<72x128xbf16>
    %cst = arith.constant dense<0.000000e+00> : vector<512x128xf32>
    %2 = tpu.matmul %0, %1, %cst {dimension_numbers = #tpu.dot_dimension_numbers<[1], [0], [0], [1], [0, 0, 1, 1], [], []>} : vector<512x72xbf16>, vector<72x128xbf16>, vector<512x128xf32> -> vector<512x128xf32>
    %c0_3 = arith.constant 0 : index
    %c0_4 = arith.constant 0 : index
    %3 = vector.load %arg2[%c0_3, %c0_4] : memref<512x72xbf16, #tpu.memory_space<vmem>>, vector<512x72xbf16>
    %c0_5 = arith.constant 0 : index
    %c0_6 = arith.constant 0 : index
    %4 = vector.load %arg4[%c0_5, %c0_6] : memref<72x128xbf16, #tpu.memory_space<vmem>>, vector<72x128xbf16>
    %cst_7 = arith.constant dense<0.000000e+00> : vector<512x128xf32>
    %5 = tpu.matmul %3, %4, %cst_7 {dimension_numbers = #tpu.dot_dimension_numbers<[1], [0], [0], [1], [0, 0, 1, 1], [], []>} : vector<512x72xbf16>, vector<72x128xbf16>, vector<512x128xf32> -> vector<512x128xf32>
    %6 = arith.addf %2, %5 : vector<512x128xf32>
    %c0_8 = arith.constant 0 : index
    %c0_9 = arith.constant 0 : index
    %7 = vector.load %arg5[%c0_8, %c0_9] : memref<1x128xf32, #tpu.memory_space<vmem>>, vector<1x128xf32>
    %8 = vector.broadcast %7 : vector<1x128xf32> to vector<512x128xf32>
    %9 = arith.addf %6, %8 : vector<512x128xf32>
    %10 = math.tanh %9 : vector<512x128xf32>
    %c0_10 = arith.constant 0 : index
    %c0_11 = arith.constant 0 : index
    %11 = vector.load %arg6[%c0_10, %c0_11] : memref<512x128xf32, #tpu.memory_space<vmem>>, vector<512x128xf32>
    tpu.vector_store %arg6[%c0_10, %c0_11], %10 {strides = array<i32>} : memref<512x128xf32, #tpu.memory_space<vmem>>, vector<512x128xf32>,
    return
  }
  func.func @transform_0(%arg0: i32) -> (i32, i32) {
    %c0_i32 = arith.constant 0 : i32
    %c0_i32_0 = arith.constant 0 : i32
    return %arg0, %c0_i32 : i32, i32
  }
  func.func @transform_1(%arg0: i32) -> (i32, i32) {
    %c0_i32 = arith.constant 0 : i32
    %c0_i32_0 = arith.constant 0 : i32
    return %arg0, %c0_i32 : i32, i32
  }
  func.func @transform_2(%arg0: i32) -> (i32, i32) {
    %c0_i32 = arith.constant 0 : i32
    %c0_i32_0 = arith.constant 0 : i32
    %c0_i32_1 = arith.constant 0 : i32
    return %c0_i32, %c0_i32_0 : i32, i32
  }
  func.func @transform_3(%arg0: i32) -> (i32, i32) {
    %c0_i32 = arith.constant 0 : i32
    %c0_i32_0 = arith.constant 0 : i32
    %c0_i32_1 = arith.constant 0 : i32
    return %c0_i32, %c0_i32_0 : i32, i32
  }
  func.func @transform_4(%arg0: i32) -> (i32, i32) {
    %c0_i32 = arith.constant 0 : i32
    %c0_i32_0 = arith.constant 0 : i32
    %c0_i32_1 = arith.constant 0 : i32
    return %c0_i32, %c0_i32_0 : i32, i32
  }
  func.func @transform_5(%arg0: i32) -> (i32, i32) {
    %c0_i32 = arith.constant 0 : i32
    %c0_i32_0 = arith.constant 0 : i32
    return %arg0, %c0_i32 : i32, i32
  }
}

</mosaic_0001>

<llo_original>
// kernel: forward.11
$region0: #{forward.11}
  #allocation0 [shape = 'u32[]', space=smem, size = 0x4, offset = 0x4, fixed_abs, tag = 'smem constant byte address 0x4 - core index']
  #allocation1 [shape = 'u32[144,128]{1,0:T(1,128)}', space=vmem, size = 0x12000, scoped, tag = 'internal scratch']
  %s0 = inlined_call_operand.vmem [shape: bf16[512,64], index: 0, kind: input, shape index: {}]
  %s1 = inlined_call_operand.vmem [shape: bf16[64,128], index: 1, kind: input, shape index: {}]
  %s2 = inlined_call_operand.vmem [shape: f32[1,128], index: 2, kind: input, shape index: {}]
  %s3 = inlined_call_operand.vmem [shape: bf16[512,128], index: 3, kind: output, shape index: {}]
  %s4 = sld [smem:[#allocation0]]
  $region22: #{forward.11} parent=0
    _
  %s6 = ssub.s32 1, %s4
  %s7 = scalar_select 0, %s6, %s4
  // Predicated region
  $region2: #{forward.11} parent=0 // pred_check
    _
  $region3: #{forward.11} parent=0 // pred_check_branch
    %9 = sbr.rel (0) target = $region5
  $region4: #{forward.11} parent=0 // pred_region
    _
  $region5: #{forward.11} parent=0 // pred_fallthru
    _
  // Predicated region
  $region6: #{forward.11} parent=0 // pred_check
    _
  $region7: #{forward.11} parent=0 // pred_check_branch
    %11 = sbr.rel (0) target = $region9
  $region8: #{forward.11} parent=0 // pred_region
    _
  $region9: #{forward.11} parent=0 // pred_fallthru
    _
  // Predicated region
  $region10: #{forward.11} parent=0 // pred_check
    _
  $region11: #{forward.11} parent=0 // pred_check_branch
    %13 = sbr.rel (0) target = $region13
  $region12: #{forward.11} parent=0 // pred_region
    _
  $region13: #{forward.11} parent=0 // pred_fallthru
    _
  %v15 = vld [vmem:[%s0] sm:$0xf]
  %v16 = vld [vmem:[%s0 + $0x4] sm:$0xf]
  %v17 = vld [vmem:[%s0 + $0x8] sm:$0xf]
  %v18 = vld [vmem:[%s0 + $0xc] sm:$0xf]
  %v19 = vld [vmem:[%s0 + $0x10] sm:$0xf]
  %v20 = vld [vmem:[%s0 + $0x14] sm:$0xf]
  %v21 = vld [vmem:[%s0 + $0x18] sm:$0xf]
  %v22 = vld [vmem:[%s0 + $0x1c] sm:$0xf]
  %v23 = vld [vmem:[%s0 + $0x20] sm:$0xf]
  %v24 = vld [vmem:[%s0 + $0x24] sm:$0xf]
  %v25 = vld [vmem:[%s0 + $0x28] sm:$0xf]
  %v26 = vld [vmem:[%s0 + $0x2c] sm:$0xf]
  %v27 = vld [vmem:[%s0 + $0x30] sm:$0xf]
  %v28 = vld [vmem:[%s0 + $0x34] sm:$0xf]
  %v29 = vld [vmem:[%s0 + $0x38] sm:$0xf]
  %v30 = vld [vmem:[%s0 + $0x3c] sm:$0xf]
  %v31 = vld [vmem:[%s0 + $0x40] sm:$0xf]
  %v32 = vld [vmem:[%s0 + $0x44] sm:$0xf]
  %v33 = vld [vmem:[%s0 + $0x48] sm:$0xf]
  %v34 = vld [vmem:[%s0 + $0x4c] sm:$0xf]
  %v35 = vld [vmem:[%s0 + $0x50] sm:$0xf]
  %v36 = vld [vmem:[%s0 + $0x54] sm:$0xf]
  %v37 = vld [vmem:[%s0 + $0x58] sm:$0xf]
  %v38 = vld [vmem:[%s0 + $0x5c] sm:$0xf]
  %v39 = vld [vmem:[%s0 + $0x60] sm:$0xf]
  %v40 = vld [vmem:[%s0 + $0x64] sm:$0xf]
  %v41 = vld [vmem:[%s0 + $0x68] sm:$0xf]
  %v42 = vld [vmem:[%s0 + $0x6c] sm:$0xf]
  %v43 = vld [vmem:[%s0 + $0x70] sm:$0xf]
  %v44 = vld [vmem:[%s0 + $0x74] sm:$0xf]
  %v45 = vld [vmem:[%s0 + $0x78] sm:$0xf]
  %v46 = vld [vmem:[%s0 + $0x7c] sm:$0xf]
  %v47 = vld [vmem:[%s0 + $0x80] sm:$0xf]
  %v48 = vld [vmem:[%s0 + $0x84] sm:$0xf]
  %v49 = vld [vmem:[%s0 + $0x88] sm:$0xf]
  %v50 = vld [vmem:[%s0 + $0x8c] sm:$0xf]
  %v51 = vld [vmem:[%s0 + $0x90] sm:$0xf]
  %v52 = vld [vmem:[%s0 + $0x94] sm:$0xf]
  %v53 = vld [vmem:[%s0 + $0x98] sm:$0xf]
  %v54 = vld [vmem:[%s0 + $0x9c] sm:$0xf]
  %v55 = vld [vmem:[%s0 + $0xa0] sm:$0xf]
  %v56 = vld [vmem:[%s0 + $0xa4] sm:$0xf]
  %v57 = vld [vmem:[%s0 + $0xa8] sm:$0xf]
  %v58 = vld [vmem:[%s0 + $0xac] sm:$0xf]
  %v59 = vld [vmem:[%s0 + $0xb0] sm:$0xf]
  %v60 = vld [vmem:[%s0 + $0xb4] sm:$0xf]
  %v61 = vld [vmem:[%s0 + $0xb8] sm:$0xf]
  %v62 = vld [vmem:[%s0 + $0xbc] sm:$0xf]
  %v63 = vld [vmem:[%s0 + $0xc0] sm:$0xf]
  %v64 = vld [vmem:[%s0 + $0xc4] sm:$0xf]
  %v65 = vld [vmem:[%s0 + $0xc8] sm:$0xf]
  %v66 = vld [vmem:[%s0 + $0xcc] sm:$0xf]
  %v67 = vld [vmem:[%s0 + $0xd0] sm:$0xf]
  %v68 = vld [vmem:[%s0 + $0xd4] sm:$0xf]
  %v69 = vld [vmem:[%s0 + $0xd8] sm:$0xf]
  %v70 = vld [vmem:[%s0 + $0xdc] sm:$0xf]
  %v71 = vld [vmem:[%s0 + $0xe0] sm:$0xf]
  %v72 = vld [vmem:[%s0 + $0xe4] sm:$0xf]
  %v73 = vld [vmem:[%s0 + $0xe8] sm:$0xf]
  %v74 = vld [vmem:[%s0 + $0xec] sm:$0xf]
  %v75 = vld [vmem:[%s0 + $0xf0] sm:$0xf]
  %v76 = vld [vmem:[%s0 + $0xf4] sm:$0xf]
  %v77 = vld [vmem:[%s0 + $0xf8] sm:$0xf]
  %v78 = vld [vmem:[%s0 + $0xfc] sm:$0xf]
  %v79 = vld [vmem:[%s1] sm:$0xf]
  %v80 = vld [vmem:[%s1 + $0x4] sm:$0xf]
  %v81 = vld [vmem:[%s1 + $0x8] sm:$0xf]
  %v82 = vld [vmem:[%s1 + $0xc] sm:$0xf]
  %v83 = vld [vmem:[%s1 + $0x10] sm:$0xf]
  %v84 = vld [vmem:[%s1 + $0x14] sm:$0xf]
  %v85 = vld [vmem:[%s1 + $0x18] sm:$0xf]
  %v86 = vld [vmem:[%s1 + $0x1c] sm:$0xf]
  %v87 = vld [vmem:[%s2] sm:$0x1]
  %v89 = vlaneseq
  %v90 = vshrl.u32 %v89, 7
  %v91 = vsub.s32 0, %v90
  %v92 = vrot.slane %v87, %v91
  %v158 = vunpack.c.l.b16 %v15
  %v159 = vunpack.c.l.b16 %v16
  %v160 = vunpack.c.l.b16 %v17
  %v161 = vunpack.c.l.b16 %v18
  %v162 = vunpack.c.l.b16 %v19
  %v163 = vunpack.c.l.b16 %v20
  %v164 = vunpack.c.l.b16 %v21
  %v165 = vunpack.c.l.b16 %v22
  %v166 = vunpack.c.l.b16 %v23
  %v167 = vunpack.c.l.b16 %v24
  %v168 = vunpack.c.l.b16 %v25
  %v169 = vunpack.c.l.b16 %v26
  %v170 = vunpack.c.l.b16 %v27
  %v171 = vunpack.c.l.b16 %v28
  %v172 = vunpack.c.l.b16 %v29
  %v173 = vunpack.c.l.b16 %v30
  %v174 = vunpack.c.l.b16 %v31
  %v175 = vunpack.c.l.b16 %v32
  %v176 = vunpack.c.l.b16 %v33
  %v177 = vunpack.c.l.b16 %v34
  %v178 = vunpack.c.l.b16 %v35
  %v179 = vunpack.c.l.b16 %v36
  %v180 = vunpack.c.l.b16 %v37
  %v181 = vunpack.c.l.b16 %v38
  %v182 = vunpack.c.l.b16 %v39
  %v183 = vunpack.c.l.b16 %v40
  %v184 = vunpack.c.l.b16 %v41
  %v185 = vunpack.c.l.b16 %v42
  %v186 = vunpack.c.l.b16 %v43
  %v187 = vunpack.c.l.b16 %v44
  %v188 = vunpack.c.l.b16 %v45
  %v189 = vunpack.c.l.b16 %v46
  %v190 = vunpack.c.l.b16 %v47
  %v191 = vunpack.c.l.b16 %v48
  %v192 = vunpack.c.l.b16 %v49
  %v193 = vunpack.c.l.b16 %v50
  %v194 = vunpack.c.l.b16 %v51
  %v195 = vunpack.c.l.b16 %v52
  %v196 = vunpack.c.l.b16 %v53
  %v197 = vunpack.c.l.b16 %v54
  %v198 = vunpack.c.l.b16 %v55
  %v199 = vunpack.c.l.b16 %v56
  %v200 = vunpack.c.l.b16 %v57
  %v201 = vunpack.c.l.b16 %v58
  %v202 = vunpack.c.l.b16 %v59
  %v203 = vunpack.c.l.b16 %v60
  %v204 = vunpack.c.l.b16 %v61
  %v205 = vunpack.c.l.b16 %v62
  %v206 = vunpack.c.l.b16 %v63
  %v207 = vunpack.c.l.b16 %v64
  %v208 = vunpack.c.l.b16 %v65
  %v209 = vunpack.c.l.b16 %v66
  %v210 = vunpack.c.l.b16 %v67
  %v211 = vunpack.c.l.b16 %v68
  %v212 = vunpack.c.l.b16 %v69
  %v213 = vunpack.c.l.b16 %v70
  %v214 = vunpack.c.l.b16 %v71
  %v215 = vunpack.c.l.b16 %v72
  %v216 = vunpack.c.l.b16 %v73
  %v217 = vunpack.c.l.b16 %v74
  %v218 = vunpack.c.l.b16 %v75
  %v219 = vunpack.c.l.b16 %v76
  %v220 = vunpack.c.l.b16 %v77
  %v221 = vunpack.c.l.b16 %v78
  %v222 = vpack.c.b16 %v159, %v158
  %v223 = vpack.c.b16 %v161, %v160
  %v224 = vpack.c.b16 %v163, %v162
  %v225 = vpack.c.b16 %v165, %v164
  %v226 = vpack.c.b16 %v167, %v166
  %v227 = vpack.c.b16 %v169, %v168
  %v228 = vpack.c.b16 %v171, %v170
  %v229 = vpack.c.b16 %v173, %v172
  %v230 = vpack.c.b16 %v175, %v174
  %v231 = vpack.c.b16 %v177, %v176
  %v232 = vpack.c.b16 %v179, %v178
  %v233 = vpack.c.b16 %v181, %v180
  %v234 = vpack.c.b16 %v183, %v182
  %v235 = vpack.c.b16 %v185, %v184
  %v236 = vpack.c.b16 %v187, %v186
  %v237 = vpack.c.b16 %v189, %v188
  %v238 = vpack.c.b16 %v191, %v190
  %v239 = vpack.c.b16 %v193, %v192
  %v240 = vpack.c.b16 %v195, %v194
  %v241 = vpack.c.b16 %v197, %v196
  %v242 = vpack.c.b16 %v199, %v198
  %v243 = vpack.c.b16 %v201, %v200
  %v244 = vpack.c.b16 %v203, %v202
  %v245 = vpack.c.b16 %v205, %v204
  %v246 = vpack.c.b16 %v207, %v206
  %v247 = vpack.c.b16 %v209, %v208
  %v248 = vpack.c.b16 %v211, %v210
  %v249 = vpack.c.b16 %v213, %v212
  %v250 = vpack.c.b16 %v215, %v214
  %v251 = vpack.c.b16 %v217, %v216
  %v252 = vpack.c.b16 %v219, %v218
  %v253 = vpack.c.b16 %v221, %v220
  %v262 = vunpack.c.l.b16 %v79
  %v263 = vunpack.c.l.b16 %v80
  %v264 = vunpack.c.l.b16 %v81
  %v265 = vunpack.c.l.b16 %v82
  %v266 = vunpack.c.l.b16 %v83
  %v267 = vunpack.c.l.b16 %v84
  %v268 = vunpack.c.l.b16 %v85
  %v269 = vunpack.c.l.b16 %v86
  %v270 = vpack.c.b16 %v263, %v262
  %v271 = vpack.c.b16 %v265, %v264
  %v272 = vpack.c.b16 %v267, %v266
  %v273 = vpack.c.b16 %v269, %v268
  %vm278 = vcmask 523264
  %v280 = vsel %vm278, %v222, 0
  %v283 = vsel %vm278, %v223, 0
  %v286 = vsel %vm278, %v224, 0
  %v289 = vsel %vm278, %v225, 0
  %v292 = vsel %vm278, %v226, 0
  %v295 = vsel %vm278, %v227, 0
  %v298 = vsel %vm278, %v228, 0
  %v301 = vsel %vm278, %v229, 0
  %v304 = vsel %vm278, %v230, 0
  %v307 = vsel %vm278, %v231, 0
  %v310 = vsel %vm278, %v232, 0
  %v313 = vsel %vm278, %v233, 0
  %v316 = vsel %vm278, %v234, 0
  %v319 = vsel %vm278, %v235, 0
  %v322 = vsel %vm278, %v236, 0
  %v325 = vsel %vm278, %v237, 0
  %v328 = vsel %vm278, %v238, 0
  %v331 = vsel %vm278, %v239, 0
  %v334 = vsel %vm278, %v240, 0
  %v337 = vsel %vm278, %v241, 0
  %v340 = vsel %vm278, %v242, 0
  %v343 = vsel %vm278, %v243, 0
  %v346 = vsel %vm278, %v244, 0
  %v349 = vsel %vm278, %v245, 0
  %v352 = vsel %vm278, %v246, 0
  %v355 = vsel %vm278, %v247, 0
  %v358 = vsel %vm278, %v248, 0
  %v361 = vsel %vm278, %v249, 0
  %v364 = vsel %vm278, %v250, 0
  %v367 = vsel %vm278, %v251, 0
  %v370 = vsel %vm278, %v252, 0
  %v373 = vsel %vm278, %v253, 0
  %375 = vmatprep.subr.bf16.mxu0 0
  %376 = vmatpush1.bf16.msra.mxu0 0
  %377 = vmatprep.subr.bf16.mxu0 0
  %378 = vmatpush1.bf16.msra.mxu0 0
  %379 = vmatprep.subr.bf16.mxu0 0
  %380 = vmatpush1.bf16.msra.mxu0 0
  %381 = vmatprep.subr.bf16.mxu0 0
  %382 = vmatpush1.bf16.msra.mxu0 0
  %383 = vmatprep.subr.bf16.mxu0 0
  %384 = vmatpush1.bf16.msra.mxu0 %v273
  %385 = vmatprep.subr.bf16.mxu0 0
  %386 = vmatpush1.bf16.msra.mxu0 %v272
  %387 = vmatprep.subr.bf16.mxu0 0
  %388 = vmatpush1.bf16.msra.mxu0 %v271
  %389 = vmatprep.subr.bf16.mxu0 0
  %390 = vmatpush1.bf16.msra.mxu0 %v270
  %391 = vmatprep.subr.bf16.mxu0 0
  %392 = vmatpush2.bf16.msra.mxu0 0
  %393 = vmatprep.subr.bf16.mxu0 0
  %394 = vmatpush2.bf16.msra.mxu0 0
  %395 = vmatprep.subr.bf16.mxu0 0
  %396 = vmatpush2.bf16.msra.mxu0 0
  %397 = vmatprep.subr.bf16.mxu0 0
  %398 = vmatpush2.bf16.msra.mxu0 0
  %399 = vmatprep.subr.bf16.mxu0 0
  %400 = vmatpush2.bf16.msra.mxu0 0
  %401 = vmatprep.subr.bf16.mxu0 0
  %402 = vmatpush2.bf16.msra.mxu0 0
  %403 = vmatprep.subr.bf16.mxu0 0
  %404 = vmatpush2.bf16.msra.mxu0 0
  %405 = vmatprep.subr.bf16.mxu0 0
  %406 = vmatpush2.bf16.msra.mxu0 0
  %407 = vmatprep.mubr.bf16.mxu0 0
  %408 = vmatmul.mubr.bf16.gmra.mxu0 %v280
  %v409 = vpop.f32.mrf.mxu0
  %v410 = vadd.f32 %v92, %v409
  %v411 = vpop.f32.mrf.mxu0
  %v412 = vpop.f32.mrf.mxu0
  %v413 = vadd.f32 %v92, %v412
  %v414 = vpop.f32.mrf.mxu0
  %415 = vmatprep.mubr.bf16.mxu0 0
  %416 = vmatmul.mubr.bf16.gmra.mxu0 %v283
  %v417 = vpop.f32.mrf.mxu0
  %v418 = vadd.f32 %v92, %v417
  %v419 = vpop.f32.mrf.mxu0
  %v420 = vpop.f32.mrf.mxu0
  %v421 = vadd.f32 %v92, %v420
  %v422 = vpop.f32.mrf.mxu0
  %423 = vmatprep.mubr.bf16.mxu0 0
  %424 = vmatmul.mubr.bf16.gmra.mxu0 %v286
  %v425 = vpop.f32.mrf.mxu0
  %v426 = vadd.f32 %v92, %v425
  %v427 = vpop.f32.mrf.mxu0
  %v428 = vpop.f32.mrf.mxu0
  %v429 = vadd.f32 %v92, %v428
  %v430 = vpop.f32.mrf.mxu0
  %431 = vmatprep.mubr.bf16.mxu0 0
  %432 = vmatmul.mubr.bf16.gmra.mxu0 %v289
  %v433 = vpop.f32.mrf.mxu0
  %v434 = vadd.f32 %v92, %v433
  %v435 = vpop.f32.mrf.mxu0
  %v436 = vpop.f32.mrf.mxu0
  %v437 = vadd.f32 %v92, %v436
  %v438 = vpop.f32.mrf.mxu0
  %439 = vmatprep.mubr.bf16.mxu0 0
  %440 = vmatmul.mubr.bf16.gmra.mxu0 %v292
  %v441 = vpop.f32.mrf.mxu0
  %v442 = vadd.f32 %v92, %v441
  %v443 = vpop.f32.mrf.mxu0
  %v444 = vpop.f32.mrf.mxu0
  %v445 = vadd.f32 %v92, %v444
  %v446 = vpop.f32.mrf.mxu0
  %447 = vmatprep.mubr.bf16.mxu0 0
  %448 = vmatmul.mubr.bf16.gmra.mxu0 %v295
  %v449 = vpop.f32.mrf.mxu0
  %v450 = vadd.f32 %v92, %v449
  %v451 = vpop.f32.mrf.mxu0
  %v452 = vpop.f32.mrf.mxu0
  %v453 = vadd.f32 %v92, %v452
  %v454 = vpop.f32.mrf.mxu0
  %455 = vmatprep.mubr.bf16.mxu0 0
  %456 = vmatmul.mubr.bf16.gmra.mxu0 %v298
  %v457 = vpop.f32.mrf.mxu0
  %v458 = vadd.f32 %v92, %v457
  %v459 = vpop.f32.mrf.mxu0
  %v460 = vpop.f32.mrf.mxu0
  %v461 = vadd.f32 %v92, %v460
  %v462 = vpop.f32.mrf.mxu0
  %463 = vmatprep.mubr.bf16.mxu0 0
  %464 = vmatmul.mubr.bf16.gmra.mxu0 %v301
  %v465 = vpop.f32.mrf.mxu0
  %v466 = vadd.f32 %v92, %v465
  %v467 = vpop.f32.mrf.mxu0
  %v468 = vpop.f32.mrf.mxu0
  %v469 = vadd.f32 %v92, %v468
  %v470 = vpop.f32.mrf.mxu0
  %471 = vmatprep.mubr.bf16.mxu0 0
  %472 = vmatmul.mubr.bf16.gmra.mxu0 %v304
  %v473 = vpop.f32.mrf.mxu0
  %v474 = vadd.f32 %v92, %v473
  %v475 = vpop.f32.mrf.mxu0
  %v476 = vpop.f32.mrf.mxu0
  %v477 = vadd.f32 %v92, %v476
  %v478 = vpop.f32.mrf.mxu0
  %479 = vmatprep.mubr.bf16.mxu0 0
  %480 = vmatmul.mubr.bf16.gmra.mxu0 %v307
  %v481 = vpop.f32.mrf.mxu0
  %v482 = vadd.f32 %v92, %v481
  %v483 = vpop.f32.mrf.mxu0
  %v484 = vpop.f32.mrf.mxu0
  %v485 = vadd.f32 %v92, %v484
  %v486 = vpop.f32.mrf.mxu0
  %487 = vmatprep.mubr.bf16.mxu0 0
  %488 = vmatmul.mubr.bf16.gmra.mxu0 %v310
  %v489 = vpop.f32.mrf.mxu0
  %v490 = vadd.f32 %v92, %v489
  %v491 = vpop.f32.mrf.mxu0
  %v492 = vpop.f32.mrf.mxu0
  %v493 = vadd.f32 %v92, %v492
  %v494 = vpop.f32.mrf.mxu0
  %495 = vmatprep.mubr.bf16.mxu0 0
  %496 = vmatmul.mubr.bf16.gmra.mxu0 %v313
  %v497 = vpop.f32.mrf.mxu0
  %v498 = vadd.f32 %v92, %v497
  %v499 = vpop.f32.mrf.mxu0
  %v500 = vpop.f32.mrf.mxu0
  %v501 = vadd.f32 %v92, %v500
  %v502 = vpop.f32.mrf.mxu0
  %503 = vmatprep.mubr.bf16.mxu0 0
  %504 = vmatmul.mubr.bf16.gmra.mxu0 %v316
  %v505 = vpop.f32.mrf.mxu0
  %v506 = vadd.f32 %v92, %v505
  %v507 = vpop.f32.mrf.mxu0
  %v508 = vpop.f32.mrf.mxu0
  %v509 = vadd.f32 %v92, %v508
  %v510 = vpop.f32.mrf.mxu0
  %511 = vmatprep.mubr.bf16.mxu0 0
  %512 = vmatmul.mubr.bf16.gmra.mxu0 %v319
  %v513 = vpop.f32.mrf.mxu0
  %v514 = vadd.f32 %v92, %v513
  %v515 = vpop.f32.mrf.mxu0
  %v516 = vpop.f32.mrf.mxu0
  %v517 = vadd.f32 %v92, %v516
  %v518 = vpop.f32.mrf.mxu0
  %519 = vmatprep.mubr.bf16.mxu0 0
  %520 = vmatmul.mubr.bf16.gmra.mxu0 %v322
  %v521 = vpop.f32.mrf.mxu0
  %v522 = vadd.f32 %v92, %v521
  %v523 = vpop.f32.mrf.mxu0
  %v524 = vpop.f32.mrf.mxu0
  %v525 = vadd.f32 %v92, %v524
  %v526 = vpop.f32.mrf.mxu0
  %527 = vmatprep.mubr.bf16.mxu0 0
  %528 = vmatmul.mubr.bf16.gmra.mxu0 %v325
  %v529 = vpop.f32.mrf.mxu0
  %v530 = vadd.f32 %v92, %v529
  %v531 = vpop.f32.mrf.mxu0
  %v532 = vpop.f32.mrf.mxu0
  %v533 = vadd.f32 %v92, %v532
  %v534 = vpop.f32.mrf.mxu0
  %535 = vmatprep.mubr.bf16.mxu0 0
  %536 = vmatmul.mubr.bf16.gmra.mxu0 %v328
  %v537 = vpop.f32.mrf.mxu0
  %v538 = vadd.f32 %v92, %v537
  %v539 = vpop.f32.mrf.mxu0
  %v540 = vpop.f32.mrf.mxu0
  %v541 = vadd.f32 %v92, %v540
  %v542 = vpop.f32.mrf.mxu0
  %543 = vmatprep.mubr.bf16.mxu0 0
  %544 = vmatmul.mubr.bf16.gmra.mxu0 %v331
  %v545 = vpop.f32.mrf.mxu0
  %v546 = vadd.f32 %v92, %v545
  %v547 = vpop.f32.mrf.mxu0
  %v548 = vpop.f32.mrf.mxu0
  %v549 = vadd.f32 %v92, %v548
  %v550 = vpop.f32.mrf.mxu0
  %551 = vmatprep.mubr.bf16.mxu0 0
  %552 = vmatmul.mubr.bf16.gmra.mxu0 %v334
  %v553 = vpop.f32.mrf.mxu0
  %v554 = vadd.f32 %v92, %v553
  %v555 = vpop.f32.mrf.mxu0
  %v556 = vpop.f32.mrf.mxu0
  %v557 = vadd.f32 %v92, %v556
  %v558 = vpop.f32.mrf.mxu0
  %559 = vmatprep.mubr.bf16.mxu0 0
  %560 = vmatmul.mubr.bf16.gmra.mxu0 %v337
  %v561 = vpop.f32.mrf.mxu0
  %v562 = vadd.f32 %v92, %v561
  %v563 = vpop.f32.mrf.mxu0
  %v564 = vpop.f32.mrf.mxu0
  %v565 = vadd.f32 %v92, %v564
  %v566 = vpop.f32.mrf.mxu0
  %567 = vmatprep.mubr.bf16.mxu0 0
  %568 = vmatmul.mubr.bf16.gmra.mxu0 %v340
  %v569 = vpop.f32.mrf.mxu0
  %v570 = vadd.f32 %v92, %v569
  %v571 = vpop.f32.mrf.mxu0
  %v572 = vpop.f32.mrf.mxu0
  %v573 = vadd.f32 %v92, %v572
  %v574 = vpop.f32.mrf.mxu0
  %575 = vmatprep.mubr.bf16.mxu0 0
  %576 = vmatmul.mubr.bf16.gmra.mxu0 %v343
  %v577 = vpop.f32.mrf.mxu0
  %v578 = vadd.f32 %v92, %v577
  %v579 = vpop.f32.mrf.mxu0
  %v580 = vpop.f32.mrf.mxu0
  %v581 = vadd.f32 %v92, %v580
  %v582 = vpop.f32.mrf.mxu0
  %583 = vmatprep.mubr.bf16.mxu0 0
  %584 = vmatmul.mubr.bf16.gmra.mxu0 %v346
  %v585 = vpop.f32.mrf.mxu0
  %v586 = vadd.f32 %v92, %v585
  %v587 = vpop.f32.mrf.mxu0
  %v588 = vpop.f32.mrf.mxu0
  %v589 = vadd.f32 %v92, %v588
  %v590 = vpop.f32.mrf.mxu0
  %591 = vmatprep.mubr.bf16.mxu0 0
  %592 = vmatmul.mubr.bf16.gmra.mxu0 %v349
  %v593 = vpop.f32.mrf.mxu0
  %v594 = vadd.f32 %v92, %v593
  %v595 = vpop.f32.mrf.mxu0
  %v596 = vpop.f32.mrf.mxu0
  %v597 = vadd.f32 %v92, %v596
  %v598 = vpop.f32.mrf.mxu0
  %599 = vmatprep.mubr.bf16.mxu0 0
  %600 = vmatmul.mubr.bf16.gmra.mxu0 %v352
  %v601 = vpop.f32.mrf.mxu0
  %v602 = vadd.f32 %v92, %v601
  %v603 = vpop.f32.mrf.mxu0
  %v604 = vpop.f32.mrf.mxu0
  %v605 = vadd.f32 %v92, %v604
  %v606 = vpop.f32.mrf.mxu0
  %607 = vmatprep.mubr.bf16.mxu0 0
  %608 = vmatmul.mubr.bf16.gmra.mxu0 %v355
  %v609 = vpop.f32.mrf.mxu0
  %v610 = vadd.f32 %v92, %v609
  %v611 = vpop.f32.mrf.mxu0
  %v612 = vpop.f32.mrf.mxu0
  %v613 = vadd.f32 %v92, %v612
  %v614 = vpop.f32.mrf.mxu0
  %615 = vmatprep.mubr.bf16.mxu0 0
  %616 = vmatmul.mubr.bf16.gmra.mxu0 %v358
  %v617 = vpop.f32.mrf.mxu0
  %v618 = vadd.f32 %v92, %v617
  %v619 = vpop.f32.mrf.mxu0
  %v620 = vpop.f32.mrf.mxu0
  %v621 = vadd.f32 %v92, %v620
  %v622 = vpop.f32.mrf.mxu0
  %623 = vmatprep.mubr.bf16.mxu0 0
  %624 = vmatmul.mubr.bf16.gmra.mxu0 %v361
  %v625 = vpop.f32.mrf.mxu0
  %v626 = vadd.f32 %v92, %v625
  %v627 = vpop.f32.mrf.mxu0
  %v628 = vpop.f32.mrf.mxu0
  %v629 = vadd.f32 %v92, %v628
  %v630 = vpop.f32.mrf.mxu0
  %631 = vmatprep.mubr.bf16.mxu0 0
  %632 = vmatmul.mubr.bf16.gmra.mxu0 %v364
  %v633 = vpop.f32.mrf.mxu0
  %v634 = vadd.f32 %v92, %v633
  %v635 = vpop.f32.mrf.mxu0
  %v636 = vpop.f32.mrf.mxu0
  %v637 = vadd.f32 %v92, %v636
  %v638 = vpop.f32.mrf.mxu0
  %639 = vmatprep.mubr.bf16.mxu0 0
  %640 = vmatmul.mubr.bf16.gmra.mxu0 %v367
  %v641 = vpop.f32.mrf.mxu0
  %v642 = vadd.f32 %v92, %v641
  %v643 = vpop.f32.mrf.mxu0
  %v644 = vpop.f32.mrf.mxu0
  %v645 = vadd.f32 %v92, %v644
  %v646 = vpop.f32.mrf.mxu0
  %647 = vmatprep.mubr.bf16.mxu0 0
  %648 = vmatmul.mubr.bf16.gmra.mxu0 %v370
  %v649 = vpop.f32.mrf.mxu0
  %v650 = vadd.f32 %v92, %v649
  %v651 = vpop.f32.mrf.mxu0
  %v652 = vpop.f32.mrf.mxu0
  %v653 = vadd.f32 %v92, %v652
  %v654 = vpop.f32.mrf.mxu0
  %655 = vmatprep.mubr.bf16.mxu0 0
  %656 = vmatmul.mubr.bf16.gmra.mxu0 %v373
  %v657 = vpop.f32.mrf.mxu0
  %v658 = vadd.f32 %v92, %v657
  %v659 = vpop.f32.mrf.mxu0
  %v660 = vpop.f32.mrf.mxu0
  %v661 = vadd.f32 %v92, %v660
  %v662 = vpop.f32.mrf.mxu0
  %663 = vdwg.mxu0
  %v664 = vpack.c.bf16 %v413, %v410
  %v665 = vpack.c.bf16 %v421, %v418
  %v666 = vpack.c.bf16 %v429, %v426
  %v667 = vpack.c.bf16 %v437, %v434
  %v668 = vpack.c.bf16 %v445, %v442
  %v669 = vpack.c.bf16 %v453, %v450
  %v670 = vpack.c.bf16 %v461, %v458
  %v671 = vpack.c.bf16 %v469, %v466
  %v672 = vpack.c.bf16 %v477, %v474
  %v673 = vpack.c.bf16 %v485, %v482
  %v674 = vpack.c.bf16 %v493, %v490
  %v675 = vpack.c.bf16 %v501, %v498
  %v676 = vpack.c.bf16 %v509, %v506
  %v677 = vpack.c.bf16 %v517, %v514
  %v678 = vpack.c.bf16 %v525, %v522
  %v679 = vpack.c.bf16 %v533, %v530
  %v680 = vpack.c.bf16 %v541, %v538
  %v681 = vpack.c.bf16 %v549, %v546
  %v682 = vpack.c.bf16 %v557, %v554
  %v683 = vpack.c.bf16 %v565, %v562
  %v684 = vpack.c.bf16 %v573, %v570
  %v685 = vpack.c.bf16 %v581, %v578
  %v686 = vpack.c.bf16 %v589, %v586
  %v687 = vpack.c.bf16 %v597, %v594
  %v688 = vpack.c.bf16 %v605, %v602
  %v689 = vpack.c.bf16 %v613, %v610
  %v690 = vpack.c.bf16 %v621, %v618
  %v691 = vpack.c.bf16 %v629, %v626
  %v692 = vpack.c.bf16 %v637, %v634
  %v693 = vpack.c.bf16 %v645, %v642
  %v694 = vpack.c.bf16 %v653, %v650
  %v695 = vpack.c.bf16 %v661, %v658
  %v728 = vunpack.c.l.b16 %v664
  %v729 = vunpack.c.h.b16 %v664
  %v730 = vunpack.c.l.b16 %v665
  %v731 = vunpack.c.h.b16 %v665
  %v732 = vunpack.c.l.b16 %v666
  %v733 = vunpack.c.h.b16 %v666
  %v734 = vunpack.c.l.b16 %v667
  %v735 = vunpack.c.h.b16 %v667
  %v736 = vunpack.c.l.b16 %v668
  %v737 = vunpack.c.h.b16 %v668
  %v738 = vunpack.c.l.b16 %v669
  %v739 = vunpack.c.h.b16 %v669
  %v740 = vunpack.c.l.b16 %v670
  %v741 = vunpack.c.h.b16 %v670
  %v742 = vunpack.c.l.b16 %v671
  %v743 = vunpack.c.h.b16 %v671
  %v744 = vunpack.c.l.b16 %v672
  %v745 = vunpack.c.h.b16 %v672
  %v746 = vunpack.c.l.b16 %v673
  %v747 = vunpack.c.h.b16 %v673
  %v748 = vunpack.c.l.b16 %v674
  %v749 = vunpack.c.h.b16 %v674
  %v750 = vunpack.c.l.b16 %v675
  %v751 = vunpack.c.h.b16 %v675
  %v752 = vunpack.c.l.b16 %v676
  %v753 = vunpack.c.h.b16 %v676
  %v754 = vunpack.c.l.b16 %v677
  %v755 = vunpack.c.h.b16 %v677
  %v756 = vunpack.c.l.b16 %v678
  %v757 = vunpack.c.h.b16 %v678
  %v758 = vunpack.c.l.b16 %v679
  %v759 = vunpack.c.h.b16 %v679
  %v760 = vunpack.c.l.b16 %v680
  %v761 = vunpack.c.h.b16 %v680
  %v762 = vunpack.c.l.b16 %v681
  %v763 = vunpack.c.h.b16 %v681
  %v764 = vunpack.c.l.b16 %v682
  %v765 = vunpack.c.h.b16 %v682
  %v766 = vunpack.c.l.b16 %v683
  %v767 = vunpack.c.h.b16 %v683
  %v768 = vunpack.c.l.b16 %v684
  %v769 = vunpack.c.h.b16 %v684
  %v770 = vunpack.c.l.b16 %v685
  %v771 = vunpack.c.h.b16 %v685
  %v772 = vunpack.c.l.b16 %v686
  %v773 = vunpack.c.h.b16 %v686
  %v774 = vunpack.c.l.b16 %v687
  %v775 = vunpack.c.h.b16 %v687
  %v776 = vunpack.c.l.b16 %v688
  %v777 = vunpack.c.h.b16 %v688
  %v778 = vunpack.c.l.b16 %v689
  %v779 = vunpack.c.h.b16 %v689
  %v780 = vunpack.c.l.b16 %v690
  %v781 = vunpack.c.h.b16 %v690
  %v782 = vunpack.c.l.b16 %v691
  %v783 = vunpack.c.h.b16 %v691
  %v784 = vunpack.c.l.b16 %v692
  %v785 = vunpack.c.h.b16 %v692
  %v786 = vunpack.c.l.b16 %v693
  %v787 = vunpack.c.h.b16 %v693
  %v788 = vunpack.c.l.b16 %v694
  %v789 = vunpack.c.h.b16 %v694
  %v790 = vunpack.c.l.b16 %v695
  %v791 = vunpack.c.h.b16 %v695
  %v792 = vpack.c.b16 %v728, %v728
  %v793 = vpack.c.b16 %v729, %v729
  %v794 = vpack.c.b16 %v730, %v730
  %v795 = vpack.c.b16 %v731, %v731
  %v796 = vpack.c.b16 %v732, %v732
  %v797 = vpack.c.b16 %v733, %v733
  %v798 = vpack.c.b16 %v734, %v734
  %v799 = vpack.c.b16 %v735, %v735
  %v800 = vpack.c.b16 %v736, %v736
  %v801 = vpack.c.b16 %v737, %v737
  %v802 = vpack.c.b16 %v738, %v738
  %v803 = vpack.c.b16 %v739, %v739
  %v804 = vpack.c.b16 %v740, %v740
  %v805 = vpack.c.b16 %v741, %v741
  %v806 = vpack.c.b16 %v742, %v742
  %v807 = vpack.c.b16 %v743, %v743
  %v808 = vpack.c.b16 %v744, %v744
  %v809 = vpack.c.b16 %v745, %v745
  %v810 = vpack.c.b16 %v746, %v746
  %v811 = vpack.c.b16 %v747, %v747
  %v812 = vpack.c.b16 %v748, %v748
  %v813 = vpack.c.b16 %v749, %v749
  %v814 = vpack.c.b16 %v750, %v750
  %v815 = vpack.c.b16 %v751, %v751
  %v816 = vpack.c.b16 %v752, %v752
  %v817 = vpack.c.b16 %v753, %v753
  %v818 = vpack.c.b16 %v754, %v754
  %v819 = vpack.c.b16 %v755, %v755
  %v820 = vpack.c.b16 %v756, %v756
  %v821 = vpack.c.b16 %v757, %v757
  %v822 = vpack.c.b16 %v758, %v758
  %v823 = vpack.c.b16 %v759, %v759
  %v824 = vpack.c.b16 %v760, %v760
  %v825 = vpack.c.b16 %v761, %v761
  %v826 = vpack.c.b16 %v762, %v762
  %v827 = vpack.c.b16 %v763, %v763
  %v828 = vpack.c.b16 %v764, %v764
  %v829 = vpack.c.b16 %v765, %v765
  %v830 = vpack.c.b16 %v766, %v766
  %v831 = vpack.c.b16 %v767, %v767
  %v832 = vpack.c.b16 %v768, %v768
  %v833 = vpack.c.b16 %v769, %v769
  %v834 = vpack.c.b16 %v770, %v770
  %v835 = vpack.c.b16 %v771, %v771
  %v836 = vpack.c.b16 %v772, %v772
  %v837 = vpack.c.b16 %v773, %v773
  %v838 = vpack.c.b16 %v774, %v774
  %v839 = vpack.c.b16 %v775, %v775
  %v840 = vpack.c.b16 %v776, %v776
  %v841 = vpack.c.b16 %v777, %v777
  %v842 = vpack.c.b16 %v778, %v778
  %v843 = vpack.c.b16 %v779, %v779
  %v844 = vpack.c.b16 %v780, %v780
  %v845 = vpack.c.b16 %v781, %v781
  %v846 = vpack.c.b16 %v782, %v782
  %v847 = vpack.c.b16 %v783, %v783
  %v848 = vpack.c.b16 %v784, %v784
  %v849 = vpack.c.b16 %v785, %v785
  %v850 = vpack.c.b16 %v786, %v786
  %v851 = vpack.c.b16 %v787, %v787
  %v852 = vpack.c.b16 %v788, %v788
  %v853 = vpack.c.b16 %v789, %v789
  %v854 = vpack.c.b16 %v790, %v790
  %v855 = vpack.c.b16 %v791, %v791
  %920 = vst [vmem:[%s3] sm:$0xf] %v792
  %921 = vst [vmem:[%s3 + $0x4] sm:$0xf] %v793
  %922 = vst [vmem:[%s3 + $0x8] sm:$0xf] %v794
  %923 = vst [vmem:[%s3 + $0xc] sm:$0xf] %v795
  %924 = vst [vmem:[%s3 + $0x10] sm:$0xf] %v796
  %925 = vst [vmem:[%s3 + $0x14] sm:$0xf] %v797
  %926 = vst [vmem:[%s3 + $0x18] sm:$0xf] %v798
  %927 = vst [vmem:[%s3 + $0x1c] sm:$0xf] %v799
  %928 = vst [vmem:[%s3 + $0x20] sm:$0xf] %v800
  %929 = vst [vmem:[%s3 + $0x24] sm:$0xf] %v801
  %930 = vst [vmem:[%s3 + $0x28] sm:$0xf] %v802
  %931 = vst [vmem:[%s3 + $0x2c] sm:$0xf] %v803
  %932 = vst [vmem:[%s3 + $0x30] sm:$0xf] %v804
  %933 = vst [vmem:[%s3 + $0x34] sm:$0xf] %v805
  %934 = vst [vmem:[%s3 + $0x38] sm:$0xf] %v806
  %935 = vst [vmem:[%s3 + $0x3c] sm:$0xf] %v807
  %936 = vst [vmem:[%s3 + $0x40] sm:$0xf] %v808
  %937 = vst [vmem:[%s3 + $0x44] sm:$0xf] %v809
  %938 = vst [vmem:[%s3 + $0x48] sm:$0xf] %v810
  %939 = vst [vmem:[%s3 + $0x4c] sm:$0xf] %v811
  %940 = vst [vmem:[%s3 + $0x50] sm:$0xf] %v812
  %941 = vst [vmem:[%s3 + $0x54] sm:$0xf] %v813
  %942 = vst [vmem:[%s3 + $0x58] sm:$0xf] %v814
  %943 = vst [vmem:[%s3 + $0x5c] sm:$0xf] %v815
  %944 = vst [vmem:[%s3 + $0x60] sm:$0xf] %v816
  %945 = vst [vmem:[%s3 + $0x64] sm:$0xf] %v817
  %946 = vst [vmem:[%s3 + $0x68] sm:$0xf] %v818
  %947 = vst [vmem:[%s3 + $0x6c] sm:$0xf] %v819
  %948 = vst [vmem:[%s3 + $0x70] sm:$0xf] %v820
  %949 = vst [vmem:[%s3 + $0x74] sm:$0xf] %v821
  %950 = vst [vmem:[%s3 + $0x78] sm:$0xf] %v822
  %951 = vst [vmem:[%s3 + $0x7c] sm:$0xf] %v823
  %952 = vst [vmem:[%s3 + $0x80] sm:$0xf] %v824
  %953 = vst [vmem:[%s3 + $0x84] sm:$0xf] %v825
  %954 = vst [vmem:[%s3 + $0x88] sm:$0xf] %v826
  %955 = vst [vmem:[%s3 + $0x8c] sm:$0xf] %v827
  %956 = vst [vmem:[%s3 + $0x90] sm:$0xf] %v828
  %957 = vst [vmem:[%s3 + $0x94] sm:$0xf] %v829
  %958 = vst [vmem:[%s3 + $0x98] sm:$0xf] %v830
  %959 = vst [vmem:[%s3 + $0x9c] sm:$0xf] %v831
  %960 = vst [vmem:[%s3 + $0xa0] sm:$0xf] %v832
  %961 = vst [vmem:[%s3 + $0xa4] sm:$0xf] %v833
  %962 = vst [vmem:[%s3 + $0xa8] sm:$0xf] %v834
  %963 = vst [vmem:[%s3 + $0xac] sm:$0xf] %v835
  %964 = vst [vmem:[%s3 + $0xb0] sm:$0xf] %v836
  %965 = vst [vmem:[%s3 + $0xb4] sm:$0xf] %v837
  %966 = vst [vmem:[%s3 + $0xb8] sm:$0xf] %v838
  %967 = vst [vmem:[%s3 + $0xbc] sm:$0xf] %v839
  %968 = vst [vmem:[%s3 + $0xc0] sm:$0xf] %v840
  %969 = vst [vmem:[%s3 + $0xc4] sm:$0xf] %v841
  %970 = vst [vmem:[%s3 + $0xc8] sm:$0xf] %v842
  %971 = vst [vmem:[%s3 + $0xcc] sm:$0xf] %v843
  %972 = vst [vmem:[%s3 + $0xd0] sm:$0xf] %v844
  %973 = vst [vmem:[%s3 + $0xd4] sm:$0xf] %v845
  %974 = vst [vmem:[%s3 + $0xd8] sm:$0xf] %v846
  %975 = vst [vmem:[%s3 + $0xdc] sm:$0xf] %v847
  %976 = vst [vmem:[%s3 + $0xe0] sm:$0xf] %v848
  %977 = vst [vmem:[%s3 + $0xe4] sm:$0xf] %v849
  %978 = vst [vmem:[%s3 + $0xe8] sm:$0xf] %v850
  %979 = vst [vmem:[%s3 + $0xec] sm:$0xf] %v851
  %980 = vst [vmem:[%s3 + $0xf0] sm:$0xf] %v852
  %981 = vst [vmem:[%s3 + $0xf4] sm:$0xf] %v853
  %982 = vst [vmem:[%s3 + $0xf8] sm:$0xf] %v854
  %983 = vst [vmem:[%s3 + $0xfc] sm:$0xf] %v855
  // Predicated region
  $region14: #{forward.11} parent=0 // pred_check
    _
  $region15: #{forward.11} parent=0 // pred_check_branch
    %985 = sbr.rel (0) target = $region17
  $region16: #{forward.11} parent=0 // pred_region
    _
  $region17: #{forward.11} parent=0 // pred_fallthru
    _
  // Predicated region
  $region18: #{forward.11} parent=0 // pred_check
    _
  $region19: #{forward.11} parent=0 // pred_check_branch
    %987 = sbr.rel (0) target = $region21
  $region20: #{forward.11} parent=0 // pred_region
    _
  $region21: #{forward.11} parent=0 // pred_fallthru
    _

// kernel: forward.12
$region0: #{forward.12}
  #allocation0 [shape = 'u32[]', space=smem, size = 0x4, offset = 0x4, fixed_abs, tag = 'smem constant byte address 0x4 - core index']
  #allocation1 [shape = 'u32[144,128]{1,0:T(1,128)}', space=vmem, size = 0x12000, scoped, tag = 'internal scratch']
  %s0 = inlined_call_operand.vmem [shape: bf16[128,128], index: 0, kind: input, shape index: {}]
  %s1 = inlined_call_operand.vmem [shape: bf16[128,128], index: 1, kind: input, shape index: {}]
  %s2 = inlined_call_operand.vmem [shape: f32[1,128], index: 2, kind: input, shape index: {}]
  %s3 = inlined_call_operand.vmem [shape: f32[128,1], index: 3, kind: input, shape index: {}]
  %s4 = inlined_call_operand.vmem [shape: bf16[128,128], index: 4, kind: output, shape index: {0}]
  %s5 = inlined_call_operand.vmem [shape: f32[1,2,128], index: 5, kind: output, shape index: {1}]
  %6 = xla_tuple %s4, %s5
  %s7 = sld [smem:[#allocation0]]
  $region34: #{forward.12} parent=0
    _
  %s9 = ssub.s32 1, %s7
  %s10 = scalar_select 0, %s9, %s7
  // Predicated region
  $region2: #{forward.12} parent=0 // pred_check
    _
  $region3: #{forward.12} parent=0 // pred_check_branch
    %12 = sbr.rel (0) target = $region5
  $region4: #{forward.12} parent=0 // pred_region
    _
  $region5: #{forward.12} parent=0 // pred_fallthru
    _
  // Predicated region
  $region6: #{forward.12} parent=0 // pred_check
    _
  $region7: #{forward.12} parent=0 // pred_check_branch
    %14 = sbr.rel (0) target = $region9
  $region8: #{forward.12} parent=0 // pred_region
    _
  $region9: #{forward.12} parent=0 // pred_fallthru
    _
  // Predicated region
  $region10: #{forward.12} parent=0 // pred_check
    _
  $region11: #{forward.12} parent=0 // pred_check_branch
    %16 = sbr.rel (0) target = $region13
  $region12: #{forward.12} parent=0 // pred_region
    _
  $region13: #{forward.12} parent=0 // pred_fallthru
    _
  // Predicated region
  $region14: #{forward.12} parent=0 // pred_check
    _
  $region15: #{forward.12} parent=0 // pred_check_branch
    %18 = sbr.rel (0) target = $region17
  $region16: #{forward.12} parent=0 // pred_region
    _
  $region17: #{forward.12} parent=0 // pred_fallthru
    _
  %v20 = vld [vmem:[%s0] sm:$0xf]
  %v21 = vld [vmem:[%s0 + $0x4] sm:$0xf]
  %v22 = vld [vmem:[%s0 + $0x8] sm:$0xf]
  %v23 = vld [vmem:[%s0 + $0xc] sm:$0xf]
  %v24 = vld [vmem:[%s0 + $0x10] sm:$0xf]
  %v25 = vld [vmem:[%s0 + $0x14] sm:$0xf]
  %v26 = vld [vmem:[%s0 + $0x18] sm:$0xf]
  %v27 = vld [vmem:[%s0 + $0x1c] sm:$0xf]
  %v28 = vld [vmem:[%s0 + $0x20] sm:$0xf]
  %v29 = vld [vmem:[%s0 + $0x24] sm:$0xf]
  %v30 = vld [vmem:[%s0 + $0x28] sm:$0xf]
  %v31 = vld [vmem:[%s0 + $0x2c] sm:$0xf]
  %v32 = vld [vmem:[%s0 + $0x30] sm:$0xf]
  %v33 = vld [vmem:[%s0 + $0x34] sm:$0xf]
  %v34 = vld [vmem:[%s0 + $0x38] sm:$0xf]
  %v35 = vld [vmem:[%s0 + $0x3c] sm:$0xf]
  %v36 = vld [vmem:[%s1] sm:$0xf]
  %v37 = vld [vmem:[%s1 + $0x4] sm:$0xf]
  %v38 = vld [vmem:[%s1 + $0x8] sm:$0xf]
  %v39 = vld [vmem:[%s1 + $0xc] sm:$0xf]
  %v40 = vld [vmem:[%s1 + $0x10] sm:$0xf]
  %v41 = vld [vmem:[%s1 + $0x14] sm:$0xf]
  %v42 = vld [vmem:[%s1 + $0x18] sm:$0xf]
  %v43 = vld [vmem:[%s1 + $0x1c] sm:$0xf]
  %v44 = vld [vmem:[%s1 + $0x20] sm:$0xf]
  %v45 = vld [vmem:[%s1 + $0x24] sm:$0xf]
  %v46 = vld [vmem:[%s1 + $0x28] sm:$0xf]
  %v47 = vld [vmem:[%s1 + $0x2c] sm:$0xf]
  %v48 = vld [vmem:[%s1 + $0x30] sm:$0xf]
  %v49 = vld [vmem:[%s1 + $0x34] sm:$0xf]
  %v50 = vld [vmem:[%s1 + $0x38] sm:$0xf]
  %v51 = vld [vmem:[%s1 + $0x3c] sm:$0xf]
  %v52 = vld [vmem:[%s2] sm:$0x1]
  %v54 = vlaneseq
  %v55 = vshrl.u32 %v54, 7
  %v56 = vsub.s32 0, %v55
  %v57 = vrot.slane %v52, %v56
  %v75 = vunpack.c.l.b16 %v20
  %v76 = vunpack.c.l.b16 %v21
  %v77 = vunpack.c.l.b16 %v22
  %v78 = vunpack.c.l.b16 %v23
  %v79 = vunpack.c.l.b16 %v24
  %v80 = vunpack.c.l.b16 %v25
  %v81 = vunpack.c.l.b16 %v26
  %v82 = vunpack.c.l.b16 %v27
  %v83 = vunpack.c.l.b16 %v28
  %v84 = vunpack.c.l.b16 %v29
  %v85 = vunpack.c.l.b16 %v30
  %v86 = vunpack.c.l.b16 %v31
  %v87 = vunpack.c.l.b16 %v32
  %v88 = vunpack.c.l.b16 %v33
  %v89 = vunpack.c.l.b16 %v34
  %v90 = vunpack.c.l.b16 %v35
  %v91 = vpack.c.b16 %v76, %v75
  %v92 = vpack.c.b16 %v78, %v77
  %v93 = vpack.c.b16 %v80, %v79
  %v94 = vpack.c.b16 %v82, %v81
  %v95 = vpack.c.b16 %v84, %v83
  %v96 = vpack.c.b16 %v86, %v85
  %v97 = vpack.c.b16 %v88, %v87
  %v98 = vpack.c.b16 %v90, %v89
  %v123 = vunpack.c.l.b16 %v36
  %v124 = vunpack.c.l.b16 %v37
  %v125 = vunpack.c.l.b16 %v38
  %v126 = vunpack.c.l.b16 %v39
  %v127 = vunpack.c.l.b16 %v40
  %v128 = vunpack.c.l.b16 %v41
  %v129 = vunpack.c.l.b16 %v42
  %v130 = vunpack.c.l.b16 %v43
  %v131 = vunpack.c.l.b16 %v44
  %v132 = vunpack.c.l.b16 %v45
  %v133 = vunpack.c.l.b16 %v46
  %v134 = vunpack.c.l.b16 %v47
  %v135 = vunpack.c.l.b16 %v48
  %v136 = vunpack.c.l.b16 %v49
  %v137 = vunpack.c.l.b16 %v50
  %v138 = vunpack.c.l.b16 %v51
  %v139 = vpack.c.b16 %v124, %v123
  %v140 = vpack.c.b16 %v126, %v125
  %v141 = vpack.c.b16 %v128, %v127
  %v142 = vpack.c.b16 %v130, %v129
  %v143 = vpack.c.b16 %v132, %v131
  %v144 = vpack.c.b16 %v134, %v133
  %v145 = vpack.c.b16 %v136, %v135
  %v146 = vpack.c.b16 %v138, %v137
  %155 = vmatprep.subr.bf16.mxu0 0
  %156 = vmatpush1.bf16.msra.mxu0 %v146
  %157 = vmatprep.subr.bf16.mxu0 0
  %158 = vmatpush1.bf16.msra.mxu0 %v145
  %159 = vmatprep.subr.bf16.mxu0 0
  %160 = vmatpush1.bf16.msra.mxu0 %v144
  %161 = vmatprep.subr.bf16.mxu0 0
  %162 = vmatpush1.bf16.msra.mxu0 %v143
  %163 = vmatprep.subr.bf16.mxu0 0
  %164 = vmatpush1.bf16.msra.mxu0 %v142
  %165 = vmatprep.subr.bf16.mxu0 0
  %166 = vmatpush1.bf16.msra.mxu0 %v141
  %167 = vmatprep.subr.bf16.mxu0 0
  %168 = vmatpush1.bf16.msra.mxu0 %v140
  %169 = vmatprep.subr.bf16.mxu0 0
  %170 = vmatpush1.bf16.msra.mxu0 %v139
  %171 = vmatprep.subr.bf16.mxu0 0
  %172 = vmatpush2.bf16.msra.mxu0 0
  %173 = vmatprep.subr.bf16.mxu0 0
  %174 = vmatpush2.bf16.msra.mxu0 0
  %175 = vmatprep.subr.bf16.mxu0 0
  %176 = vmatpush2.bf16.msra.mxu0 0
  %177 = vmatprep.subr.bf16.mxu0 0
  %178 = vmatpush2.bf16.msra.mxu0 0
  %179 = vmatprep.subr.bf16.mxu0 0
  %180 = vmatpush2.bf16.msra.mxu0 0
  %181 = vmatprep.subr.bf16.mxu0 0
  %182 = vmatpush2.bf16.msra.mxu0 0
  %183 = vmatprep.subr.bf16.mxu0 0
  %184 = vmatpush2.bf16.msra.mxu0 0
  %185 = vmatprep.subr.bf16.mxu0 0
  %186 = vmatpush2.bf16.msra.mxu0 0
  %187 = vmatprep.mubr.bf16.mxu0 0
  %188 = vmatmul.mubr.bf16.gmra.mxu0 %v91
  %v189 = vpop.f32.mrf.mxu0
  %v190 = vadd.f32 %v57, %v189
  %v191 = vpop.f32.mrf.mxu0
  %v192 = vpop.f32.mrf.mxu0
  %v193 = vadd.f32 %v57, %v192
  %v194 = vpop.f32.mrf.mxu0
  %195 = vmatprep.mubr.bf16.mxu0 0
  %196 = vmatmul.mubr.bf16.gmra.mxu0 %v92
  %v197 = vpop.f32.mrf.mxu0
  %v198 = vadd.f32 %v57, %v197
  %v199 = vpop.f32.mrf.mxu0
  %v200 = vpop.f32.mrf.mxu0
  %v201 = vadd.f32 %v57, %v200
  %v202 = vpop.f32.mrf.mxu0
  %203 = vmatprep.mubr.bf16.mxu0 0
  %204 = vmatmul.mubr.bf16.gmra.mxu0 %v93
  %v205 = vpop.f32.mrf.mxu0
  %v206 = vadd.f32 %v57, %v205
  %v207 = vpop.f32.mrf.mxu0
  %v208 = vpop.f32.mrf.mxu0
  %v209 = vadd.f32 %v57, %v208
  %v210 = vpop.f32.mrf.mxu0
  %211 = vmatprep.mubr.bf16.mxu0 0
  %212 = vmatmul.mubr.bf16.gmra.mxu0 %v94
  %v213 = vpop.f32.mrf.mxu0
  %v214 = vadd.f32 %v57, %v213
  %v215 = vpop.f32.mrf.mxu0
  %v216 = vpop.f32.mrf.mxu0
  %v217 = vadd.f32 %v57, %v216
  %v218 = vpop.f32.mrf.mxu0
  %219 = vmatprep.mubr.bf16.mxu0 0
  %220 = vmatmul.mubr.bf16.gmra.mxu0 %v95
  %v221 = vpop.f32.mrf.mxu0
  %v222 = vadd.f32 %v57, %v221
  %v223 = vpop.f32.mrf.mxu0
  %v224 = vpop.f32.mrf.mxu0
  %v225 = vadd.f32 %v57, %v224
  %v226 = vpop.f32.mrf.mxu0
  %227 = vmatprep.mubr.bf16.mxu0 0
  %228 = vmatmul.mubr.bf16.gmra.mxu0 %v96
  %v229 = vpop.f32.mrf.mxu0
  %v230 = vadd.f32 %v57, %v229
  %v231 = vpop.f32.mrf.mxu0
  %v232 = vpop.f32.mrf.mxu0
  %v233 = vadd.f32 %v57, %v232
  %v234 = vpop.f32.mrf.mxu0
  %235 = vmatprep.mubr.bf16.mxu0 0
  %236 = vmatmul.mubr.bf16.gmra.mxu0 %v97
  %v237 = vpop.f32.mrf.mxu0
  %v238 = vadd.f32 %v57, %v237
  %v239 = vpop.f32.mrf.mxu0
  %v240 = vpop.f32.mrf.mxu0
  %v241 = vadd.f32 %v57, %v240
  %v242 = vpop.f32.mrf.mxu0
  %243 = vmatprep.mubr.bf16.mxu0 0
  %244 = vmatmul.mubr.bf16.gmra.mxu0 %v98
  %v245 = vpop.f32.mrf.mxu0
  %v246 = vadd.f32 %v57, %v245
  %v247 = vpop.f32.mrf.mxu0
  %v248 = vpop.f32.mrf.mxu0
  %v249 = vadd.f32 %v57, %v248
  %v250 = vpop.f32.mrf.mxu0
  %251 = vdwg.mxu0
  %v252 = vld [vmem:[%s3] sm:$0xff]
  %v253 = vld [vmem:[%s3 + $0x8] sm:$0xff]
  %v254 = vld [vmem:[%s3 + $0x10] sm:$0xff]
  %v255 = vld [vmem:[%s3 + $0x18] sm:$0xff]
  %v256 = vld [vmem:[%s3 + $0x20] sm:$0xff]
  %v257 = vld [vmem:[%s3 + $0x28] sm:$0xff]
  %v258 = vld [vmem:[%s3 + $0x30] sm:$0xff]
  %v259 = vld [vmem:[%s3 + $0x38] sm:$0xff]
  %v260 = vld [vmem:[%s3 + $0x40] sm:$0xff]
  %v261 = vld [vmem:[%s3 + $0x48] sm:$0xff]
  %v262 = vld [vmem:[%s3 + $0x50] sm:$0xff]
  %v263 = vld [vmem:[%s3 + $0x58] sm:$0xff]
  %v264 = vld [vmem:[%s3 + $0x60] sm:$0xff]
  %v265 = vld [vmem:[%s3 + $0x68] sm:$0xff]
  %v266 = vld [vmem:[%s3 + $0x70] sm:$0xff]
  %v267 = vld [vmem:[%s3 + $0x78] sm:$0xff]
  %269 = vset.pattern.permute.xlu0 0
  %270 = vperm.xlu0 %269, %v252
  %v271 = vpop.permute.xlu0 %270
  %274 = vset.pattern.permute.xlu0 0
  %275 = vperm.xlu0 %274, %v253
  %v276 = vpop.permute.xlu0 %275
  %279 = vset.pattern.permute.xlu0 0
  %280 = vperm.xlu0 %279, %v254
  %v281 = vpop.permute.xlu0 %280
  %284 = vset.pattern.permute.xlu0 0
  %285 = vperm.xlu0 %284, %v255
  %v286 = vpop.permute.xlu0 %285
  %289 = vset.pattern.permute.xlu0 0
  %290 = vperm.xlu0 %289, %v256
  %v291 = vpop.permute.xlu0 %290
  %294 = vset.pattern.permute.xlu0 0
  %295 = vperm.xlu0 %294, %v257
  %v296 = vpop.permute.xlu0 %295
  %299 = vset.pattern.permute.xlu0 0
  %300 = vperm.xlu0 %299, %v258
  %v301 = vpop.permute.xlu0 %300
  %304 = vset.pattern.permute.xlu0 0
  %305 = vperm.xlu0 %304, %v259
  %v306 = vpop.permute.xlu0 %305
  %309 = vset.pattern.permute.xlu0 0
  %310 = vperm.xlu0 %309, %v260
  %v311 = vpop.permute.xlu0 %310
  %314 = vset.pattern.permute.xlu0 0
  %315 = vperm.xlu0 %314, %v261
  %v316 = vpop.permute.xlu0 %315
  %319 = vset.pattern.permute.xlu0 0
  %320 = vperm.xlu0 %319, %v262
  %v321 = vpop.permute.xlu0 %320
  %324 = vset.pattern.permute.xlu0 0
  %325 = vperm.xlu0 %324, %v263
  %v326 = vpop.permute.xlu0 %325
  %329 = vset.pattern.permute.xlu0 0
  %330 = vperm.xlu0 %329, %v264
  %v331 = vpop.permute.xlu0 %330
  %334 = vset.pattern.permute.xlu0 0
  %335 = vperm.xlu0 %334, %v265
  %v336 = vpop.permute.xlu0 %335
  %339 = vset.pattern.permute.xlu0 0
  %340 = vperm.xlu0 %339, %v266
  %v341 = vpop.permute.xlu0 %340
  %344 = vset.pattern.permute.xlu0 0
  %345 = vperm.xlu0 %344, %v267
  %v346 = vpop.permute.xlu0 %345
  %v348 = vmul.f32 %v190, %v271
  %v349 = vmul.f32 %v193, %v276
  %v350 = vmul.f32 %v198, %v281
  %v351 = vmul.f32 %v201, %v286
  %v352 = vmul.f32 %v206, %v291
  %v353 = vmul.f32 %v209, %v296
  %v354 = vmul.f32 %v214, %v301
  %v355 = vmul.f32 %v217, %v306
  %v356 = vmul.f32 %v222, %v311
  %v357 = vmul.f32 %v225, %v316
  %v358 = vmul.f32 %v230, %v321
  %v359 = vmul.f32 %v233, %v326
  %v360 = vmul.f32 %v238, %v331
  %v361 = vmul.f32 %v241, %v336
  %v362 = vmul.f32 %v246, %v341
  %v363 = vmul.f32 %v249, %v346
  %v364 = vadd.f32 %v348, %v349
  %v365 = vadd.f32 %v364, %v350
  %v366 = vadd.f32 %v365, %v351
  %v367 = vadd.f32 %v366, %v352
  %v368 = vadd.f32 %v367, %v353
  %v369 = vadd.f32 %v368, %v354
  %v370 = vadd.f32 %v369, %v355
  %v371 = vadd.f32 %v370, %v356
  %v372 = vadd.f32 %v371, %v357
  %v373 = vadd.f32 %v372, %v358
  %v374 = vadd.f32 %v373, %v359
  %v375 = vadd.f32 %v374, %v360
  %v376 = vadd.f32 %v375, %v361
  %v377 = vadd.f32 %v376, %v362
  %v378 = vadd.f32 %v377, %v363
  %v379 = vrot.slane %v378, 4
  %v380 = vadd.f32 %v378, %v379
  %v381 = vrot.slane %v380, 2
  %v382 = vadd.f32 %v380, %v381
  %v383 = vrot.slane %v382, 1
  %v384 = vadd.f32 %v382, %v383
  %v385 = vmul.f32 %v348, %v190
  %v386 = vmul.f32 %v349, %v193
  %v387 = vmul.f32 %v350, %v198
  %v388 = vmul.f32 %v351, %v201
  %v389 = vmul.f32 %v352, %v206
  %v390 = vmul.f32 %v353, %v209
  %v391 = vmul.f32 %v354, %v214
  %v392 = vmul.f32 %v355, %v217
  %v393 = vmul.f32 %v356, %v222
  %v394 = vmul.f32 %v357, %v225
  %v395 = vmul.f32 %v358, %v230
  %v396 = vmul.f32 %v359, %v233
  %v397 = vmul.f32 %v360, %v238
  %v398 = vmul.f32 %v361, %v241
  %v399 = vmul.f32 %v362, %v246
  %v400 = vmul.f32 %v363, %v249
  %v401 = vadd.f32 %v385, %v386
  %v402 = vadd.f32 %v401, %v387
  %v403 = vadd.f32 %v402, %v388
  %v404 = vadd.f32 %v403, %v389
  %v405 = vadd.f32 %v404, %v390
  %v406 = vadd.f32 %v405, %v391
  %v407 = vadd.f32 %v406, %v392
  %v408 = vadd.f32 %v407, %v393
  %v409 = vadd.f32 %v408, %v394
  %v410 = vadd.f32 %v409, %v395
  %v411 = vadd.f32 %v410, %v396
  %v412 = vadd.f32 %v411, %v397
  %v413 = vadd.f32 %v412, %v398
  %v414 = vadd.f32 %v413, %v399
  %v415 = vadd.f32 %v414, %v400
  %v416 = vrot.slane %v415, 4
  %v417 = vadd.f32 %v415, %v416
  %v418 = vrot.slane %v417, 2
  %v419 = vadd.f32 %v417, %v418
  %v420 = vrot.slane %v419, 1
  %v421 = vadd.f32 %v419, %v420
  %vm422 = vcmask 1040384
  %v423 = vsel %vm422, %v384, %v421
  %424 = vst [vmem:[%s5] sm:$0x3] %v423
  %v425 = vpack.c.bf16 %v193, %v190
  %v426 = vpack.c.bf16 %v201, %v198
  %v427 = vpack.c.bf16 %v209, %v206
  %v428 = vpack.c.bf16 %v217, %v214
  %v429 = vpack.c.bf16 %v225, %v222
  %v430 = vpack.c.bf16 %v233, %v230
  %v431 = vpack.c.bf16 %v241, %v238
  %v432 = vpack.c.bf16 %v249, %v246
  %v441 = vunpack.c.l.b16 %v425
  %v442 = vunpack.c.h.b16 %v425
  %v443 = vunpack.c.l.b16 %v426
  %v444 = vunpack.c.h.b16 %v426
  %v445 = vunpack.c.l.b16 %v427
  %v446 = vunpack.c.h.b16 %v427
  %v447 = vunpack.c.l.b16 %v428
  %v448 = vunpack.c.h.b16 %v428
  %v449 = vunpack.c.l.b16 %v429
  %v450 = vunpack.c.h.b16 %v429
  %v451 = vunpack.c.l.b16 %v430
  %v452 = vunpack.c.h.b16 %v430
  %v453 = vunpack.c.l.b16 %v431
  %v454 = vunpack.c.h.b16 %v431
  %v455 = vunpack.c.l.b16 %v432
  %v456 = vunpack.c.h.b16 %v432
  %v457 = vpack.c.b16 %v441, %v441
  %v458 = vpack.c.b16 %v442, %v442
  %v459 = vpack.c.b16 %v443, %v443
  %v460 = vpack.c.b16 %v444, %v444
  %v461 = vpack.c.b16 %v445, %v445
  %v462 = vpack.c.b16 %v446, %v446
  %v463 = vpack.c.b16 %v447, %v447
  %v464 = vpack.c.b16 %v448, %v448
  %v465 = vpack.c.b16 %v449, %v449
  %v466 = vpack.c.b16 %v450, %v450
  %v467 = vpack.c.b16 %v451, %v451
  %v468 = vpack.c.b16 %v452, %v452
  %v469 = vpack.c.b16 %v453, %v453
  %v470 = vpack.c.b16 %v454, %v454
  %v471 = vpack.c.b16 %v455, %v455
  %v472 = vpack.c.b16 %v456, %v456
  %489 = vst [vmem:[%s4] sm:$0xf] %v457
  %490 = vst [vmem:[%s4 + $0x4] sm:$0xf] %v458
  %491 = vst [vmem:[%s4 + $0x8] sm:$0xf] %v459
  %492 = vst [vmem:[%s4 + $0xc] sm:$0xf] %v460
  %493 = vst [vmem:[%s4 + $0x10] sm:$0xf] %v461
  %494 = vst [vmem:[%s4 + $0x14] sm:$0xf] %v462
  %495 = vst [vmem:[%s4 + $0x18] sm:$0xf] %v463
  %496 = vst [vmem:[%s4 + $0x1c] sm:$0xf] %v464
  %497 = vst [vmem:[%s4 + $0x20] sm:$0xf] %v465
  %498 = vst [vmem:[%s4 + $0x24] sm:$0xf] %v466
  %499 = vst [vmem:[%s4 + $0x28] sm:$0xf] %v467
  %500 = vst [vmem:[%s4 + $0x2c] sm:$0xf] %v468
  %501 = vst [vmem:[%s4 + $0x30] sm:$0xf] %v469
  %502 = vst [vmem:[%s4 + $0x34] sm:$0xf] %v470
  %503 = vst [vmem:[%s4 + $0x38] sm:$0xf] %v471
  %504 = vst [vmem:[%s4 + $0x3c] sm:$0xf] %v472
  // Predicated region
  $region18: #{forward.12} parent=0 // pred_check
    _
  $region19: #{forward.12} parent=0 // pred_check_branch
    %506 = sbr.rel (0) target = $region21
  $region20: #{forward.12} parent=0 // pred_region
    _
  $region21: #{forward.12} parent=0 // pred_fallthru
    _
  // Predicated region
  $region22: #{forward.12} parent=0 // pred_check
    _
  $region23: #{forward.12} parent=0 // pred_check_branch
    %508 = sbr.rel (0) target = $region25
  $region24: #{forward.12} parent=0 // pred_region
    _
  $region25: #{forward.12} parent=0 // pred_fallthru
    _
  // Predicated region
  $region26: #{forward.12} parent=0 // pred_check
    _
  $region27: #{forward.12} parent=0 // pred_check_branch
    %510 = sbr.rel (0) target = $region29
  $region28: #{forward.12} parent=0 // pred_region
    _
  $region29: #{forward.12} parent=0 // pred_fallthru
    _
  // Predicated region
  $region30: #{forward.12} parent=0 // pred_check
    _
  $region31: #{forward.12} parent=0 // pred_check_branch
    %512 = sbr.rel (0) target = $region33
  $region32: #{forward.12} parent=0 // pred_region
    _
  $region33: #{forward.12} parent=0 // pred_fallthru
    _

// kernel: forward.13
$region0: #{forward.13}
  #allocation0 [shape = 'u32[]', space=smem, size = 0x4, offset = 0x4, fixed_abs, tag = 'smem constant byte address 0x4 - core index']
  #allocation1 [shape = 'u32[144,128]{1,0:T(1,128)}', space=vmem, size = 0x12000, scoped, tag = 'internal scratch']
  %s0 = inlined_call_operand.vmem [shape: bf16[32,256], index: 0, kind: input, shape index: {}]
  %s1 = inlined_call_operand.vmem [shape: bf16[256,128], index: 1, kind: input, shape index: {}]
  %s2 = inlined_call_operand.vmem [shape: f32[1,128], index: 2, kind: input, shape index: {}]
  %s3 = inlined_call_operand.vmem [shape: f32[32,1], index: 3, kind: input, shape index: {}]
  %s4 = inlined_call_operand.vmem [shape: bf16[32,128], index: 4, kind: output, shape index: {0}]
  %s5 = inlined_call_operand.vmem [shape: f32[1,2,128], index: 5, kind: output, shape index: {1}]
  %6 = xla_tuple %s4, %s5
  %s7 = sld [smem:[#allocation0]]
  $region34: #{forward.13} parent=0
    _
  %s9 = ssub.s32 1, %s7
  %s10 = scalar_select 0, %s9, %s7
  // Predicated region
  $region2: #{forward.13} parent=0 // pred_check
    _
  $region3: #{forward.13} parent=0 // pred_check_branch
    %12 = sbr.rel (0) target = $region5
  $region4: #{forward.13} parent=0 // pred_region
    _
  $region5: #{forward.13} parent=0 // pred_fallthru
    _
  // Predicated region
  $region6: #{forward.13} parent=0 // pred_check
    _
  $region7: #{forward.13} parent=0 // pred_check_branch
    %14 = sbr.rel (0) target = $region9
  $region8: #{forward.13} parent=0 // pred_region
    _
  $region9: #{forward.13} parent=0 // pred_fallthru
    _
  // Predicated region
  $region10: #{forward.13} parent=0 // pred_check
    _
  $region11: #{forward.13} parent=0 // pred_check_branch
    %16 = sbr.rel (0) target = $region13
  $region12: #{forward.13} parent=0 // pred_region
    _
  $region13: #{forward.13} parent=0 // pred_fallthru
    _
  // Predicated region
  $region14: #{forward.13} parent=0 // pred_check
    _
  $region15: #{forward.13} parent=0 // pred_check_branch
    %18 = sbr.rel (0) target = $region17
  $region16: #{forward.13} parent=0 // pred_region
    _
  $region17: #{forward.13} parent=0 // pred_fallthru
    _
  %v20 = vld [vmem:[%s0] sm:$0xff]
  %v21 = vld [vmem:[%s0 + $0x8] sm:$0xff]
  %v22 = vld [vmem:[%s0 + $0x10] sm:$0xff]
  %v23 = vld [vmem:[%s0 + $0x18] sm:$0xff]
  %v24 = vld [vmem:[%s1] sm:$0xf]
  %v25 = vld [vmem:[%s1 + $0x4] sm:$0xf]
  %v26 = vld [vmem:[%s1 + $0x8] sm:$0xf]
  %v27 = vld [vmem:[%s1 + $0xc] sm:$0xf]
  %v28 = vld [vmem:[%s1 + $0x10] sm:$0xf]
  %v29 = vld [vmem:[%s1 + $0x14] sm:$0xf]
  %v30 = vld [vmem:[%s1 + $0x18] sm:$0xf]
  %v31 = vld [vmem:[%s1 + $0x1c] sm:$0xf]
  %v32 = vld [vmem:[%s1 + $0x20] sm:$0xf]
  %v33 = vld [vmem:[%s1 + $0x24] sm:$0xf]
  %v34 = vld [vmem:[%s1 + $0x28] sm:$0xf]
  %v35 = vld [vmem:[%s1 + $0x2c] sm:$0xf]
  %v36 = vld [vmem:[%s1 + $0x30] sm:$0xf]
  %v37 = vld [vmem:[%s1 + $0x34] sm:$0xf]
  %v38 = vld [vmem:[%s1 + $0x38] sm:$0xf]
  %v39 = vld [vmem:[%s1 + $0x3c] sm:$0xf]
  %v40 = vld [vmem:[%s1 + $0x40] sm:$0xf]
  %v41 = vld [vmem:[%s1 + $0x44] sm:$0xf]
  %v42 = vld [vmem:[%s1 + $0x48] sm:$0xf]
  %v43 = vld [vmem:[%s1 + $0x4c] sm:$0xf]
  %v44 = vld [vmem:[%s1 + $0x50] sm:$0xf]
  %v45 = vld [vmem:[%s1 + $0x54] sm:$0xf]
  %v46 = vld [vmem:[%s1 + $0x58] sm:$0xf]
  %v47 = vld [vmem:[%s1 + $0x5c] sm:$0xf]
  %v48 = vld [vmem:[%s1 + $0x60] sm:$0xf]
  %v49 = vld [vmem:[%s1 + $0x64] sm:$0xf]
  %v50 = vld [vmem:[%s1 + $0x68] sm:$0xf]
  %v51 = vld [vmem:[%s1 + $0x6c] sm:$0xf]
  %v52 = vld [vmem:[%s1 + $0x70] sm:$0xf]
  %v53 = vld [vmem:[%s1 + $0x74] sm:$0xf]
  %v54 = vld [vmem:[%s1 + $0x78] sm:$0xf]
  %v55 = vld [vmem:[%s1 + $0x7c] sm:$0xf]
  %v56 = vld [vmem:[%s2] sm:$0x1]
  %v58 = vlaneseq
  %v59 = vshrl.u32 %v58, 7
  %v60 = vsub.s32 0, %v59
  %v61 = vrot.slane %v56, %v60
  %v67 = vunpack.c.l.b16 %v20
  %v68 = vunpack.c.h.b16 %v20
  %v69 = vunpack.c.l.b16 %v21
  %v70 = vunpack.c.h.b16 %v21
  %v71 = vunpack.c.l.b16 %v22
  %v72 = vunpack.c.h.b16 %v22
  %v73 = vunpack.c.l.b16 %v23
  %v74 = vunpack.c.h.b16 %v23
  %v75 = vpack.c.b16 %v69, %v67
  %v76 = vpack.c.b16 %v70, %v68
  %v77 = vpack.c.b16 %v73, %v71
  %v78 = vpack.c.b16 %v74, %v72
  %v115 = vunpack.c.l.b16 %v24
  %v116 = vunpack.c.l.b16 %v25
  %v117 = vunpack.c.l.b16 %v26
  %v118 = vunpack.c.l.b16 %v27
  %v119 = vunpack.c.l.b16 %v28
  %v120 = vunpack.c.l.b16 %v29
  %v121 = vunpack.c.l.b16 %v30
  %v122 = vunpack.c.l.b16 %v31
  %v123 = vunpack.c.l.b16 %v32
  %v124 = vunpack.c.l.b16 %v33
  %v125 = vunpack.c.l.b16 %v34
  %v126 = vunpack.c.l.b16 %v35
  %v127 = vunpack.c.l.b16 %v36
  %v128 = vunpack.c.l.b16 %v37
  %v129 = vunpack.c.l.b16 %v38
  %v130 = vunpack.c.l.b16 %v39
  %v131 = vunpack.c.l.b16 %v40
  %v132 = vunpack.c.l.b16 %v41
  %v133 = vunpack.c.l.b16 %v42
  %v134 = vunpack.c.l.b16 %v43
  %v135 = vunpack.c.l.b16 %v44
  %v136 = vunpack.c.l.b16 %v45
  %v137 = vunpack.c.l.b16 %v46
  %v138 = vunpack.c.l.b16 %v47
  %v139 = vunpack.c.l.b16 %v48
  %v140 = vunpack.c.l.b16 %v49
  %v141 = vunpack.c.l.b16 %v50
  %v142 = vunpack.c.l.b16 %v51
  %v143 = vunpack.c.l.b16 %v52
  %v144 = vunpack.c.l.b16 %v53
  %v145 = vunpack.c.l.b16 %v54
  %v146 = vunpack.c.l.b16 %v55
  %v147 = vpack.c.b16 %v116, %v115
  %v148 = vpack.c.b16 %v118, %v117
  %v149 = vpack.c.b16 %v120, %v119
  %v150 = vpack.c.b16 %v122, %v121
  %v151 = vpack.c.b16 %v124, %v123
  %v152 = vpack.c.b16 %v126, %v125
  %v153 = vpack.c.b16 %v128, %v127
  %v154 = vpack.c.b16 %v130, %v129
  %v155 = vpack.c.b16 %v132, %v131
  %v156 = vpack.c.b16 %v134, %v133
  %v157 = vpack.c.b16 %v136, %v135
  %v158 = vpack.c.b16 %v138, %v137
  %v159 = vpack.c.b16 %v140, %v139
  %v160 = vpack.c.b16 %v142, %v141
  %v161 = vpack.c.b16 %v144, %v143
  %v162 = vpack.c.b16 %v146, %v145
  %179 = vmatprep.subr.bf16.mxu0 0
  %180 = vmatpush1.bf16.msra.mxu0 %v154
  %181 = vmatprep.subr.bf16.mxu0 0
  %182 = vmatpush1.bf16.msra.mxu0 %v153
  %183 = vmatprep.subr.bf16.mxu0 0
  %184 = vmatpush1.bf16.msra.mxu0 %v152
  %185 = vmatprep.subr.bf16.mxu0 0
  %186 = vmatpush1.bf16.msra.mxu0 %v151
  %187 = vmatprep.subr.bf16.mxu0 0
  %188 = vmatpush1.bf16.msra.mxu0 %v150
  %189 = vmatprep.subr.bf16.mxu0 0
  %190 = vmatpush1.bf16.msra.mxu0 %v149
  %191 = vmatprep.subr.bf16.mxu0 0
  %192 = vmatpush1.bf16.msra.mxu0 %v148
  %193 = vmatprep.subr.bf16.mxu0 0
  %194 = vmatpush1.bf16.msra.mxu0 %v147
  %195 = vmatprep.subr.bf16.mxu0 0
  %196 = vmatpush2.bf16.msra.mxu0 %v162
  %197 = vmatprep.subr.bf16.mxu0 0
  %198 = vmatpush2.bf16.msra.mxu0 %v161
  %199 = vmatprep.subr.bf16.mxu0 0
  %200 = vmatpush2.bf16.msra.mxu0 %v160
  %201 = vmatprep.subr.bf16.mxu0 0
  %202 = vmatpush2.bf16.msra.mxu0 %v159
  %203 = vmatprep.subr.bf16.mxu0 0
  %204 = vmatpush2.bf16.msra.mxu0 %v158
  %205 = vmatprep.subr.bf16.mxu0 0
  %206 = vmatpush2.bf16.msra.mxu0 %v157
  %207 = vmatprep.subr.bf16.mxu0 0
  %208 = vmatpush2.bf16.msra.mxu0 %v156
  %209 = vmatprep.subr.bf16.mxu0 0
  %210 = vmatpush2.bf16.msra.mxu0 %v155
  %211 = vmatprep.mubr.bf16.mxu0 %v76
  %212 = vmatmul.mubr.bf16.gmra.mxu0 %v75
  %v213 = vpop.f32.mrf.mxu0
  %v214 = vadd.f32 %v61, %v213
  %v215 = vpop.f32.mrf.mxu0
  %v216 = vpop.f32.mrf.mxu0
  %v217 = vadd.f32 %v61, %v216
  %v218 = vpop.f32.mrf.mxu0
  %219 = vmatprep.mubr.bf16.mxu0 %v78
  %220 = vmatmul.mubr.bf16.gmra.mxu0 %v77
  %v221 = vpop.f32.mrf.mxu0
  %v222 = vadd.f32 %v61, %v221
  %v223 = vpop.f32.mrf.mxu0
  %v224 = vpop.f32.mrf.mxu0
  %v225 = vadd.f32 %v61, %v224
  %v226 = vpop.f32.mrf.mxu0
  %227 = vdwg.mxu0
  %v228 = vld [vmem:[%s3] sm:$0xff]
  %v229 = vld [vmem:[%s3 + $0x8] sm:$0xff]
  %v230 = vld [vmem:[%s3 + $0x10] sm:$0xff]
  %v231 = vld [vmem:[%s3 + $0x18] sm:$0xff]
  %233 = vset.pattern.permute.xlu0 0
  %234 = vperm.xlu0 %233, %v228
  %v235 = vpop.permute.xlu0 %234
  %238 = vset.pattern.permute.xlu0 0
  %239 = vperm.xlu0 %238, %v229
  %v240 = vpop.permute.xlu0 %239
  %243 = vset.pattern.permute.xlu0 0
  %244 = vperm.xlu0 %243, %v230
  %v245 = vpop.permute.xlu0 %244
  %248 = vset.pattern.permute.xlu0 0
  %249 = vperm.xlu0 %248, %v231
  %v250 = vpop.permute.xlu0 %249
  %v252 = vmul.f32 %v214, %v235
  %v253 = vmul.f32 %v217, %v240
  %v254 = vmul.f32 %v222, %v245
  %v255 = vmul.f32 %v225, %v250
  %v256 = vadd.f32 %v252, %v253
  %v257 = vadd.f32 %v256, %v254
  %v258 = vadd.f32 %v257, %v255
  %v259 = vrot.slane %v258, 4
  %v260 = vadd.f32 %v258, %v259
  %v261 = vrot.slane %v260, 2
  %v262 = vadd.f32 %v260, %v261
  %v263 = vrot.slane %v262, 1
  %v264 = vadd.f32 %v262, %v263
  %v265 = vmul.f32 %v252, %v214
  %v266 = vmul.f32 %v253, %v217
  %v267 = vmul.f32 %v254, %v222
  %v268 = vmul.f32 %v255, %v225
  %v269 = vadd.f32 %v265, %v266
  %v270 = vadd.f32 %v269, %v267
  %v271 = vadd.f32 %v270, %v268
  %v272 = vrot.slane %v271, 4
  %v273 = vadd.f32 %v271, %v272
  %v274 = vrot.slane %v273, 2
  %v275 = vadd.f32 %v273, %v274
  %v276 = vrot.slane %v275, 1
  %v277 = vadd.f32 %v275, %v276
  %vm278 = vcmask 1040384
  %v279 = vsel %vm278, %v264, %v277
  %280 = vst [vmem:[%s5] sm:$0x3] %v279
  %v281 = vpack.c.bf16 %v217, %v214
  %v282 = vpack.c.bf16 %v225, %v222
  %v285 = vunpack.c.l.b16 %v281
  %v286 = vunpack.c.h.b16 %v281
  %v287 = vunpack.c.l.b16 %v282
  %v288 = vunpack.c.h.b16 %v282
  %v289 = vpack.c.b16 %v285, %v285
  %v290 = vpack.c.b16 %v286, %v286
  %v291 = vpack.c.b16 %v287, %v287
  %v292 = vpack.c.b16 %v288, %v288
  %297 = vst [vmem:[%s4] sm:$0xf] %v289
  %298 = vst [vmem:[%s4 + $0x4] sm:$0xf] %v290
  %299 = vst [vmem:[%s4 + $0x8] sm:$0xf] %v291
  %300 = vst [vmem:[%s4 + $0xc] sm:$0xf] %v292
  // Predicated region
  $region18: #{forward.13} parent=0 // pred_check
    _
  $region19: #{forward.13} parent=0 // pred_check_branch
    %302 = sbr.rel (0) target = $region21
  $region20: #{forward.13} parent=0 // pred_region
    _
  $region21: #{forward.13} parent=0 // pred_fallthru
    _
  // Predicated region
  $region22: #{forward.13} parent=0 // pred_check
    _
  $region23: #{forward.13} parent=0 // pred_check_branch
    %304 = sbr.rel (0) target = $region25
  $region24: #{forward.13} parent=0 // pred_region
    _
  $region25: #{forward.13} parent=0 // pred_fallthru
    _
  // Predicated region
  $region26: #{forward.13} parent=0 // pred_check
    _
  $region27: #{forward.13} parent=0 // pred_check_branch
    %306 = sbr.rel (0) target = $region29
  $region28: #{forward.13} parent=0 // pred_region
    _
  $region29: #{forward.13} parent=0 // pred_fallthru
    _
  // Predicated region
  $region30: #{forward.13} parent=0 // pred_check
    _
  $region31: #{forward.13} parent=0 // pred_check_branch
    %308 = sbr.rel (0) target = $region33
  $region32: #{forward.13} parent=0 // pred_region
    _
  $region33: #{forward.13} parent=0 // pred_fallthru
    _

// kernel: forward.14
$region0: #{forward.14}
  #allocation0 [shape = 'u32[]', space=smem, size = 0x4, offset = 0x4, fixed_abs, tag = 'smem constant byte address 0x4 - core index']
  #allocation1 [shape = 'u32[144,128]{1,0:T(1,128)}', space=vmem, size = 0x12000, scoped, tag = 'internal scratch']
  %s0 = inlined_call_operand.vmem [shape: bf16[16,512], index: 0, kind: input, shape index: {}]
  %s1 = inlined_call_operand.vmem [shape: bf16[512,128], index: 1, kind: input, shape index: {}]
  %s2 = inlined_call_operand.vmem [shape: f32[1,128], index: 2, kind: input, shape index: {}]
  %s3 = inlined_call_operand.vmem [shape: f32[16,1], index: 3, kind: input, shape index: {}]
  %s4 = inlined_call_operand.vmem [shape: bf16[16,128], index: 4, kind: output, shape index: {0}]
  %s5 = inlined_call_operand.vmem [shape: f32[1,2,128], index: 5, kind: output, shape index: {1}]
  %6 = xla_tuple %s4, %s5
  %s7 = sld [smem:[#allocation0]]
  $region34: #{forward.14} parent=0
    _
  %s9 = ssub.s32 1, %s7
  %s10 = scalar_select 0, %s9, %s7
  // Predicated region
  $region2: #{forward.14} parent=0 // pred_check
    _
  $region3: #{forward.14} parent=0 // pred_check_branch
    %12 = sbr.rel (0) target = $region5
  $region4: #{forward.14} parent=0 // pred_region
    _
  $region5: #{forward.14} parent=0 // pred_fallthru
    _
  // Predicated region
  $region6: #{forward.14} parent=0 // pred_check
    _
  $region7: #{forward.14} parent=0 // pred_check_branch
    %14 = sbr.rel (0) target = $region9
  $region8: #{forward.14} parent=0 // pred_region
    _
  $region9: #{forward.14} parent=0 // pred_fallthru
    _
  // Predicated region
  $region10: #{forward.14} parent=0 // pred_check
    _
  $region11: #{forward.14} parent=0 // pred_check_branch
    %16 = sbr.rel (0) target = $region13
  $region12: #{forward.14} parent=0 // pred_region
    _
  $region13: #{forward.14} parent=0 // pred_fallthru
    _
  // Predicated region
  $region14: #{forward.14} parent=0 // pred_check
    _
  $region15: #{forward.14} parent=0 // pred_check_branch
    %18 = sbr.rel (0) target = $region17
  $region16: #{forward.14} parent=0 // pred_region
    _
  $region17: #{forward.14} parent=0 // pred_fallthru
    _
  %v20 = vld [vmem:[%s0] sm:$0xff]
  %v21 = vld [vmem:[%s0 + $0x8] sm:$0xff]
  %v22 = vld [vmem:[%s0 + $0x10] sm:$0xff]
  %v23 = vld [vmem:[%s0 + $0x18] sm:$0xff]
  %v24 = vld [vmem:[%s1] sm:$0xf]
  %v25 = vld [vmem:[%s1 + $0x4] sm:$0xf]
  %v26 = vld [vmem:[%s1 + $0x8] sm:$0xf]
  %v27 = vld [vmem:[%s1 + $0xc] sm:$0xf]
  %v28 = vld [vmem:[%s1 + $0x10] sm:$0xf]
  %v29 = vld [vmem:[%s1 + $0x14] sm:$0xf]
  %v30 = vld [vmem:[%s1 + $0x18] sm:$0xf]
  %v31 = vld [vmem:[%s1 + $0x1c] sm:$0xf]
  %v32 = vld [vmem:[%s1 + $0x20] sm:$0xf]
  %v33 = vld [vmem:[%s1 + $0x24] sm:$0xf]
  %v34 = vld [vmem:[%s1 + $0x28] sm:$0xf]
  %v35 = vld [vmem:[%s1 + $0x2c] sm:$0xf]
  %v36 = vld [vmem:[%s1 + $0x30] sm:$0xf]
  %v37 = vld [vmem:[%s1 + $0x34] sm:$0xf]
  %v38 = vld [vmem:[%s1 + $0x38] sm:$0xf]
  %v39 = vld [vmem:[%s1 + $0x3c] sm:$0xf]
  %v40 = vld [vmem:[%s1 + $0x40] sm:$0xf]
  %v41 = vld [vmem:[%s1 + $0x44] sm:$0xf]
  %v42 = vld [vmem:[%s1 + $0x48] sm:$0xf]
  %v43 = vld [vmem:[%s1 + $0x4c] sm:$0xf]
  %v44 = vld [vmem:[%s1 + $0x50] sm:$0xf]
  %v45 = vld [vmem:[%s1 + $0x54] sm:$0xf]
  %v46 = vld [vmem:[%s1 + $0x58] sm:$0xf]
  %v47 = vld [vmem:[%s1 + $0x5c] sm:$0xf]
  %v48 = vld [vmem:[%s1 + $0x60] sm:$0xf]
  %v49 = vld [vmem:[%s1 + $0x64] sm:$0xf]
  %v50 = vld [vmem:[%s1 + $0x68] sm:$0xf]
  %v51 = vld [vmem:[%s1 + $0x6c] sm:$0xf]
  %v52 = vld [vmem:[%s1 + $0x70] sm:$0xf]
  %v53 = vld [vmem:[%s1 + $0x74] sm:$0xf]
  %v54 = vld [vmem:[%s1 + $0x78] sm:$0xf]
  %v55 = vld [vmem:[%s1 + $0x7c] sm:$0xf]
  %v56 = vld [vmem:[%s1 + $0x80] sm:$0xf]
  %v57 = vld [vmem:[%s1 + $0x84] sm:$0xf]
  %v58 = vld [vmem:[%s1 + $0x88] sm:$0xf]
  %v59 = vld [vmem:[%s1 + $0x8c] sm:$0xf]
  %v60 = vld [vmem:[%s1 + $0x90] sm:$0xf]
  %v61 = vld [vmem:[%s1 + $0x94] sm:$0xf]
  %v62 = vld [vmem:[%s1 + $0x98] sm:$0xf]
  %v63 = vld [vmem:[%s1 + $0x9c] sm:$0xf]
  %v64 = vld [vmem:[%s1 + $0xa0] sm:$0xf]
  %v65 = vld [vmem:[%s1 + $0xa4] sm:$0xf]
  %v66 = vld [vmem:[%s1 + $0xa8] sm:$0xf]
  %v67 = vld [vmem:[%s1 + $0xac] sm:$0xf]
  %v68 = vld [vmem:[%s1 + $0xb0] sm:$0xf]
  %v69 = vld [vmem:[%s1 + $0xb4] sm:$0xf]
  %v70 = vld [vmem:[%s1 + $0xb8] sm:$0xf]
  %v71 = vld [vmem:[%s1 + $0xbc] sm:$0xf]
  %v72 = vld [vmem:[%s1 + $0xc0] sm:$0xf]
  %v73 = vld [vmem:[%s1 + $0xc4] sm:$0xf]
  %v74 = vld [vmem:[%s1 + $0xc8] sm:$0xf]
  %v75 = vld [vmem:[%s1 + $0xcc] sm:$0xf]
  %v76 = vld [vmem:[%s1 + $0xd0] sm:$0xf]
  %v77 = vld [vmem:[%s1 + $0xd4] sm:$0xf]
  %v78 = vld [vmem:[%s1 + $0xd8] sm:$0xf]
  %v79 = vld [vmem:[%s1 + $0xdc] sm:$0xf]
  %v80 = vld [vmem:[%s1 + $0xe0] sm:$0xf]
  %v81 = vld [vmem:[%s1 + $0xe4] sm:$0xf]
  %v82 = vld [vmem:[%s1 + $0xe8] sm:$0xf]
  %v83 = vld [vmem:[%s1 + $0xec] sm:$0xf]
  %v84 = vld [vmem:[%s1 + $0xf0] sm:$0xf]
  %v85 = vld [vmem:[%s1 + $0xf4] sm:$0xf]
  %v86 = vld [vmem:[%s1 + $0xf8] sm:$0xf]
  %v87 = vld [vmem:[%s1 + $0xfc] sm:$0xf]
  %v88 = vld [vmem:[%s2] sm:$0x1]
  %v90 = vlaneseq
  %v91 = vshrl.u32 %v90, 7
  %v92 = vsub.s32 0, %v91
  %v93 = vrot.slane %v88, %v92
  %v99 = vunpack.c.l.b16 %v20
  %v100 = vunpack.c.h.b16 %v20
  %v101 = vunpack.c.l.b16 %v21
  %v102 = vunpack.c.h.b16 %v21
  %v103 = vunpack.c.l.b16 %v22
  %v104 = vunpack.c.h.b16 %v22
  %v105 = vunpack.c.l.b16 %v23
  %v106 = vunpack.c.h.b16 %v23
  %v107 = vpack.c.b16 %v103, %v99
  %v108 = vpack.c.b16 %v104, %v100
  %v109 = vpack.c.b16 %v105, %v101
  %v110 = vpack.c.b16 %v106, %v102
  %v179 = vunpack.c.l.b16 %v24
  %v180 = vunpack.c.l.b16 %v25
  %v181 = vunpack.c.l.b16 %v26
  %v182 = vunpack.c.l.b16 %v27
  %v183 = vunpack.c.l.b16 %v28
  %v184 = vunpack.c.l.b16 %v29
  %v185 = vunpack.c.l.b16 %v30
  %v186 = vunpack.c.l.b16 %v31
  %v187 = vunpack.c.l.b16 %v32
  %v188 = vunpack.c.l.b16 %v33
  %v189 = vunpack.c.l.b16 %v34
  %v190 = vunpack.c.l.b16 %v35
  %v191 = vunpack.c.l.b16 %v36
  %v192 = vunpack.c.l.b16 %v37
  %v193 = vunpack.c.l.b16 %v38
  %v194 = vunpack.c.l.b16 %v39
  %v195 = vunpack.c.l.b16 %v40
  %v196 = vunpack.c.l.b16 %v41
  %v197 = vunpack.c.l.b16 %v42
  %v198 = vunpack.c.l.b16 %v43
  %v199 = vunpack.c.l.b16 %v44
  %v200 = vunpack.c.l.b16 %v45
  %v201 = vunpack.c.l.b16 %v46
  %v202 = vunpack.c.l.b16 %v47
  %v203 = vunpack.c.l.b16 %v48
  %v204 = vunpack.c.l.b16 %v49
  %v205 = vunpack.c.l.b16 %v50
  %v206 = vunpack.c.l.b16 %v51
  %v207 = vunpack.c.l.b16 %v52
  %v208 = vunpack.c.l.b16 %v53
  %v209 = vunpack.c.l.b16 %v54
  %v210 = vunpack.c.l.b16 %v55
  %v211 = vunpack.c.l.b16 %v56
  %v212 = vunpack.c.l.b16 %v57
  %v213 = vunpack.c.l.b16 %v58
  %v214 = vunpack.c.l.b16 %v59
  %v215 = vunpack.c.l.b16 %v60
  %v216 = vunpack.c.l.b16 %v61
  %v217 = vunpack.c.l.b16 %v62
  %v218 = vunpack.c.l.b16 %v63
  %v219 = vunpack.c.l.b16 %v64
  %v220 = vunpack.c.l.b16 %v65
  %v221 = vunpack.c.l.b16 %v66
  %v222 = vunpack.c.l.b16 %v67
  %v223 = vunpack.c.l.b16 %v68
  %v224 = vunpack.c.l.b16 %v69
  %v225 = vunpack.c.l.b16 %v70
  %v226 = vunpack.c.l.b16 %v71
  %v227 = vunpack.c.l.b16 %v72
  %v228 = vunpack.c.l.b16 %v73
  %v229 = vunpack.c.l.b16 %v74
  %v230 = vunpack.c.l.b16 %v75
  %v231 = vunpack.c.l.b16 %v76
  %v232 = vunpack.c.l.b16 %v77
  %v233 = vunpack.c.l.b16 %v78
  %v234 = vunpack.c.l.b16 %v79
  %v235 = vunpack.c.l.b16 %v80
  %v236 = vunpack.c.l.b16 %v81
  %v237 = vunpack.c.l.b16 %v82
  %v238 = vunpack.c.l.b16 %v83
  %v239 = vunpack.c.l.b16 %v84
  %v240 = vunpack.c.l.b16 %v85
  %v241 = vunpack.c.l.b16 %v86
  %v242 = vunpack.c.l.b16 %v87
  %v243 = vpack.c.b16 %v180, %v179
  %v244 = vpack.c.b16 %v182, %v181
  %v245 = vpack.c.b16 %v184, %v183
  %v246 = vpack.c.b16 %v186, %v185
  %v247 = vpack.c.b16 %v188, %v187
  %v248 = vpack.c.b16 %v190, %v189
  %v249 = vpack.c.b16 %v192, %v191
  %v250 = vpack.c.b16 %v194, %v193
  %v251 = vpack.c.b16 %v196, %v195
  %v252 = vpack.c.b16 %v198, %v197
  %v253 = vpack.c.b16 %v200, %v199
  %v254 = vpack.c.b16 %v202, %v201
  %v255 = vpack.c.b16 %v204, %v203
  %v256 = vpack.c.b16 %v206, %v205
  %v257 = vpack.c.b16 %v208, %v207
  %v258 = vpack.c.b16 %v210, %v209
  %v259 = vpack.c.b16 %v212, %v211
  %v260 = vpack.c.b16 %v214, %v213
  %v261 = vpack.c.b16 %v216, %v215
  %v262 = vpack.c.b16 %v218, %v217
  %v263 = vpack.c.b16 %v220, %v219
  %v264 = vpack.c.b16 %v222, %v221
  %v265 = vpack.c.b16 %v224, %v223
  %v266 = vpack.c.b16 %v226, %v225
  %v267 = vpack.c.b16 %v228, %v227
  %v268 = vpack.c.b16 %v230, %v229
  %v269 = vpack.c.b16 %v232, %v231
  %v270 = vpack.c.b16 %v234, %v233
  %v271 = vpack.c.b16 %v236, %v235
  %v272 = vpack.c.b16 %v238, %v237
  %v273 = vpack.c.b16 %v240, %v239
  %v274 = vpack.c.b16 %v242, %v241
  %307 = vmatprep.subr.bf16.mxu0 0
  %308 = vmatpush1.bf16.msra.mxu0 %v250
  %309 = vmatprep.subr.bf16.mxu0 0
  %310 = vmatpush1.bf16.msra.mxu0 %v249
  %311 = vmatprep.subr.bf16.mxu0 0
  %312 = vmatpush1.bf16.msra.mxu0 %v248
  %313 = vmatprep.subr.bf16.mxu0 0
  %314 = vmatpush1.bf16.msra.mxu0 %v247
  %315 = vmatprep.subr.bf16.mxu0 0
  %316 = vmatpush1.bf16.msra.mxu0 %v246
  %317 = vmatprep.subr.bf16.mxu0 0
  %318 = vmatpush1.bf16.msra.mxu0 %v245
  %319 = vmatprep.subr.bf16.mxu0 0
  %320 = vmatpush1.bf16.msra.mxu0 %v244
  %321 = vmatprep.subr.bf16.mxu0 0
  %322 = vmatpush1.bf16.msra.mxu0 %v243
  %323 = vmatprep.subr.bf16.mxu0 0
  %324 = vmatpush2.bf16.msra.mxu0 %v258
  %325 = vmatprep.subr.bf16.mxu0 0
  %326 = vmatpush2.bf16.msra.mxu0 %v257
  %327 = vmatprep.subr.bf16.mxu0 0
  %328 = vmatpush2.bf16.msra.mxu0 %v256
  %329 = vmatprep.subr.bf16.mxu0 0
  %330 = vmatpush2.bf16.msra.mxu0 %v255
  %331 = vmatprep.subr.bf16.mxu0 0
  %332 = vmatpush2.bf16.msra.mxu0 %v254
  %333 = vmatprep.subr.bf16.mxu0 0
  %334 = vmatpush2.bf16.msra.mxu0 %v253
  %335 = vmatprep.subr.bf16.mxu0 0
  %336 = vmatpush2.bf16.msra.mxu0 %v252
  %337 = vmatprep.subr.bf16.mxu0 0
  %338 = vmatpush2.bf16.msra.mxu0 %v251
  %339 = vmatprep.mubr.bf16.mxu0 %v108
  %340 = vmatmul.mubr.bf16.gmra.mxu0 %v107
  %v341 = vpop.f32.mrf.mxu0
  %v342 = vadd.f32 %v93, %v341
  %v343 = vpop.f32.mrf.mxu0
  %v344 = vpop.f32.mrf.mxu0
  %v345 = vadd.f32 %v93, %v344
  %v346 = vpop.f32.mrf.mxu0
  %347 = vdwg.mxu0
  %348 = vmatprep.subr.bf16.mxu0 0
  %349 = vmatpush1.bf16.msra.mxu0 %v266
  %350 = vmatprep.subr.bf16.mxu0 0
  %351 = vmatpush1.bf16.msra.mxu0 %v265
  %352 = vmatprep.subr.bf16.mxu0 0
  %353 = vmatpush1.bf16.msra.mxu0 %v264
  %354 = vmatprep.subr.bf16.mxu0 0
  %355 = vmatpush1.bf16.msra.mxu0 %v263
  %356 = vmatprep.subr.bf16.mxu0 0
  %357 = vmatpush1.bf16.msra.mxu0 %v262
  %358 = vmatprep.subr.bf16.mxu0 0
  %359 = vmatpush1.bf16.msra.mxu0 %v261
  %360 = vmatprep.subr.bf16.mxu0 0
  %361 = vmatpush1.bf16.msra.mxu0 %v260
  %362 = vmatprep.subr.bf16.mxu0 0
  %363 = vmatpush1.bf16.msra.mxu0 %v259
  %364 = vmatprep.subr.bf16.mxu0 0
  %365 = vmatpush2.bf16.msra.mxu0 %v274
  %366 = vmatprep.subr.bf16.mxu0 0
  %367 = vmatpush2.bf16.msra.mxu0 %v273
  %368 = vmatprep.subr.bf16.mxu0 0
  %369 = vmatpush2.bf16.msra.mxu0 %v272
  %370 = vmatprep.subr.bf16.mxu0 0
  %371 = vmatpush2.bf16.msra.mxu0 %v271
  %372 = vmatprep.subr.bf16.mxu0 0
  %373 = vmatpush2.bf16.msra.mxu0 %v270
  %374 = vmatprep.subr.bf16.mxu0 0
  %375 = vmatpush2.bf16.msra.mxu0 %v269
  %376 = vmatprep.subr.bf16.mxu0 0
  %377 = vmatpush2.bf16.msra.mxu0 %v268
  %378 = vmatprep.subr.bf16.mxu0 0
  %379 = vmatpush2.bf16.msra.mxu0 %v267
  %380 = vmatprep.mubr.bf16.mxu0 %v110
  %381 = vmatmul.mubr.bf16.gmra.mxu0 %v109
  %v382 = vpop.f32.mrf.mxu0
  %v383 = vadd.f32 %v342, %v382
  %v384 = vpop.f32.mrf.mxu0
  %v385 = vpop.f32.mrf.mxu0
  %v386 = vadd.f32 %v345, %v385
  %v387 = vpop.f32.mrf.mxu0
  %388 = vdwg.mxu0
  %v389 = vld [vmem:[%s3] sm:$0xff]
  %v390 = vld [vmem:[%s3 + $0x8] sm:$0xff]
  %392 = vset.pattern.permute.xlu0 0
  %393 = vperm.xlu0 %392, %v389
  %v394 = vpop.permute.xlu0 %393
  %397 = vset.pattern.permute.xlu0 0
  %398 = vperm.xlu0 %397, %v390
  %v399 = vpop.permute.xlu0 %398
  %v401 = vmul.f32 %v383, %v394
  %v402 = vmul.f32 %v386, %v399
  %v403 = vadd.f32 %v401, %v402
  %v404 = vrot.slane %v403, 4
  %v405 = vadd.f32 %v403, %v404
  %v406 = vrot.slane %v405, 2
  %v407 = vadd.f32 %v405, %v406
  %v408 = vrot.slane %v407, 1
  %v409 = vadd.f32 %v407, %v408
  %v410 = vmul.f32 %v401, %v383
  %v411 = vmul.f32 %v402, %v386
  %v412 = vadd.f32 %v410, %v411
  %v413 = vrot.slane %v412, 4
  %v414 = vadd.f32 %v412, %v413
  %v415 = vrot.slane %v414, 2
  %v416 = vadd.f32 %v414, %v415
  %v417 = vrot.slane %v416, 1
  %v418 = vadd.f32 %v416, %v417
  %vm419 = vcmask 1040384
  %v420 = vsel %vm419, %v409, %v418
  %421 = vst [vmem:[%s5] sm:$0x3] %v420
  %v422 = vpack.c.bf16 %v386, %v383
  %v424 = vunpack.c.l.b16 %v422
  %v425 = vunpack.c.h.b16 %v422
  %v426 = vpack.c.b16 %v424, %v424
  %v427 = vpack.c.b16 %v425, %v425
  %430 = vst [vmem:[%s4] sm:$0xf] %v426
  %431 = vst [vmem:[%s4 + $0x4] sm:$0xf] %v427
  // Predicated region
  $region18: #{forward.14} parent=0 // pred_check
    _
  $region19: #{forward.14} parent=0 // pred_check_branch
    %433 = sbr.rel (0) target = $region21
  $region20: #{forward.14} parent=0 // pred_region
    _
  $region21: #{forward.14} parent=0 // pred_fallthru
    _
  // Predicated region
  $region22: #{forward.14} parent=0 // pred_check
    _
  $region23: #{forward.14} parent=0 // pred_check_branch
    %435 = sbr.rel (0) target = $region25
  $region24: #{forward.14} parent=0 // pred_region
    _
  $region25: #{forward.14} parent=0 // pred_fallthru
    _
  // Predicated region
  $region26: #{forward.14} parent=0 // pred_check
    _
  $region27: #{forward.14} parent=0 // pred_check_branch
    %437 = sbr.rel (0) target = $region29
  $region28: #{forward.14} parent=0 // pred_region
    _
  $region29: #{forward.14} parent=0 // pred_fallthru
    _
  // Predicated region
  $region30: #{forward.14} parent=0 // pred_check
    _
  $region31: #{forward.14} parent=0 // pred_check_branch
    %439 = sbr.rel (0) target = $region33
  $region32: #{forward.14} parent=0 // pred_region
    _
  $region33: #{forward.14} parent=0 // pred_fallthru
    _

// kernel: forward.15
$region0: #{forward.15}
  #allocation0 [shape = 'u32[]', space=smem, size = 0x4, offset = 0x4, fixed_abs, tag = 'smem constant byte address 0x4 - core index']
  #allocation1 [shape = 'u32[144,128]{1,0:T(1,128)}', space=vmem, size = 0x12000, scoped, tag = 'internal scratch']
  %s0 = inlined_call_operand.vmem [shape: bf16[16,1024], index: 0, kind: input, shape index: {}]
  %s1 = inlined_call_operand.vmem [shape: bf16[1024,128], index: 1, kind: input, shape index: {}]
  %s2 = inlined_call_operand.vmem [shape: f32[1,128], index: 2, kind: input, shape index: {}]
  %s3 = inlined_call_operand.vmem [shape: bf16[16,128], index: 3, kind: output, shape index: {}]
  %s4 = sld [smem:[#allocation0]]
  $region22: #{forward.15} parent=0
    _
  %s6 = ssub.s32 1, %s4
  %s7 = scalar_select 0, %s6, %s4
  // Predicated region
  $region2: #{forward.15} parent=0 // pred_check
    _
  $region3: #{forward.15} parent=0 // pred_check_branch
    %9 = sbr.rel (0) target = $region5
  $region4: #{forward.15} parent=0 // pred_region
    _
  $region5: #{forward.15} parent=0 // pred_fallthru
    _
  // Predicated region
  $region6: #{forward.15} parent=0 // pred_check
    _
  $region7: #{forward.15} parent=0 // pred_check_branch
    %11 = sbr.rel (0) target = $region9
  $region8: #{forward.15} parent=0 // pred_region
    _
  $region9: #{forward.15} parent=0 // pred_fallthru
    _
  // Predicated region
  $region10: #{forward.15} parent=0 // pred_check
    _
  $region11: #{forward.15} parent=0 // pred_check_branch
    %13 = sbr.rel (0) target = $region13
  $region12: #{forward.15} parent=0 // pred_region
    _
  $region13: #{forward.15} parent=0 // pred_fallthru
    _
  %v15 = vld [vmem:[%s0] sm:$0xff]
  %v16 = vld [vmem:[%s0 + $0x8] sm:$0xff]
  %v17 = vld [vmem:[%s0 + $0x10] sm:$0xff]
  %v18 = vld [vmem:[%s0 + $0x18] sm:$0xff]
  %v19 = vld [vmem:[%s0 + $0x20] sm:$0xff]
  %v20 = vld [vmem:[%s0 + $0x28] sm:$0xff]
  %v21 = vld [vmem:[%s0 + $0x30] sm:$0xff]
  %v22 = vld [vmem:[%s0 + $0x38] sm:$0xff]
  %v23 = vld [vmem:[%s1] sm:$0xf]
  %v24 = vld [vmem:[%s1 + $0x4] sm:$0xf]
  %v25 = vld [vmem:[%s1 + $0x8] sm:$0xf]
  %v26 = vld [vmem:[%s1 + $0xc] sm:$0xf]
  %v27 = vld [vmem:[%s1 + $0x10] sm:$0xf]
  %v28 = vld [vmem:[%s1 + $0x14] sm:$0xf]
  %v29 = vld [vmem:[%s1 + $0x18] sm:$0xf]
  %v30 = vld [vmem:[%s1 + $0x1c] sm:$0xf]
  %v31 = vld [vmem:[%s1 + $0x20] sm:$0xf]
  %v32 = vld [vmem:[%s1 + $0x24] sm:$0xf]
  %v33 = vld [vmem:[%s1 + $0x28] sm:$0xf]
  %v34 = vld [vmem:[%s1 + $0x2c] sm:$0xf]
  %v35 = vld [vmem:[%s1 + $0x30] sm:$0xf]
  %v36 = vld [vmem:[%s1 + $0x34] sm:$0xf]
  %v37 = vld [vmem:[%s1 + $0x38] sm:$0xf]
  %v38 = vld [vmem:[%s1 + $0x3c] sm:$0xf]
  %v39 = vld [vmem:[%s1 + $0x40] sm:$0xf]
  %v40 = vld [vmem:[%s1 + $0x44] sm:$0xf]
  %v41 = vld [vmem:[%s1 + $0x48] sm:$0xf]
  %v42 = vld [vmem:[%s1 + $0x4c] sm:$0xf]
  %v43 = vld [vmem:[%s1 + $0x50] sm:$0xf]
  %v44 = vld [vmem:[%s1 + $0x54] sm:$0xf]
  %v45 = vld [vmem:[%s1 + $0x58] sm:$0xf]
  %v46 = vld [vmem:[%s1 + $0x5c] sm:$0xf]
  %v47 = vld [vmem:[%s1 + $0x60] sm:$0xf]
  %v48 = vld [vmem:[%s1 + $0x64] sm:$0xf]
  %v49 = vld [vmem:[%s1 + $0x68] sm:$0xf]
  %v50 = vld [vmem:[%s1 + $0x6c] sm:$0xf]
  %v51 = vld [vmem:[%s1 + $0x70] sm:$0xf]
  %v52 = vld [vmem:[%s1 + $0x74] sm:$0xf]
  %v53 = vld [vmem:[%s1 + $0x78] sm:$0xf]
  %v54 = vld [vmem:[%s1 + $0x7c] sm:$0xf]
  %v55 = vld [vmem:[%s1 + $0x80] sm:$0xf]
  %v56 = vld [vmem:[%s1 + $0x84] sm:$0xf]
  %v57 = vld [vmem:[%s1 + $0x88] sm:$0xf]
  %v58 = vld [vmem:[%s1 + $0x8c] sm:$0xf]
  %v59 = vld [vmem:[%s1 + $0x90] sm:$0xf]
  %v60 = vld [vmem:[%s1 + $0x94] sm:$0xf]
  %v61 = vld [vmem:[%s1 + $0x98] sm:$0xf]
  %v62 = vld [vmem:[%s1 + $0x9c] sm:$0xf]
  %v63 = vld [vmem:[%s1 + $0xa0] sm:$0xf]
  %v64 = vld [vmem:[%s1 + $0xa4] sm:$0xf]
  %v65 = vld [vmem:[%s1 + $0xa8] sm:$0xf]
  %v66 = vld [vmem:[%s1 + $0xac] sm:$0xf]
  %v67 = vld [vmem:[%s1 + $0xb0] sm:$0xf]
  %v68 = vld [vmem:[%s1 + $0xb4] sm:$0xf]
  %v69 = vld [vmem:[%s1 + $0xb8] sm:$0xf]
  %v70 = vld [vmem:[%s1 + $0xbc] sm:$0xf]
  %v71 = vld [vmem:[%s1 + $0xc0] sm:$0xf]
  %v72 = vld [vmem:[%s1 + $0xc4] sm:$0xf]
  %v73 = vld [vmem:[%s1 + $0xc8] sm:$0xf]
  %v74 = vld [vmem:[%s1 + $0xcc] sm:$0xf]
  %v75 = vld [vmem:[%s1 + $0xd0] sm:$0xf]
  %v76 = vld [vmem:[%s1 + $0xd4] sm:$0xf]
  %v77 = vld [vmem:[%s1 + $0xd8] sm:$0xf]
  %v78 = vld [vmem:[%s1 + $0xdc] sm:$0xf]
  %v79 = vld [vmem:[%s1 + $0xe0] sm:$0xf]
  %v80 = vld [vmem:[%s1 + $0xe4] sm:$0xf]
  %v81 = vld [vmem:[%s1 + $0xe8] sm:$0xf]
  %v82 = vld [vmem:[%s1 + $0xec] sm:$0xf]
  %v83 = vld [vmem:[%s1 + $0xf0] sm:$0xf]
  %v84 = vld [vmem:[%s1 + $0xf4] sm:$0xf]
  %v85 = vld [vmem:[%s1 + $0xf8] sm:$0xf]
  %v86 = vld [vmem:[%s1 + $0xfc] sm:$0xf]
  %v87 = vld [vmem:[%s1 + $0x100] sm:$0xf]
  %v88 = vld [vmem:[%s1 + $0x104] sm:$0xf]
  %v89 = vld [vmem:[%s1 + $0x108] sm:$0xf]
  %v90 = vld [vmem:[%s1 + $0x10c] sm:$0xf]
  %v91 = vld [vmem:[%s1 + $0x110] sm:$0xf]
  %v92 = vld [vmem:[%s1 + $0x114] sm:$0xf]
  %v93 = vld [vmem:[%s1 + $0x118] sm:$0xf]
  %v94 = vld [vmem:[%s1 + $0x11c] sm:$0xf]
  %v95 = vld [vmem:[%s1 + $0x120] sm:$0xf]
  %v96 = vld [vmem:[%s1 + $0x124] sm:$0xf]
  %v97 = vld [vmem:[%s1 + $0x128] sm:$0xf]
  %v98 = vld [vmem:[%s1 + $0x12c] sm:$0xf]
  %v99 = vld [vmem:[%s1 + $0x130] sm:$0xf]
  %v100 = vld [vmem:[%s1 + $0x134] sm:$0xf]
  %v101 = vld [vmem:[%s1 + $0x138] sm:$0xf]
  %v102 = vld [vmem:[%s1 + $0x13c] sm:$0xf]
  %v103 = vld [vmem:[%s1 + $0x140] sm:$0xf]
  %v104 = vld [vmem:[%s1 + $0x144] sm:$0xf]
  %v105 = vld [vmem:[%s1 + $0x148] sm:$0xf]
  %v106 = vld [vmem:[%s1 + $0x14c] sm:$0xf]
  %v107 = vld [vmem:[%s1 + $0x150] sm:$0xf]
  %v108 = vld [vmem:[%s1 + $0x154] sm:$0xf]
  %v109 = vld [vmem:[%s1 + $0x158] sm:$0xf]
  %v110 = vld [vmem:[%s1 + $0x15c] sm:$0xf]
  %v111 = vld [vmem:[%s1 + $0x160] sm:$0xf]
  %v112 = vld [vmem:[%s1 + $0x164] sm:$0xf]
  %v113 = vld [vmem:[%s1 + $0x168] sm:$0xf]
  %v114 = vld [vmem:[%s1 + $0x16c] sm:$0xf]
  %v115 = vld [vmem:[%s1 + $0x170] sm:$0xf]
  %v116 = vld [vmem:[%s1 + $0x174] sm:$0xf]
  %v117 = vld [vmem:[%s1 + $0x178] sm:$0xf]
  %v118 = vld [vmem:[%s1 + $0x17c] sm:$0xf]
  %v119 = vld [vmem:[%s1 + $0x180] sm:$0xf]
  %v120 = vld [vmem:[%s1 + $0x184] sm:$0xf]
  %v121 = vld [vmem:[%s1 + $0x188] sm:$0xf]
  %v122 = vld [vmem:[%s1 + $0x18c] sm:$0xf]
  %v123 = vld [vmem:[%s1 + $0x190] sm:$0xf]
  %v124 = vld [vmem:[%s1 + $0x194] sm:$0xf]
  %v125 = vld [vmem:[%s1 + $0x198] sm:$0xf]
  %v126 = vld [vmem:[%s1 + $0x19c] sm:$0xf]
  %v127 = vld [vmem:[%s1 + $0x1a0] sm:$0xf]
  %v128 = vld [vmem:[%s1 + $0x1a4] sm:$0xf]
  %v129 = vld [vmem:[%s1 + $0x1a8] sm:$0xf]
  %v130 = vld [vmem:[%s1 + $0x1ac] sm:$0xf]
  %v131 = vld [vmem:[%s1 + $0x1b0] sm:$0xf]
  %v132 = vld [vmem:[%s1 + $0x1b4] sm:$0xf]
  %v133 = vld [vmem:[%s1 + $0x1b8] sm:$0xf]
  %v134 = vld [vmem:[%s1 + $0x1bc] sm:$0xf]
  %v135 = vld [vmem:[%s1 + $0x1c0] sm:$0xf]
  %v136 = vld [vmem:[%s1 + $0x1c4] sm:$0xf]
  %v137 = vld [vmem:[%s1 + $0x1c8] sm:$0xf]
  %v138 = vld [vmem:[%s1 + $0x1cc] sm:$0xf]
  %v139 = vld [vmem:[%s1 + $0x1d0] sm:$0xf]
  %v140 = vld [vmem:[%s1 + $0x1d4] sm:$0xf]
  %v141 = vld [vmem:[%s1 + $0x1d8] sm:$0xf]
  %v142 = vld [vmem:[%s1 + $0x1dc] sm:$0xf]
  %v143 = vld [vmem:[%s1 + $0x1e0] sm:$0xf]
  %v144 = vld [vmem:[%s1 + $0x1e4] sm:$0xf]
  %v145 = vld [vmem:[%s1 + $0x1e8] sm:$0xf]
  %v146 = vld [vmem:[%s1 + $0x1ec] sm:$0xf]
  %v147 = vld [vmem:[%s1 + $0x1f0] sm:$0xf]
  %v148 = vld [vmem:[%s1 + $0x1f4] sm:$0xf]
  %v149 = vld [vmem:[%s1 + $0x1f8] sm:$0xf]
  %v150 = vld [vmem:[%s1 + $0x1fc] sm:$0xf]
  %v151 = vld [vmem:[%s2] sm:$0x1]
  %v153 = vlaneseq
  %v154 = vshrl.u32 %v153, 7
  %v155 = vsub.s32 0, %v154
  %v156 = vrot.slane %v151, %v155
  %v166 = vunpack.c.l.b16 %v15
  %v167 = vunpack.c.h.b16 %v15
  %v168 = vunpack.c.l.b16 %v16
  %v169 = vunpack.c.h.b16 %v16
  %v170 = vunpack.c.l.b16 %v17
  %v171 = vunpack.c.h.b16 %v17
  %v172 = vunpack.c.l.b16 %v18
  %v173 = vunpack.c.h.b16 %v18
  %v174 = vunpack.c.l.b16 %v19
  %v175 = vunpack.c.h.b16 %v19
  %v176 = vunpack.c.l.b16 %v20
  %v177 = vunpack.c.h.b16 %v20
  %v178 = vunpack.c.l.b16 %v21
  %v179 = vunpack.c.h.b16 %v21
  %v180 = vunpack.c.l.b16 %v22
  %v181 = vunpack.c.h.b16 %v22
  %v182 = vpack.c.b16 %v174, %v166
  %v183 = vpack.c.b16 %v175, %v167
  %v184 = vpack.c.b16 %v176, %v168
  %v185 = vpack.c.b16 %v177, %v169
  %v186 = vpack.c.b16 %v178, %v170
  %v187 = vpack.c.b16 %v179, %v171
  %v188 = vpack.c.b16 %v180, %v172
  %v189 = vpack.c.b16 %v181, %v173
  %v326 = vunpack.c.l.b16 %v23
  %v327 = vunpack.c.l.b16 %v24
  %v328 = vunpack.c.l.b16 %v25
  %v329 = vunpack.c.l.b16 %v26
  %v330 = vunpack.c.l.b16 %v27
  %v331 = vunpack.c.l.b16 %v28
  %v332 = vunpack.c.l.b16 %v29
  %v333 = vunpack.c.l.b16 %v30
  %v334 = vunpack.c.l.b16 %v31
  %v335 = vunpack.c.l.b16 %v32
  %v336 = vunpack.c.l.b16 %v33
  %v337 = vunpack.c.l.b16 %v34
  %v338 = vunpack.c.l.b16 %v35
  %v339 = vunpack.c.l.b16 %v36
  %v340 = vunpack.c.l.b16 %v37
  %v341 = vunpack.c.l.b16 %v38
  %v342 = vunpack.c.l.b16 %v39
  %v343 = vunpack.c.l.b16 %v40
  %v344 = vunpack.c.l.b16 %v41
  %v345 = vunpack.c.l.b16 %v42
  %v346 = vunpack.c.l.b16 %v43
  %v347 = vunpack.c.l.b16 %v44
  %v348 = vunpack.c.l.b16 %v45
  %v349 = vunpack.c.l.b16 %v46
  %v350 = vunpack.c.l.b16 %v47
  %v351 = vunpack.c.l.b16 %v48
  %v352 = vunpack.c.l.b16 %v49
  %v353 = vunpack.c.l.b16 %v50
  %v354 = vunpack.c.l.b16 %v51
  %v355 = vunpack.c.l.b16 %v52
  %v356 = vunpack.c.l.b16 %v53
  %v357 = vunpack.c.l.b16 %v54
  %v358 = vunpack.c.l.b16 %v55
  %v359 = vunpack.c.l.b16 %v56
  %v360 = vunpack.c.l.b16 %v57
  %v361 = vunpack.c.l.b16 %v58
  %v362 = vunpack.c.l.b16 %v59
  %v363 = vunpack.c.l.b16 %v60
  %v364 = vunpack.c.l.b16 %v61
  %v365 = vunpack.c.l.b16 %v62
  %v366 = vunpack.c.l.b16 %v63
  %v367 = vunpack.c.l.b16 %v64
  %v368 = vunpack.c.l.b16 %v65
  %v369 = vunpack.c.l.b16 %v66
  %v370 = vunpack.c.l.b16 %v67
  %v371 = vunpack.c.l.b16 %v68
  %v372 = vunpack.c.l.b16 %v69
  %v373 = vunpack.c.l.b16 %v70
  %v374 = vunpack.c.l.b16 %v71
  %v375 = vunpack.c.l.b16 %v72
  %v376 = vunpack.c.l.b16 %v73
  %v377 = vunpack.c.l.b16 %v74
  %v378 = vunpack.c.l.b16 %v75
  %v379 = vunpack.c.l.b16 %v76
  %v380 = vunpack.c.l.b16 %v77
  %v381 = vunpack.c.l.b16 %v78
  %v382 = vunpack.c.l.b16 %v79
  %v383 = vunpack.c.l.b16 %v80
  %v384 = vunpack.c.l.b16 %v81
  %v385 = vunpack.c.l.b16 %v82
  %v386 = vunpack.c.l.b16 %v83
  %v387 = vunpack.c.l.b16 %v84
  %v388 = vunpack.c.l.b16 %v85
  %v389 = vunpack.c.l.b16 %v86
  %v390 = vunpack.c.l.b16 %v87
  %v391 = vunpack.c.l.b16 %v88
  %v392 = vunpack.c.l.b16 %v89
  %v393 = vunpack.c.l.b16 %v90
  %v394 = vunpack.c.l.b16 %v91
  %v395 = vunpack.c.l.b16 %v92
  %v396 = vunpack.c.l.b16 %v93
  %v397 = vunpack.c.l.b16 %v94
  %v398 = vunpack.c.l.b16 %v95
  %v399 = vunpack.c.l.b16 %v96
  %v400 = vunpack.c.l.b16 %v97
  %v401 = vunpack.c.l.b16 %v98
  %v402 = vunpack.c.l.b16 %v99
  %v403 = vunpack.c.l.b16 %v100
  %v404 = vunpack.c.l.b16 %v101
  %v405 = vunpack.c.l.b16 %v102
  %v406 = vunpack.c.l.b16 %v103
  %v407 = vunpack.c.l.b16 %v104
  %v408 = vunpack.c.l.b16 %v105
  %v409 = vunpack.c.l.b16 %v106
  %v410 = vunpack.c.l.b16 %v107
  %v411 = vunpack.c.l.b16 %v108
  %v412 = vunpack.c.l.b16 %v109
  %v413 = vunpack.c.l.b16 %v110
  %v414 = vunpack.c.l.b16 %v111
  %v415 = vunpack.c.l.b16 %v112
  %v416 = vunpack.c.l.b16 %v113
  %v417 = vunpack.c.l.b16 %v114
  %v418 = vunpack.c.l.b16 %v115
  %v419 = vunpack.c.l.b16 %v116
  %v420 = vunpack.c.l.b16 %v117
  %v421 = vunpack.c.l.b16 %v118
  %v422 = vunpack.c.l.b16 %v119
  %v423 = vunpack.c.l.b16 %v120
  %v424 = vunpack.c.l.b16 %v121
  %v425 = vunpack.c.l.b16 %v122
  %v426 = vunpack.c.l.b16 %v123
  %v427 = vunpack.c.l.b16 %v124
  %v428 = vunpack.c.l.b16 %v125
  %v429 = vunpack.c.l.b16 %v126
  %v430 = vunpack.c.l.b16 %v127
  %v431 = vunpack.c.l.b16 %v128
  %v432 = vunpack.c.l.b16 %v129
  %v433 = vunpack.c.l.b16 %v130
  %v434 = vunpack.c.l.b16 %v131
  %v435 = vunpack.c.l.b16 %v132
  %v436 = vunpack.c.l.b16 %v133
  %v437 = vunpack.c.l.b16 %v134
  %v438 = vunpack.c.l.b16 %v135
  %v439 = vunpack.c.l.b16 %v136
  %v440 = vunpack.c.l.b16 %v137
  %v441 = vunpack.c.l.b16 %v138
  %v442 = vunpack.c.l.b16 %v139
  %v443 = vunpack.c.l.b16 %v140
  %v444 = vunpack.c.l.b16 %v141
  %v445 = vunpack.c.l.b16 %v142
  %v446 = vunpack.c.l.b16 %v143
  %v447 = vunpack.c.l.b16 %v144
  %v448 = vunpack.c.l.b16 %v145
  %v449 = vunpack.c.l.b16 %v146
  %v450 = vunpack.c.l.b16 %v147
  %v451 = vunpack.c.l.b16 %v148
  %v452 = vunpack.c.l.b16 %v149
  %v453 = vunpack.c.l.b16 %v150
  %v454 = vpack.c.b16 %v327, %v326
  %v455 = vpack.c.b16 %v329, %v328
  %v456 = vpack.c.b16 %v331, %v330
  %v457 = vpack.c.b16 %v333, %v332
  %v458 = vpack.c.b16 %v335, %v334
  %v459 = vpack.c.b16 %v337, %v336
  %v460 = vpack.c.b16 %v339, %v338
  %v461 = vpack.c.b16 %v341, %v340
  %v462 = vpack.c.b16 %v343, %v342
  %v463 = vpack.c.b16 %v345, %v344
  %v464 = vpack.c.b16 %v347, %v346
  %v465 = vpack.c.b16 %v349, %v348
  %v466 = vpack.c.b16 %v351, %v350
  %v467 = vpack.c.b16 %v353, %v352
  %v468 = vpack.c.b16 %v355, %v354
  %v469 = vpack.c.b16 %v357, %v356
  %v470 = vpack.c.b16 %v359, %v358
  %v471 = vpack.c.b16 %v361, %v360
  %v472 = vpack.c.b16 %v363, %v362
  %v473 = vpack.c.b16 %v365, %v364
  %v474 = vpack.c.b16 %v367, %v366
  %v475 = vpack.c.b16 %v369, %v368
  %v476 = vpack.c.b16 %v371, %v370
  %v477 = vpack.c.b16 %v373, %v372
  %v478 = vpack.c.b16 %v375, %v374
  %v479 = vpack.c.b16 %v377, %v376
  %v480 = vpack.c.b16 %v379, %v378
  %v481 = vpack.c.b16 %v381, %v380
  %v482 = vpack.c.b16 %v383, %v382
  %v483 = vpack.c.b16 %v385, %v384
  %v484 = vpack.c.b16 %v387, %v386
  %v485 = vpack.c.b16 %v389, %v388
  %v486 = vpack.c.b16 %v391, %v390
  %v487 = vpack.c.b16 %v393, %v392
  %v488 = vpack.c.b16 %v395, %v394
  %v489 = vpack.c.b16 %v397, %v396
  %v490 = vpack.c.b16 %v399, %v398
  %v491 = vpack.c.b16 %v401, %v400
  %v492 = vpack.c.b16 %v403, %v402
  %v493 = vpack.c.b16 %v405, %v404
  %v494 = vpack.c.b16 %v407, %v406
  %v495 = vpack.c.b16 %v409, %v408
  %v496 = vpack.c.b16 %v411, %v410
  %v497 = vpack.c.b16 %v413, %v412
  %v498 = vpack.c.b16 %v415, %v414
  %v499 = vpack.c.b16 %v417, %v416
  %v500 = vpack.c.b16 %v419, %v418
  %v501 = vpack.c.b16 %v421, %v420
  %v502 = vpack.c.b16 %v423, %v422
  %v503 = vpack.c.b16 %v425, %v424
  %v504 = vpack.c.b16 %v427, %v426
  %v505 = vpack.c.b16 %v429, %v428
  %v506 = vpack.c.b16 %v431, %v430
  %v507 = vpack.c.b16 %v433, %v432
  %v508 = vpack.c.b16 %v435, %v434
  %v509 = vpack.c.b16 %v437, %v436
  %v510 = vpack.c.b16 %v439, %v438
  %v511 = vpack.c.b16 %v441, %v440
  %v512 = vpack.c.b16 %v443, %v442
  %v513 = vpack.c.b16 %v445, %v444
  %v514 = vpack.c.b16 %v447, %v446
  %v515 = vpack.c.b16 %v449, %v448
  %v516 = vpack.c.b16 %v451, %v450
  %v517 = vpack.c.b16 %v453, %v452
  %582 = vmatprep.subr.bf16.mxu0 0
  %583 = vmatpush1.bf16.msra.mxu0 %v461
  %584 = vmatprep.subr.bf16.mxu0 0
  %585 = vmatpush1.bf16.msra.mxu0 %v460
  %586 = vmatprep.subr.bf16.mxu0 0
  %587 = vmatpush1.bf16.msra.mxu0 %v459
  %588 = vmatprep.subr.bf16.mxu0 0
  %589 = vmatpush1.bf16.msra.mxu0 %v458
  %590 = vmatprep.subr.bf16.mxu0 0
  %591 = vmatpush1.bf16.msra.mxu0 %v457
  %592 = vmatprep.subr.bf16.mxu0 0
  %593 = vmatpush1.bf16.msra.mxu0 %v456
  %594 = vmatprep.subr.bf16.mxu0 0
  %595 = vmatpush1.bf16.msra.mxu0 %v455
  %596 = vmatprep.subr.bf16.mxu0 0
  %597 = vmatpush1.bf16.msra.mxu0 %v454
  %598 = vmatprep.subr.bf16.mxu0 0
  %599 = vmatpush2.bf16.msra.mxu0 %v469
  %600 = vmatprep.subr.bf16.mxu0 0
  %601 = vmatpush2.bf16.msra.mxu0 %v468
  %602 = vmatprep.subr.bf16.mxu0 0
  %603 = vmatpush2.bf16.msra.mxu0 %v467
  %604 = vmatprep.subr.bf16.mxu0 0
  %605 = vmatpush2.bf16.msra.mxu0 %v466
  %606 = vmatprep.subr.bf16.mxu0 0
  %607 = vmatpush2.bf16.msra.mxu0 %v465
  %608 = vmatprep.subr.bf16.mxu0 0
  %609 = vmatpush2.bf16.msra.mxu0 %v464
  %610 = vmatprep.subr.bf16.mxu0 0
  %611 = vmatpush2.bf16.msra.mxu0 %v463
  %612 = vmatprep.subr.bf16.mxu0 0
  %613 = vmatpush2.bf16.msra.mxu0 %v462
  %614 = vmatprep.mubr.bf16.mxu0 %v183
  %615 = vmatmul.mubr.bf16.gmra.mxu0 %v182
  %v616 = vpop.f32.mrf.mxu0
  %v617 = vadd.f32 %v156, %v616
  %v618 = vpop.f32.mrf.mxu0
  %v619 = vpop.f32.mrf.mxu0
  %v620 = vadd.f32 %v156, %v619
  %v621 = vpop.f32.mrf.mxu0
  %622 = vdwg.mxu0
  %623 = vmatprep.subr.bf16.mxu0 0
  %624 = vmatpush1.bf16.msra.mxu0 %v477
  %625 = vmatprep.subr.bf16.mxu0 0
  %626 = vmatpush1.bf16.msra.mxu0 %v476
  %627 = vmatprep.subr.bf16.mxu0 0
  %628 = vmatpush1.bf16.msra.mxu0 %v475
  %629 = vmatprep.subr.bf16.mxu0 0
  %630 = vmatpush1.bf16.msra.mxu0 %v474
  %631 = vmatprep.subr.bf16.mxu0 0
  %632 = vmatpush1.bf16.msra.mxu0 %v473
  %633 = vmatprep.subr.bf16.mxu0 0
  %634 = vmatpush1.bf16.msra.mxu0 %v472
  %635 = vmatprep.subr.bf16.mxu0 0
  %636 = vmatpush1.bf16.msra.mxu0 %v471
  %637 = vmatprep.subr.bf16.mxu0 0
  %638 = vmatpush1.bf16.msra.mxu0 %v470
  %639 = vmatprep.subr.bf16.mxu0 0
  %640 = vmatpush2.bf16.msra.mxu0 %v485
  %641 = vmatprep.subr.bf16.mxu0 0
  %642 = vmatpush2.bf16.msra.mxu0 %v484
  %643 = vmatprep.subr.bf16.mxu0 0
  %644 = vmatpush2.bf16.msra.mxu0 %v483
  %645 = vmatprep.subr.bf16.mxu0 0
  %646 = vmatpush2.bf16.msra.mxu0 %v482
  %647 = vmatprep.subr.bf16.mxu0 0
  %648 = vmatpush2.bf16.msra.mxu0 %v481
  %649 = vmatprep.subr.bf16.mxu0 0
  %650 = vmatpush2.bf16.msra.mxu0 %v480
  %651 = vmatprep.subr.bf16.mxu0 0
  %652 = vmatpush2.bf16.msra.mxu0 %v479
  %653 = vmatprep.subr.bf16.mxu0 0
  %654 = vmatpush2.bf16.msra.mxu0 %v478
  %655 = vmatprep.mubr.bf16.mxu0 %v185
  %656 = vmatmul.mubr.bf16.gmra.mxu0 %v184
  %v657 = vpop.f32.mrf.mxu0
  %v658 = vadd.f32 %v617, %v657
  %v659 = vpop.f32.mrf.mxu0
  %v660 = vpop.f32.mrf.mxu0
  %v661 = vadd.f32 %v620, %v660
  %v662 = vpop.f32.mrf.mxu0
  %663 = vdwg.mxu0
  %664 = vmatprep.subr.bf16.mxu0 0
  %665 = vmatpush1.bf16.msra.mxu0 %v493
  %666 = vmatprep.subr.bf16.mxu0 0
  %667 = vmatpush1.bf16.msra.mxu0 %v492
  %668 = vmatprep.subr.bf16.mxu0 0
  %669 = vmatpush1.bf16.msra.mxu0 %v491
  %670 = vmatprep.subr.bf16.mxu0 0
  %671 = vmatpush1.bf16.msra.mxu0 %v490
  %672 = vmatprep.subr.bf16.mxu0 0
  %673 = vmatpush1.bf16.msra.mxu0 %v489
  %674 = vmatprep.subr.bf16.mxu0 0
  %675 = vmatpush1.bf16.msra.mxu0 %v488
  %676 = vmatprep.subr.bf16.mxu0 0
  %677 = vmatpush1.bf16.msra.mxu0 %v487
  %678 = vmatprep.subr.bf16.mxu0 0
  %679 = vmatpush1.bf16.msra.mxu0 %v486
  %680 = vmatprep.subr.bf16.mxu0 0
  %681 = vmatpush2.bf16.msra.mxu0 %v501
  %682 = vmatprep.subr.bf16.mxu0 0
  %683 = vmatpush2.bf16.msra.mxu0 %v500
  %684 = vmatprep.subr.bf16.mxu0 0
  %685 = vmatpush2.bf16.msra.mxu0 %v499
  %686 = vmatprep.subr.bf16.mxu0 0
  %687 = vmatpush2.bf16.msra.mxu0 %v498
  %688 = vmatprep.subr.bf16.mxu0 0
  %689 = vmatpush2.bf16.msra.mxu0 %v497
  %690 = vmatprep.subr.bf16.mxu0 0
  %691 = vmatpush2.bf16.msra.mxu0 %v496
  %692 = vmatprep.subr.bf16.mxu0 0
  %693 = vmatpush2.bf16.msra.mxu0 %v495
  %694 = vmatprep.subr.bf16.mxu0 0
  %695 = vmatpush2.bf16.msra.mxu0 %v494
  %696 = vmatprep.mubr.bf16.mxu0 %v187
  %697 = vmatmul.mubr.bf16.gmra.mxu0 %v186
  %v698 = vpop.f32.mrf.mxu0
  %v699 = vadd.f32 %v658, %v698
  %v700 = vpop.f32.mrf.mxu0
  %v701 = vpop.f32.mrf.mxu0
  %v702 = vadd.f32 %v661, %v701
  %v703 = vpop.f32.mrf.mxu0
  %704 = vdwg.mxu0
  %705 = vmatprep.subr.bf16.mxu0 0
  %706 = vmatpush1.bf16.msra.mxu0 %v509
  %707 = vmatprep.subr.bf16.mxu0 0
  %708 = vmatpush1.bf16.msra.mxu0 %v508
  %709 = vmatprep.subr.bf16.mxu0 0
  %710 = vmatpush1.bf16.msra.mxu0 %v507
  %711 = vmatprep.subr.bf16.mxu0 0
  %712 = vmatpush1.bf16.msra.mxu0 %v506
  %713 = vmatprep.subr.bf16.mxu0 0
  %714 = vmatpush1.bf16.msra.mxu0 %v505
  %715 = vmatprep.subr.bf16.mxu0 0
  %716 = vmatpush1.bf16.msra.mxu0 %v504
  %717 = vmatprep.subr.bf16.mxu0 0
  %718 = vmatpush1.bf16.msra.mxu0 %v503
  %719 = vmatprep.subr.bf16.mxu0 0
  %720 = vmatpush1.bf16.msra.mxu0 %v502
  %721 = vmatprep.subr.bf16.mxu0 0
  %722 = vmatpush2.bf16.msra.mxu0 %v517
  %723 = vmatprep.subr.bf16.mxu0 0
  %724 = vmatpush2.bf16.msra.mxu0 %v516
  %725 = vmatprep.subr.bf16.mxu0 0
  %726 = vmatpush2.bf16.msra.mxu0 %v515
  %727 = vmatprep.subr.bf16.mxu0 0
  %728 = vmatpush2.bf16.msra.mxu0 %v514
  %729 = vmatprep.subr.bf16.mxu0 0
  %730 = vmatpush2.bf16.msra.mxu0 %v513
  %731 = vmatprep.subr.bf16.mxu0 0
  %732 = vmatpush2.bf16.msra.mxu0 %v512
  %733 = vmatprep.subr.bf16.mxu0 0
  %734 = vmatpush2.bf16.msra.mxu0 %v511
  %735 = vmatprep.subr.bf16.mxu0 0
  %736 = vmatpush2.bf16.msra.mxu0 %v510
  %737 = vmatprep.mubr.bf16.mxu0 %v189
  %738 = vmatmul.mubr.bf16.gmra.mxu0 %v188
  %v739 = vpop.f32.mrf.mxu0
  %v740 = vadd.f32 %v699, %v739
  %v741 = vpop.f32.mrf.mxu0
  %v742 = vpop.f32.mrf.mxu0
  %v743 = vadd.f32 %v702, %v742
  %v744 = vpop.f32.mrf.mxu0
  %745 = vdwg.mxu0
  %v746 = vpack.c.bf16 %v743, %v740
  %v748 = vunpack.c.l.b16 %v746
  %v749 = vunpack.c.h.b16 %v746
  %v750 = vpack.c.b16 %v748, %v748
  %v751 = vpack.c.b16 %v749, %v749
  %754 = vst [vmem:[%s3] sm:$0xf] %v750
  %755 = vst [vmem:[%s3 + $0x4] sm:$0xf] %v751
  // Predicated region
  $region14: #{forward.15} parent=0 // pred_check
    _
  $region15: #{forward.15} parent=0 // pred_check_branch
    %757 = sbr.rel (0) target = $region17
  $region16: #{forward.15} parent=0 // pred_region
    _
  $region17: #{forward.15} parent=0 // pred_fallthru
    _
  // Predicated region
  $region18: #{forward.15} parent=0 // pred_check
    _
  $region19: #{forward.15} parent=0 // pred_check_branch
    %759 = sbr.rel (0) target = $region21
  $region20: #{forward.15} parent=0 // pred_region
    _
  $region21: #{forward.15} parent=0 // pred_fallthru
    _

// kernel: squeeze.196
$region0: #{squeeze.196}
  %s0 = inlined_call_operand.vmem [shape: f32[256], index: 0, kind: input, shape index: {}]
  %s1 = inlined_call_operand.vmem [shape: f32[4,64], index: 1, kind: output, shape index: {}]
  $region1: #{squeeze.196} parent=0
    #allocation0 [shape = 'u8[4096]{0}', space=vmem, size = 0x1000, scoped, tag = 'scoped mem for output reshape']
    #allocation1 [shape = 'u8[4096]{0}', space=vmem, size = 0x1000, scoped, tag = 'scoped mem for input reshape']
    %s3 = sshll.u32 1, 2
    %s4 = ssub.s32 %s3, 1
    %v5 = vld [vmem:[%s0] sm:%s4]
    %6 = vst [vmem:[#allocation1] sm:%s4] %v5
    %v7 = vld [vmem:[#allocation1] sm:$0x3]
    %vm8 = vcmask 523264
    %9 = vst.msk [vmem:[#allocation0] ss:$2 sm:$0x3] %vm8, %v7
    %v10 = vld [vmem:[#allocation1] sm:$0x3]
    %11 = vrot.lane.b32.xlu0 %v10, 64
    %v12 = vpop.permute.xlu0 %11
    %vm13 = vcmask 523264
    %s14 = scalar_lea.vmem [#allocation0], 1
    %15 = vst.msk [vmem:[%s14] ss:$2 sm:$0x3] %vm13, %v12
    %s17 = sshll.u32 1, 4
    %s18 = ssub.s32 %s17, 1
    %v20 = vld [vmem:[#allocation0] sm:%s18]
    %s21 = sshll.u32 1, 4
    %s22 = ssub.s32 %s21, 1
    %23 = vst [vmem:[%s1] sm:%s22] %v20

// kernel: forward.16
$region0: #{forward.16}
  #allocation0 [shape = 'u32[]', space=smem, size = 0x4, offset = 0x4, fixed_abs, tag = 'smem constant byte address 0x4 - core index']
  #allocation1 [shape = 'u32[144,128]{1,0:T(1,128)}', space=vmem, size = 0x12000, scoped, tag = 'internal scratch']
  %s0 = inlined_call_operand.vmem [shape: bf16[16,576], index: 0, kind: input, shape index: {}]
  %s1 = inlined_call_operand.vmem [shape: bf16[576,256], index: 1, kind: input, shape index: {}]
  %s2 = inlined_call_operand.vmem [shape: f32[1,256], index: 2, kind: input, shape index: {}]
  %s3 = inlined_call_operand.vmem [shape: f32[16,1], index: 3, kind: input, shape index: {}]
  %s4 = inlined_call_operand.vmem [shape: bf16[16,256], index: 4, kind: output, shape index: {0}]
  %s5 = inlined_call_operand.vmem [shape: f32[1,2,256], index: 5, kind: output, shape index: {1}]
  %6 = xla_tuple %s4, %s5
  %s7 = sld [smem:[#allocation0]]
  $region34: #{forward.16} parent=0
    _
  %s9 = ssub.s32 1, %s7
  %s10 = scalar_select 0, %s9, %s7
  // Predicated region
  $region2: #{forward.16} parent=0 // pred_check
    _
  $region3: #{forward.16} parent=0 // pred_check_branch
    %12 = sbr.rel (0) target = $region5
  $region4: #{forward.16} parent=0 // pred_region
    _
  $region5: #{forward.16} parent=0 // pred_fallthru
    _
  // Predicated region
  $region6: #{forward.16} parent=0 // pred_check
    _
  $region7: #{forward.16} parent=0 // pred_check_branch
    %14 = sbr.rel (0) target = $region9
  $region8: #{forward.16} parent=0 // pred_region
    _
  $region9: #{forward.16} parent=0 // pred_fallthru
    _
  // Predicated region
  $region10: #{forward.16} parent=0 // pred_check
    _
  $region11: #{forward.16} parent=0 // pred_check_branch
    %16 = sbr.rel (0) target = $region13
  $region12: #{forward.16} parent=0 // pred_region
    _
  $region13: #{forward.16} parent=0 // pred_fallthru
    _
  // Predicated region
  $region14: #{forward.16} parent=0 // pred_check
    _
  $region15: #{forward.16} parent=0 // pred_check_branch
    %18 = sbr.rel (0) target = $region17
  $region16: #{forward.16} parent=0 // pred_region
    _
  $region17: #{forward.16} parent=0 // pred_fallthru
    _
  %v20 = vld [vmem:[%s0] sm:$0xff]
  %v21 = vld [vmem:[%s0 + $0x8] sm:$0xff]
  %v22 = vld [vmem:[%s0 + $0x10] sm:$0xf]
  %v23 = vld [vmem:[%s0 + $0x14] sm:$0xff]
  %v24 = vld [vmem:[%s0 + $0x1c] sm:$0xff]
  %v25 = vld [vmem:[%s0 + $0x24] sm:$0xf]
  %v26 = vld [vmem:[%s1] sm:$0xff]
  %v27 = vld [vmem:[%s1 + $0x8] sm:$0xff]
  %v28 = vld [vmem:[%s1 + $0x10] sm:$0xff]
  %v29 = vld [vmem:[%s1 + $0x18] sm:$0xff]
  %v30 = vld [vmem:[%s1 + $0x20] sm:$0xff]
  %v31 = vld [vmem:[%s1 + $0x28] sm:$0xff]
  %v32 = vld [vmem:[%s1 + $0x30] sm:$0xff]
  %v33 = vld [vmem:[%s1 + $0x38] sm:$0xff]
  %v34 = vld [vmem:[%s1 + $0x40] sm:$0xff]
  %v35 = vld [vmem:[%s1 + $0x48] sm:$0xff]
  %v36 = vld [vmem:[%s1 + $0x50] sm:$0xff]
  %v37 = vld [vmem:[%s1 + $0x58] sm:$0xff]
  %v38 = vld [vmem:[%s1 + $0x60] sm:$0xff]
  %v39 = vld [vmem:[%s1 + $0x68] sm:$0xff]
  %v40 = vld [vmem:[%s1 + $0x70] sm:$0xff]
  %v41 = vld [vmem:[%s1 + $0x78] sm:$0xff]
  %v42 = vld [vmem:[%s1 + $0x80] sm:$0xff]
  %v43 = vld [vmem:[%s1 + $0x88] sm:$0xff]
  %v44 = vld [vmem:[%s1 + $0x90] sm:$0xff]
  %v45 = vld [vmem:[%s1 + $0x98] sm:$0xff]
  %v46 = vld [vmem:[%s1 + $0xa0] sm:$0xff]
  %v47 = vld [vmem:[%s1 + $0xa8] sm:$0xff]
  %v48 = vld [vmem:[%s1 + $0xb0] sm:$0xff]
  %v49 = vld [vmem:[%s1 + $0xb8] sm:$0xff]
  %v50 = vld [vmem:[%s1 + $0xc0] sm:$0xff]
  %v51 = vld [vmem:[%s1 + $0xc8] sm:$0xff]
  %v52 = vld [vmem:[%s1 + $0xd0] sm:$0xff]
  %v53 = vld [vmem:[%s1 + $0xd8] sm:$0xff]
  %v54 = vld [vmem:[%s1 + $0xe0] sm:$0xff]
  %v55 = vld [vmem:[%s1 + $0xe8] sm:$0xff]
  %v56 = vld [vmem:[%s1 + $0xf0] sm:$0xff]
  %v57 = vld [vmem:[%s1 + $0xf8] sm:$0xff]
  %v58 = vld [vmem:[%s1 + $0x100] sm:$0xff]
  %v59 = vld [vmem:[%s1 + $0x108] sm:$0xff]
  %v60 = vld [vmem:[%s1 + $0x110] sm:$0xff]
  %v61 = vld [vmem:[%s1 + $0x118] sm:$0xff]
  %v62 = vld [vmem:[%s1 + $0x120] sm:$0xff]
  %v63 = vld [vmem:[%s1 + $0x128] sm:$0xff]
  %v64 = vld [vmem:[%s1 + $0x130] sm:$0xff]
  %v65 = vld [vmem:[%s1 + $0x138] sm:$0xff]
  %v66 = vld [vmem:[%s1 + $0x140] sm:$0xff]
  %v67 = vld [vmem:[%s1 + $0x148] sm:$0xff]
  %v68 = vld [vmem:[%s1 + $0x150] sm:$0xff]
  %v69 = vld [vmem:[%s1 + $0x158] sm:$0xff]
  %v70 = vld [vmem:[%s1 + $0x160] sm:$0xff]
  %v71 = vld [vmem:[%s1 + $0x168] sm:$0xff]
  %v72 = vld [vmem:[%s1 + $0x170] sm:$0xff]
  %v73 = vld [vmem:[%s1 + $0x178] sm:$0xff]
  %v74 = vld [vmem:[%s1 + $0x180] sm:$0xff]
  %v75 = vld [vmem:[%s1 + $0x188] sm:$0xff]
  %v76 = vld [vmem:[%s1 + $0x190] sm:$0xff]
  %v77 = vld [vmem:[%s1 + $0x198] sm:$0xff]
  %v78 = vld [vmem:[%s1 + $0x1a0] sm:$0xff]
  %v79 = vld [vmem:[%s1 + $0x1a8] sm:$0xff]
  %v80 = vld [vmem:[%s1 + $0x1b0] sm:$0xff]
  %v81 = vld [vmem:[%s1 + $0x1b8] sm:$0xff]
  %v82 = vld [vmem:[%s1 + $0x1c0] sm:$0xff]
  %v83 = vld [vmem:[%s1 + $0x1c8] sm:$0xff]
  %v84 = vld [vmem:[%s1 + $0x1d0] sm:$0xff]
  %v85 = vld [vmem:[%s1 + $0x1d8] sm:$0xff]
  %v86 = vld [vmem:[%s1 + $0x1e0] sm:$0xff]
  %v87 = vld [vmem:[%s1 + $0x1e8] sm:$0xff]
  %v88 = vld [vmem:[%s1 + $0x1f0] sm:$0xff]
  %v89 = vld [vmem:[%s1 + $0x1f8] sm:$0xff]
  %v90 = vld [vmem:[%s1 + $0x200] sm:$0xff]
  %v91 = vld [vmem:[%s1 + $0x208] sm:$0xff]
  %v92 = vld [vmem:[%s1 + $0x210] sm:$0xff]
  %v93 = vld [vmem:[%s1 + $0x218] sm:$0xff]
  %v94 = vld [vmem:[%s1 + $0x220] sm:$0xff]
  %v95 = vld [vmem:[%s1 + $0x228] sm:$0xff]
  %v96 = vld [vmem:[%s1 + $0x230] sm:$0xff]
  %v97 = vld [vmem:[%s1 + $0x238] sm:$0xff]
  %v98 = vld [vmem:[%s2] sm:$0x3]
  %v100 = vlaneseq
  %v101 = vshrl.u32 %v100, 7
  %v102 = vsub.s32 0, %v101
  %v103 = vrot.slane %v98, %v102
  %v104 = vlaneseq
  %v105 = vshrl.u32 %v104, 7
  %v106 = vsub.s32 1, %v105
  %v107 = vrot.slane %v98, %v106
  %v116 = vunpack.c.l.b16 %v20
  %v117 = vunpack.c.h.b16 %v20
  %v118 = vunpack.c.l.b16 %v21
  %v119 = vunpack.c.h.b16 %v21
  %v120 = vunpack.c.l.b16 %v22
  %v121 = vunpack.c.l.b16 %v23
  %v122 = vunpack.c.h.b16 %v23
  %v123 = vunpack.c.l.b16 %v24
  %v124 = vunpack.c.h.b16 %v24
  %v125 = vunpack.c.l.b16 %v25
  %v126 = vpack.c.b16 %v121, %v116
  %v127 = vpack.c.b16 %v122, %v117
  %v128 = vpack.c.b16 %v123, %v118
  %v129 = vpack.c.b16 %v124, %v119
  %v130 = vpack.c.b16 %v125, %v120
  %v207 = vunpack.c.l.b16 %v26
  %v208 = vunpack.c.h.b16 %v26
  %v209 = vunpack.c.l.b16 %v27
  %v210 = vunpack.c.h.b16 %v27
  %v211 = vunpack.c.l.b16 %v28
  %v212 = vunpack.c.h.b16 %v28
  %v213 = vunpack.c.l.b16 %v29
  %v214 = vunpack.c.h.b16 %v29
  %v215 = vunpack.c.l.b16 %v30
  %v216 = vunpack.c.h.b16 %v30
  %v217 = vunpack.c.l.b16 %v31
  %v218 = vunpack.c.h.b16 %v31
  %v219 = vunpack.c.l.b16 %v32
  %v220 = vunpack.c.h.b16 %v32
  %v221 = vunpack.c.l.b16 %v33
  %v222 = vunpack.c.h.b16 %v33
  %v223 = vunpack.c.l.b16 %v34
  %v224 = vunpack.c.h.b16 %v34
  %v225 = vunpack.c.l.b16 %v35
  %v226 = vunpack.c.h.b16 %v35
  %v227 = vunpack.c.l.b16 %v36
  %v228 = vunpack.c.h.b16 %v36
  %v229 = vunpack.c.l.b16 %v37
  %v230 = vunpack.c.h.b16 %v37
  %v231 = vunpack.c.l.b16 %v38
  %v232 = vunpack.c.h.b16 %v38
  %v233 = vunpack.c.l.b16 %v39
  %v234 = vunpack.c.h.b16 %v39
  %v235 = vunpack.c.l.b16 %v40
  %v236 = vunpack.c.h.b16 %v40
  %v237 = vunpack.c.l.b16 %v41
  %v238 = vunpack.c.h.b16 %v41
  %v239 = vunpack.c.l.b16 %v42
  %v240 = vunpack.c.h.b16 %v42
  %v241 = vunpack.c.l.b16 %v43
  %v242 = vunpack.c.h.b16 %v43
  %v243 = vunpack.c.l.b16 %v44
  %v244 = vunpack.c.h.b16 %v44
  %v245 = vunpack.c.l.b16 %v45
  %v246 = vunpack.c.h.b16 %v45
  %v247 = vunpack.c.l.b16 %v46
  %v248 = vunpack.c.h.b16 %v46
  %v249 = vunpack.c.l.b16 %v47
  %v250 = vunpack.c.h.b16 %v47
  %v251 = vunpack.c.l.b16 %v48
  %v252 = vunpack.c.h.b16 %v48
  %v253 = vunpack.c.l.b16 %v49
  %v254 = vunpack.c.h.b16 %v49
  %v255 = vunpack.c.l.b16 %v50
  %v256 = vunpack.c.h.b16 %v50
  %v257 = vunpack.c.l.b16 %v51
  %v258 = vunpack.c.h.b16 %v51
  %v259 = vunpack.c.l.b16 %v52
  %v260 = vunpack.c.h.b16 %v52
  %v261 = vunpack.c.l.b16 %v53
  %v262 = vunpack.c.h.b16 %v53
  %v263 = vunpack.c.l.b16 %v54
  %v264 = vunpack.c.h.b16 %v54
  %v265 = vunpack.c.l.b16 %v55
  %v266 = vunpack.c.h.b16 %v55
  %v267 = vunpack.c.l.b16 %v56
  %v268 = vunpack.c.h.b16 %v56
  %v269 = vunpack.c.l.b16 %v57
  %v270 = vunpack.c.h.b16 %v57
  %v271 = vunpack.c.l.b16 %v58
  %v272 = vunpack.c.h.b16 %v58
  %v273 = vunpack.c.l.b16 %v59
  %v274 = vunpack.c.h.b16 %v59
  %v275 = vunpack.c.l.b16 %v60
  %v276 = vunpack.c.h.b16 %v60
  %v277 = vunpack.c.l.b16 %v61
  %v278 = vunpack.c.h.b16 %v61
  %v279 = vunpack.c.l.b16 %v62
  %v280 = vunpack.c.h.b16 %v62
  %v281 = vunpack.c.l.b16 %v63
  %v282 = vunpack.c.h.b16 %v63
  %v283 = vunpack.c.l.b16 %v64
  %v284 = vunpack.c.h.b16 %v64
  %v285 = vunpack.c.l.b16 %v65
  %v286 = vunpack.c.h.b16 %v65
  %v287 = vunpack.c.l.b16 %v66
  %v288 = vunpack.c.h.b16 %v66
  %v289 = vunpack.c.l.b16 %v67
  %v290 = vunpack.c.h.b16 %v67
  %v291 = vunpack.c.l.b16 %v68
  %v292 = vunpack.c.h.b16 %v68
  %v293 = vunpack.c.l.b16 %v69
  %v294 = vunpack.c.h.b16 %v69
  %v295 = vunpack.c.l.b16 %v70
  %v296 = vunpack.c.h.b16 %v70
  %v297 = vunpack.c.l.b16 %v71
  %v298 = vunpack.c.h.b16 %v71
  %v299 = vunpack.c.l.b16 %v72
  %v300 = vunpack.c.h.b16 %v72
  %v301 = vunpack.c.l.b16 %v73
  %v302 = vunpack.c.h.b16 %v73
  %v303 = vunpack.c.l.b16 %v74
  %v304 = vunpack.c.h.b16 %v74
  %v305 = vunpack.c.l.b16 %v75
  %v306 = vunpack.c.h.b16 %v75
  %v307 = vunpack.c.l.b16 %v76
  %v308 = vunpack.c.h.b16 %v76
  %v309 = vunpack.c.l.b16 %v77
  %v310 = vunpack.c.h.b16 %v77
  %v311 = vunpack.c.l.b16 %v78
  %v312 = vunpack.c.h.b16 %v78
  %v313 = vunpack.c.l.b16 %v79
  %v314 = vunpack.c.h.b16 %v79
  %v315 = vunpack.c.l.b16 %v80
  %v316 = vunpack.c.h.b16 %v80
  %v317 = vunpack.c.l.b16 %v81
  %v318 = vunpack.c.h.b16 %v81
  %v319 = vunpack.c.l.b16 %v82
  %v320 = vunpack.c.h.b16 %v82
  %v321 = vunpack.c.l.b16 %v83
  %v322 = vunpack.c.h.b16 %v83
  %v323 = vunpack.c.l.b16 %v84
  %v324 = vunpack.c.h.b16 %v84
  %v325 = vunpack.c.l.b16 %v85
  %v326 = vunpack.c.h.b16 %v85
  %v327 = vunpack.c.l.b16 %v86
  %v328 = vunpack.c.h.b16 %v86
  %v329 = vunpack.c.l.b16 %v87
  %v330 = vunpack.c.h.b16 %v87
  %v331 = vunpack.c.l.b16 %v88
  %v332 = vunpack.c.h.b16 %v88
  %v333 = vunpack.c.l.b16 %v89
  %v334 = vunpack.c.h.b16 %v89
  %v335 = vunpack.c.l.b16 %v90
  %v336 = vunpack.c.h.b16 %v90
  %v337 = vunpack.c.l.b16 %v91
  %v338 = vunpack.c.h.b16 %v91
  %v339 = vunpack.c.l.b16 %v92
  %v340 = vunpack.c.h.b16 %v92
  %v341 = vunpack.c.l.b16 %v93
  %v342 = vunpack.c.h.b16 %v93
  %v343 = vunpack.c.l.b16 %v94
  %v344 = vunpack.c.h.b16 %v94
  %v345 = vunpack.c.l.b16 %v95
  %v346 = vunpack.c.h.b16 %v95
  %v347 = vunpack.c.l.b16 %v96
  %v348 = vunpack.c.h.b16 %v96
  %v349 = vunpack.c.l.b16 %v97
  %v350 = vunpack.c.h.b16 %v97
  %v351 = vpack.c.b16 %v209, %v207
  %v352 = vpack.c.b16 %v210, %v208
  %v353 = vpack.c.b16 %v213, %v211
  %v354 = vpack.c.b16 %v214, %v212
  %v355 = vpack.c.b16 %v217, %v215
  %v356 = vpack.c.b16 %v218, %v216
  %v357 = vpack.c.b16 %v221, %v219
  %v358 = vpack.c.b16 %v222, %v220
  %v359 = vpack.c.b16 %v225, %v223
  %v360 = vpack.c.b16 %v226, %v224
  %v361 = vpack.c.b16 %v229, %v227
  %v362 = vpack.c.b16 %v230, %v228
  %v363 = vpack.c.b16 %v233, %v231
  %v364 = vpack.c.b16 %v234, %v232
  %v365 = vpack.c.b16 %v237, %v235
  %v366 = vpack.c.b16 %v238, %v236
  %v367 = vpack.c.b16 %v241, %v239
  %v368 = vpack.c.b16 %v242, %v240
  %v369 = vpack.c.b16 %v245, %v243
  %v370 = vpack.c.b16 %v246, %v244
  %v371 = vpack.c.b16 %v249, %v247
  %v372 = vpack.c.b16 %v250, %v248
  %v373 = vpack.c.b16 %v253, %v251
  %v374 = vpack.c.b16 %v254, %v252
  %v375 = vpack.c.b16 %v257, %v255
  %v376 = vpack.c.b16 %v258, %v256
  %v377 = vpack.c.b16 %v261, %v259
  %v378 = vpack.c.b16 %v262, %v260
  %v379 = vpack.c.b16 %v265, %v263
  %v380 = vpack.c.b16 %v266, %v264
  %v381 = vpack.c.b16 %v269, %v267
  %v382 = vpack.c.b16 %v270, %v268
  %v383 = vpack.c.b16 %v273, %v271
  %v384 = vpack.c.b16 %v274, %v272
  %v385 = vpack.c.b16 %v277, %v275
  %v386 = vpack.c.b16 %v278, %v276
  %v387 = vpack.c.b16 %v281, %v279
  %v388 = vpack.c.b16 %v282, %v280
  %v389 = vpack.c.b16 %v285, %v283
  %v390 = vpack.c.b16 %v286, %v284
  %v391 = vpack.c.b16 %v289, %v287
  %v392 = vpack.c.b16 %v290, %v288
  %v393 = vpack.c.b16 %v293, %v291
  %v394 = vpack.c.b16 %v294, %v292
  %v395 = vpack.c.b16 %v297, %v295
  %v396 = vpack.c.b16 %v298, %v296
  %v397 = vpack.c.b16 %v301, %v299
  %v398 = vpack.c.b16 %v302, %v300
  %v399 = vpack.c.b16 %v305, %v303
  %v400 = vpack.c.b16 %v306, %v304
  %v401 = vpack.c.b16 %v309, %v307
  %v402 = vpack.c.b16 %v310, %v308
  %v403 = vpack.c.b16 %v313, %v311
  %v404 = vpack.c.b16 %v314, %v312
  %v405 = vpack.c.b16 %v317, %v315
  %v406 = vpack.c.b16 %v318, %v316
  %v407 = vpack.c.b16 %v321, %v319
  %v408 = vpack.c.b16 %v322, %v320
  %v409 = vpack.c.b16 %v325, %v323
  %v410 = vpack.c.b16 %v326, %v324
  %v411 = vpack.c.b16 %v329, %v327
  %v412 = vpack.c.b16 %v330, %v328
  %v413 = vpack.c.b16 %v333, %v331
  %v414 = vpack.c.b16 %v334, %v332
  %v415 = vpack.c.b16 %v337, %v335
  %v416 = vpack.c.b16 %v338, %v336
  %v417 = vpack.c.b16 %v341, %v339
  %v418 = vpack.c.b16 %v342, %v340
  %v419 = vpack.c.b16 %v345, %v343
  %v420 = vpack.c.b16 %v346, %v344
  %v421 = vpack.c.b16 %v349, %v347
  %v422 = vpack.c.b16 %v350, %v348
  %vm495 = vcmask 523264
  %v497 = vsel %vm495, %v130, 0
  %499 = vmatprep.subr.bf16.mxu0 %v366
  %500 = vmatpush1.bf16.msra.mxu0 %v365
  %501 = vmatprep.subr.bf16.mxu0 %v364
  %502 = vmatpush1.bf16.msra.mxu0 %v363
  %503 = vmatprep.subr.bf16.mxu0 %v362
  %504 = vmatpush1.bf16.msra.mxu0 %v361
  %505 = vmatprep.subr.bf16.mxu0 %v360
  %506 = vmatpush1.bf16.msra.mxu0 %v359
  %507 = vmatprep.subr.bf16.mxu0 %v358
  %508 = vmatpush1.bf16.msra.mxu0 %v357
  %509 = vmatprep.subr.bf16.mxu0 %v356
  %510 = vmatpush1.bf16.msra.mxu0 %v355
  %511 = vmatprep.subr.bf16.mxu0 %v354
  %512 = vmatpush1.bf16.msra.mxu0 %v353
  %513 = vmatprep.subr.bf16.mxu0 %v352
  %514 = vmatpush1.bf16.msra.mxu0 %v351
  %515 = vmatprep.subr.bf16.mxu0 %v382
  %516 = vmatpush2.bf16.msra.mxu0 %v381
  %517 = vmatprep.subr.bf16.mxu0 %v380
  %518 = vmatpush2.bf16.msra.mxu0 %v379
  %519 = vmatprep.subr.bf16.mxu0 %v378
  %520 = vmatpush2.bf16.msra.mxu0 %v377
  %521 = vmatprep.subr.bf16.mxu0 %v376
  %522 = vmatpush2.bf16.msra.mxu0 %v375
  %523 = vmatprep.subr.bf16.mxu0 %v374
  %524 = vmatpush2.bf16.msra.mxu0 %v373
  %525 = vmatprep.subr.bf16.mxu0 %v372
  %526 = vmatpush2.bf16.msra.mxu0 %v371
  %527 = vmatprep.subr.bf16.mxu0 %v370
  %528 = vmatpush2.bf16.msra.mxu0 %v369
  %529 = vmatprep.subr.bf16.mxu0 %v368
  %530 = vmatpush2.bf16.msra.mxu0 %v367
  %531 = vmatprep.mubr.bf16.mxu0 %v127
  %532 = vmatmul.mubr.bf16.gmra.mxu0 %v126
  %v533 = vpop.f32.mrf.mxu0
  %v534 = vadd.f32 %v103, %v533
  %v535 = vpop.f32.mrf.mxu0
  %v536 = vadd.f32 %v107, %v535
  %v537 = vpop.f32.mrf.mxu0
  %v538 = vadd.f32 %v103, %v537
  %v539 = vpop.f32.mrf.mxu0
  %v540 = vadd.f32 %v107, %v539
  %541 = vdwg.mxu0
  %542 = vmatprep.subr.bf16.mxu0 %v398
  %543 = vmatpush1.bf16.msra.mxu0 %v397
  %544 = vmatprep.subr.bf16.mxu0 %v396
  %545 = vmatpush1.bf16.msra.mxu0 %v395
  %546 = vmatprep.subr.bf16.mxu0 %v394
  %547 = vmatpush1.bf16.msra.mxu0 %v393
  %548 = vmatprep.subr.bf16.mxu0 %v392
  %549 = vmatpush1.bf16.msra.mxu0 %v391
  %550 = vmatprep.subr.bf16.mxu0 %v390
  %551 = vmatpush1.bf16.msra.mxu0 %v389
  %552 = vmatprep.subr.bf16.mxu0 %v388
  %553 = vmatpush1.bf16.msra.mxu0 %v387
  %554 = vmatprep.subr.bf16.mxu0 %v386
  %555 = vmatpush1.bf16.msra.mxu0 %v385
  %556 = vmatprep.subr.bf16.mxu0 %v384
  %557 = vmatpush1.bf16.msra.mxu0 %v383
  %558 = vmatprep.subr.bf16.mxu0 %v414
  %559 = vmatpush2.bf16.msra.mxu0 %v413
  %560 = vmatprep.subr.bf16.mxu0 %v412
  %561 = vmatpush2.bf16.msra.mxu0 %v411
  %562 = vmatprep.subr.bf16.mxu0 %v410
  %563 = vmatpush2.bf16.msra.mxu0 %v409
  %564 = vmatprep.subr.bf16.mxu0 %v408
  %565 = vmatpush2.bf16.msra.mxu0 %v407
  %566 = vmatprep.subr.bf16.mxu0 %v406
  %567 = vmatpush2.bf16.msra.mxu0 %v405
  %568 = vmatprep.subr.bf16.mxu0 %v404
  %569 = vmatpush2.bf16.msra.mxu0 %v403
  %570 = vmatprep.subr.bf16.mxu0 %v402
  %571 = vmatpush2.bf16.msra.mxu0 %v401
  %572 = vmatprep.subr.bf16.mxu0 %v400
  %573 = vmatpush2.bf16.msra.mxu0 %v399
  %574 = vmatprep.mubr.bf16.mxu0 %v129
  %575 = vmatmul.mubr.bf16.gmra.mxu0 %v128
  %v576 = vpop.f32.mrf.mxu0
  %v577 = vadd.f32 %v534, %v576
  %v578 = vpop.f32.mrf.mxu0
  %v579 = vadd.f32 %v536, %v578
  %v580 = vpop.f32.mrf.mxu0
  %v581 = vadd.f32 %v538, %v580
  %v582 = vpop.f32.mrf.mxu0
  %v583 = vadd.f32 %v540, %v582
  %584 = vdwg.mxu0
  %585 = vmatprep.subr.bf16.mxu0 0
  %586 = vmatpush1.bf16.msra.mxu0 0
  %587 = vmatprep.subr.bf16.mxu0 0
  %588 = vmatpush1.bf16.msra.mxu0 0
  %589 = vmatprep.subr.bf16.mxu0 0
  %590 = vmatpush1.bf16.msra.mxu0 0
  %591 = vmatprep.subr.bf16.mxu0 0
  %592 = vmatpush1.bf16.msra.mxu0 0
  %593 = vmatprep.subr.bf16.mxu0 %v422
  %594 = vmatpush1.bf16.msra.mxu0 %v421
  %595 = vmatprep.subr.bf16.mxu0 %v420
  %596 = vmatpush1.bf16.msra.mxu0 %v419
  %597 = vmatprep.subr.bf16.mxu0 %v418
  %598 = vmatpush1.bf16.msra.mxu0 %v417
  %599 = vmatprep.subr.bf16.mxu0 %v416
  %600 = vmatpush1.bf16.msra.mxu0 %v415
  %601 = vmatprep.subr.bf16.mxu0 0
  %602 = vmatpush2.bf16.msra.mxu0 0
  %603 = vmatprep.subr.bf16.mxu0 0
  %604 = vmatpush2.bf16.msra.mxu0 0
  %605 = vmatprep.subr.bf16.mxu0 0
  %606 = vmatpush2.bf16.msra.mxu0 0
  %607 = vmatprep.subr.bf16.mxu0 0
  %608 = vmatpush2.bf16.msra.mxu0 0
  %609 = vmatprep.subr.bf16.mxu0 0
  %610 = vmatpush2.bf16.msra.mxu0 0
  %611 = vmatprep.subr.bf16.mxu0 0
  %612 = vmatpush2.bf16.msra.mxu0 0
  %613 = vmatprep.subr.bf16.mxu0 0
  %614 = vmatpush2.bf16.msra.mxu0 0
  %615 = vmatprep.subr.bf16.mxu0 0
  %616 = vmatpush2.bf16.msra.mxu0 0
  %617 = vmatprep.mubr.bf16.mxu0 0
  %618 = vmatmul.mubr.bf16.gmra.mxu0 %v497
  %v619 = vpop.f32.mrf.mxu0
  %v620 = vadd.f32 %v577, %v619
  %v621 = vpop.f32.mrf.mxu0
  %v622 = vadd.f32 %v579, %v621
  %v623 = vpop.f32.mrf.mxu0
  %v624 = vadd.f32 %v581, %v623
  %v625 = vpop.f32.mrf.mxu0
  %v626 = vadd.f32 %v583, %v625
  %627 = vdwg.mxu0
  %v628 = vld [vmem:[%s3] sm:$0xff]
  %v629 = vld [vmem:[%s3 + $0x8] sm:$0xff]
  %631 = vset.pattern.permute.xlu0 0
  %632 = vperm.xlu0 %631, %v628
  %v633 = vpop.permute.xlu0 %632
  %636 = vset.pattern.permute.xlu0 0
  %637 = vperm.xlu0 %636, %v629
  %v638 = vpop.permute.xlu0 %637
  %v640 = vmul.f32 %v620, %v633
  %v641 = vmul.f32 %v622, %v633
  %v642 = vmul.f32 %v624, %v638
  %v643 = vmul.f32 %v626, %v638
  %v644 = vadd.f32 %v640, %v642
  %v645 = vrot.slane %v644, 4
  %v646 = vadd.f32 %v644, %v645
  %v647 = vrot.slane %v646, 2
  %v648 = vadd.f32 %v646, %v647
  %v649 = vrot.slane %v648, 1
  %v650 = vadd.f32 %v648, %v649
  %v651 = vadd.f32 %v641, %v643
  %v652 = vrot.slane %v651, 4
  %v653 = vadd.f32 %v651, %v652
  %v654 = vrot.slane %v653, 2
  %v655 = vadd.f32 %v653, %v654
  %v656 = vrot.slane %v655, 1
  %v657 = vadd.f32 %v655, %v656
  %v658 = vmul.f32 %v640, %v620
  %v659 = vmul.f32 %v641, %v622
  %v660 = vmul.f32 %v642, %v624
  %v661 = vmul.f32 %v643, %v626
  %v662 = vadd.f32 %v658, %v660
  %v663 = vrot.slane %v662, 4
  %v664 = vadd.f32 %v662, %v663
  %v665 = vrot.slane %v664, 2
  %v666 = vadd.f32 %v664, %v665
  %v667 = vrot.slane %v666, 1
  %v668 = vadd.f32 %v666, %v667
  %v669 = vadd.f32 %v659, %v661
  %v670 = vrot.slane %v669, 4
  %v671 = vadd.f32 %v669, %v670
  %v672 = vrot.slane %v671, 2
  %v673 = vadd.f32 %v671, %v672
  %v674 = vrot.slane %v673, 1
  %v675 = vadd.f32 %v673, %v674
  %vm676 = vcmask 1040384
  %v677 = vsel %vm676, %v650, %v668
  %v678 = vsel %vm676, %v657, %v675
  %v681 = vcombine.low %v677, %v678
  %v683 = vunpack.c.l.s4 1983009808
  %v684 = vunpack.c.0.s8 %v683
  %v685 = vlaneseq
  %v686 = vshrl.u32 %v685, 7
  %v687 = vsub.s32 %v684, %v686
  %v688 = vrot.slane %v681, %v687
  %690 = vst [vmem:[%s5] sm:$0xf] %v688
  %v691 = vpack.c.bf16 %v624, %v620
  %v692 = vpack.c.bf16 %v626, %v622
  %v695 = vunpack.c.l.b16 %v691
  %v696 = vunpack.c.l.b16 %v692
  %v697 = vunpack.c.h.b16 %v691
  %v698 = vunpack.c.h.b16 %v692
  %v699 = vpack.c.b16 %v696, %v695
  %v700 = vpack.c.b16 %v698, %v697
  %703 = vst [vmem:[%s4] sm:$0xff] %v699
  %704 = vst [vmem:[%s4 + $0x8] sm:$0xff] %v700
  // Predicated region
  $region18: #{forward.16} parent=0 // pred_check
    _
  $region19: #{forward.16} parent=0 // pred_check_branch
    %706 = sbr.rel (0) target = $region21
  $region20: #{forward.16} parent=0 // pred_region
    _
  $region21: #{forward.16} parent=0 // pred_fallthru
    _
  // Predicated region
  $region22: #{forward.16} parent=0 // pred_check
    _
  $region23: #{forward.16} parent=0 // pred_check_branch
    %708 = sbr.rel (0) target = $region25
  $region24: #{forward.16} parent=0 // pred_region
    _
  $region25: #{forward.16} parent=0 // pred_fallthru
    _
  // Predicated region
  $region26: #{forward.16} parent=0 // pred_check
    _
  $region27: #{forward.16} parent=0 // pred_check_branch
    %710 = sbr.rel (0) target = $region29
  $region28: #{forward.16} parent=0 // pred_region
    _
  $region29: #{forward.16} parent=0 // pred_fallthru
    _
  // Predicated region
  $region30: #{forward.16} parent=0 // pred_check
    _
  $region31: #{forward.16} parent=0 // pred_check_branch
    %712 = sbr.rel (0) target = $region33
  $region32: #{forward.16} parent=0 // pred_region
    _
  $region33: #{forward.16} parent=0 // pred_fallthru
    _

// kernel: squeeze.230
$region0: #{squeeze.230}
  %s0 = inlined_call_operand.vmem [shape: f32[128], index: 0, kind: input, shape index: {}]
  %s1 = inlined_call_operand.vmem [shape: f32[4,32], index: 1, kind: output, shape index: {}]
  $region1: #{squeeze.230} parent=0
    #allocation0 [shape = 'u8[4096]{0}', space=vmem, size = 0x1000, scoped, tag = 'scoped mem for output reshape']
    #allocation1 [shape = 'u8[4096]{0}', space=vmem, size = 0x1000, scoped, tag = 'scoped mem for input reshape']
    %s3 = sshll.u32 1, 1
    %s4 = ssub.s32 %s3, 1
    %v5 = vld [vmem:[%s0] sm:%s4]
    %6 = vst [vmem:[#allocation1] sm:%s4] %v5
    %v7 = vld [vmem:[#allocation1] sm:$0x1]
    %vm8 = vcmask 261120
    %9 = vst.msk [vmem:[#allocation0] sm:$0x1] %vm8, %v7
    %v10 = vld [vmem:[#allocation1] sm:$0x1]
    %11 = vrot.lane.b32.xlu0 %v10, 96
    %v12 = vpop.permute.xlu0 %11
    %vm13 = vcmask 261120
    %s14 = scalar_lea.vmem [#allocation0], 1
    %15 = vst.msk [vmem:[%s14] sm:$0x1] %vm13, %v12
    %v16 = vld [vmem:[#allocation1] sm:$0x1]
    %17 = vrot.lane.b32.xlu0 %v16, 64
    %v18 = vpop.permute.xlu0 %17
    %vm19 = vcmask 261120
    %s20 = scalar_lea.vmem [#allocation0], 2
    %21 = vst.msk [vmem:[%s20] sm:$0x1] %vm19, %v18
    %v22 = vld [vmem:[#allocation1] sm:$0x1]
    %23 = vrot.lane.b32.xlu0 %v22, 32
    %v24 = vpop.permute.xlu0 %23
    %vm25 = vcmask 261120
    %s26 = scalar_lea.vmem [#allocation0], 3
    %27 = vst.msk [vmem:[%s26] sm:$0x1] %vm25, %v24
    %s29 = sshll.u32 1, 4
    %s30 = ssub.s32 %s29, 1
    %v32 = vld [vmem:[#allocation0] sm:%s30]
    %s33 = sshll.u32 1, 4
    %s34 = ssub.s32 %s33, 1
    %35 = vst [vmem:[%s1] sm:%s34] %v32

// kernel: forward.17
$region0: #{forward.17}
  #allocation0 [shape = 'u32[]', space=smem, size = 0x4, offset = 0x4, fixed_abs, tag = 'smem constant byte address 0x4 - core index']
  #allocation1 [shape = 'u32[144,128]{1,0:T(1,128)}', space=vmem, size = 0x12000, scoped, tag = 'internal scratch']
  %s0 = inlined_call_operand.vmem [shape: bf16[16,576], index: 0, kind: input, shape index: {}]
  %s1 = inlined_call_operand.vmem [shape: bf16[16,576], index: 1, kind: input, shape index: {}]
  %s2 = inlined_call_operand.vmem [shape: bf16[576,128], index: 2, kind: input, shape index: {}]
  %s3 = inlined_call_operand.vmem [shape: bf16[576,128], index: 3, kind: input, shape index: {}]
  %s4 = inlined_call_operand.vmem [shape: f32[1,128], index: 4, kind: input, shape index: {}]
  %s5 = inlined_call_operand.vmem [shape: f32[16,1], index: 5, kind: input, shape index: {}]
  %s6 = inlined_call_operand.vmem [shape: bf16[16,128], index: 6, kind: output, shape index: {0}]
  %s7 = inlined_call_operand.vmem [shape: f32[1,2,128], index: 7, kind: output, shape index: {1}]
  %8 = xla_tuple %s6, %s7
  %s9 = sld [smem:[#allocation0]]
  $region42: #{forward.17} parent=0
    _
  %s11 = ssub.s32 1, %s9
  %s12 = scalar_select 0, %s11, %s9
  // Predicated region
  $region2: #{forward.17} parent=0 // pred_check
    _
  $region3: #{forward.17} parent=0 // pred_check_branch
    %14 = sbr.rel (0) target = $region5
  $region4: #{forward.17} parent=0 // pred_region
    _
  $region5: #{forward.17} parent=0 // pred_fallthru
    _
  // Predicated region
  $region6: #{forward.17} parent=0 // pred_check
    _
  $region7: #{forward.17} parent=0 // pred_check_branch
    %16 = sbr.rel (0) target = $region9
  $region8: #{forward.17} parent=0 // pred_region
    _
  $region9: #{forward.17} parent=0 // pred_fallthru
    _
  // Predicated region
  $region10: #{forward.17} parent=0 // pred_check
    _
  $region11: #{forward.17} parent=0 // pred_check_branch
    %18 = sbr.rel (0) target = $region13
  $region12: #{forward.17} parent=0 // pred_region
    _
  $region13: #{forward.17} parent=0 // pred_fallthru
    _
  // Predicated region
  $region14: #{forward.17} parent=0 // pred_check
    _
  $region15: #{forward.17} parent=0 // pred_check_branch
    %20 = sbr.rel (0) target = $region17
  $region16: #{forward.17} parent=0 // pred_region
    _
  $region17: #{forward.17} parent=0 // pred_fallthru
    _
  // Predicated region
  $region18: #{forward.17} parent=0 // pred_check
    _
  $region19: #{forward.17} parent=0 // pred_check_branch
    %22 = sbr.rel (0) target = $region21
  $region20: #{forward.17} parent=0 // pred_region
    _
  $region21: #{forward.17} parent=0 // pred_fallthru
    _
  // Predicated region
  $region22: #{forward.17} parent=0 // pred_check
    _
  $region23: #{forward.17} parent=0 // pred_check_branch
    %24 = sbr.rel (0) target = $region25
  $region24: #{forward.17} parent=0 // pred_region
    _
  $region25: #{forward.17} parent=0 // pred_fallthru
    _
  %v26 = vld [vmem:[%s0] sm:$0xff]
  %v27 = vld [vmem:[%s0 + $0x8] sm:$0xff]
  %v28 = vld [vmem:[%s0 + $0x10] sm:$0xf]
  %v29 = vld [vmem:[%s0 + $0x14] sm:$0xff]
  %v30 = vld [vmem:[%s0 + $0x1c] sm:$0xff]
  %v31 = vld [vmem:[%s0 + $0x24] sm:$0xf]
  %v32 = vld [vmem:[%s2] sm:$0xf]
  %v33 = vld [vmem:[%s2 + $0x4] sm:$0xf]
  %v34 = vld [vmem:[%s2 + $0x8] sm:$0xf]
  %v35 = vld [vmem:[%s2 + $0xc] sm:$0xf]
  %v36 = vld [vmem:[%s2 + $0x10] sm:$0xf]
  %v37 = vld [vmem:[%s2 + $0x14] sm:$0xf]
  %v38 = vld [vmem:[%s2 + $0x18] sm:$0xf]
  %v39 = vld [vmem:[%s2 + $0x1c] sm:$0xf]
  %v40 = vld [vmem:[%s2 + $0x20] sm:$0xf]
  %v41 = vld [vmem:[%s2 + $0x24] sm:$0xf]
  %v42 = vld [vmem:[%s2 + $0x28] sm:$0xf]
  %v43 = vld [vmem:[%s2 + $0x2c] sm:$0xf]
  %v44 = vld [vmem:[%s2 + $0x30] sm:$0xf]
  %v45 = vld [vmem:[%s2 + $0x34] sm:$0xf]
  %v46 = vld [vmem:[%s2 + $0x38] sm:$0xf]
  %v47 = vld [vmem:[%s2 + $0x3c] sm:$0xf]
  %v48 = vld [vmem:[%s2 + $0x40] sm:$0xf]
  %v49 = vld [vmem:[%s2 + $0x44] sm:$0xf]
  %v50 = vld [vmem:[%s2 + $0x48] sm:$0xf]
  %v51 = vld [vmem:[%s2 + $0x4c] sm:$0xf]
  %v52 = vld [vmem:[%s2 + $0x50] sm:$0xf]
  %v53 = vld [vmem:[%s2 + $0x54] sm:$0xf]
  %v54 = vld [vmem:[%s2 + $0x58] sm:$0xf]
  %v55 = vld [vmem:[%s2 + $0x5c] sm:$0xf]
  %v56 = vld [vmem:[%s2 + $0x60] sm:$0xf]
  %v57 = vld [vmem:[%s2 + $0x64] sm:$0xf]
  %v58 = vld [vmem:[%s2 + $0x68] sm:$0xf]
  %v59 = vld [vmem:[%s2 + $0x6c] sm:$0xf]
  %v60 = vld [vmem:[%s2 + $0x70] sm:$0xf]
  %v61 = vld [vmem:[%s2 + $0x74] sm:$0xf]
  %v62 = vld [vmem:[%s2 + $0x78] sm:$0xf]
  %v63 = vld [vmem:[%s2 + $0x7c] sm:$0xf]
  %v64 = vld [vmem:[%s2 + $0x80] sm:$0xf]
  %v65 = vld [vmem:[%s2 + $0x84] sm:$0xf]
  %v66 = vld [vmem:[%s2 + $0x88] sm:$0xf]
  %v67 = vld [vmem:[%s2 + $0x8c] sm:$0xf]
  %v68 = vld [vmem:[%s2 + $0x90] sm:$0xf]
  %v69 = vld [vmem:[%s2 + $0x94] sm:$0xf]
  %v70 = vld [vmem:[%s2 + $0x98] sm:$0xf]
  %v71 = vld [vmem:[%s2 + $0x9c] sm:$0xf]
  %v72 = vld [vmem:[%s2 + $0xa0] sm:$0xf]
  %v73 = vld [vmem:[%s2 + $0xa4] sm:$0xf]
  %v74 = vld [vmem:[%s2 + $0xa8] sm:$0xf]
  %v75 = vld [vmem:[%s2 + $0xac] sm:$0xf]
  %v76 = vld [vmem:[%s2 + $0xb0] sm:$0xf]
  %v77 = vld [vmem:[%s2 + $0xb4] sm:$0xf]
  %v78 = vld [vmem:[%s2 + $0xb8] sm:$0xf]
  %v79 = vld [vmem:[%s2 + $0xbc] sm:$0xf]
  %v80 = vld [vmem:[%s2 + $0xc0] sm:$0xf]
  %v81 = vld [vmem:[%s2 + $0xc4] sm:$0xf]
  %v82 = vld [vmem:[%s2 + $0xc8] sm:$0xf]
  %v83 = vld [vmem:[%s2 + $0xcc] sm:$0xf]
  %v84 = vld [vmem:[%s2 + $0xd0] sm:$0xf]
  %v85 = vld [vmem:[%s2 + $0xd4] sm:$0xf]
  %v86 = vld [vmem:[%s2 + $0xd8] sm:$0xf]
  %v87 = vld [vmem:[%s2 + $0xdc] sm:$0xf]
  %v88 = vld [vmem:[%s2 + $0xe0] sm:$0xf]
  %v89 = vld [vmem:[%s2 + $0xe4] sm:$0xf]
  %v90 = vld [vmem:[%s2 + $0xe8] sm:$0xf]
  %v91 = vld [vmem:[%s2 + $0xec] sm:$0xf]
  %v92 = vld [vmem:[%s2 + $0xf0] sm:$0xf]
  %v93 = vld [vmem:[%s2 + $0xf4] sm:$0xf]
  %v94 = vld [vmem:[%s2 + $0xf8] sm:$0xf]
  %v95 = vld [vmem:[%s2 + $0xfc] sm:$0xf]
  %v96 = vld [vmem:[%s2 + $0x100] sm:$0xf]
  %v97 = vld [vmem:[%s2 + $0x104] sm:$0xf]
  %v98 = vld [vmem:[%s2 + $0x108] sm:$0xf]
  %v99 = vld [vmem:[%s2 + $0x10c] sm:$0xf]
  %v100 = vld [vmem:[%s2 + $0x110] sm:$0xf]
  %v101 = vld [vmem:[%s2 + $0x114] sm:$0xf]
  %v102 = vld [vmem:[%s2 + $0x118] sm:$0xf]
  %v103 = vld [vmem:[%s2 + $0x11c] sm:$0xf]
  %v104 = vld [vmem:[%s1] sm:$0xff]
  %v105 = vld [vmem:[%s1 + $0x8] sm:$0xff]
  %v106 = vld [vmem:[%s1 + $0x10] sm:$0xf]
  %v107 = vld [vmem:[%s1 + $0x14] sm:$0xff]
  %v108 = vld [vmem:[%s1 + $0x1c] sm:$0xff]
  %v109 = vld [vmem:[%s1 + $0x24] sm:$0xf]
  %v110 = vld [vmem:[%s3] sm:$0xf]
  %v111 = vld [vmem:[%s3 + $0x4] sm:$0xf]
  %v112 = vld [vmem:[%s3 + $0x8] sm:$0xf]
  %v113 = vld [vmem:[%s3 + $0xc] sm:$0xf]
  %v114 = vld [vmem:[%s3 + $0x10] sm:$0xf]
  %v115 = vld [vmem:[%s3 + $0x14] sm:$0xf]
  %v116 = vld [vmem:[%s3 + $0x18] sm:$0xf]
  %v117 = vld [vmem:[%s3 + $0x1c] sm:$0xf]
  %v118 = vld [vmem:[%s3 + $0x20] sm:$0xf]
  %v119 = vld [vmem:[%s3 + $0x24] sm:$0xf]
  %v120 = vld [vmem:[%s3 + $0x28] sm:$0xf]
  %v121 = vld [vmem:[%s3 + $0x2c] sm:$0xf]
  %v122 = vld [vmem:[%s3 + $0x30] sm:$0xf]
  %v123 = vld [vmem:[%s3 + $0x34] sm:$0xf]
  %v124 = vld [vmem:[%s3 + $0x38] sm:$0xf]
  %v125 = vld [vmem:[%s3 + $0x3c] sm:$0xf]
  %v126 = vld [vmem:[%s3 + $0x40] sm:$0xf]
  %v127 = vld [vmem:[%s3 + $0x44] sm:$0xf]
  %v128 = vld [vmem:[%s3 + $0x48] sm:$0xf]
  %v129 = vld [vmem:[%s3 + $0x4c] sm:$0xf]
  %v130 = vld [vmem:[%s3 + $0x50] sm:$0xf]
  %v131 = vld [vmem:[%s3 + $0x54] sm:$0xf]
  %v132 = vld [vmem:[%s3 + $0x58] sm:$0xf]
  %v133 = vld [vmem:[%s3 + $0x5c] sm:$0xf]
  %v134 = vld [vmem:[%s3 + $0x60] sm:$0xf]
  %v135 = vld [vmem:[%s3 + $0x64] sm:$0xf]
  %v136 = vld [vmem:[%s3 + $0x68] sm:$0xf]
  %v137 = vld [vmem:[%s3 + $0x6c] sm:$0xf]
  %v138 = vld [vmem:[%s3 + $0x70] sm:$0xf]
  %v139 = vld [vmem:[%s3 + $0x74] sm:$0xf]
  %v140 = vld [vmem:[%s3 + $0x78] sm:$0xf]
  %v141 = vld [vmem:[%s3 + $0x7c] sm:$0xf]
  %v142 = vld [vmem:[%s3 + $0x80] sm:$0xf]
  %v143 = vld [vmem:[%s3 + $0x84] sm:$0xf]
  %v144 = vld [vmem:[%s3 + $0x88] sm:$0xf]
  %v145 = vld [vmem:[%s3 + $0x8c] sm:$0xf]
  %v146 = vld [vmem:[%s3 + $0x90] sm:$0xf]
  %v147 = vld [vmem:[%s3 + $0x94] sm:$0xf]
  %v148 = vld [vmem:[%s3 + $0x98] sm:$0xf]
  %v149 = vld [vmem:[%s3 + $0x9c] sm:$0xf]
  %v150 = vld [vmem:[%s3 + $0xa0] sm:$0xf]
  %v151 = vld [vmem:[%s3 + $0xa4] sm:$0xf]
  %v152 = vld [vmem:[%s3 + $0xa8] sm:$0xf]
  %v153 = vld [vmem:[%s3 + $0xac] sm:$0xf]
  %v154 = vld [vmem:[%s3 + $0xb0] sm:$0xf]
  %v155 = vld [vmem:[%s3 + $0xb4] sm:$0xf]
  %v156 = vld [vmem:[%s3 + $0xb8] sm:$0xf]
  %v157 = vld [vmem:[%s3 + $0xbc] sm:$0xf]
  %v158 = vld [vmem:[%s3 + $0xc0] sm:$0xf]
  %v159 = vld [vmem:[%s3 + $0xc4] sm:$0xf]
  %v160 = vld [vmem:[%s3 + $0xc8] sm:$0xf]
  %v161 = vld [vmem:[%s3 + $0xcc] sm:$0xf]
  %v162 = vld [vmem:[%s3 + $0xd0] sm:$0xf]
  %v163 = vld [vmem:[%s3 + $0xd4] sm:$0xf]
  %v164 = vld [vmem:[%s3 + $0xd8] sm:$0xf]
  %v165 = vld [vmem:[%s3 + $0xdc] sm:$0xf]
  %v166 = vld [vmem:[%s3 + $0xe0] sm:$0xf]
  %v167 = vld [vmem:[%s3 + $0xe4] sm:$0xf]
  %v168 = vld [vmem:[%s3 + $0xe8] sm:$0xf]
  %v169 = vld [vmem:[%s3 + $0xec] sm:$0xf]
  %v170 = vld [vmem:[%s3 + $0xf0] sm:$0xf]
  %v171 = vld [vmem:[%s3 + $0xf4] sm:$0xf]
  %v172 = vld [vmem:[%s3 + $0xf8] sm:$0xf]
  %v173 = vld [vmem:[%s3 + $0xfc] sm:$0xf]
  %v174 = vld [vmem:[%s3 + $0x100] sm:$0xf]
  %v175 = vld [vmem:[%s3 + $0x104] sm:$0xf]
  %v176 = vld [vmem:[%s3 + $0x108] sm:$0xf]
  %v177 = vld [vmem:[%s3 + $0x10c] sm:$0xf]
  %v178 = vld [vmem:[%s3 + $0x110] sm:$0xf]
  %v179 = vld [vmem:[%s3 + $0x114] sm:$0xf]
  %v180 = vld [vmem:[%s3 + $0x118] sm:$0xf]
  %v181 = vld [vmem:[%s3 + $0x11c] sm:$0xf]
  %v188 = vunpack.c.l.b16 %v104
  %v189 = vunpack.c.h.b16 %v104
  %v190 = vunpack.c.l.b16 %v105
  %v191 = vunpack.c.h.b16 %v105
  %v192 = vunpack.c.l.b16 %v106
  %v193 = vunpack.c.l.b16 %v107
  %v194 = vunpack.c.h.b16 %v107
  %v195 = vunpack.c.l.b16 %v108
  %v196 = vunpack.c.h.b16 %v108
  %v197 = vunpack.c.l.b16 %v109
  %v198 = vpack.c.b16 %v193, %v188
  %v199 = vpack.c.b16 %v194, %v189
  %v200 = vpack.c.b16 %v195, %v190
  %v201 = vpack.c.b16 %v196, %v191
  %v202 = vpack.c.b16 %v197, %v192
  %v279 = vunpack.c.l.b16 %v110
  %v280 = vunpack.c.l.b16 %v111
  %v281 = vunpack.c.l.b16 %v112
  %v282 = vunpack.c.l.b16 %v113
  %v283 = vunpack.c.l.b16 %v114
  %v284 = vunpack.c.l.b16 %v115
  %v285 = vunpack.c.l.b16 %v116
  %v286 = vunpack.c.l.b16 %v117
  %v287 = vunpack.c.l.b16 %v118
  %v288 = vunpack.c.l.b16 %v119
  %v289 = vunpack.c.l.b16 %v120
  %v290 = vunpack.c.l.b16 %v121
  %v291 = vunpack.c.l.b16 %v122
  %v292 = vunpack.c.l.b16 %v123
  %v293 = vunpack.c.l.b16 %v124
  %v294 = vunpack.c.l.b16 %v125
  %v295 = vunpack.c.l.b16 %v126
  %v296 = vunpack.c.l.b16 %v127
  %v297 = vunpack.c.l.b16 %v128
  %v298 = vunpack.c.l.b16 %v129
  %v299 = vunpack.c.l.b16 %v130
  %v300 = vunpack.c.l.b16 %v131
  %v301 = vunpack.c.l.b16 %v132
  %v302 = vunpack.c.l.b16 %v133
  %v303 = vunpack.c.l.b16 %v134
  %v304 = vunpack.c.l.b16 %v135
  %v305 = vunpack.c.l.b16 %v136
  %v306 = vunpack.c.l.b16 %v137
  %v307 = vunpack.c.l.b16 %v138
  %v308 = vunpack.c.l.b16 %v139
  %v309 = vunpack.c.l.b16 %v140
  %v310 = vunpack.c.l.b16 %v141
  %v311 = vunpack.c.l.b16 %v142
  %v312 = vunpack.c.l.b16 %v143
  %v313 = vunpack.c.l.b16 %v144
  %v314 = vunpack.c.l.b16 %v145
  %v315 = vunpack.c.l.b16 %v146
  %v316 = vunpack.c.l.b16 %v147
  %v317 = vunpack.c.l.b16 %v148
  %v318 = vunpack.c.l.b16 %v149
  %v319 = vunpack.c.l.b16 %v150
  %v320 = vunpack.c.l.b16 %v151
  %v321 = vunpack.c.l.b16 %v152
  %v322 = vunpack.c.l.b16 %v153
  %v323 = vunpack.c.l.b16 %v154
  %v324 = vunpack.c.l.b16 %v155
  %v325 = vunpack.c.l.b16 %v156
  %v326 = vunpack.c.l.b16 %v157
  %v327 = vunpack.c.l.b16 %v158
  %v328 = vunpack.c.l.b16 %v159
  %v329 = vunpack.c.l.b16 %v160
  %v330 = vunpack.c.l.b16 %v161
  %v331 = vunpack.c.l.b16 %v162
  %v332 = vunpack.c.l.b16 %v163
  %v333 = vunpack.c.l.b16 %v164
  %v334 = vunpack.c.l.b16 %v165
  %v335 = vunpack.c.l.b16 %v166
  %v336 = vunpack.c.l.b16 %v167
  %v337 = vunpack.c.l.b16 %v168
  %v338 = vunpack.c.l.b16 %v169
  %v339 = vunpack.c.l.b16 %v170
  %v340 = vunpack.c.l.b16 %v171
  %v341 = vunpack.c.l.b16 %v172
  %v342 = vunpack.c.l.b16 %v173
  %v343 = vunpack.c.l.b16 %v174
  %v344 = vunpack.c.l.b16 %v175
  %v345 = vunpack.c.l.b16 %v176
  %v346 = vunpack.c.l.b16 %v177
  %v347 = vunpack.c.l.b16 %v178
  %v348 = vunpack.c.l.b16 %v179
  %v349 = vunpack.c.l.b16 %v180
  %v350 = vunpack.c.l.b16 %v181
  %v351 = vpack.c.b16 %v280, %v279
  %v352 = vpack.c.b16 %v282, %v281
  %v353 = vpack.c.b16 %v284, %v283
  %v354 = vpack.c.b16 %v286, %v285
  %v355 = vpack.c.b16 %v288, %v287
  %v356 = vpack.c.b16 %v290, %v289
  %v357 = vpack.c.b16 %v292, %v291
  %v358 = vpack.c.b16 %v294, %v293
  %v359 = vpack.c.b16 %v296, %v295
  %v360 = vpack.c.b16 %v298, %v297
  %v361 = vpack.c.b16 %v300, %v299
  %v362 = vpack.c.b16 %v302, %v301
  %v363 = vpack.c.b16 %v304, %v303
  %v364 = vpack.c.b16 %v306, %v305
  %v365 = vpack.c.b16 %v308, %v307
  %v366 = vpack.c.b16 %v310, %v309
  %v367 = vpack.c.b16 %v312, %v311
  %v368 = vpack.c.b16 %v314, %v313
  %v369 = vpack.c.b16 %v316, %v315
  %v370 = vpack.c.b16 %v318, %v317
  %v371 = vpack.c.b16 %v320, %v319
  %v372 = vpack.c.b16 %v322, %v321
  %v373 = vpack.c.b16 %v324, %v323
  %v374 = vpack.c.b16 %v326, %v325
  %v375 = vpack.c.b16 %v328, %v327
  %v376 = vpack.c.b16 %v330, %v329
  %v377 = vpack.c.b16 %v332, %v331
  %v378 = vpack.c.b16 %v334, %v333
  %v379 = vpack.c.b16 %v336, %v335
  %v380 = vpack.c.b16 %v338, %v337
  %v381 = vpack.c.b16 %v340, %v339
  %v382 = vpack.c.b16 %v342, %v341
  %v383 = vpack.c.b16 %v344, %v343
  %v384 = vpack.c.b16 %v346, %v345
  %v385 = vpack.c.b16 %v348, %v347
  %v386 = vpack.c.b16 %v350, %v349
  %vm423 = vcmask 523264
  %v425 = vsel %vm423, %v202, 0
  %427 = vmatprep.subr.bf16.mxu0 0
  %428 = vmatpush1.bf16.msra.mxu0 %v358
  %429 = vmatprep.subr.bf16.mxu0 0
  %430 = vmatpush1.bf16.msra.mxu0 %v357
  %431 = vmatprep.subr.bf16.mxu0 0
  %432 = vmatpush1.bf16.msra.mxu0 %v356
  %433 = vmatprep.subr.bf16.mxu0 0
  %434 = vmatpush1.bf16.msra.mxu0 %v355
  %435 = vmatprep.subr.bf16.mxu0 0
  %436 = vmatpush1.bf16.msra.mxu0 %v354
  %437 = vmatprep.subr.bf16.mxu0 0
  %438 = vmatpush1.bf16.msra.mxu0 %v353
  %439 = vmatprep.subr.bf16.mxu0 0
  %440 = vmatpush1.bf16.msra.mxu0 %v352
  %441 = vmatprep.subr.bf16.mxu0 0
  %442 = vmatpush1.bf16.msra.mxu0 %v351
  %443 = vmatprep.subr.bf16.mxu0 0
  %444 = vmatpush2.bf16.msra.mxu0 %v366
  %445 = vmatprep.subr.bf16.mxu0 0
  %446 = vmatpush2.bf16.msra.mxu0 %v365
  %447 = vmatprep.subr.bf16.mxu0 0
  %448 = vmatpush2.bf16.msra.mxu0 %v364
  %449 = vmatprep.subr.bf16.mxu0 0
  %450 = vmatpush2.bf16.msra.mxu0 %v363
  %451 = vmatprep.subr.bf16.mxu0 0
  %452 = vmatpush2.bf16.msra.mxu0 %v362
  %453 = vmatprep.subr.bf16.mxu0 0
  %454 = vmatpush2.bf16.msra.mxu0 %v361
  %455 = vmatprep.subr.bf16.mxu0 0
  %456 = vmatpush2.bf16.msra.mxu0 %v360
  %457 = vmatprep.subr.bf16.mxu0 0
  %458 = vmatpush2.bf16.msra.mxu0 %v359
  %459 = vmatprep.mubr.bf16.mxu0 %v199
  %460 = vmatmul.mubr.bf16.gmra.mxu0 %v198
  %v461 = vpop.f32.mrf.mxu0
  %v462 = vadd.f32 0.0, %v461
  %v463 = vpop.f32.mrf.mxu0
  %v464 = vpop.f32.mrf.mxu0
  %v465 = vadd.f32 0.0, %v464
  %v466 = vpop.f32.mrf.mxu0
  %467 = vdwg.mxu0
  %468 = vmatprep.subr.bf16.mxu0 0
  %469 = vmatpush1.bf16.msra.mxu0 %v374
  %470 = vmatprep.subr.bf16.mxu0 0
  %471 = vmatpush1.bf16.msra.mxu0 %v373
  %472 = vmatprep.subr.bf16.mxu0 0
  %473 = vmatpush1.bf16.msra.mxu0 %v372
  %474 = vmatprep.subr.bf16.mxu0 0
  %475 = vmatpush1.bf16.msra.mxu0 %v371
  %476 = vmatprep.subr.bf16.mxu0 0
  %477 = vmatpush1.bf16.msra.mxu0 %v370
  %478 = vmatprep.subr.bf16.mxu0 0
  %479 = vmatpush1.bf16.msra.mxu0 %v369
  %480 = vmatprep.subr.bf16.mxu0 0
  %481 = vmatpush1.bf16.msra.mxu0 %v368
  %482 = vmatprep.subr.bf16.mxu0 0
  %483 = vmatpush1.bf16.msra.mxu0 %v367
  %484 = vmatprep.subr.bf16.mxu0 0
  %485 = vmatpush2.bf16.msra.mxu0 %v382
  %486 = vmatprep.subr.bf16.mxu0 0
  %487 = vmatpush2.bf16.msra.mxu0 %v381
  %488 = vmatprep.subr.bf16.mxu0 0
  %489 = vmatpush2.bf16.msra.mxu0 %v380
  %490 = vmatprep.subr.bf16.mxu0 0
  %491 = vmatpush2.bf16.msra.mxu0 %v379
  %492 = vmatprep.subr.bf16.mxu0 0
  %493 = vmatpush2.bf16.msra.mxu0 %v378
  %494 = vmatprep.subr.bf16.mxu0 0
  %495 = vmatpush2.bf16.msra.mxu0 %v377
  %496 = vmatprep.subr.bf16.mxu0 0
  %497 = vmatpush2.bf16.msra.mxu0 %v376
  %498 = vmatprep.subr.bf16.mxu0 0
  %499 = vmatpush2.bf16.msra.mxu0 %v375
  %500 = vmatprep.mubr.bf16.mxu0 %v201
  %501 = vmatmul.mubr.bf16.gmra.mxu0 %v200
  %v502 = vpop.f32.mrf.mxu0
  %v503 = vadd.f32 %v462, %v502
  %v504 = vpop.f32.mrf.mxu0
  %v505 = vpop.f32.mrf.mxu0
  %v506 = vadd.f32 %v465, %v505
  %v507 = vpop.f32.mrf.mxu0
  %508 = vdwg.mxu0
  %509 = vmatprep.subr.bf16.mxu0 0
  %510 = vmatpush1.bf16.msra.mxu0 0
  %511 = vmatprep.subr.bf16.mxu0 0
  %512 = vmatpush1.bf16.msra.mxu0 0
  %513 = vmatprep.subr.bf16.mxu0 0
  %514 = vmatpush1.bf16.msra.mxu0 0
  %515 = vmatprep.subr.bf16.mxu0 0
  %516 = vmatpush1.bf16.msra.mxu0 0
  %517 = vmatprep.subr.bf16.mxu0 0
  %518 = vmatpush1.bf16.msra.mxu0 %v386
  %519 = vmatprep.subr.bf16.mxu0 0
  %520 = vmatpush1.bf16.msra.mxu0 %v385
  %521 = vmatprep.subr.bf16.mxu0 0
  %522 = vmatpush1.bf16.msra.mxu0 %v384
  %523 = vmatprep.subr.bf16.mxu0 0
  %524 = vmatpush1.bf16.msra.mxu0 %v383
  %525 = vmatprep.subr.bf16.mxu0 0
  %526 = vmatpush2.bf16.msra.mxu0 0
  %527 = vmatprep.subr.bf16.mxu0 0
  %528 = vmatpush2.bf16.msra.mxu0 0
  %529 = vmatprep.subr.bf16.mxu0 0
  %530 = vmatpush2.bf16.msra.mxu0 0
  %531 = vmatprep.subr.bf16.mxu0 0
  %532 = vmatpush2.bf16.msra.mxu0 0
  %533 = vmatprep.subr.bf16.mxu0 0
  %534 = vmatpush2.bf16.msra.mxu0 0
  %535 = vmatprep.subr.bf16.mxu0 0
  %536 = vmatpush2.bf16.msra.mxu0 0
  %537 = vmatprep.subr.bf16.mxu0 0
  %538 = vmatpush2.bf16.msra.mxu0 0
  %539 = vmatprep.subr.bf16.mxu0 0
  %540 = vmatpush2.bf16.msra.mxu0 0
  %541 = vmatprep.mubr.bf16.mxu0 0
  %542 = vmatmul.mubr.bf16.gmra.mxu0 %v425
  %v543 = vpop.f32.mrf.mxu0
  %v544 = vadd.f32 %v503, %v543
  %v545 = vpop.f32.mrf.mxu0
  %v546 = vpop.f32.mrf.mxu0
  %v547 = vadd.f32 %v506, %v546
  %v548 = vpop.f32.mrf.mxu0
  %549 = vdwg.mxu0
  %v556 = vunpack.c.l.b16 %v26
  %v557 = vunpack.c.h.b16 %v26
  %v558 = vunpack.c.l.b16 %v27
  %v559 = vunpack.c.h.b16 %v27
  %v560 = vunpack.c.l.b16 %v28
  %v561 = vunpack.c.l.b16 %v29
  %v562 = vunpack.c.h.b16 %v29
  %v563 = vunpack.c.l.b16 %v30
  %v564 = vunpack.c.h.b16 %v30
  %v565 = vunpack.c.l.b16 %v31
  %v566 = vpack.c.b16 %v561, %v556
  %v567 = vpack.c.b16 %v562, %v557
  %v568 = vpack.c.b16 %v563, %v558
  %v569 = vpack.c.b16 %v564, %v559
  %v570 = vpack.c.b16 %v565, %v560
  %v647 = vunpack.c.l.b16 %v32
  %v648 = vunpack.c.l.b16 %v33
  %v649 = vunpack.c.l.b16 %v34
  %v650 = vunpack.c.l.b16 %v35
  %v651 = vunpack.c.l.b16 %v36
  %v652 = vunpack.c.l.b16 %v37
  %v653 = vunpack.c.l.b16 %v38
  %v654 = vunpack.c.l.b16 %v39
  %v655 = vunpack.c.l.b16 %v40
  %v656 = vunpack.c.l.b16 %v41
  %v657 = vunpack.c.l.b16 %v42
  %v658 = vunpack.c.l.b16 %v43
  %v659 = vunpack.c.l.b16 %v44
  %v660 = vunpack.c.l.b16 %v45
  %v661 = vunpack.c.l.b16 %v46
  %v662 = vunpack.c.l.b16 %v47
  %v663 = vunpack.c.l.b16 %v48
  %v664 = vunpack.c.l.b16 %v49
  %v665 = vunpack.c.l.b16 %v50
  %v666 = vunpack.c.l.b16 %v51
  %v667 = vunpack.c.l.b16 %v52
  %v668 = vunpack.c.l.b16 %v53
  %v669 = vunpack.c.l.b16 %v54
  %v670 = vunpack.c.l.b16 %v55
  %v671 = vunpack.c.l.b16 %v56
  %v672 = vunpack.c.l.b16 %v57
  %v673 = vunpack.c.l.b16 %v58
  %v674 = vunpack.c.l.b16 %v59
  %v675 = vunpack.c.l.b16 %v60
  %v676 = vunpack.c.l.b16 %v61
  %v677 = vunpack.c.l.b16 %v62
  %v678 = vunpack.c.l.b16 %v63
  %v679 = vunpack.c.l.b16 %v64
  %v680 = vunpack.c.l.b16 %v65
  %v681 = vunpack.c.l.b16 %v66
  %v682 = vunpack.c.l.b16 %v67
  %v683 = vunpack.c.l.b16 %v68
  %v684 = vunpack.c.l.b16 %v69
  %v685 = vunpack.c.l.b16 %v70
  %v686 = vunpack.c.l.b16 %v71
  %v687 = vunpack.c.l.b16 %v72
  %v688 = vunpack.c.l.b16 %v73
  %v689 = vunpack.c.l.b16 %v74
  %v690 = vunpack.c.l.b16 %v75
  %v691 = vunpack.c.l.b16 %v76
  %v692 = vunpack.c.l.b16 %v77
  %v693 = vunpack.c.l.b16 %v78
  %v694 = vunpack.c.l.b16 %v79
  %v695 = vunpack.c.l.b16 %v80
  %v696 = vunpack.c.l.b16 %v81
  %v697 = vunpack.c.l.b16 %v82
  %v698 = vunpack.c.l.b16 %v83
  %v699 = vunpack.c.l.b16 %v84
  %v700 = vunpack.c.l.b16 %v85
  %v701 = vunpack.c.l.b16 %v86
  %v702 = vunpack.c.l.b16 %v87
  %v703 = vunpack.c.l.b16 %v88
  %v704 = vunpack.c.l.b16 %v89
  %v705 = vunpack.c.l.b16 %v90
  %v706 = vunpack.c.l.b16 %v91
  %v707 = vunpack.c.l.b16 %v92
  %v708 = vunpack.c.l.b16 %v93
  %v709 = vunpack.c.l.b16 %v94
  %v710 = vunpack.c.l.b16 %v95
  %v711 = vunpack.c.l.b16 %v96
  %v712 = vunpack.c.l.b16 %v97
  %v713 = vunpack.c.l.b16 %v98
  %v714 = vunpack.c.l.b16 %v99
  %v715 = vunpack.c.l.b16 %v100
  %v716 = vunpack.c.l.b16 %v101
  %v717 = vunpack.c.l.b16 %v102
  %v718 = vunpack.c.l.b16 %v103
  %v719 = vpack.c.b16 %v648, %v647
  %v720 = vpack.c.b16 %v650, %v649
  %v721 = vpack.c.b16 %v652, %v651
  %v722 = vpack.c.b16 %v654, %v653
  %v723 = vpack.c.b16 %v656, %v655
  %v724 = vpack.c.b16 %v658, %v657
  %v725 = vpack.c.b16 %v660, %v659
  %v726 = vpack.c.b16 %v662, %v661
  %v727 = vpack.c.b16 %v664, %v663
  %v728 = vpack.c.b16 %v666, %v665
  %v729 = vpack.c.b16 %v668, %v667
  %v730 = vpack.c.b16 %v670, %v669
  %v731 = vpack.c.b16 %v672, %v671
  %v732 = vpack.c.b16 %v674, %v673
  %v733 = vpack.c.b16 %v676, %v675
  %v734 = vpack.c.b16 %v678, %v677
  %v735 = vpack.c.b16 %v680, %v679
  %v736 = vpack.c.b16 %v682, %v681
  %v737 = vpack.c.b16 %v684, %v683
  %v738 = vpack.c.b16 %v686, %v685
  %v739 = vpack.c.b16 %v688, %v687
  %v740 = vpack.c.b16 %v690, %v689
  %v741 = vpack.c.b16 %v692, %v691
  %v742 = vpack.c.b16 %v694, %v693
  %v743 = vpack.c.b16 %v696, %v695
  %v744 = vpack.c.b16 %v698, %v697
  %v745 = vpack.c.b16 %v700, %v699
  %v746 = vpack.c.b16 %v702, %v701
  %v747 = vpack.c.b16 %v704, %v703
  %v748 = vpack.c.b16 %v706, %v705
  %v749 = vpack.c.b16 %v708, %v707
  %v750 = vpack.c.b16 %v710, %v709
  %v751 = vpack.c.b16 %v712, %v711
  %v752 = vpack.c.b16 %v714, %v713
  %v753 = vpack.c.b16 %v716, %v715
  %v754 = vpack.c.b16 %v718, %v717
  %v792 = vsel %vm423, %v570, 0
  %794 = vmatprep.subr.bf16.mxu0 0
  %795 = vmatpush1.bf16.msra.mxu0 %v726
  %796 = vmatprep.subr.bf16.mxu0 0
  %797 = vmatpush1.bf16.msra.mxu0 %v725
  %798 = vmatprep.subr.bf16.mxu0 0
  %799 = vmatpush1.bf16.msra.mxu0 %v724
  %800 = vmatprep.subr.bf16.mxu0 0
  %801 = vmatpush1.bf16.msra.mxu0 %v723
  %802 = vmatprep.subr.bf16.mxu0 0
  %803 = vmatpush1.bf16.msra.mxu0 %v722
  %804 = vmatprep.subr.bf16.mxu0 0
  %805 = vmatpush1.bf16.msra.mxu0 %v721
  %806 = vmatprep.subr.bf16.mxu0 0
  %807 = vmatpush1.bf16.msra.mxu0 %v720
  %808 = vmatprep.subr.bf16.mxu0 0
  %809 = vmatpush1.bf16.msra.mxu0 %v719
  %810 = vmatprep.subr.bf16.mxu0 0
  %811 = vmatpush2.bf16.msra.mxu0 %v734
  %812 = vmatprep.subr.bf16.mxu0 0
  %813 = vmatpush2.bf16.msra.mxu0 %v733
  %814 = vmatprep.subr.bf16.mxu0 0
  %815 = vmatpush2.bf16.msra.mxu0 %v732
  %816 = vmatprep.subr.bf16.mxu0 0
  %817 = vmatpush2.bf16.msra.mxu0 %v731
  %818 = vmatprep.subr.bf16.mxu0 0
  %819 = vmatpush2.bf16.msra.mxu0 %v730
  %820 = vmatprep.subr.bf16.mxu0 0
  %821 = vmatpush2.bf16.msra.mxu0 %v729
  %822 = vmatprep.subr.bf16.mxu0 0
  %823 = vmatpush2.bf16.msra.mxu0 %v728
  %824 = vmatprep.subr.bf16.mxu0 0
  %825 = vmatpush2.bf16.msra.mxu0 %v727
  %826 = vmatprep.mubr.bf16.mxu0 %v567
  %827 = vmatmul.mubr.bf16.gmra.mxu0 %v566
  %v828 = vpop.f32.mrf.mxu0
  %v829 = vadd.f32 %v544, %v828
  %v830 = vpop.f32.mrf.mxu0
  %v831 = vpop.f32.mrf.mxu0
  %v832 = vadd.f32 %v547, %v831
  %v833 = vpop.f32.mrf.mxu0
  %834 = vdwg.mxu0
  %835 = vmatprep.subr.bf16.mxu0 0
  %836 = vmatpush1.bf16.msra.mxu0 %v742
  %837 = vmatprep.subr.bf16.mxu0 0
  %838 = vmatpush1.bf16.msra.mxu0 %v741
  %839 = vmatprep.subr.bf16.mxu0 0
  %840 = vmatpush1.bf16.msra.mxu0 %v740
  %841 = vmatprep.subr.bf16.mxu0 0
  %842 = vmatpush1.bf16.msra.mxu0 %v739
  %843 = vmatprep.subr.bf16.mxu0 0
  %844 = vmatpush1.bf16.msra.mxu0 %v738
  %845 = vmatprep.subr.bf16.mxu0 0
  %846 = vmatpush1.bf16.msra.mxu0 %v737
  %847 = vmatprep.subr.bf16.mxu0 0
  %848 = vmatpush1.bf16.msra.mxu0 %v736
  %849 = vmatprep.subr.bf16.mxu0 0
  %850 = vmatpush1.bf16.msra.mxu0 %v735
  %851 = vmatprep.subr.bf16.mxu0 0
  %852 = vmatpush2.bf16.msra.mxu0 %v750
  %853 = vmatprep.subr.bf16.mxu0 0
  %854 = vmatpush2.bf16.msra.mxu0 %v749
  %855 = vmatprep.subr.bf16.mxu0 0
  %856 = vmatpush2.bf16.msra.mxu0 %v748
  %857 = vmatprep.subr.bf16.mxu0 0
  %858 = vmatpush2.bf16.msra.mxu0 %v747
  %859 = vmatprep.subr.bf16.mxu0 0
  %860 = vmatpush2.bf16.msra.mxu0 %v746
  %861 = vmatprep.subr.bf16.mxu0 0
  %862 = vmatpush2.bf16.msra.mxu0 %v745
  %863 = vmatprep.subr.bf16.mxu0 0
  %864 = vmatpush2.bf16.msra.mxu0 %v744
  %865 = vmatprep.subr.bf16.mxu0 0
  %866 = vmatpush2.bf16.msra.mxu0 %v743
  %867 = vmatprep.mubr.bf16.mxu0 %v569
  %868 = vmatmul.mubr.bf16.gmra.mxu0 %v568
  %v869 = vpop.f32.mrf.mxu0
  %v870 = vadd.f32 %v829, %v869
  %v871 = vpop.f32.mrf.mxu0
  %v872 = vpop.f32.mrf.mxu0
  %v873 = vadd.f32 %v832, %v872
  %v874 = vpop.f32.mrf.mxu0
  %875 = vdwg.mxu0
  %876 = vmatprep.subr.bf16.mxu0 0
  %877 = vmatpush1.bf16.msra.mxu0 0
  %878 = vmatprep.subr.bf16.mxu0 0
  %879 = vmatpush1.bf16.msra.mxu0 0
  %880 = vmatprep.subr.bf16.mxu0 0
  %881 = vmatpush1.bf16.msra.mxu0 0
  %882 = vmatprep.subr.bf16.mxu0 0
  %883 = vmatpush1.bf16.msra.mxu0 0
  %884 = vmatprep.subr.bf16.mxu0 0
  %885 = vmatpush1.bf16.msra.mxu0 %v754
  %886 = vmatprep.subr.bf16.mxu0 0
  %887 = vmatpush1.bf16.msra.mxu0 %v753
  %888 = vmatprep.subr.bf16.mxu0 0
  %889 = vmatpush1.bf16.msra.mxu0 %v752
  %890 = vmatprep.subr.bf16.mxu0 0
  %891 = vmatpush1.bf16.msra.mxu0 %v751
  %892 = vmatprep.subr.bf16.mxu0 0
  %893 = vmatpush2.bf16.msra.mxu0 0
  %894 = vmatprep.subr.bf16.mxu0 0
  %895 = vmatpush2.bf16.msra.mxu0 0
  %896 = vmatprep.subr.bf16.mxu0 0
  %897 = vmatpush2.bf16.msra.mxu0 0
  %898 = vmatprep.subr.bf16.mxu0 0
  %899 = vmatpush2.bf16.msra.mxu0 0
  %900 = vmatprep.subr.bf16.mxu0 0
  %901 = vmatpush2.bf16.msra.mxu0 0
  %902 = vmatprep.subr.bf16.mxu0 0
  %903 = vmatpush2.bf16.msra.mxu0 0
  %904 = vmatprep.subr.bf16.mxu0 0
  %905 = vmatpush2.bf16.msra.mxu0 0
  %906 = vmatprep.subr.bf16.mxu0 0
  %907 = vmatpush2.bf16.msra.mxu0 0
  %908 = vmatprep.mubr.bf16.mxu0 0
  %909 = vmatmul.mubr.bf16.gmra.mxu0 %v792
  %v910 = vpop.f32.mrf.mxu0
  %v911 = vadd.f32 %v870, %v910
  %v912 = vpop.f32.mrf.mxu0
  %v913 = vpop.f32.mrf.mxu0
  %v914 = vadd.f32 %v873, %v913
  %v915 = vpop.f32.mrf.mxu0
  %916 = vdwg.mxu0
  %v917 = vld [vmem:[%s4] sm:$0x1]
  %v919 = vlaneseq
  %v920 = vshrl.u32 %v919, 7
  %v921 = vsub.s32 0, %v920
  %v922 = vrot.slane %v917, %v921
  %v924 = vadd.f32 %v911, %v922
  %v925 = vadd.f32 %v914, %v922
  %v926 = vld [vmem:[%s5] sm:$0xff]
  %v927 = vld [vmem:[%s5 + $0x8] sm:$0xff]
  %929 = vset.pattern.permute.xlu0 0
  %930 = vperm.xlu0 %929, %v926
  %v931 = vpop.permute.xlu0 %930
  %934 = vset.pattern.permute.xlu0 0
  %935 = vperm.xlu0 %934, %v927
  %v936 = vpop.permute.xlu0 %935
  %v938 = vmul.f32 %v924, %v931
  %v939 = vmul.f32 %v925, %v936
  %v940 = vadd.f32 %v938, %v939
  %v941 = vrot.slane %v940, 4
  %v942 = vadd.f32 %v940, %v941
  %v943 = vrot.slane %v942, 2
  %v944 = vadd.f32 %v942, %v943
  %v945 = vrot.slane %v944, 1
  %v946 = vadd.f32 %v944, %v945
  %v947 = vmul.f32 %v938, %v924
  %v948 = vmul.f32 %v939, %v925
  %v949 = vadd.f32 %v947, %v948
  %v950 = vrot.slane %v949, 4
  %v951 = vadd.f32 %v949, %v950
  %v952 = vrot.slane %v951, 2
  %v953 = vadd.f32 %v951, %v952
  %v954 = vrot.slane %v953, 1
  %v955 = vadd.f32 %v953, %v954
  %vm956 = vcmask 1040384
  %v957 = vsel %vm956, %v946, %v955
  %958 = vst [vmem:[%s7] sm:$0x3] %v957
  %v959 = vpack.c.bf16 %v925, %v924
  %v961 = vunpack.c.l.b16 %v959
  %v962 = vunpack.c.h.b16 %v959
  %v963 = vpack.c.b16 %v961, %v961
  %v964 = vpack.c.b16 %v962, %v962
  %967 = vst [vmem:[%s6] sm:$0xf] %v963
  %968 = vst [vmem:[%s6 + $0x4] sm:$0xf] %v964
  // Predicated region
  $region26: #{forward.17} parent=0 // pred_check
    _
  $region27: #{forward.17} parent=0 // pred_check_branch
    %970 = sbr.rel (0) target = $region29
  $region28: #{forward.17} parent=0 // pred_region
    _
  $region29: #{forward.17} parent=0 // pred_fallthru
    _
  // Predicated region
  $region30: #{forward.17} parent=0 // pred_check
    _
  $region31: #{forward.17} parent=0 // pred_check_branch
    %972 = sbr.rel (0) target = $region33
  $region32: #{forward.17} parent=0 // pred_region
    _
  $region33: #{forward.17} parent=0 // pred_fallthru
    _
  // Predicated region
  $region34: #{forward.17} parent=0 // pred_check
    _
  $region35: #{forward.17} parent=0 // pred_check_branch
    %974 = sbr.rel (0) target = $region37
  $region36: #{forward.17} parent=0 // pred_region
    _
  $region37: #{forward.17} parent=0 // pred_fallthru
    _
  // Predicated region
  $region38: #{forward.17} parent=0 // pred_check
    _
  $region39: #{forward.17} parent=0 // pred_check_branch
    %976 = sbr.rel (0) target = $region41
  $region40: #{forward.17} parent=0 // pred_region
    _
  $region41: #{forward.17} parent=0 // pred_fallthru
    _

// kernel: forward.18
$region0: #{forward.18}
  #allocation0 [shape = 'u32[]', space=smem, size = 0x4, offset = 0x4, fixed_abs, tag = 'smem constant byte address 0x4 - core index']
  #allocation1 [shape = 'u32[144,128]{1,0:T(1,128)}', space=vmem, size = 0x12000, scoped, tag = 'internal scratch']
  %s0 = inlined_call_operand.vmem [shape: bf16[2,4,32], index: 0, kind: input, shape index: {}]
  %s1 = inlined_call_operand.vmem [shape: bf16[2,12,32], index: 1, kind: input, shape index: {}]
  %s2 = inlined_call_operand.vmem [shape: bf16[2,4,32], index: 2, kind: output, shape index: {}]
  %s3 = sld [smem:[#allocation0]]
  $region41: #{forward.18} parent=0
    _
  %s5 = ssub.s32 1, %s3
  %s6 = scalar_select 0, %s5, %s3
  loop: start=0, step=1, limit=4
  $region2: #{forward.18} parent=0 // loop_pre_header
    _
  $region3: #{forward.18} parent=0 // loop_header
    %s8 = sphi 0, %s12
    %p9 = scmp.ge.s32.totalorder %s8, 4
    %s18 = sphi 0, %s20
    %s21 = sphi 0, %s18
    %s22 = sphi 0, %s21
    %s38 = sphi 0, %s22
    %s44 = sphi 0, %s46
    %s47 = sphi 0, %s44
    %s48 = sphi 0, %s47
    %s64 = sphi 0, %s48
    %s70 = sphi 0, %s72
    %s73 = sphi 0, %s70
    %s74 = sphi 0, %s73
    %s90 = sphi 0, %s74
  $region4: #{forward.18} parent=0 // loop_header_branch
    %11 = sbr.rel (%p9) target = $region8
  $region5: #{forward.18} parent=0 // loop_body
    %s13 = ssub.s32 %s8, 1
    %s14 = ssub.s32 %s8, 2
    %s15 = sadd.s32 %s8, 1
    %s16 = ssub.s32 %s8, %s15
    %p17 = scmp.eq.s32.totalorder %s16, 0
    %s19 = sadd.s32 %s18, 1
    %s20 = scalar_select %p17, %s18, %s19
    %p23 = pneg %p17
    %p24 = scmp.eq.s32.totalorder %s8, 1
    %p25 = por %p23, %p24
    %p26 = scmp.ne.s32.totalorder %s18, %s21
    %p27 = scmp.eq.s32.totalorder %s8, 0
    %p28 = por %p26, %p27
    %p29 = scmp.ne.s32.totalorder %s18, %s21
    %p30 = scmp.eq.s32.totalorder %s13, 1
    %p31 = por %p29, %p30
    %p32 = scmp.ne.s32.totalorder %s21, %s22
    %p33 = scmp.eq.s32.totalorder %s13, 0
    %p34 = por %p32, %p33
    %p35 = scmp.ne.s32.totalorder %s21, %s22
    %p36 = scmp.eq.s32.totalorder %s14, 1
    %p37 = por %p35, %p36
    %p39 = scmp.ne.s32.totalorder %s22, %s38
    %p40 = scmp.eq.s32.totalorder %s14, 0
    %p41 = por %p39, %p40
    %s42 = ssub.s32 %s8, %s15
    %p43 = scmp.eq.s32.totalorder %s42, 0
    %s45 = sadd.s32 %s44, 1
    %s46 = scalar_select %p43, %s44, %s45
    %p49 = pneg %p43
    %p50 = scmp.eq.s32.totalorder %s8, 1
    %p51 = por %p49, %p50
    %p52 = scmp.ne.s32.totalorder %s44, %s47
    %p53 = scmp.eq.s32.totalorder %s8, 0
    %p54 = por %p52, %p53
    %p55 = scmp.ne.s32.totalorder %s44, %s47
    %p56 = scmp.eq.s32.totalorder %s13, 1
    %p57 = por %p55, %p56
    %p58 = scmp.ne.s32.totalorder %s47, %s48
    %p59 = scmp.eq.s32.totalorder %s13, 0
    %p60 = por %p58, %p59
    %p61 = scmp.ne.s32.totalorder %s47, %s48
    %p62 = scmp.eq.s32.totalorder %s14, 1
    %p63 = por %p61, %p62
    %p65 = scmp.ne.s32.totalorder %s48, %s64
    %p66 = scmp.eq.s32.totalorder %s14, 0
    %p67 = por %p65, %p66
    %s68 = ssub.s32 %s8, %s15
    %p69 = scmp.eq.s32.totalorder %s68, 0
    %s71 = sadd.s32 %s70, 1
    %s72 = scalar_select %p69, %s70, %s71
    %p75 = pneg %p69
    %p76 = scmp.eq.s32.totalorder %s8, 1
    %p77 = por %p75, %p76
    %p78 = scmp.ne.s32.totalorder %s70, %s73
    %p79 = scmp.eq.s32.totalorder %s8, 0
    %p80 = por %p78, %p79
    %p81 = scmp.ne.s32.totalorder %s70, %s73
    %p82 = scmp.eq.s32.totalorder %s13, 1
    %p83 = por %p81, %p82
    %p84 = scmp.ne.s32.totalorder %s73, %s74
    %p85 = scmp.eq.s32.totalorder %s13, 0
    %p86 = por %p84, %p85
    %p87 = scmp.ne.s32.totalorder %s73, %s74
    %p88 = scmp.eq.s32.totalorder %s14, 1
    %p89 = por %p87, %p88
    %p91 = scmp.ne.s32.totalorder %s74, %s90
    %p92 = scmp.eq.s32.totalorder %s14, 0
    %p93 = por %p91, %p92
    %p94 = scmp.le.s32.totalorder 1, %s8
    %p95 = scmp.lt.s32.totalorder %s8, 3
    %p96 = pnand %p94, %p95
    %p97 = pneg %p96
    // Predicated region
    $region9: #{forward.18} parent=5 // pred_check
      _
    $region10: #{forward.18} parent=5 // pred_check_branch
      %99 = sbr.rel (%p96) target = $region12
    $region11: #{forward.18} parent=5 // pred_region
      %s100 = ssub.s32 %s8, 1
    $region12: #{forward.18} parent=5 // pred_fallthru
      _
    %p101 = scmp.lt.s32.totalorder %s8, 2
    // Predicated region
    $region13: #{forward.18} parent=5 // pred_check
      %p102 = pneg %p101
    $region14: #{forward.18} parent=5 // pred_check_branch
      %104 = sbr.rel (%p102) target = $region16
    $region15: #{forward.18} parent=5 // pred_region
      // Predicated region
      $region17: #{forward.18} parent=15 // pred_check
        %p105 = pneg %p28
      $region18: #{forward.18} parent=15 // pred_check_branch
        %107 = sbr.rel (%p105) target = $region20
      $region19: #{forward.18} parent=15 // pred_region
        %p108 = scmp.lt.s32.totalorder %s8, 1
        %s109 = scalar_select %p108, %s8, 1
        %s110 = smul.addr %s109, 2
        %s111 = scalar_lea.vmem %s0, %s110
      $region20: #{forward.18} parent=15 // pred_fallthru
        _
      // Predicated region
      $region21: #{forward.18} parent=15 // pred_check
        %p112 = pneg %p54
      $region22: #{forward.18} parent=15 // pred_check_branch
        %114 = sbr.rel (%p112) target = $region24
      $region23: #{forward.18} parent=15 // pred_region
        %p115 = scmp.lt.s32.totalorder %s8, 1
        %s116 = scalar_select %p115, %s8, 1
        %s117 = smul.addr %s116, 2
        %s118 = smul.addr %s117, 4
        %s119 = scalar_lea.vmem %s1, %s118
      $region24: #{forward.18} parent=15 // pred_fallthru
        _
    $region16: #{forward.18} parent=5 // pred_fallthru
      _
    %p120 = scmp.le.s32.totalorder 1, %s8
    %p121 = scmp.lt.s32.totalorder %s8, 3
    %p122 = pnand %p120, %p121
    %p123 = pneg %p122
    // Predicated region
    $region25: #{forward.18} parent=5 // pred_check
      _
    $region26: #{forward.18} parent=5 // pred_check_branch
      %125 = sbr.rel (%p122) target = $region28
    $region27: #{forward.18} parent=5 // pred_region
      %s126 = ssub.s32 %s8, 1
      %p127 = scmp.lt.s32.totalorder %s13, 1
      %s128 = scalar_select %p127, %s13, 1
      %s129 = smul.addr %s128, 2
      %s130 = scalar_lea.vmem %s0, %s129
      %p131 = pneg %p34
      %p132 = pneg %p31
      %p133 = scmp.lt.s32.totalorder %s13, 1
      %s134 = scalar_select %p133, %s13, 1
      %s135 = smul.addr %s134, 2
      %s136 = smul.addr %s135, 4
      %s137 = scalar_lea.vmem %s1, %s136
      %p138 = pneg %p60
      %p139 = pneg %p57
      %p140 = pneg %p86
      %p141 = pneg %p83
      %p142 = scmp.lt.s32.totalorder %s13, 1
      %s143 = scalar_select %p142, %s13, 1
      %s144 = smul.addr %s143, 2
      %s145 = scalar_lea.vmem %s2, %s144
      %p146 = scmp.lt.s32.totalorder %s13, 1
      %s147 = scalar_select %p146, %s13, 1
      %s148 = smul.addr %s147, 2
      %s149 = scalar_lea.vmem %s0, %s148
      %p150 = scmp.lt.s32.totalorder %s13, 1
      %s151 = scalar_select %p150, %s13, 1
      %s152 = smul.addr %s151, 2
      %s153 = smul.addr %s152, 4
      %s154 = scalar_lea.vmem %s1, %s153
      %p155 = scmp.lt.s32.totalorder %s13, 1
      %s156 = scalar_select %p155, %s13, 1
      %s157 = smul.addr %s156, 2
      %s158 = scalar_lea.vmem %s2, %s157
      %v160 = vld [vmem:[%s149] sm:$0x3]
      %v161 = vunpack.c.l.bf16 %v160
      %v162 = vld [vmem:[%s154] sm:$0xf]
      %v163 = vld [vmem:[%s154 + $0x4] sm:$0x3]
      %v164 = vunpack.c.l.bf16 %v162
      %v165 = vunpack.c.l.bf16 %v163
      %v166 = vmul.f32 %v161, %v161
      %vm167 = vcmask 257024
      %v168 = vsel %vm167, %v166, 0.0
      %169 = vadd.xlane.f32.xlu0 %v168
      %v170 = vpop.xlane.xlu0 %169
      %v171 = vadd.f32 %v170, 1e-08
      %v172 = vrsqrt.pop %v171
      %v173 = vmul.f32 %v161, %v172
      %v174 = vmul.f32 %v164, %v164
      %v175 = vmul.f32 %v165, %v165
      %vm176 = vcmask 261120
      %v177 = vsel %vm176, %v174, 0.0
      %178 = vadd.xlane.f32.xlu0 %v177
      %v179 = vpop.xlane.xlu0 %178
      %v180 = vsel %vm167, %v175, 0.0
      %181 = vadd.xlane.f32.xlu0 %v180
      %v182 = vpop.xlane.xlu0 %181
      %v183 = vadd.f32 %v179, 1e-08
      %v184 = vadd.f32 %v182, 1e-08
      %v185 = vrsqrt.pop %v183
      %v186 = vrsqrt.pop %v184
      %v187 = vmul.f32 %v164, %v185
      %v188 = vmul.f32 %v165, %v186
      %v189 = vpack.c.bf16 %v173, %v173
      %v190 = vpack.c.bf16 %v188, %v187
      %v192 = vsel %vm176, %v189, 0
      %v195 = vsel %vm176, %v190, 0
      %197 = vmatprep.subr.bf16.mxu0 0
      %198 = vmatpush1.bf16.xpose.msra.mxu0 0
      %199 = vmatprep.subr.bf16.mxu0 0
      %200 = vmatpush1.bf16.xpose.msra.mxu0 0
      %201 = vmatprep.subr.bf16.mxu0 0
      %202 = vmatpush1.bf16.xpose.msra.mxu0 0
      %203 = vmatprep.subr.bf16.mxu0 0
      %204 = vmatpush1.bf16.xpose.msra.mxu0 0
      %205 = vmatprep.subr.bf16.mxu0 0
      %206 = vmatpush1.bf16.xpose.msra.mxu0 0
      %207 = vmatprep.subr.bf16.mxu0 0
      %208 = vmatpush1.bf16.xpose.msra.mxu0 0
      %209 = vmatprep.subr.bf16.mxu0 0
      %210 = vmatpush1.bf16.xpose.msra.mxu0 0
      %211 = vmatprep.subr.bf16.mxu0 0
      %212 = vmatpush1.bf16.xpose.msra.mxu0 %v195
      %213 = vmatprep.subr.bf16.mxu0 0
      %214 = vmatpush2.bf16.xpose.msra.mxu0 0
      %215 = vmatprep.subr.bf16.mxu0 0
      %216 = vmatpush2.bf16.xpose.msra.mxu0 0
      %217 = vmatprep.subr.bf16.mxu0 0
      %218 = vmatpush2.bf16.xpose.msra.mxu0 0
      %219 = vmatprep.subr.bf16.mxu0 0
      %220 = vmatpush2.bf16.xpose.msra.mxu0 0
      %221 = vmatprep.subr.bf16.mxu0 0
      %222 = vmatpush2.bf16.xpose.msra.mxu0 0
      %223 = vmatprep.subr.bf16.mxu0 0
      %224 = vmatpush2.bf16.xpose.msra.mxu0 0
      %225 = vmatprep.subr.bf16.mxu0 0
      %226 = vmatpush2.bf16.xpose.msra.mxu0 0
      %227 = vmatprep.subr.bf16.mxu0 0
      %228 = vmatpush2.bf16.xpose.msra.mxu0 0
      %229 = vmatprep.mubr.bf16.mxu0 0
      %230 = vmatmul.mubr.bf16.gmra.mxu0 %v192
      %v231 = vpop.f32.mrf.mxu0
      %v232 = vadd.f32 0.0, %v231
      %v233 = vpop.f32.mrf.mxu0
      %v234 = vpop.f32.mrf.mxu0
      %v235 = vpop.f32.mrf.mxu0
      %236 = vdwg.mxu0
      %v237 = vlaneseq
      %v238 = vand.u32 %v237, 127
      %vm239 = vcmask 93184
      %v240 = vsel %vm239, %v232, -inf
      %241 = vmax.xlane.f32.xlu0 %v240
      %v242 = vpop.xlane.xlu0 %241
      %vm243 = vcmp.ge.f32.partialorder %v232, %v242
      %v244 = vsel %vm243, %v238, 12
      %v245 = vsel %vm239, %v244, 2147483647
      %v246 = vand.u32 %v245, 65535
      %v247 = vshra.s32 %v245, 16
      %v248 = vcvt.s32.f32 %v246
      %v249 = vcvt.s32.f32 %v247
      %250 = vmin.xlane.f32.xlu0 %v249
      %v251 = vpop.xlane.xlu0 %250
      %vm252 = vcmp.eq.f32.partialorder %v249, %v251
      %v253 = vsel %vm252, %v248, inf
      %254 = vmin.xlane.f32.xlu0 %v253
      %v255 = vpop.xlane.xlu0 %254
      %v256 = vcvt.f32.s32 %v255
      %v257 = vcvt.f32.s32 %v251
      %v258 = vshll.u32 %v257, 16
      %v259 = vadd.s32 %v258, %v256
      %vm260 = vcmp.eq.s32.totalorder %v238, %v259
      %v261 = vsel %vm260, 1, 0
      %v262 = vcvt.s32.f32 %v261
      %v263 = vpack.c.bf16 %v262, %v262
      %v266 = vunpack.c.l.b16 %v162
      %v267 = vunpack.c.l.b16 %v163
      %v268 = vpack.c.b16 %v267, %v266
      %vm269 = vcmask 97280
      %v271 = vsel %vm269, %v263, 0
      %vm273 = vcmask 1045504
      %v275 = vsel %vm273, %v268, 0
      %277 = vmatprep.subr.bf16.mxu0 0
      %278 = vmatpush1.bf16.msra.mxu0 0
      %279 = vmatprep.subr.bf16.mxu0 0
      %280 = vmatpush1.bf16.msra.mxu0 0
      %281 = vmatprep.subr.bf16.mxu0 0
      %282 = vmatpush1.bf16.msra.mxu0 0
      %283 = vmatprep.subr.bf16.mxu0 0
      %284 = vmatpush1.bf16.msra.mxu0 0
      %285 = vmatprep.subr.bf16.mxu0 0
      %286 = vmatpush1.bf16.msra.mxu0 0
      %287 = vmatprep.subr.bf16.mxu0 0
      %288 = vmatpush1.bf16.msra.mxu0 0
      %289 = vmatprep.subr.bf16.mxu0 0
      %290 = vmatpush1.bf16.msra.mxu0 0
      %291 = vmatprep.subr.bf16.mxu0 0
      %292 = vmatpush1.bf16.msra.mxu0 %v275
      %293 = vmatprep.subr.bf16.mxu0 0
      %294 = vmatpush2.bf16.msra.mxu0 0
      %295 = vmatprep.subr.bf16.mxu0 0
      %296 = vmatpush2.bf16.msra.mxu0 0
      %297 = vmatprep.subr.bf16.mxu0 0
      %298 = vmatpush2.bf16.msra.mxu0 0
      %299 = vmatprep.subr.bf16.mxu0 0
      %300 = vmatpush2.bf16.msra.mxu0 0
      %301 = vmatprep.subr.bf16.mxu0 0
      %302 = vmatpush2.bf16.msra.mxu0 0
      %303 = vmatprep.subr.bf16.mxu0 0
      %304 = vmatpush2.bf16.msra.mxu0 0
      %305 = vmatprep.subr.bf16.mxu0 0
      %306 = vmatpush2.bf16.msra.mxu0 0
      %307 = vmatprep.subr.bf16.mxu0 0
      %308 = vmatpush2.bf16.msra.mxu0 0
      %309 = vmatprep.mubr.bf16.mxu0 0
      %310 = vmatmul.mubr.bf16.gmra.mxu0 %v271
      %v311 = vpop.f32.mrf.mxu0
      %v312 = vadd.f32 0.0, %v311
      %v313 = vpop.f32.mrf.mxu0
      %v314 = vpop.f32.mrf.mxu0
      %v315 = vpop.f32.mrf.mxu0
      %316 = vdwg.mxu0
      %v317 = vpack.c.bf16 %v312, %v312
      %vm318 = vcmask 254976
      %319 = vst.msk [vmem:[%s158] sm:$0x3] %vm318, %v317
      %p320 = scmp.lt.s32.totalorder %s13, 1
      %s321 = scalar_select %p320, %s13, 1
      %s322 = smul.addr %s321, 2
      %s323 = scalar_lea.vmem %s2, %s322
      // Predicated region
      $region29: #{forward.18} parent=27 // pred_check
        %p324 = pneg %p83
      $region30: #{forward.18} parent=27 // pred_check_branch
        %326 = sbr.rel (%p324) target = $region32
      $region31: #{forward.18} parent=27 // pred_region
        _
      $region32: #{forward.18} parent=27 // pred_fallthru
        _
    $region28: #{forward.18} parent=5 // pred_fallthru
      _
    %p327 = scmp.le.s32.totalorder 2, %s8
    // Predicated region
    $region33: #{forward.18} parent=5 // pred_check
      %p328 = pneg %p327
    $region34: #{forward.18} parent=5 // pred_check_branch
      %330 = sbr.rel (%p328) target = $region36
    $region35: #{forward.18} parent=5 // pred_region
      %s331 = ssub.s32 %s8, 2
      // Predicated region
      $region37: #{forward.18} parent=35 // pred_check
        %p332 = pneg %p89
      $region38: #{forward.18} parent=35 // pred_check_branch
        %334 = sbr.rel (%p332) target = $region40
      $region39: #{forward.18} parent=35 // pred_region
        %p335 = scmp.lt.s32.totalorder %s14, 1
        %s336 = scalar_select %p335, %s14, 1
        %s337 = smul.addr %s336, 2
        %s338 = scalar_lea.vmem %s2, %s337
      $region40: #{forward.18} parent=35 // pred_fallthru
        _
    $region36: #{forward.18} parent=5 // pred_fallthru
      _
  $region6: #{forward.18} parent=0 // loop_footer
    %s12 = sadd.s32 1, %s8
  $region7: #{forward.18} parent=0 // loop_footer_branch
    %7 = sbr.rel target = $region3
  $region8: #{forward.18} parent=0 // loop_exit
    _

// kernel: squeeze.280
$region0: #{squeeze.280}
  %s0 = inlined_call_operand.vmem [shape: f32[64], index: 0, kind: input, shape index: {}]
  %s1 = inlined_call_operand.vmem [shape: f32[4,16], index: 1, kind: output, shape index: {}]
  $region1: #{squeeze.280} parent=0
    #allocation0 [shape = 'u8[4096]{0}', space=vmem, size = 0x1000, scoped, tag = 'scoped mem for output reshape']
    #allocation1 [shape = 'u8[4096]{0}', space=vmem, size = 0x1000, scoped, tag = 'scoped mem for input reshape']
    %s3 = sshll.u32 1, 1
    %s4 = ssub.s32 %s3, 1
    %v5 = vld [vmem:[%s0] sm:%s4]
    %6 = vst [vmem:[#allocation1] sm:%s4] %v5
    %v7 = vld [vmem:[#allocation1] sm:$0x1]
    %vm8 = vcmask 130048
    %9 = vst.msk [vmem:[#allocation0] sm:$0x1] %vm8, %v7
    %v10 = vld [vmem:[#allocation1] sm:$0x1]
    %11 = vrot.lane.b32.xlu0 %v10, 112
    %v12 = vpop.permute.xlu0 %11
    %vm13 = vcmask 130048
    %s14 = scalar_lea.vmem [#allocation0], 1
    %15 = vst.msk [vmem:[%s14] sm:$0x1] %vm13, %v12
    %v16 = vld [vmem:[#allocation1] sm:$0x1]
    %17 = vrot.lane.b32.xlu0 %v16, 96
    %v18 = vpop.permute.xlu0 %17
    %vm19 = vcmask 130048
    %s20 = scalar_lea.vmem [#allocation0], 2
    %21 = vst.msk [vmem:[%s20] sm:$0x1] %vm19, %v18
    %v22 = vld [vmem:[#allocation1] sm:$0x1]
    %23 = vrot.lane.b32.xlu0 %v22, 80
    %v24 = vpop.permute.xlu0 %23
    %vm25 = vcmask 130048
    %s26 = scalar_lea.vmem [#allocation0], 3
    %27 = vst.msk [vmem:[%s26] sm:$0x1] %vm25, %v24
    %s29 = sshll.u32 1, 4
    %s30 = ssub.s32 %s29, 1
    %v32 = vld [vmem:[#allocation0] sm:%s30]
    %s33 = sshll.u32 1, 4
    %s34 = ssub.s32 %s33, 1
    %35 = vst [vmem:[%s1] sm:%s34] %v32

// kernel: forward.19
$region0: #{forward.19}
  #allocation0 [shape = 'u32[]', space=smem, size = 0x4, offset = 0x4, fixed_abs, tag = 'smem constant byte address 0x4 - core index']
  #allocation1 [shape = 'u32[144,128]{1,0:T(1,128)}', space=vmem, size = 0x12000, scoped, tag = 'internal scratch']
  %s0 = inlined_call_operand.vmem [shape: bf16[32,288], index: 0, kind: input, shape index: {}]
  %s1 = inlined_call_operand.vmem [shape: bf16[32,288], index: 1, kind: input, shape index: {}]
  %s2 = inlined_call_operand.vmem [shape: bf16[32,288], index: 2, kind: input, shape index: {}]
  %s3 = inlined_call_operand.vmem [shape: bf16[288,128], index: 3, kind: input, shape index: {}]
  %s4 = inlined_call_operand.vmem [shape: bf16[288,128], index: 4, kind: input, shape index: {}]
  %s5 = inlined_call_operand.vmem [shape: bf16[288,128], index: 5, kind: input, shape index: {}]
  %s6 = inlined_call_operand.vmem [shape: f32[1,128], index: 6, kind: input, shape index: {}]
  %s7 = inlined_call_operand.vmem [shape: f32[32,1], index: 7, kind: input, shape index: {}]
  %s8 = inlined_call_operand.vmem [shape: bf16[32,128], index: 8, kind: output, shape index: {0}]
  %s9 = inlined_call_operand.vmem [shape: f32[1,2,128], index: 9, kind: output, shape index: {1}]
  %10 = xla_tuple %s8, %s9
  %s11 = sld [smem:[#allocation0]]
  $region50: #{forward.19} parent=0
    _
  %s13 = ssub.s32 1, %s11
  %s14 = scalar_select 0, %s13, %s11
  // Predicated region
  $region2: #{forward.19} parent=0 // pred_check
    _
  $region3: #{forward.19} parent=0 // pred_check_branch
    %16 = sbr.rel (0) target = $region5
  $region4: #{forward.19} parent=0 // pred_region
    _
  $region5: #{forward.19} parent=0 // pred_fallthru
    _
  // Predicated region
  $region6: #{forward.19} parent=0 // pred_check
    _
  $region7: #{forward.19} parent=0 // pred_check_branch
    %18 = sbr.rel (0) target = $region9
  $region8: #{forward.19} parent=0 // pred_region
    _
  $region9: #{forward.19} parent=0 // pred_fallthru
    _
  // Predicated region
  $region10: #{forward.19} parent=0 // pred_check
    _
  $region11: #{forward.19} parent=0 // pred_check_branch
    %20 = sbr.rel (0) target = $region13
  $region12: #{forward.19} parent=0 // pred_region
    _
  $region13: #{forward.19} parent=0 // pred_fallthru
    _
  // Predicated region
  $region14: #{forward.19} parent=0 // pred_check
    _
  $region15: #{forward.19} parent=0 // pred_check_branch
    %22 = sbr.rel (0) target = $region17
  $region16: #{forward.19} parent=0 // pred_region
    _
  $region17: #{forward.19} parent=0 // pred_fallthru
    _
  // Predicated region
  $region18: #{forward.19} parent=0 // pred_check
    _
  $region19: #{forward.19} parent=0 // pred_check_branch
    %24 = sbr.rel (0) target = $region21
  $region20: #{forward.19} parent=0 // pred_region
    _
  $region21: #{forward.19} parent=0 // pred_fallthru
    _
  // Predicated region
  $region22: #{forward.19} parent=0 // pred_check
    _
  $region23: #{forward.19} parent=0 // pred_check_branch
    %26 = sbr.rel (0) target = $region25
  $region24: #{forward.19} parent=0 // pred_region
    _
  $region25: #{forward.19} parent=0 // pred_fallthru
    _
  // Predicated region
  $region26: #{forward.19} parent=0 // pred_check
    _
  $region27: #{forward.19} parent=0 // pred_check_branch
    %28 = sbr.rel (0) target = $region29
  $region28: #{forward.19} parent=0 // pred_region
    _
  $region29: #{forward.19} parent=0 // pred_fallthru
    _
  // Predicated region
  $region30: #{forward.19} parent=0 // pred_check
    _
  $region31: #{forward.19} parent=0 // pred_check_branch
    %30 = sbr.rel (0) target = $region33
  $region32: #{forward.19} parent=0 // pred_region
    _
  $region33: #{forward.19} parent=0 // pred_fallthru
    _
  %v32 = vld [vmem:[%s0] sm:$0xff]
  %v33 = vld [vmem:[%s0 + $0x8] sm:$0xf]
  %v34 = vld [vmem:[%s0 + $0xc] sm:$0xff]
  %v35 = vld [vmem:[%s0 + $0x14] sm:$0xf]
  %v36 = vld [vmem:[%s0 + $0x18] sm:$0xff]
  %v37 = vld [vmem:[%s0 + $0x20] sm:$0xf]
  %v38 = vld [vmem:[%s0 + $0x24] sm:$0xff]
  %v39 = vld [vmem:[%s0 + $0x2c] sm:$0xf]
  %v40 = vld [vmem:[%s3] sm:$0xf]
  %v41 = vld [vmem:[%s3 + $0x4] sm:$0xf]
  %v42 = vld [vmem:[%s3 + $0x8] sm:$0xf]
  %v43 = vld [vmem:[%s3 + $0xc] sm:$0xf]
  %v44 = vld [vmem:[%s3 + $0x10] sm:$0xf]
  %v45 = vld [vmem:[%s3 + $0x14] sm:$0xf]
  %v46 = vld [vmem:[%s3 + $0x18] sm:$0xf]
  %v47 = vld [vmem:[%s3 + $0x1c] sm:$0xf]
  %v48 = vld [vmem:[%s3 + $0x20] sm:$0xf]
  %v49 = vld [vmem:[%s3 + $0x24] sm:$0xf]
  %v50 = vld [vmem:[%s3 + $0x28] sm:$0xf]
  %v51 = vld [vmem:[%s3 + $0x2c] sm:$0xf]
  %v52 = vld [vmem:[%s3 + $0x30] sm:$0xf]
  %v53 = vld [vmem:[%s3 + $0x34] sm:$0xf]
  %v54 = vld [vmem:[%s3 + $0x38] sm:$0xf]
  %v55 = vld [vmem:[%s3 + $0x3c] sm:$0xf]
  %v56 = vld [vmem:[%s3 + $0x40] sm:$0xf]
  %v57 = vld [vmem:[%s3 + $0x44] sm:$0xf]
  %v58 = vld [vmem:[%s3 + $0x48] sm:$0xf]
  %v59 = vld [vmem:[%s3 + $0x4c] sm:$0xf]
  %v60 = vld [vmem:[%s3 + $0x50] sm:$0xf]
  %v61 = vld [vmem:[%s3 + $0x54] sm:$0xf]
  %v62 = vld [vmem:[%s3 + $0x58] sm:$0xf]
  %v63 = vld [vmem:[%s3 + $0x5c] sm:$0xf]
  %v64 = vld [vmem:[%s3 + $0x60] sm:$0xf]
  %v65 = vld [vmem:[%s3 + $0x64] sm:$0xf]
  %v66 = vld [vmem:[%s3 + $0x68] sm:$0xf]
  %v67 = vld [vmem:[%s3 + $0x6c] sm:$0xf]
  %v68 = vld [vmem:[%s3 + $0x70] sm:$0xf]
  %v69 = vld [vmem:[%s3 + $0x74] sm:$0xf]
  %v70 = vld [vmem:[%s3 + $0x78] sm:$0xf]
  %v71 = vld [vmem:[%s3 + $0x7c] sm:$0xf]
  %v72 = vld [vmem:[%s3 + $0x80] sm:$0xf]
  %v73 = vld [vmem:[%s3 + $0x84] sm:$0xf]
  %v74 = vld [vmem:[%s3 + $0x88] sm:$0xf]
  %v75 = vld [vmem:[%s3 + $0x8c] sm:$0xf]
  %v76 = vld [vmem:[%s1] sm:$0xff]
  %v77 = vld [vmem:[%s1 + $0x8] sm:$0xf]
  %v78 = vld [vmem:[%s1 + $0xc] sm:$0xff]
  %v79 = vld [vmem:[%s1 + $0x14] sm:$0xf]
  %v80 = vld [vmem:[%s1 + $0x18] sm:$0xff]
  %v81 = vld [vmem:[%s1 + $0x20] sm:$0xf]
  %v82 = vld [vmem:[%s1 + $0x24] sm:$0xff]
  %v83 = vld [vmem:[%s1 + $0x2c] sm:$0xf]
  %v84 = vld [vmem:[%s4] sm:$0xf]
  %v85 = vld [vmem:[%s4 + $0x4] sm:$0xf]
  %v86 = vld [vmem:[%s4 + $0x8] sm:$0xf]
  %v87 = vld [vmem:[%s4 + $0xc] sm:$0xf]
  %v88 = vld [vmem:[%s4 + $0x10] sm:$0xf]
  %v89 = vld [vmem:[%s4 + $0x14] sm:$0xf]
  %v90 = vld [vmem:[%s4 + $0x18] sm:$0xf]
  %v91 = vld [vmem:[%s4 + $0x1c] sm:$0xf]
  %v92 = vld [vmem:[%s4 + $0x20] sm:$0xf]
  %v93 = vld [vmem:[%s4 + $0x24] sm:$0xf]
  %v94 = vld [vmem:[%s4 + $0x28] sm:$0xf]
  %v95 = vld [vmem:[%s4 + $0x2c] sm:$0xf]
  %v96 = vld [vmem:[%s4 + $0x30] sm:$0xf]
  %v97 = vld [vmem:[%s4 + $0x34] sm:$0xf]
  %v98 = vld [vmem:[%s4 + $0x38] sm:$0xf]
  %v99 = vld [vmem:[%s4 + $0x3c] sm:$0xf]
  %v100 = vld [vmem:[%s4 + $0x40] sm:$0xf]
  %v101 = vld [vmem:[%s4 + $0x44] sm:$0xf]
  %v102 = vld [vmem:[%s4 + $0x48] sm:$0xf]
  %v103 = vld [vmem:[%s4 + $0x4c] sm:$0xf]
  %v104 = vld [vmem:[%s4 + $0x50] sm:$0xf]
  %v105 = vld [vmem:[%s4 + $0x54] sm:$0xf]
  %v106 = vld [vmem:[%s4 + $0x58] sm:$0xf]
  %v107 = vld [vmem:[%s4 + $0x5c] sm:$0xf]
  %v108 = vld [vmem:[%s4 + $0x60] sm:$0xf]
  %v109 = vld [vmem:[%s4 + $0x64] sm:$0xf]
  %v110 = vld [vmem:[%s4 + $0x68] sm:$0xf]
  %v111 = vld [vmem:[%s4 + $0x6c] sm:$0xf]
  %v112 = vld [vmem:[%s4 + $0x70] sm:$0xf]
  %v113 = vld [vmem:[%s4 + $0x74] sm:$0xf]
  %v114 = vld [vmem:[%s4 + $0x78] sm:$0xf]
  %v115 = vld [vmem:[%s4 + $0x7c] sm:$0xf]
  %v116 = vld [vmem:[%s4 + $0x80] sm:$0xf]
  %v117 = vld [vmem:[%s4 + $0x84] sm:$0xf]
  %v118 = vld [vmem:[%s4 + $0x88] sm:$0xf]
  %v119 = vld [vmem:[%s4 + $0x8c] sm:$0xf]
  %v128 = vunpack.c.l.b16 %v76
  %v129 = vunpack.c.h.b16 %v76
  %v130 = vunpack.c.l.b16 %v77
  %v131 = vunpack.c.l.b16 %v78
  %v132 = vunpack.c.h.b16 %v78
  %v133 = vunpack.c.l.b16 %v79
  %v134 = vunpack.c.l.b16 %v80
  %v135 = vunpack.c.h.b16 %v80
  %v136 = vunpack.c.l.b16 %v81
  %v137 = vunpack.c.l.b16 %v82
  %v138 = vunpack.c.h.b16 %v82
  %v139 = vunpack.c.l.b16 %v83
  %v140 = vpack.c.b16 %v131, %v128
  %v141 = vpack.c.b16 %v132, %v129
  %v142 = vpack.c.b16 %v133, %v130
  %v143 = vpack.c.b16 %v137, %v134
  %v144 = vpack.c.b16 %v138, %v135
  %v145 = vpack.c.b16 %v139, %v136
  %v186 = vunpack.c.l.b16 %v84
  %v187 = vunpack.c.l.b16 %v85
  %v188 = vunpack.c.l.b16 %v86
  %v189 = vunpack.c.l.b16 %v87
  %v190 = vunpack.c.l.b16 %v88
  %v191 = vunpack.c.l.b16 %v89
  %v192 = vunpack.c.l.b16 %v90
  %v193 = vunpack.c.l.b16 %v91
  %v194 = vunpack.c.l.b16 %v92
  %v195 = vunpack.c.l.b16 %v93
  %v196 = vunpack.c.l.b16 %v94
  %v197 = vunpack.c.l.b16 %v95
  %v198 = vunpack.c.l.b16 %v96
  %v199 = vunpack.c.l.b16 %v97
  %v200 = vunpack.c.l.b16 %v98
  %v201 = vunpack.c.l.b16 %v99
  %v202 = vunpack.c.l.b16 %v100
  %v203 = vunpack.c.l.b16 %v101
  %v204 = vunpack.c.l.b16 %v102
  %v205 = vunpack.c.l.b16 %v103
  %v206 = vunpack.c.l.b16 %v104
  %v207 = vunpack.c.l.b16 %v105
  %v208 = vunpack.c.l.b16 %v106
  %v209 = vunpack.c.l.b16 %v107
  %v210 = vunpack.c.l.b16 %v108
  %v211 = vunpack.c.l.b16 %v109
  %v212 = vunpack.c.l.b16 %v110
  %v213 = vunpack.c.l.b16 %v111
  %v214 = vunpack.c.l.b16 %v112
  %v215 = vunpack.c.l.b16 %v113
  %v216 = vunpack.c.l.b16 %v114
  %v217 = vunpack.c.l.b16 %v115
  %v218 = vunpack.c.l.b16 %v116
  %v219 = vunpack.c.l.b16 %v117
  %v220 = vunpack.c.l.b16 %v118
  %v221 = vunpack.c.l.b16 %v119
  %v222 = vpack.c.b16 %v187, %v186
  %v223 = vpack.c.b16 %v189, %v188
  %v224 = vpack.c.b16 %v191, %v190
  %v225 = vpack.c.b16 %v193, %v192
  %v226 = vpack.c.b16 %v195, %v194
  %v227 = vpack.c.b16 %v197, %v196
  %v228 = vpack.c.b16 %v199, %v198
  %v229 = vpack.c.b16 %v201, %v200
  %v230 = vpack.c.b16 %v203, %v202
  %v231 = vpack.c.b16 %v205, %v204
  %v232 = vpack.c.b16 %v207, %v206
  %v233 = vpack.c.b16 %v209, %v208
  %v234 = vpack.c.b16 %v211, %v210
  %v235 = vpack.c.b16 %v213, %v212
  %v236 = vpack.c.b16 %v215, %v214
  %v237 = vpack.c.b16 %v217, %v216
  %v238 = vpack.c.b16 %v219, %v218
  %v239 = vpack.c.b16 %v221, %v220
  %vm258 = vcmask 261120
  %v260 = vsel %vm258, %v142, 0
  %v263 = vsel %vm258, %v145, 0
  %265 = vmatprep.subr.bf16.mxu0 0
  %266 = vmatpush1.bf16.msra.mxu0 %v229
  %267 = vmatprep.subr.bf16.mxu0 0
  %268 = vmatpush1.bf16.msra.mxu0 %v228
  %269 = vmatprep.subr.bf16.mxu0 0
  %270 = vmatpush1.bf16.msra.mxu0 %v227
  %271 = vmatprep.subr.bf16.mxu0 0
  %272 = vmatpush1.bf16.msra.mxu0 %v226
  %273 = vmatprep.subr.bf16.mxu0 0
  %274 = vmatpush1.bf16.msra.mxu0 %v225
  %275 = vmatprep.subr.bf16.mxu0 0
  %276 = vmatpush1.bf16.msra.mxu0 %v224
  %277 = vmatprep.subr.bf16.mxu0 0
  %278 = vmatpush1.bf16.msra.mxu0 %v223
  %279 = vmatprep.subr.bf16.mxu0 0
  %280 = vmatpush1.bf16.msra.mxu0 %v222
  %281 = vmatprep.subr.bf16.mxu0 0
  %282 = vmatpush2.bf16.msra.mxu0 %v237
  %283 = vmatprep.subr.bf16.mxu0 0
  %284 = vmatpush2.bf16.msra.mxu0 %v236
  %285 = vmatprep.subr.bf16.mxu0 0
  %286 = vmatpush2.bf16.msra.mxu0 %v235
  %287 = vmatprep.subr.bf16.mxu0 0
  %288 = vmatpush2.bf16.msra.mxu0 %v234
  %289 = vmatprep.subr.bf16.mxu0 0
  %290 = vmatpush2.bf16.msra.mxu0 %v233
  %291 = vmatprep.subr.bf16.mxu0 0
  %292 = vmatpush2.bf16.msra.mxu0 %v232
  %293 = vmatprep.subr.bf16.mxu0 0
  %294 = vmatpush2.bf16.msra.mxu0 %v231
  %295 = vmatprep.subr.bf16.mxu0 0
  %296 = vmatpush2.bf16.msra.mxu0 %v230
  %297 = vmatprep.mubr.bf16.mxu0 %v141
  %298 = vmatmul.mubr.bf16.gmra.mxu0 %v140
  %v299 = vpop.f32.mrf.mxu0
  %v300 = vadd.f32 0.0, %v299
  %v301 = vpop.f32.mrf.mxu0
  %v302 = vpop.f32.mrf.mxu0
  %v303 = vadd.f32 0.0, %v302
  %v304 = vpop.f32.mrf.mxu0
  %305 = vmatprep.mubr.bf16.mxu0 %v144
  %306 = vmatmul.mubr.bf16.gmra.mxu0 %v143
  %v307 = vpop.f32.mrf.mxu0
  %v308 = vadd.f32 0.0, %v307
  %v309 = vpop.f32.mrf.mxu0
  %v310 = vpop.f32.mrf.mxu0
  %v311 = vadd.f32 0.0, %v310
  %v312 = vpop.f32.mrf.mxu0
  %313 = vdwg.mxu0
  %314 = vmatprep.subr.bf16.mxu0 0
  %315 = vmatpush1.bf16.msra.mxu0 0
  %316 = vmatprep.subr.bf16.mxu0 0
  %317 = vmatpush1.bf16.msra.mxu0 0
  %318 = vmatprep.subr.bf16.mxu0 0
  %319 = vmatpush1.bf16.msra.mxu0 0
  %320 = vmatprep.subr.bf16.mxu0 0
  %321 = vmatpush1.bf16.msra.mxu0 0
  %322 = vmatprep.subr.bf16.mxu0 0
  %323 = vmatpush1.bf16.msra.mxu0 0
  %324 = vmatprep.subr.bf16.mxu0 0
  %325 = vmatpush1.bf16.msra.mxu0 0
  %326 = vmatprep.subr.bf16.mxu0 0
  %327 = vmatpush1.bf16.msra.mxu0 %v239
  %328 = vmatprep.subr.bf16.mxu0 0
  %329 = vmatpush1.bf16.msra.mxu0 %v238
  %330 = vmatprep.subr.bf16.mxu0 0
  %331 = vmatpush2.bf16.msra.mxu0 0
  %332 = vmatprep.subr.bf16.mxu0 0
  %333 = vmatpush2.bf16.msra.mxu0 0
  %334 = vmatprep.subr.bf16.mxu0 0
  %335 = vmatpush2.bf16.msra.mxu0 0
  %336 = vmatprep.subr.bf16.mxu0 0
  %337 = vmatpush2.bf16.msra.mxu0 0
  %338 = vmatprep.subr.bf16.mxu0 0
  %339 = vmatpush2.bf16.msra.mxu0 0
  %340 = vmatprep.subr.bf16.mxu0 0
  %341 = vmatpush2.bf16.msra.mxu0 0
  %342 = vmatprep.subr.bf16.mxu0 0
  %343 = vmatpush2.bf16.msra.mxu0 0
  %344 = vmatprep.subr.bf16.mxu0 0
  %345 = vmatpush2.bf16.msra.mxu0 0
  %346 = vmatprep.mubr.bf16.mxu0 0
  %347 = vmatmul.mubr.bf16.gmra.mxu0 %v260
  %v348 = vpop.f32.mrf.mxu0
  %v349 = vadd.f32 %v300, %v348
  %v350 = vpop.f32.mrf.mxu0
  %v351 = vpop.f32.mrf.mxu0
  %v352 = vadd.f32 %v303, %v351
  %v353 = vpop.f32.mrf.mxu0
  %354 = vmatprep.mubr.bf16.mxu0 0
  %355 = vmatmul.mubr.bf16.gmra.mxu0 %v263
  %v356 = vpop.f32.mrf.mxu0
  %v357 = vadd.f32 %v308, %v356
  %v358 = vpop.f32.mrf.mxu0
  %v359 = vpop.f32.mrf.mxu0
  %v360 = vadd.f32 %v311, %v359
  %v361 = vpop.f32.mrf.mxu0
  %362 = vdwg.mxu0
  %v371 = vunpack.c.l.b16 %v32
  %v372 = vunpack.c.h.b16 %v32
  %v373 = vunpack.c.l.b16 %v33
  %v374 = vunpack.c.l.b16 %v34
  %v375 = vunpack.c.h.b16 %v34
  %v376 = vunpack.c.l.b16 %v35
  %v377 = vunpack.c.l.b16 %v36
  %v378 = vunpack.c.h.b16 %v36
  %v379 = vunpack.c.l.b16 %v37
  %v380 = vunpack.c.l.b16 %v38
  %v381 = vunpack.c.h.b16 %v38
  %v382 = vunpack.c.l.b16 %v39
  %v383 = vpack.c.b16 %v374, %v371
  %v384 = vpack.c.b16 %v375, %v372
  %v385 = vpack.c.b16 %v376, %v373
  %v386 = vpack.c.b16 %v380, %v377
  %v387 = vpack.c.b16 %v381, %v378
  %v388 = vpack.c.b16 %v382, %v379
  %v429 = vunpack.c.l.b16 %v40
  %v430 = vunpack.c.l.b16 %v41
  %v431 = vunpack.c.l.b16 %v42
  %v432 = vunpack.c.l.b16 %v43
  %v433 = vunpack.c.l.b16 %v44
  %v434 = vunpack.c.l.b16 %v45
  %v435 = vunpack.c.l.b16 %v46
  %v436 = vunpack.c.l.b16 %v47
  %v437 = vunpack.c.l.b16 %v48
  %v438 = vunpack.c.l.b16 %v49
  %v439 = vunpack.c.l.b16 %v50
  %v440 = vunpack.c.l.b16 %v51
  %v441 = vunpack.c.l.b16 %v52
  %v442 = vunpack.c.l.b16 %v53
  %v443 = vunpack.c.l.b16 %v54
  %v444 = vunpack.c.l.b16 %v55
  %v445 = vunpack.c.l.b16 %v56
  %v446 = vunpack.c.l.b16 %v57
  %v447 = vunpack.c.l.b16 %v58
  %v448 = vunpack.c.l.b16 %v59
  %v449 = vunpack.c.l.b16 %v60
  %v450 = vunpack.c.l.b16 %v61
  %v451 = vunpack.c.l.b16 %v62
  %v452 = vunpack.c.l.b16 %v63
  %v453 = vunpack.c.l.b16 %v64
  %v454 = vunpack.c.l.b16 %v65
  %v455 = vunpack.c.l.b16 %v66
  %v456 = vunpack.c.l.b16 %v67
  %v457 = vunpack.c.l.b16 %v68
  %v458 = vunpack.c.l.b16 %v69
  %v459 = vunpack.c.l.b16 %v70
  %v460 = vunpack.c.l.b16 %v71
  %v461 = vunpack.c.l.b16 %v72
  %v462 = vunpack.c.l.b16 %v73
  %v463 = vunpack.c.l.b16 %v74
  %v464 = vunpack.c.l.b16 %v75
  %v465 = vpack.c.b16 %v430, %v429
  %v466 = vpack.c.b16 %v432, %v431
  %v467 = vpack.c.b16 %v434, %v433
  %v468 = vpack.c.b16 %v436, %v435
  %v469 = vpack.c.b16 %v438, %v437
  %v470 = vpack.c.b16 %v440, %v439
  %v471 = vpack.c.b16 %v442, %v441
  %v472 = vpack.c.b16 %v444, %v443
  %v473 = vpack.c.b16 %v446, %v445
  %v474 = vpack.c.b16 %v448, %v447
  %v475 = vpack.c.b16 %v450, %v449
  %v476 = vpack.c.b16 %v452, %v451
  %v477 = vpack.c.b16 %v454, %v453
  %v478 = vpack.c.b16 %v456, %v455
  %v479 = vpack.c.b16 %v458, %v457
  %v480 = vpack.c.b16 %v460, %v459
  %v481 = vpack.c.b16 %v462, %v461
  %v482 = vpack.c.b16 %v464, %v463
  %v502 = vsel %vm258, %v385, 0
  %v505 = vsel %vm258, %v388, 0
  %507 = vmatprep.subr.bf16.mxu0 0
  %508 = vmatpush1.bf16.msra.mxu0 %v472
  %509 = vmatprep.subr.bf16.mxu0 0
  %510 = vmatpush1.bf16.msra.mxu0 %v471
  %511 = vmatprep.subr.bf16.mxu0 0
  %512 = vmatpush1.bf16.msra.mxu0 %v470
  %513 = vmatprep.subr.bf16.mxu0 0
  %514 = vmatpush1.bf16.msra.mxu0 %v469
  %515 = vmatprep.subr.bf16.mxu0 0
  %516 = vmatpush1.bf16.msra.mxu0 %v468
  %517 = vmatprep.subr.bf16.mxu0 0
  %518 = vmatpush1.bf16.msra.mxu0 %v467
  %519 = vmatprep.subr.bf16.mxu0 0
  %520 = vmatpush1.bf16.msra.mxu0 %v466
  %521 = vmatprep.subr.bf16.mxu0 0
  %522 = vmatpush1.bf16.msra.mxu0 %v465
  %523 = vmatprep.subr.bf16.mxu0 0
  %524 = vmatpush2.bf16.msra.mxu0 %v480
  %525 = vmatprep.subr.bf16.mxu0 0
  %526 = vmatpush2.bf16.msra.mxu0 %v479
  %527 = vmatprep.subr.bf16.mxu0 0
  %528 = vmatpush2.bf16.msra.mxu0 %v478
  %529 = vmatprep.subr.bf16.mxu0 0
  %530 = vmatpush2.bf16.msra.mxu0 %v477
  %531 = vmatprep.subr.bf16.mxu0 0
  %532 = vmatpush2.bf16.msra.mxu0 %v476
  %533 = vmatprep.subr.bf16.mxu0 0
  %534 = vmatpush2.bf16.msra.mxu0 %v475
  %535 = vmatprep.subr.bf16.mxu0 0
  %536 = vmatpush2.bf16.msra.mxu0 %v474
  %537 = vmatprep.subr.bf16.mxu0 0
  %538 = vmatpush2.bf16.msra.mxu0 %v473
  %539 = vmatprep.mubr.bf16.mxu0 %v384
  %540 = vmatmul.mubr.bf16.gmra.mxu0 %v383
  %v541 = vpop.f32.mrf.mxu0
  %v542 = vadd.f32 %v349, %v541
  %v543 = vpop.f32.mrf.mxu0
  %v544 = vpop.f32.mrf.mxu0
  %v545 = vadd.f32 %v352, %v544
  %v546 = vpop.f32.mrf.mxu0
  %547 = vmatprep.mubr.bf16.mxu0 %v387
  %548 = vmatmul.mubr.bf16.gmra.mxu0 %v386
  %v549 = vpop.f32.mrf.mxu0
  %v550 = vadd.f32 %v357, %v549
  %v551 = vpop.f32.mrf.mxu0
  %v552 = vpop.f32.mrf.mxu0
  %v553 = vadd.f32 %v360, %v552
  %v554 = vpop.f32.mrf.mxu0
  %555 = vdwg.mxu0
  %556 = vmatprep.subr.bf16.mxu0 0
  %557 = vmatpush1.bf16.msra.mxu0 0
  %558 = vmatprep.subr.bf16.mxu0 0
  %559 = vmatpush1.bf16.msra.mxu0 0
  %560 = vmatprep.subr.bf16.mxu0 0
  %561 = vmatpush1.bf16.msra.mxu0 0
  %562 = vmatprep.subr.bf16.mxu0 0
  %563 = vmatpush1.bf16.msra.mxu0 0
  %564 = vmatprep.subr.bf16.mxu0 0
  %565 = vmatpush1.bf16.msra.mxu0 0
  %566 = vmatprep.subr.bf16.mxu0 0
  %567 = vmatpush1.bf16.msra.mxu0 0
  %568 = vmatprep.subr.bf16.mxu0 0
  %569 = vmatpush1.bf16.msra.mxu0 %v482
  %570 = vmatprep.subr.bf16.mxu0 0
  %571 = vmatpush1.bf16.msra.mxu0 %v481
  %572 = vmatprep.subr.bf16.mxu0 0
  %573 = vmatpush2.bf16.msra.mxu0 0
  %574 = vmatprep.subr.bf16.mxu0 0
  %575 = vmatpush2.bf16.msra.mxu0 0
  %576 = vmatprep.subr.bf16.mxu0 0
  %577 = vmatpush2.bf16.msra.mxu0 0
  %578 = vmatprep.subr.bf16.mxu0 0
  %579 = vmatpush2.bf16.msra.mxu0 0
  %580 = vmatprep.subr.bf16.mxu0 0
  %581 = vmatpush2.bf16.msra.mxu0 0
  %582 = vmatprep.subr.bf16.mxu0 0
  %583 = vmatpush2.bf16.msra.mxu0 0
  %584 = vmatprep.subr.bf16.mxu0 0
  %585 = vmatpush2.bf16.msra.mxu0 0
  %586 = vmatprep.subr.bf16.mxu0 0
  %587 = vmatpush2.bf16.msra.mxu0 0
  %588 = vmatprep.mubr.bf16.mxu0 0
  %589 = vmatmul.mubr.bf16.gmra.mxu0 %v502
  %v590 = vpop.f32.mrf.mxu0
  %v591 = vadd.f32 %v542, %v590
  %v592 = vpop.f32.mrf.mxu0
  %v593 = vpop.f32.mrf.mxu0
  %v594 = vadd.f32 %v545, %v593
  %v595 = vpop.f32.mrf.mxu0
  %596 = vmatprep.mubr.bf16.mxu0 0
  %597 = vmatmul.mubr.bf16.gmra.mxu0 %v505
  %v598 = vpop.f32.mrf.mxu0
  %v599 = vadd.f32 %v550, %v598
  %v600 = vpop.f32.mrf.mxu0
  %v601 = vpop.f32.mrf.mxu0
  %v602 = vadd.f32 %v553, %v601
  %v603 = vpop.f32.mrf.mxu0
  %604 = vdwg.mxu0
  %v605 = vld [vmem:[%s2] sm:$0xff]
  %v606 = vld [vmem:[%s2 + $0x8] sm:$0xf]
  %v607 = vld [vmem:[%s2 + $0xc] sm:$0xff]
  %v608 = vld [vmem:[%s2 + $0x14] sm:$0xf]
  %v609 = vld [vmem:[%s2 + $0x18] sm:$0xff]
  %v610 = vld [vmem:[%s2 + $0x20] sm:$0xf]
  %v611 = vld [vmem:[%s2 + $0x24] sm:$0xff]
  %v612 = vld [vmem:[%s2 + $0x2c] sm:$0xf]
  %v613 = vld [vmem:[%s5] sm:$0xf]
  %v614 = vld [vmem:[%s5 + $0x4] sm:$0xf]
  %v615 = vld [vmem:[%s5 + $0x8] sm:$0xf]
  %v616 = vld [vmem:[%s5 + $0xc] sm:$0xf]
  %v617 = vld [vmem:[%s5 + $0x10] sm:$0xf]
  %v618 = vld [vmem:[%s5 + $0x14] sm:$0xf]
  %v619 = vld [vmem:[%s5 + $0x18] sm:$0xf]
  %v620 = vld [vmem:[%s5 + $0x1c] sm:$0xf]
  %v621 = vld [vmem:[%s5 + $0x20] sm:$0xf]
  %v622 = vld [vmem:[%s5 + $0x24] sm:$0xf]
  %v623 = vld [vmem:[%s5 + $0x28] sm:$0xf]
  %v624 = vld [vmem:[%s5 + $0x2c] sm:$0xf]
  %v625 = vld [vmem:[%s5 + $0x30] sm:$0xf]
  %v626 = vld [vmem:[%s5 + $0x34] sm:$0xf]
  %v627 = vld [vmem:[%s5 + $0x38] sm:$0xf]
  %v628 = vld [vmem:[%s5 + $0x3c] sm:$0xf]
  %v629 = vld [vmem:[%s5 + $0x40] sm:$0xf]
  %v630 = vld [vmem:[%s5 + $0x44] sm:$0xf]
  %v631 = vld [vmem:[%s5 + $0x48] sm:$0xf]
  %v632 = vld [vmem:[%s5 + $0x4c] sm:$0xf]
  %v633 = vld [vmem:[%s5 + $0x50] sm:$0xf]
  %v634 = vld [vmem:[%s5 + $0x54] sm:$0xf]
  %v635 = vld [vmem:[%s5 + $0x58] sm:$0xf]
  %v636 = vld [vmem:[%s5 + $0x5c] sm:$0xf]
  %v637 = vld [vmem:[%s5 + $0x60] sm:$0xf]
  %v638 = vld [vmem:[%s5 + $0x64] sm:$0xf]
  %v639 = vld [vmem:[%s5 + $0x68] sm:$0xf]
  %v640 = vld [vmem:[%s5 + $0x6c] sm:$0xf]
  %v641 = vld [vmem:[%s5 + $0x70] sm:$0xf]
  %v642 = vld [vmem:[%s5 + $0x74] sm:$0xf]
  %v643 = vld [vmem:[%s5 + $0x78] sm:$0xf]
  %v644 = vld [vmem:[%s5 + $0x7c] sm:$0xf]
  %v645 = vld [vmem:[%s5 + $0x80] sm:$0xf]
  %v646 = vld [vmem:[%s5 + $0x84] sm:$0xf]
  %v647 = vld [vmem:[%s5 + $0x88] sm:$0xf]
  %v648 = vld [vmem:[%s5 + $0x8c] sm:$0xf]
  %v657 = vunpack.c.l.b16 %v605
  %v658 = vunpack.c.h.b16 %v605
  %v659 = vunpack.c.l.b16 %v606
  %v660 = vunpack.c.l.b16 %v607
  %v661 = vunpack.c.h.b16 %v607
  %v662 = vunpack.c.l.b16 %v608
  %v663 = vunpack.c.l.b16 %v609
  %v664 = vunpack.c.h.b16 %v609
  %v665 = vunpack.c.l.b16 %v610
  %v666 = vunpack.c.l.b16 %v611
  %v667 = vunpack.c.h.b16 %v611
  %v668 = vunpack.c.l.b16 %v612
  %v669 = vpack.c.b16 %v660, %v657
  %v670 = vpack.c.b16 %v661, %v658
  %v671 = vpack.c.b16 %v662, %v659
  %v672 = vpack.c.b16 %v666, %v663
  %v673 = vpack.c.b16 %v667, %v664
  %v674 = vpack.c.b16 %v668, %v665
  %v715 = vunpack.c.l.b16 %v613
  %v716 = vunpack.c.l.b16 %v614
  %v717 = vunpack.c.l.b16 %v615
  %v718 = vunpack.c.l.b16 %v616
  %v719 = vunpack.c.l.b16 %v617
  %v720 = vunpack.c.l.b16 %v618
  %v721 = vunpack.c.l.b16 %v619
  %v722 = vunpack.c.l.b16 %v620
  %v723 = vunpack.c.l.b16 %v621
  %v724 = vunpack.c.l.b16 %v622
  %v725 = vunpack.c.l.b16 %v623
  %v726 = vunpack.c.l.b16 %v624
  %v727 = vunpack.c.l.b16 %v625
  %v728 = vunpack.c.l.b16 %v626
  %v729 = vunpack.c.l.b16 %v627
  %v730 = vunpack.c.l.b16 %v628
  %v731 = vunpack.c.l.b16 %v629
  %v732 = vunpack.c.l.b16 %v630
  %v733 = vunpack.c.l.b16 %v631
  %v734 = vunpack.c.l.b16 %v632
  %v735 = vunpack.c.l.b16 %v633
  %v736 = vunpack.c.l.b16 %v634
  %v737 = vunpack.c.l.b16 %v635
  %v738 = vunpack.c.l.b16 %v636
  %v739 = vunpack.c.l.b16 %v637
  %v740 = vunpack.c.l.b16 %v638
  %v741 = vunpack.c.l.b16 %v639
  %v742 = vunpack.c.l.b16 %v640
  %v743 = vunpack.c.l.b16 %v641
  %v744 = vunpack.c.l.b16 %v642
  %v745 = vunpack.c.l.b16 %v643
  %v746 = vunpack.c.l.b16 %v644
  %v747 = vunpack.c.l.b16 %v645
  %v748 = vunpack.c.l.b16 %v646
  %v749 = vunpack.c.l.b16 %v647
  %v750 = vunpack.c.l.b16 %v648
  %v751 = vpack.c.b16 %v716, %v715
  %v752 = vpack.c.b16 %v718, %v717
  %v753 = vpack.c.b16 %v720, %v719
  %v754 = vpack.c.b16 %v722, %v721
  %v755 = vpack.c.b16 %v724, %v723
  %v756 = vpack.c.b16 %v726, %v725
  %v757 = vpack.c.b16 %v728, %v727
  %v758 = vpack.c.b16 %v730, %v729
  %v759 = vpack.c.b16 %v732, %v731
  %v760 = vpack.c.b16 %v734, %v733
  %v761 = vpack.c.b16 %v736, %v735
  %v762 = vpack.c.b16 %v738, %v737
  %v763 = vpack.c.b16 %v740, %v739
  %v764 = vpack.c.b16 %v742, %v741
  %v765 = vpack.c.b16 %v744, %v743
  %v766 = vpack.c.b16 %v746, %v745
  %v767 = vpack.c.b16 %v748, %v747
  %v768 = vpack.c.b16 %v750, %v749
  %v788 = vsel %vm258, %v671, 0
  %v791 = vsel %vm258, %v674, 0
  %793 = vmatprep.subr.bf16.mxu0 0
  %794 = vmatpush1.bf16.msra.mxu0 %v758
  %795 = vmatprep.subr.bf16.mxu0 0
  %796 = vmatpush1.bf16.msra.mxu0 %v757
  %797 = vmatprep.subr.bf16.mxu0 0
  %798 = vmatpush1.bf16.msra.mxu0 %v756
  %799 = vmatprep.subr.bf16.mxu0 0
  %800 = vmatpush1.bf16.msra.mxu0 %v755
  %801 = vmatprep.subr.bf16.mxu0 0
  %802 = vmatpush1.bf16.msra.mxu0 %v754
  %803 = vmatprep.subr.bf16.mxu0 0
  %804 = vmatpush1.bf16.msra.mxu0 %v753
  %805 = vmatprep.subr.bf16.mxu0 0
  %806 = vmatpush1.bf16.msra.mxu0 %v752
  %807 = vmatprep.subr.bf16.mxu0 0
  %808 = vmatpush1.bf16.msra.mxu0 %v751
  %809 = vmatprep.subr.bf16.mxu0 0
  %810 = vmatpush2.bf16.msra.mxu0 %v766
  %811 = vmatprep.subr.bf16.mxu0 0
  %812 = vmatpush2.bf16.msra.mxu0 %v765
  %813 = vmatprep.subr.bf16.mxu0 0
  %814 = vmatpush2.bf16.msra.mxu0 %v764
  %815 = vmatprep.subr.bf16.mxu0 0
  %816 = vmatpush2.bf16.msra.mxu0 %v763
  %817 = vmatprep.subr.bf16.mxu0 0
  %818 = vmatpush2.bf16.msra.mxu0 %v762
  %819 = vmatprep.subr.bf16.mxu0 0
  %820 = vmatpush2.bf16.msra.mxu0 %v761
  %821 = vmatprep.subr.bf16.mxu0 0
  %822 = vmatpush2.bf16.msra.mxu0 %v760
  %823 = vmatprep.subr.bf16.mxu0 0
  %824 = vmatpush2.bf16.msra.mxu0 %v759
  %825 = vmatprep.mubr.bf16.mxu0 %v670
  %826 = vmatmul.mubr.bf16.gmra.mxu0 %v669
  %v827 = vpop.f32.mrf.mxu0
  %v828 = vadd.f32 0.0, %v827
  %v829 = vpop.f32.mrf.mxu0
  %v830 = vpop.f32.mrf.mxu0
  %v831 = vadd.f32 0.0, %v830
  %v832 = vpop.f32.mrf.mxu0
  %833 = vmatprep.mubr.bf16.mxu0 %v673
  %834 = vmatmul.mubr.bf16.gmra.mxu0 %v672
  %v835 = vpop.f32.mrf.mxu0
  %v836 = vadd.f32 0.0, %v835
  %v837 = vpop.f32.mrf.mxu0
  %v838 = vpop.f32.mrf.mxu0
  %v839 = vadd.f32 0.0, %v838
  %v840 = vpop.f32.mrf.mxu0
  %841 = vdwg.mxu0
  %842 = vmatprep.subr.bf16.mxu0 0
  %843 = vmatpush1.bf16.msra.mxu0 0
  %844 = vmatprep.subr.bf16.mxu0 0
  %845 = vmatpush1.bf16.msra.mxu0 0
  %846 = vmatprep.subr.bf16.mxu0 0
  %847 = vmatpush1.bf16.msra.mxu0 0
  %848 = vmatprep.subr.bf16.mxu0 0
  %849 = vmatpush1.bf16.msra.mxu0 0
  %850 = vmatprep.subr.bf16.mxu0 0
  %851 = vmatpush1.bf16.msra.mxu0 0
  %852 = vmatprep.subr.bf16.mxu0 0
  %853 = vmatpush1.bf16.msra.mxu0 0
  %854 = vmatprep.subr.bf16.mxu0 0
  %855 = vmatpush1.bf16.msra.mxu0 %v768
  %856 = vmatprep.subr.bf16.mxu0 0
  %857 = vmatpush1.bf16.msra.mxu0 %v767
  %858 = vmatprep.subr.bf16.mxu0 0
  %859 = vmatpush2.bf16.msra.mxu0 0
  %860 = vmatprep.subr.bf16.mxu0 0
  %861 = vmatpush2.bf16.msra.mxu0 0
  %862 = vmatprep.subr.bf16.mxu0 0
  %863 = vmatpush2.bf16.msra.mxu0 0
  %864 = vmatprep.subr.bf16.mxu0 0
  %865 = vmatpush2.bf16.msra.mxu0 0
  %866 = vmatprep.subr.bf16.mxu0 0
  %867 = vmatpush2.bf16.msra.mxu0 0
  %868 = vmatprep.subr.bf16.mxu0 0
  %869 = vmatpush2.bf16.msra.mxu0 0
  %870 = vmatprep.subr.bf16.mxu0 0
  %871 = vmatpush2.bf16.msra.mxu0 0
  %872 = vmatprep.subr.bf16.mxu0 0
  %873 = vmatpush2.bf16.msra.mxu0 0
  %874 = vmatprep.mubr.bf16.mxu0 0
  %875 = vmatmul.mubr.bf16.gmra.mxu0 %v788
  %v876 = vpop.f32.mrf.mxu0
  %v877 = vadd.f32 %v828, %v876
  %v878 = vpop.f32.mrf.mxu0
  %v879 = vpop.f32.mrf.mxu0
  %v880 = vadd.f32 %v831, %v879
  %v881 = vpop.f32.mrf.mxu0
  %882 = vmatprep.mubr.bf16.mxu0 0
  %883 = vmatmul.mubr.bf16.gmra.mxu0 %v791
  %v884 = vpop.f32.mrf.mxu0
  %v885 = vadd.f32 %v836, %v884
  %v886 = vpop.f32.mrf.mxu0
  %v887 = vpop.f32.mrf.mxu0
  %v888 = vadd.f32 %v839, %v887
  %v889 = vpop.f32.mrf.mxu0
  %890 = vdwg.mxu0
  %v891 = vadd.f32 %v591, %v877
  %v892 = vadd.f32 %v594, %v880
  %v893 = vadd.f32 %v599, %v885
  %v894 = vadd.f32 %v602, %v888
  %v895 = vld [vmem:[%s6] sm:$0x1]
  %v897 = vlaneseq
  %v898 = vshrl.u32 %v897, 7
  %v899 = vsub.s32 0, %v898
  %v900 = vrot.slane %v895, %v899
  %v902 = vadd.f32 %v891, %v900
  %v903 = vadd.f32 %v892, %v900
  %v904 = vadd.f32 %v893, %v900
  %v905 = vadd.f32 %v894, %v900
  %v906 = vld [vmem:[%s7] sm:$0xff]
  %v907 = vld [vmem:[%s7 + $0x8] sm:$0xff]
  %v908 = vld [vmem:[%s7 + $0x10] sm:$0xff]
  %v909 = vld [vmem:[%s7 + $0x18] sm:$0xff]
  %911 = vset.pattern.permute.xlu0 0
  %912 = vperm.xlu0 %911, %v906
  %v913 = vpop.permute.xlu0 %912
  %916 = vset.pattern.permute.xlu0 0
  %917 = vperm.xlu0 %916, %v907
  %v918 = vpop.permute.xlu0 %917
  %921 = vset.pattern.permute.xlu0 0
  %922 = vperm.xlu0 %921, %v908
  %v923 = vpop.permute.xlu0 %922
  %926 = vset.pattern.permute.xlu0 0
  %927 = vperm.xlu0 %926, %v909
  %v928 = vpop.permute.xlu0 %927
  %v930 = vmul.f32 %v902, %v913
  %v931 = vmul.f32 %v903, %v918
  %v932 = vmul.f32 %v904, %v923
  %v933 = vmul.f32 %v905, %v928
  %v934 = vadd.f32 %v930, %v931
  %v935 = vadd.f32 %v934, %v932
  %v936 = vadd.f32 %v935, %v933
  %v937 = vrot.slane %v936, 4
  %v938 = vadd.f32 %v936, %v937
  %v939 = vrot.slane %v938, 2
  %v940 = vadd.f32 %v938, %v939
  %v941 = vrot.slane %v940, 1
  %v942 = vadd.f32 %v940, %v941
  %v943 = vmul.f32 %v930, %v902
  %v944 = vmul.f32 %v931, %v903
  %v945 = vmul.f32 %v932, %v904
  %v946 = vmul.f32 %v933, %v905
  %v947 = vadd.f32 %v943, %v944
  %v948 = vadd.f32 %v947, %v945
  %v949 = vadd.f32 %v948, %v946
  %v950 = vrot.slane %v949, 4
  %v951 = vadd.f32 %v949, %v950
  %v952 = vrot.slane %v951, 2
  %v953 = vadd.f32 %v951, %v952
  %v954 = vrot.slane %v953, 1
  %v955 = vadd.f32 %v953, %v954
  %vm956 = vcmask 1040384
  %v957 = vsel %vm956, %v942, %v955
  %958 = vst [vmem:[%s9] sm:$0x3] %v957
  %v959 = vpack.c.bf16 %v903, %v902
  %v960 = vpack.c.bf16 %v905, %v904
  %v963 = vunpack.c.l.b16 %v959
  %v964 = vunpack.c.h.b16 %v959
  %v965 = vunpack.c.l.b16 %v960
  %v966 = vunpack.c.h.b16 %v960
  %v967 = vpack.c.b16 %v963, %v963
  %v968 = vpack.c.b16 %v964, %v964
  %v969 = vpack.c.b16 %v965, %v965
  %v970 = vpack.c.b16 %v966, %v966
  %975 = vst [vmem:[%s8] sm:$0xf] %v967
  %976 = vst [vmem:[%s8 + $0x4] sm:$0xf] %v968
  %977 = vst [vmem:[%s8 + $0x8] sm:$0xf] %v969
  %978 = vst [vmem:[%s8 + $0xc] sm:$0xf] %v970
  // Predicated region
  $region34: #{forward.19} parent=0 // pred_check
    _
  $region35: #{forward.19} parent=0 // pred_check_branch
    %980 = sbr.rel (0) target = $region37
  $region36: #{forward.19} parent=0 // pred_region
    _
  $region37: #{forward.19} parent=0 // pred_fallthru
    _
  // Predicated region
  $region38: #{forward.19} parent=0 // pred_check
    _
  $region39: #{forward.19} parent=0 // pred_check_branch
    %982 = sbr.rel (0) target = $region41
  $region40: #{forward.19} parent=0 // pred_region
    _
  $region41: #{forward.19} parent=0 // pred_fallthru
    _
  // Predicated region
  $region42: #{forward.19} parent=0 // pred_check
    _
  $region43: #{forward.19} parent=0 // pred_check_branch
    %984 = sbr.rel (0) target = $region45
  $region44: #{forward.19} parent=0 // pred_region
    _
  $region45: #{forward.19} parent=0 // pred_fallthru
    _
  // Predicated region
  $region46: #{forward.19} parent=0 // pred_check
    _
  $region47: #{forward.19} parent=0 // pred_check_branch
    %986 = sbr.rel (0) target = $region49
  $region48: #{forward.19} parent=0 // pred_region
    _
  $region49: #{forward.19} parent=0 // pred_fallthru
    _

// kernel: squeeze.314
$region0: #{squeeze.314}
  %s0 = inlined_call_operand.vmem [shape: f32[32], index: 0, kind: input, shape index: {}]
  %s1 = inlined_call_operand.vmem [shape: f32[4,8], index: 1, kind: output, shape index: {}]
  $region1: #{squeeze.314} parent=0
    #allocation0 [shape = 'u8[4096]{0}', space=vmem, size = 0x1000, scoped, tag = 'scoped mem for output reshape']
    #allocation1 [shape = 'u8[4096]{0}', space=vmem, size = 0x1000, scoped, tag = 'scoped mem for input reshape']
    %s3 = sshll.u32 1, 1
    %s4 = ssub.s32 %s3, 1
    %v5 = vld [vmem:[%s0] sm:%s4]
    %6 = vst [vmem:[#allocation1] sm:%s4] %v5
    %v7 = vld [vmem:[#allocation1] sm:$0x1]
    %vm8 = vcmask 64512
    %9 = vst.msk [vmem:[#allocation0] sm:$0x1] %vm8, %v7
    %v10 = vld [vmem:[#allocation1] sm:$0x1]
    %11 = vrot.lane.b32.xlu0 %v10, 120
    %v12 = vpop.permute.xlu0 %11
    %vm13 = vcmask 64512
    %s14 = scalar_lea.vmem [#allocation0], 1
    %15 = vst.msk [vmem:[%s14] sm:$0x1] %vm13, %v12
    %v16 = vld [vmem:[#allocation1] sm:$0x1]
    %17 = vrot.lane.b32.xlu0 %v16, 112
    %v18 = vpop.permute.xlu0 %17
    %vm19 = vcmask 64512
    %s20 = scalar_lea.vmem [#allocation0], 2
    %21 = vst.msk [vmem:[%s20] sm:$0x1] %vm19, %v18
    %v22 = vld [vmem:[#allocation1] sm:$0x1]
    %23 = vrot.lane.b32.xlu0 %v22, 104
    %v24 = vpop.permute.xlu0 %23
    %vm25 = vcmask 64512
    %s26 = scalar_lea.vmem [#allocation0], 3
    %27 = vst.msk [vmem:[%s26] sm:$0x1] %vm25, %v24
    %s29 = sshll.u32 1, 4
    %s30 = ssub.s32 %s29, 1
    %v32 = vld [vmem:[#allocation0] sm:%s30]
    %s33 = sshll.u32 1, 4
    %s34 = ssub.s32 %s33, 1
    %35 = vst [vmem:[%s1] sm:%s34] %v32

// kernel: forward.20
$region0: #{forward.20}
  #allocation0 [shape = 'u32[]', space=smem, size = 0x4, offset = 0x4, fixed_abs, tag = 'smem constant byte address 0x4 - core index']
  #allocation1 [shape = 'u32[144,128]{1,0:T(1,128)}', space=vmem, size = 0x12000, scoped, tag = 'internal scratch']
  %s0 = inlined_call_operand.vmem [shape: bf16[128,144], index: 0, kind: input, shape index: {}]
  %s1 = inlined_call_operand.vmem [shape: bf16[128,144], index: 1, kind: input, shape index: {}]
  %s2 = inlined_call_operand.vmem [shape: bf16[144,128], index: 2, kind: input, shape index: {}]
  %s3 = inlined_call_operand.vmem [shape: bf16[144,128], index: 3, kind: input, shape index: {}]
  %s4 = inlined_call_operand.vmem [shape: f32[1,128], index: 4, kind: input, shape index: {}]
  %s5 = inlined_call_operand.vmem [shape: f32[128,1], index: 5, kind: input, shape index: {}]
  %s6 = inlined_call_operand.vmem [shape: bf16[128,128], index: 6, kind: output, shape index: {0}]
  %s7 = inlined_call_operand.vmem [shape: f32[1,2,128], index: 7, kind: output, shape index: {1}]
  %8 = xla_tuple %s6, %s7
  %s9 = sld [smem:[#allocation0]]
  $region42: #{forward.20} parent=0
    _
  %s11 = ssub.s32 1, %s9
  %s12 = scalar_select 0, %s11, %s9
  // Predicated region
  $region2: #{forward.20} parent=0 // pred_check
    _
  $region3: #{forward.20} parent=0 // pred_check_branch
    %14 = sbr.rel (0) target = $region5
  $region4: #{forward.20} parent=0 // pred_region
    _
  $region5: #{forward.20} parent=0 // pred_fallthru
    _
  // Predicated region
  $region6: #{forward.20} parent=0 // pred_check
    _
  $region7: #{forward.20} parent=0 // pred_check_branch
    %16 = sbr.rel (0) target = $region9
  $region8: #{forward.20} parent=0 // pred_region
    _
  $region9: #{forward.20} parent=0 // pred_fallthru
    _
  // Predicated region
  $region10: #{forward.20} parent=0 // pred_check
    _
  $region11: #{forward.20} parent=0 // pred_check_branch
    %18 = sbr.rel (0) target = $region13
  $region12: #{forward.20} parent=0 // pred_region
    _
  $region13: #{forward.20} parent=0 // pred_fallthru
    _
  // Predicated region
  $region14: #{forward.20} parent=0 // pred_check
    _
  $region15: #{forward.20} parent=0 // pred_check_branch
    %20 = sbr.rel (0) target = $region17
  $region16: #{forward.20} parent=0 // pred_region
    _
  $region17: #{forward.20} parent=0 // pred_fallthru
    _
  // Predicated region
  $region18: #{forward.20} parent=0 // pred_check
    _
  $region19: #{forward.20} parent=0 // pred_check_branch
    %22 = sbr.rel (0) target = $region21
  $region20: #{forward.20} parent=0 // pred_region
    _
  $region21: #{forward.20} parent=0 // pred_fallthru
    _
  // Predicated region
  $region22: #{forward.20} parent=0 // pred_check
    _
  $region23: #{forward.20} parent=0 // pred_check_branch
    %24 = sbr.rel (0) target = $region25
  $region24: #{forward.20} parent=0 // pred_region
    _
  $region25: #{forward.20} parent=0 // pred_fallthru
    _
  %v26 = vld [vmem:[%s0] sm:$0xff]
  %v27 = vld [vmem:[%s0 + $0x8] sm:$0xff]
  %v28 = vld [vmem:[%s0 + $0x10] sm:$0xff]
  %v29 = vld [vmem:[%s0 + $0x18] sm:$0xff]
  %v30 = vld [vmem:[%s0 + $0x20] sm:$0xff]
  %v31 = vld [vmem:[%s0 + $0x28] sm:$0xff]
  %v32 = vld [vmem:[%s0 + $0x30] sm:$0xff]
  %v33 = vld [vmem:[%s0 + $0x38] sm:$0xff]
  %v34 = vld [vmem:[%s0 + $0x40] sm:$0xff]
  %v35 = vld [vmem:[%s0 + $0x48] sm:$0xff]
  %v36 = vld [vmem:[%s0 + $0x50] sm:$0xff]
  %v37 = vld [vmem:[%s0 + $0x58] sm:$0xff]
  %v38 = vld [vmem:[%s0 + $0x60] sm:$0xff]
  %v39 = vld [vmem:[%s0 + $0x68] sm:$0xff]
  %v40 = vld [vmem:[%s0 + $0x70] sm:$0xff]
  %v41 = vld [vmem:[%s0 + $0x78] sm:$0xff]
  %v42 = vld [vmem:[%s2] sm:$0xf]
  %v43 = vld [vmem:[%s2 + $0x4] sm:$0xf]
  %v44 = vld [vmem:[%s2 + $0x8] sm:$0xf]
  %v45 = vld [vmem:[%s2 + $0xc] sm:$0xf]
  %v46 = vld [vmem:[%s2 + $0x10] sm:$0xf]
  %v47 = vld [vmem:[%s2 + $0x14] sm:$0xf]
  %v48 = vld [vmem:[%s2 + $0x18] sm:$0xf]
  %v49 = vld [vmem:[%s2 + $0x1c] sm:$0xf]
  %v50 = vld [vmem:[%s2 + $0x20] sm:$0xf]
  %v51 = vld [vmem:[%s2 + $0x24] sm:$0xf]
  %v52 = vld [vmem:[%s2 + $0x28] sm:$0xf]
  %v53 = vld [vmem:[%s2 + $0x2c] sm:$0xf]
  %v54 = vld [vmem:[%s2 + $0x30] sm:$0xf]
  %v55 = vld [vmem:[%s2 + $0x34] sm:$0xf]
  %v56 = vld [vmem:[%s2 + $0x38] sm:$0xf]
  %v57 = vld [vmem:[%s2 + $0x3c] sm:$0xf]
  %v58 = vld [vmem:[%s2 + $0x40] sm:$0xf]
  %v59 = vld [vmem:[%s2 + $0x44] sm:$0xf]
  %v60 = vld [vmem:[%s1] sm:$0xff]
  %v61 = vld [vmem:[%s1 + $0x8] sm:$0xff]
  %v62 = vld [vmem:[%s1 + $0x10] sm:$0xff]
  %v63 = vld [vmem:[%s1 + $0x18] sm:$0xff]
  %v64 = vld [vmem:[%s1 + $0x20] sm:$0xff]
  %v65 = vld [vmem:[%s1 + $0x28] sm:$0xff]
  %v66 = vld [vmem:[%s1 + $0x30] sm:$0xff]
  %v67 = vld [vmem:[%s1 + $0x38] sm:$0xff]
  %v68 = vld [vmem:[%s1 + $0x40] sm:$0xff]
  %v69 = vld [vmem:[%s1 + $0x48] sm:$0xff]
  %v70 = vld [vmem:[%s1 + $0x50] sm:$0xff]
  %v71 = vld [vmem:[%s1 + $0x58] sm:$0xff]
  %v72 = vld [vmem:[%s1 + $0x60] sm:$0xff]
  %v73 = vld [vmem:[%s1 + $0x68] sm:$0xff]
  %v74 = vld [vmem:[%s1 + $0x70] sm:$0xff]
  %v75 = vld [vmem:[%s1 + $0x78] sm:$0xff]
  %v76 = vld [vmem:[%s3] sm:$0xf]
  %v77 = vld [vmem:[%s3 + $0x4] sm:$0xf]
  %v78 = vld [vmem:[%s3 + $0x8] sm:$0xf]
  %v79 = vld [vmem:[%s3 + $0xc] sm:$0xf]
  %v80 = vld [vmem:[%s3 + $0x10] sm:$0xf]
  %v81 = vld [vmem:[%s3 + $0x14] sm:$0xf]
  %v82 = vld [vmem:[%s3 + $0x18] sm:$0xf]
  %v83 = vld [vmem:[%s3 + $0x1c] sm:$0xf]
  %v84 = vld [vmem:[%s3 + $0x20] sm:$0xf]
  %v85 = vld [vmem:[%s3 + $0x24] sm:$0xf]
  %v86 = vld [vmem:[%s3 + $0x28] sm:$0xf]
  %v87 = vld [vmem:[%s3 + $0x2c] sm:$0xf]
  %v88 = vld [vmem:[%s3 + $0x30] sm:$0xf]
  %v89 = vld [vmem:[%s3 + $0x34] sm:$0xf]
  %v90 = vld [vmem:[%s3 + $0x38] sm:$0xf]
  %v91 = vld [vmem:[%s3 + $0x3c] sm:$0xf]
  %v92 = vld [vmem:[%s3 + $0x40] sm:$0xf]
  %v93 = vld [vmem:[%s3 + $0x44] sm:$0xf]
  %v110 = vunpack.c.l.b16 %v60
  %v111 = vunpack.c.h.b16 %v60
  %v112 = vunpack.c.l.b16 %v61
  %v113 = vunpack.c.h.b16 %v61
  %v114 = vunpack.c.l.b16 %v62
  %v115 = vunpack.c.h.b16 %v62
  %v116 = vunpack.c.l.b16 %v63
  %v117 = vunpack.c.h.b16 %v63
  %v118 = vunpack.c.l.b16 %v64
  %v119 = vunpack.c.h.b16 %v64
  %v120 = vunpack.c.l.b16 %v65
  %v121 = vunpack.c.h.b16 %v65
  %v122 = vunpack.c.l.b16 %v66
  %v123 = vunpack.c.h.b16 %v66
  %v124 = vunpack.c.l.b16 %v67
  %v125 = vunpack.c.h.b16 %v67
  %v126 = vunpack.c.l.b16 %v68
  %v127 = vunpack.c.h.b16 %v68
  %v128 = vunpack.c.l.b16 %v69
  %v129 = vunpack.c.h.b16 %v69
  %v130 = vunpack.c.l.b16 %v70
  %v131 = vunpack.c.h.b16 %v70
  %v132 = vunpack.c.l.b16 %v71
  %v133 = vunpack.c.h.b16 %v71
  %v134 = vunpack.c.l.b16 %v72
  %v135 = vunpack.c.h.b16 %v72
  %v136 = vunpack.c.l.b16 %v73
  %v137 = vunpack.c.h.b16 %v73
  %v138 = vunpack.c.l.b16 %v74
  %v139 = vunpack.c.h.b16 %v74
  %v140 = vunpack.c.l.b16 %v75
  %v141 = vunpack.c.h.b16 %v75
  %v142 = vpack.c.b16 %v112, %v110
  %v143 = vpack.c.b16 %v113, %v111
  %v144 = vpack.c.b16 %v116, %v114
  %v145 = vpack.c.b16 %v117, %v115
  %v146 = vpack.c.b16 %v120, %v118
  %v147 = vpack.c.b16 %v121, %v119
  %v148 = vpack.c.b16 %v124, %v122
  %v149 = vpack.c.b16 %v125, %v123
  %v150 = vpack.c.b16 %v128, %v126
  %v151 = vpack.c.b16 %v129, %v127
  %v152 = vpack.c.b16 %v132, %v130
  %v153 = vpack.c.b16 %v133, %v131
  %v154 = vpack.c.b16 %v136, %v134
  %v155 = vpack.c.b16 %v137, %v135
  %v156 = vpack.c.b16 %v140, %v138
  %v157 = vpack.c.b16 %v141, %v139
  %v184 = vunpack.c.l.b16 %v76
  %v185 = vunpack.c.l.b16 %v77
  %v186 = vunpack.c.l.b16 %v78
  %v187 = vunpack.c.l.b16 %v79
  %v188 = vunpack.c.l.b16 %v80
  %v189 = vunpack.c.l.b16 %v81
  %v190 = vunpack.c.l.b16 %v82
  %v191 = vunpack.c.l.b16 %v83
  %v192 = vunpack.c.l.b16 %v84
  %v193 = vunpack.c.l.b16 %v85
  %v194 = vunpack.c.l.b16 %v86
  %v195 = vunpack.c.l.b16 %v87
  %v196 = vunpack.c.l.b16 %v88
  %v197 = vunpack.c.l.b16 %v89
  %v198 = vunpack.c.l.b16 %v90
  %v199 = vunpack.c.l.b16 %v91
  %v200 = vunpack.c.l.b16 %v92
  %v201 = vunpack.c.l.b16 %v93
  %v202 = vpack.c.b16 %v185, %v184
  %v203 = vpack.c.b16 %v187, %v186
  %v204 = vpack.c.b16 %v189, %v188
  %v205 = vpack.c.b16 %v191, %v190
  %v206 = vpack.c.b16 %v193, %v192
  %v207 = vpack.c.b16 %v195, %v194
  %v208 = vpack.c.b16 %v197, %v196
  %v209 = vpack.c.b16 %v199, %v198
  %v210 = vpack.c.b16 %v201, %v200
  %vm220 = vcmask 130048
  %v222 = vsel %vm220, %v143, 0
  %v225 = vsel %vm220, %v145, 0
  %v228 = vsel %vm220, %v147, 0
  %v231 = vsel %vm220, %v149, 0
  %v234 = vsel %vm220, %v151, 0
  %v237 = vsel %vm220, %v153, 0
  %v240 = vsel %vm220, %v155, 0
  %v243 = vsel %vm220, %v157, 0
  %245 = vmatprep.subr.bf16.mxu0 0
  %246 = vmatpush1.bf16.msra.mxu0 %v209
  %247 = vmatprep.subr.bf16.mxu0 0
  %248 = vmatpush1.bf16.msra.mxu0 %v208
  %249 = vmatprep.subr.bf16.mxu0 0
  %250 = vmatpush1.bf16.msra.mxu0 %v207
  %251 = vmatprep.subr.bf16.mxu0 0
  %252 = vmatpush1.bf16.msra.mxu0 %v206
  %253 = vmatprep.subr.bf16.mxu0 0
  %254 = vmatpush1.bf16.msra.mxu0 %v205
  %255 = vmatprep.subr.bf16.mxu0 0
  %256 = vmatpush1.bf16.msra.mxu0 %v204
  %257 = vmatprep.subr.bf16.mxu0 0
  %258 = vmatpush1.bf16.msra.mxu0 %v203
  %259 = vmatprep.subr.bf16.mxu0 0
  %260 = vmatpush1.bf16.msra.mxu0 %v202
  %261 = vmatprep.subr.bf16.mxu0 0
  %262 = vmatpush2.bf16.msra.mxu0 0
  %263 = vmatprep.subr.bf16.mxu0 0
  %264 = vmatpush2.bf16.msra.mxu0 0
  %265 = vmatprep.subr.bf16.mxu0 0
  %266 = vmatpush2.bf16.msra.mxu0 0
  %267 = vmatprep.subr.bf16.mxu0 0
  %268 = vmatpush2.bf16.msra.mxu0 0
  %269 = vmatprep.subr.bf16.mxu0 0
  %270 = vmatpush2.bf16.msra.mxu0 0
  %271 = vmatprep.subr.bf16.mxu0 0
  %272 = vmatpush2.bf16.msra.mxu0 0
  %273 = vmatprep.subr.bf16.mxu0 0
  %274 = vmatpush2.bf16.msra.mxu0 0
  %275 = vmatprep.subr.bf16.mxu0 0
  %276 = vmatpush2.bf16.msra.mxu0 %v210
  %277 = vmatprep.mubr.bf16.mxu0 %v222
  %278 = vmatmul.mubr.bf16.gmra.mxu0 %v142
  %v279 = vpop.f32.mrf.mxu0
  %v280 = vadd.f32 0.0, %v279
  %v281 = vpop.f32.mrf.mxu0
  %v282 = vpop.f32.mrf.mxu0
  %v283 = vadd.f32 0.0, %v282
  %v284 = vpop.f32.mrf.mxu0
  %285 = vmatprep.mubr.bf16.mxu0 %v225
  %286 = vmatmul.mubr.bf16.gmra.mxu0 %v144
  %v287 = vpop.f32.mrf.mxu0
  %v288 = vadd.f32 0.0, %v287
  %v289 = vpop.f32.mrf.mxu0
  %v290 = vpop.f32.mrf.mxu0
  %v291 = vadd.f32 0.0, %v290
  %v292 = vpop.f32.mrf.mxu0
  %293 = vmatprep.mubr.bf16.mxu0 %v228
  %294 = vmatmul.mubr.bf16.gmra.mxu0 %v146
  %v295 = vpop.f32.mrf.mxu0
  %v296 = vadd.f32 0.0, %v295
  %v297 = vpop.f32.mrf.mxu0
  %v298 = vpop.f32.mrf.mxu0
  %v299 = vadd.f32 0.0, %v298
  %v300 = vpop.f32.mrf.mxu0
  %301 = vmatprep.mubr.bf16.mxu0 %v231
  %302 = vmatmul.mubr.bf16.gmra.mxu0 %v148
  %v303 = vpop.f32.mrf.mxu0
  %v304 = vadd.f32 0.0, %v303
  %v305 = vpop.f32.mrf.mxu0
  %v306 = vpop.f32.mrf.mxu0
  %v307 = vadd.f32 0.0, %v306
  %v308 = vpop.f32.mrf.mxu0
  %309 = vmatprep.mubr.bf16.mxu0 %v234
  %310 = vmatmul.mubr.bf16.gmra.mxu0 %v150
  %v311 = vpop.f32.mrf.mxu0
  %v312 = vadd.f32 0.0, %v311
  %v313 = vpop.f32.mrf.mxu0
  %v314 = vpop.f32.mrf.mxu0
  %v315 = vadd.f32 0.0, %v314
  %v316 = vpop.f32.mrf.mxu0
  %317 = vmatprep.mubr.bf16.mxu0 %v237
  %318 = vmatmul.mubr.bf16.gmra.mxu0 %v152
  %v319 = vpop.f32.mrf.mxu0
  %v320 = vadd.f32 0.0, %v319
  %v321 = vpop.f32.mrf.mxu0
  %v322 = vpop.f32.mrf.mxu0
  %v323 = vadd.f32 0.0, %v322
  %v324 = vpop.f32.mrf.mxu0
  %325 = vmatprep.mubr.bf16.mxu0 %v240
  %326 = vmatmul.mubr.bf16.gmra.mxu0 %v154
  %v327 = vpop.f32.mrf.mxu0
  %v328 = vadd.f32 0.0, %v327
  %v329 = vpop.f32.mrf.mxu0
  %v330 = vpop.f32.mrf.mxu0
  %v331 = vadd.f32 0.0, %v330
  %v332 = vpop.f32.mrf.mxu0
  %333 = vmatprep.mubr.bf16.mxu0 %v243
  %334 = vmatmul.mubr.bf16.gmra.mxu0 %v156
  %v335 = vpop.f32.mrf.mxu0
  %v336 = vadd.f32 0.0, %v335
  %v337 = vpop.f32.mrf.mxu0
  %v338 = vpop.f32.mrf.mxu0
  %v339 = vadd.f32 0.0, %v338
  %v340 = vpop.f32.mrf.mxu0
  %341 = vdwg.mxu0
  %v358 = vunpack.c.l.b16 %v26
  %v359 = vunpack.c.h.b16 %v26
  %v360 = vunpack.c.l.b16 %v27
  %v361 = vunpack.c.h.b16 %v27
  %v362 = vunpack.c.l.b16 %v28
  %v363 = vunpack.c.h.b16 %v28
  %v364 = vunpack.c.l.b16 %v29
  %v365 = vunpack.c.h.b16 %v29
  %v366 = vunpack.c.l.b16 %v30
  %v367 = vunpack.c.h.b16 %v30
  %v368 = vunpack.c.l.b16 %v31
  %v369 = vunpack.c.h.b16 %v31
  %v370 = vunpack.c.l.b16 %v32
  %v371 = vunpack.c.h.b16 %v32
  %v372 = vunpack.c.l.b16 %v33
  %v373 = vunpack.c.h.b16 %v33
  %v374 = vunpack.c.l.b16 %v34
  %v375 = vunpack.c.h.b16 %v34
  %v376 = vunpack.c.l.b16 %v35
  %v377 = vunpack.c.h.b16 %v35
  %v378 = vunpack.c.l.b16 %v36
  %v379 = vunpack.c.h.b16 %v36
  %v380 = vunpack.c.l.b16 %v37
  %v381 = vunpack.c.h.b16 %v37
  %v382 = vunpack.c.l.b16 %v38
  %v383 = vunpack.c.h.b16 %v38
  %v384 = vunpack.c.l.b16 %v39
  %v385 = vunpack.c.h.b16 %v39
  %v386 = vunpack.c.l.b16 %v40
  %v387 = vunpack.c.h.b16 %v40
  %v388 = vunpack.c.l.b16 %v41
  %v389 = vunpack.c.h.b16 %v41
  %v390 = vpack.c.b16 %v360, %v358
  %v391 = vpack.c.b16 %v361, %v359
  %v392 = vpack.c.b16 %v364, %v362
  %v393 = vpack.c.b16 %v365, %v363
  %v394 = vpack.c.b16 %v368, %v366
  %v395 = vpack.c.b16 %v369, %v367
  %v396 = vpack.c.b16 %v372, %v370
  %v397 = vpack.c.b16 %v373, %v371
  %v398 = vpack.c.b16 %v376, %v374
  %v399 = vpack.c.b16 %v377, %v375
  %v400 = vpack.c.b16 %v380, %v378
  %v401 = vpack.c.b16 %v381, %v379
  %v402 = vpack.c.b16 %v384, %v382
  %v403 = vpack.c.b16 %v385, %v383
  %v404 = vpack.c.b16 %v388, %v386
  %v405 = vpack.c.b16 %v389, %v387
  %v432 = vunpack.c.l.b16 %v42
  %v433 = vunpack.c.l.b16 %v43
  %v434 = vunpack.c.l.b16 %v44
  %v435 = vunpack.c.l.b16 %v45
  %v436 = vunpack.c.l.b16 %v46
  %v437 = vunpack.c.l.b16 %v47
  %v438 = vunpack.c.l.b16 %v48
  %v439 = vunpack.c.l.b16 %v49
  %v440 = vunpack.c.l.b16 %v50
  %v441 = vunpack.c.l.b16 %v51
  %v442 = vunpack.c.l.b16 %v52
  %v443 = vunpack.c.l.b16 %v53
  %v444 = vunpack.c.l.b16 %v54
  %v445 = vunpack.c.l.b16 %v55
  %v446 = vunpack.c.l.b16 %v56
  %v447 = vunpack.c.l.b16 %v57
  %v448 = vunpack.c.l.b16 %v58
  %v449 = vunpack.c.l.b16 %v59
  %v450 = vpack.c.b16 %v433, %v432
  %v451 = vpack.c.b16 %v435, %v434
  %v452 = vpack.c.b16 %v437, %v436
  %v453 = vpack.c.b16 %v439, %v438
  %v454 = vpack.c.b16 %v441, %v440
  %v455 = vpack.c.b16 %v443, %v442
  %v456 = vpack.c.b16 %v445, %v444
  %v457 = vpack.c.b16 %v447, %v446
  %v458 = vpack.c.b16 %v449, %v448
  %v469 = vsel %vm220, %v391, 0
  %v472 = vsel %vm220, %v393, 0
  %v475 = vsel %vm220, %v395, 0
  %v478 = vsel %vm220, %v397, 0
  %v481 = vsel %vm220, %v399, 0
  %v484 = vsel %vm220, %v401, 0
  %v487 = vsel %vm220, %v403, 0
  %v490 = vsel %vm220, %v405, 0
  %492 = vmatprep.subr.bf16.mxu0 0
  %493 = vmatpush1.bf16.msra.mxu0 %v457
  %494 = vmatprep.subr.bf16.mxu0 0
  %495 = vmatpush1.bf16.msra.mxu0 %v456
  %496 = vmatprep.subr.bf16.mxu0 0
  %497 = vmatpush1.bf16.msra.mxu0 %v455
  %498 = vmatprep.subr.bf16.mxu0 0
  %499 = vmatpush1.bf16.msra.mxu0 %v454
  %500 = vmatprep.subr.bf16.mxu0 0
  %501 = vmatpush1.bf16.msra.mxu0 %v453
  %502 = vmatprep.subr.bf16.mxu0 0
  %503 = vmatpush1.bf16.msra.mxu0 %v452
  %504 = vmatprep.subr.bf16.mxu0 0
  %505 = vmatpush1.bf16.msra.mxu0 %v451
  %506 = vmatprep.subr.bf16.mxu0 0
  %507 = vmatpush1.bf16.msra.mxu0 %v450
  %508 = vmatprep.subr.bf16.mxu0 0
  %509 = vmatpush2.bf16.msra.mxu0 0
  %510 = vmatprep.subr.bf16.mxu0 0
  %511 = vmatpush2.bf16.msra.mxu0 0
  %512 = vmatprep.subr.bf16.mxu0 0
  %513 = vmatpush2.bf16.msra.mxu0 0
  %514 = vmatprep.subr.bf16.mxu0 0
  %515 = vmatpush2.bf16.msra.mxu0 0
  %516 = vmatprep.subr.bf16.mxu0 0
  %517 = vmatpush2.bf16.msra.mxu0 0
  %518 = vmatprep.subr.bf16.mxu0 0
  %519 = vmatpush2.bf16.msra.mxu0 0
  %520 = vmatprep.subr.bf16.mxu0 0
  %521 = vmatpush2.bf16.msra.mxu0 0
  %522 = vmatprep.subr.bf16.mxu0 0
  %523 = vmatpush2.bf16.msra.mxu0 %v458
  %524 = vmatprep.mubr.bf16.mxu0 %v469
  %525 = vmatmul.mubr.bf16.gmra.mxu0 %v390
  %v526 = vpop.f32.mrf.mxu0
  %v527 = vadd.f32 %v280, %v526
  %v528 = vpop.f32.mrf.mxu0
  %v529 = vpop.f32.mrf.mxu0
  %v530 = vadd.f32 %v283, %v529
  %v531 = vpop.f32.mrf.mxu0
  %532 = vmatprep.mubr.bf16.mxu0 %v472
  %533 = vmatmul.mubr.bf16.gmra.mxu0 %v392
  %v534 = vpop.f32.mrf.mxu0
  %v535 = vadd.f32 %v288, %v534
  %v536 = vpop.f32.mrf.mxu0
  %v537 = vpop.f32.mrf.mxu0
  %v538 = vadd.f32 %v291, %v537
  %v539 = vpop.f32.mrf.mxu0
  %540 = vmatprep.mubr.bf16.mxu0 %v475
  %541 = vmatmul.mubr.bf16.gmra.mxu0 %v394
  %v542 = vpop.f32.mrf.mxu0
  %v543 = vadd.f32 %v296, %v542
  %v544 = vpop.f32.mrf.mxu0
  %v545 = vpop.f32.mrf.mxu0
  %v546 = vadd.f32 %v299, %v545
  %v547 = vpop.f32.mrf.mxu0
  %548 = vmatprep.mubr.bf16.mxu0 %v478
  %549 = vmatmul.mubr.bf16.gmra.mxu0 %v396
  %v550 = vpop.f32.mrf.mxu0
  %v551 = vadd.f32 %v304, %v550
  %v552 = vpop.f32.mrf.mxu0
  %v553 = vpop.f32.mrf.mxu0
  %v554 = vadd.f32 %v307, %v553
  %v555 = vpop.f32.mrf.mxu0
  %556 = vmatprep.mubr.bf16.mxu0 %v481
  %557 = vmatmul.mubr.bf16.gmra.mxu0 %v398
  %v558 = vpop.f32.mrf.mxu0
  %v559 = vadd.f32 %v312, %v558
  %v560 = vpop.f32.mrf.mxu0
  %v561 = vpop.f32.mrf.mxu0
  %v562 = vadd.f32 %v315, %v561
  %v563 = vpop.f32.mrf.mxu0
  %564 = vmatprep.mubr.bf16.mxu0 %v484
  %565 = vmatmul.mubr.bf16.gmra.mxu0 %v400
  %v566 = vpop.f32.mrf.mxu0
  %v567 = vadd.f32 %v320, %v566
  %v568 = vpop.f32.mrf.mxu0
  %v569 = vpop.f32.mrf.mxu0
  %v570 = vadd.f32 %v323, %v569
  %v571 = vpop.f32.mrf.mxu0
  %572 = vmatprep.mubr.bf16.mxu0 %v487
  %573 = vmatmul.mubr.bf16.gmra.mxu0 %v402
  %v574 = vpop.f32.mrf.mxu0
  %v575 = vadd.f32 %v328, %v574
  %v576 = vpop.f32.mrf.mxu0
  %v577 = vpop.f32.mrf.mxu0
  %v578 = vadd.f32 %v331, %v577
  %v579 = vpop.f32.mrf.mxu0
  %580 = vmatprep.mubr.bf16.mxu0 %v490
  %581 = vmatmul.mubr.bf16.gmra.mxu0 %v404
  %v582 = vpop.f32.mrf.mxu0
  %v583 = vadd.f32 %v336, %v582
  %v584 = vpop.f32.mrf.mxu0
  %v585 = vpop.f32.mrf.mxu0
  %v586 = vadd.f32 %v339, %v585
  %v587 = vpop.f32.mrf.mxu0
  %588 = vdwg.mxu0
  %v589 = vld [vmem:[%s4] sm:$0x1]
  %v591 = vlaneseq
  %v592 = vshrl.u32 %v591, 7
  %v593 = vsub.s32 0, %v592
  %v594 = vrot.slane %v589, %v593
  %v596 = vadd.f32 %v527, %v594
  %v597 = vadd.f32 %v530, %v594
  %v598 = vadd.f32 %v535, %v594
  %v599 = vadd.f32 %v538, %v594
  %v600 = vadd.f32 %v543, %v594
  %v601 = vadd.f32 %v546, %v594
  %v602 = vadd.f32 %v551, %v594
  %v603 = vadd.f32 %v554, %v594
  %v604 = vadd.f32 %v559, %v594
  %v605 = vadd.f32 %v562, %v594
  %v606 = vadd.f32 %v567, %v594
  %v607 = vadd.f32 %v570, %v594
  %v608 = vadd.f32 %v575, %v594
  %v609 = vadd.f32 %v578, %v594
  %v610 = vadd.f32 %v583, %v594
  %v611 = vadd.f32 %v586, %v594
  %v612 = vld [vmem:[%s5] sm:$0xff]
  %v613 = vld [vmem:[%s5 + $0x8] sm:$0xff]
  %v614 = vld [vmem:[%s5 + $0x10] sm:$0xff]
  %v615 = vld [vmem:[%s5 + $0x18] sm:$0xff]
  %v616 = vld [vmem:[%s5 + $0x20] sm:$0xff]
  %v617 = vld [vmem:[%s5 + $0x28] sm:$0xff]
  %v618 = vld [vmem:[%s5 + $0x30] sm:$0xff]
  %v619 = vld [vmem:[%s5 + $0x38] sm:$0xff]
  %v620 = vld [vmem:[%s5 + $0x40] sm:$0xff]
  %v621 = vld [vmem:[%s5 + $0x48] sm:$0xff]
  %v622 = vld [vmem:[%s5 + $0x50] sm:$0xff]
  %v623 = vld [vmem:[%s5 + $0x58] sm:$0xff]
  %v624 = vld [vmem:[%s5 + $0x60] sm:$0xff]
  %v625 = vld [vmem:[%s5 + $0x68] sm:$0xff]
  %v626 = vld [vmem:[%s5 + $0x70] sm:$0xff]
  %v627 = vld [vmem:[%s5 + $0x78] sm:$0xff]
  %629 = vset.pattern.permute.xlu0 0
  %630 = vperm.xlu0 %629, %v612
  %v631 = vpop.permute.xlu0 %630
  %634 = vset.pattern.permute.xlu0 0
  %635 = vperm.xlu0 %634, %v613
  %v636 = vpop.permute.xlu0 %635
  %639 = vset.pattern.permute.xlu0 0
  %640 = vperm.xlu0 %639, %v614
  %v641 = vpop.permute.xlu0 %640
  %644 = vset.pattern.permute.xlu0 0
  %645 = vperm.xlu0 %644, %v615
  %v646 = vpop.permute.xlu0 %645
  %649 = vset.pattern.permute.xlu0 0
  %650 = vperm.xlu0 %649, %v616
  %v651 = vpop.permute.xlu0 %650
  %654 = vset.pattern.permute.xlu0 0
  %655 = vperm.xlu0 %654, %v617
  %v656 = vpop.permute.xlu0 %655
  %659 = vset.pattern.permute.xlu0 0
  %660 = vperm.xlu0 %659, %v618
  %v661 = vpop.permute.xlu0 %660
  %664 = vset.pattern.permute.xlu0 0
  %665 = vperm.xlu0 %664, %v619
  %v666 = vpop.permute.xlu0 %665
  %669 = vset.pattern.permute.xlu0 0
  %670 = vperm.xlu0 %669, %v620
  %v671 = vpop.permute.xlu0 %670
  %674 = vset.pattern.permute.xlu0 0
  %675 = vperm.xlu0 %674, %v621
  %v676 = vpop.permute.xlu0 %675
  %679 = vset.pattern.permute.xlu0 0
  %680 = vperm.xlu0 %679, %v622
  %v681 = vpop.permute.xlu0 %680
  %684 = vset.pattern.permute.xlu0 0
  %685 = vperm.xlu0 %684, %v623
  %v686 = vpop.permute.xlu0 %685
  %689 = vset.pattern.permute.xlu0 0
  %690 = vperm.xlu0 %689, %v624
  %v691 = vpop.permute.xlu0 %690
  %694 = vset.pattern.permute.xlu0 0
  %695 = vperm.xlu0 %694, %v625
  %v696 = vpop.permute.xlu0 %695
  %699 = vset.pattern.permute.xlu0 0
  %700 = vperm.xlu0 %699, %v626
  %v701 = vpop.permute.xlu0 %700
  %704 = vset.pattern.permute.xlu0 0
  %705 = vperm.xlu0 %704, %v627
  %v706 = vpop.permute.xlu0 %705
  %v708 = vmul.f32 %v596, %v631
  %v709 = vmul.f32 %v597, %v636
  %v710 = vmul.f32 %v598, %v641
  %v711 = vmul.f32 %v599, %v646
  %v712 = vmul.f32 %v600, %v651
  %v713 = vmul.f32 %v601, %v656
  %v714 = vmul.f32 %v602, %v661
  %v715 = vmul.f32 %v603, %v666
  %v716 = vmul.f32 %v604, %v671
  %v717 = vmul.f32 %v605, %v676
  %v718 = vmul.f32 %v606, %v681
  %v719 = vmul.f32 %v607, %v686
  %v720 = vmul.f32 %v608, %v691
  %v721 = vmul.f32 %v609, %v696
  %v722 = vmul.f32 %v610, %v701
  %v723 = vmul.f32 %v611, %v706
  %v724 = vadd.f32 %v708, %v709
  %v725 = vadd.f32 %v724, %v710
  %v726 = vadd.f32 %v725, %v711
  %v727 = vadd.f32 %v726, %v712
  %v728 = vadd.f32 %v727, %v713
  %v729 = vadd.f32 %v728, %v714
  %v730 = vadd.f32 %v729, %v715
  %v731 = vadd.f32 %v730, %v716
  %v732 = vadd.f32 %v731, %v717
  %v733 = vadd.f32 %v732, %v718
  %v734 = vadd.f32 %v733, %v719
  %v735 = vadd.f32 %v734, %v720
  %v736 = vadd.f32 %v735, %v721
  %v737 = vadd.f32 %v736, %v722
  %v738 = vadd.f32 %v737, %v723
  %v739 = vrot.slane %v738, 4
  %v740 = vadd.f32 %v738, %v739
  %v741 = vrot.slane %v740, 2
  %v742 = vadd.f32 %v740, %v741
  %v743 = vrot.slane %v742, 1
  %v744 = vadd.f32 %v742, %v743
  %v745 = vmul.f32 %v708, %v596
  %v746 = vmul.f32 %v709, %v597
  %v747 = vmul.f32 %v710, %v598
  %v748 = vmul.f32 %v711, %v599
  %v749 = vmul.f32 %v712, %v600
  %v750 = vmul.f32 %v713, %v601
  %v751 = vmul.f32 %v714, %v602
  %v752 = vmul.f32 %v715, %v603
  %v753 = vmul.f32 %v716, %v604
  %v754 = vmul.f32 %v717, %v605
  %v755 = vmul.f32 %v718, %v606
  %v756 = vmul.f32 %v719, %v607
  %v757 = vmul.f32 %v720, %v608
  %v758 = vmul.f32 %v721, %v609
  %v759 = vmul.f32 %v722, %v610
  %v760 = vmul.f32 %v723, %v611
  %v761 = vadd.f32 %v745, %v746
  %v762 = vadd.f32 %v761, %v747
  %v763 = vadd.f32 %v762, %v748
  %v764 = vadd.f32 %v763, %v749
  %v765 = vadd.f32 %v764, %v750
  %v766 = vadd.f32 %v765, %v751
  %v767 = vadd.f32 %v766, %v752
  %v768 = vadd.f32 %v767, %v753
  %v769 = vadd.f32 %v768, %v754
  %v770 = vadd.f32 %v769, %v755
  %v771 = vadd.f32 %v770, %v756
  %v772 = vadd.f32 %v771, %v757
  %v773 = vadd.f32 %v772, %v758
  %v774 = vadd.f32 %v773, %v759
  %v775 = vadd.f32 %v774, %v760
  %v776 = vrot.slane %v775, 4
  %v777 = vadd.f32 %v775, %v776
  %v778 = vrot.slane %v777, 2
  %v779 = vadd.f32 %v777, %v778
  %v780 = vrot.slane %v779, 1
  %v781 = vadd.f32 %v779, %v780
  %vm782 = vcmask 1040384
  %v783 = vsel %vm782, %v744, %v781
  %784 = vst [vmem:[%s7] sm:$0x3] %v783
  %v785 = vpack.c.bf16 %v597, %v596
  %v786 = vpack.c.bf16 %v599, %v598
  %v787 = vpack.c.bf16 %v601, %v600
  %v788 = vpack.c.bf16 %v603, %v602
  %v789 = vpack.c.bf16 %v605, %v604
  %v790 = vpack.c.bf16 %v607, %v606
  %v791 = vpack.c.bf16 %v609, %v608
  %v792 = vpack.c.bf16 %v611, %v610
  %v801 = vunpack.c.l.b16 %v785
  %v802 = vunpack.c.h.b16 %v785
  %v803 = vunpack.c.l.b16 %v786
  %v804 = vunpack.c.h.b16 %v786
  %v805 = vunpack.c.l.b16 %v787
  %v806 = vunpack.c.h.b16 %v787
  %v807 = vunpack.c.l.b16 %v788
  %v808 = vunpack.c.h.b16 %v788
  %v809 = vunpack.c.l.b16 %v789
  %v810 = vunpack.c.h.b16 %v789
  %v811 = vunpack.c.l.b16 %v790
  %v812 = vunpack.c.h.b16 %v790
  %v813 = vunpack.c.l.b16 %v791
  %v814 = vunpack.c.h.b16 %v791
  %v815 = vunpack.c.l.b16 %v792
  %v816 = vunpack.c.h.b16 %v792
  %v817 = vpack.c.b16 %v801, %v801
  %v818 = vpack.c.b16 %v802, %v802
  %v819 = vpack.c.b16 %v803, %v803
  %v820 = vpack.c.b16 %v804, %v804
  %v821 = vpack.c.b16 %v805, %v805
  %v822 = vpack.c.b16 %v806, %v806
  %v823 = vpack.c.b16 %v807, %v807
  %v824 = vpack.c.b16 %v808, %v808
  %v825 = vpack.c.b16 %v809, %v809
  %v826 = vpack.c.b16 %v810, %v810
  %v827 = vpack.c.b16 %v811, %v811
  %v828 = vpack.c.b16 %v812, %v812
  %v829 = vpack.c.b16 %v813, %v813
  %v830 = vpack.c.b16 %v814, %v814
  %v831 = vpack.c.b16 %v815, %v815
  %v832 = vpack.c.b16 %v816, %v816
  %849 = vst [vmem:[%s6] sm:$0xf] %v817
  %850 = vst [vmem:[%s6 + $0x4] sm:$0xf] %v818
  %851 = vst [vmem:[%s6 + $0x8] sm:$0xf] %v819
  %852 = vst [vmem:[%s6 + $0xc] sm:$0xf] %v820
  %853 = vst [vmem:[%s6 + $0x10] sm:$0xf] %v821
  %854 = vst [vmem:[%s6 + $0x14] sm:$0xf] %v822
  %855 = vst [vmem:[%s6 + $0x18] sm:$0xf] %v823
  %856 = vst [vmem:[%s6 + $0x1c] sm:$0xf] %v824
  %857 = vst [vmem:[%s6 + $0x20] sm:$0xf] %v825
  %858 = vst [vmem:[%s6 + $0x24] sm:$0xf] %v826
  %859 = vst [vmem:[%s6 + $0x28] sm:$0xf] %v827
  %860 = vst [vmem:[%s6 + $0x2c] sm:$0xf] %v828
  %861 = vst [vmem:[%s6 + $0x30] sm:$0xf] %v829
  %862 = vst [vmem:[%s6 + $0x34] sm:$0xf] %v830
  %863 = vst [vmem:[%s6 + $0x38] sm:$0xf] %v831
  %864 = vst [vmem:[%s6 + $0x3c] sm:$0xf] %v832
  // Predicated region
  $region26: #{forward.20} parent=0 // pred_check
    _
  $region27: #{forward.20} parent=0 // pred_check_branch
    %866 = sbr.rel (0) target = $region29
  $region28: #{forward.20} parent=0 // pred_region
    _
  $region29: #{forward.20} parent=0 // pred_fallthru
    _
  // Predicated region
  $region30: #{forward.20} parent=0 // pred_check
    _
  $region31: #{forward.20} parent=0 // pred_check_branch
    %868 = sbr.rel (0) target = $region33
  $region32: #{forward.20} parent=0 // pred_region
    _
  $region33: #{forward.20} parent=0 // pred_fallthru
    _
  // Predicated region
  $region34: #{forward.20} parent=0 // pred_check
    _
  $region35: #{forward.20} parent=0 // pred_check_branch
    %870 = sbr.rel (0) target = $region37
  $region36: #{forward.20} parent=0 // pred_region
    _
  $region37: #{forward.20} parent=0 // pred_fallthru
    _
  // Predicated region
  $region38: #{forward.20} parent=0 // pred_check
    _
  $region39: #{forward.20} parent=0 // pred_check_branch
    %872 = sbr.rel (0) target = $region41
  $region40: #{forward.20} parent=0 // pred_region
    _
  $region41: #{forward.20} parent=0 // pred_fallthru
    _

// kernel: forward.21
$region0: #{forward.21}
  #allocation0 [shape = 'u32[]', space=smem, size = 0x4, offset = 0x4, fixed_abs, tag = 'smem constant byte address 0x4 - core index']
  #allocation1 [shape = 'u32[144,128]{1,0:T(1,128)}', space=vmem, size = 0x12000, scoped, tag = 'internal scratch']
  %s0 = inlined_call_operand.vmem [shape: bf16[512,72], index: 0, kind: input, shape index: {}]
  %s1 = inlined_call_operand.vmem [shape: bf16[512,72], index: 1, kind: input, shape index: {}]
  %s2 = inlined_call_operand.vmem [shape: bf16[72,128], index: 2, kind: input, shape index: {}]
  %s3 = inlined_call_operand.vmem [shape: bf16[72,128], index: 3, kind: input, shape index: {}]
  %s4 = inlined_call_operand.vmem [shape: f32[1,128], index: 4, kind: input, shape index: {}]
  %s5 = inlined_call_operand.vmem [shape: f32[512,128], index: 5, kind: output, shape index: {}]
  %s6 = sld [smem:[#allocation0]]
  $region30: #{forward.21} parent=0
    _
  %s8 = ssub.s32 1, %s6
  %s9 = scalar_select 0, %s8, %s6
  // Predicated region
  $region2: #{forward.21} parent=0 // pred_check
    _
  $region3: #{forward.21} parent=0 // pred_check_branch
    %11 = sbr.rel (0) target = $region5
  $region4: #{forward.21} parent=0 // pred_region
    _
  $region5: #{forward.21} parent=0 // pred_fallthru
    _
  // Predicated region
  $region6: #{forward.21} parent=0 // pred_check
    _
  $region7: #{forward.21} parent=0 // pred_check_branch
    %13 = sbr.rel (0) target = $region9
  $region8: #{forward.21} parent=0 // pred_region
    _
  $region9: #{forward.21} parent=0 // pred_fallthru
    _
  // Predicated region
  $region10: #{forward.21} parent=0 // pred_check
    _
  $region11: #{forward.21} parent=0 // pred_check_branch
    %15 = sbr.rel (0) target = $region13
  $region12: #{forward.21} parent=0 // pred_region
    _
  $region13: #{forward.21} parent=0 // pred_fallthru
    _
  // Predicated region
  $region14: #{forward.21} parent=0 // pred_check
    _
  $region15: #{forward.21} parent=0 // pred_check_branch
    %17 = sbr.rel (0) target = $region17
  $region16: #{forward.21} parent=0 // pred_region
    _
  $region17: #{forward.21} parent=0 // pred_fallthru
    _
  // Predicated region
  $region18: #{forward.21} parent=0 // pred_check
    _
  $region19: #{forward.21} parent=0 // pred_check_branch
    %19 = sbr.rel (0) target = $region21
  $region20: #{forward.21} parent=0 // pred_region
    _
  $region21: #{forward.21} parent=0 // pred_fallthru
    _
  %v21 = vld [vmem:[%s0] sm:$0xf]
  %v22 = vld [vmem:[%s0 + $0x4] sm:$0xf]
  %v23 = vld [vmem:[%s0 + $0x8] sm:$0xf]
  %v24 = vld [vmem:[%s0 + $0xc] sm:$0xf]
  %v25 = vld [vmem:[%s0 + $0x10] sm:$0xf]
  %v26 = vld [vmem:[%s0 + $0x14] sm:$0xf]
  %v27 = vld [vmem:[%s0 + $0x18] sm:$0xf]
  %v28 = vld [vmem:[%s0 + $0x1c] sm:$0xf]
  %v29 = vld [vmem:[%s0 + $0x20] sm:$0xf]
  %v30 = vld [vmem:[%s0 + $0x24] sm:$0xf]
  %v31 = vld [vmem:[%s0 + $0x28] sm:$0xf]
  %v32 = vld [vmem:[%s0 + $0x2c] sm:$0xf]
  %v33 = vld [vmem:[%s0 + $0x30] sm:$0xf]
  %v34 = vld [vmem:[%s0 + $0x34] sm:$0xf]
  %v35 = vld [vmem:[%s0 + $0x38] sm:$0xf]
  %v36 = vld [vmem:[%s0 + $0x3c] sm:$0xf]
  %v37 = vld [vmem:[%s0 + $0x40] sm:$0xf]
  %v38 = vld [vmem:[%s0 + $0x44] sm:$0xf]
  %v39 = vld [vmem:[%s0 + $0x48] sm:$0xf]
  %v40 = vld [vmem:[%s0 + $0x4c] sm:$0xf]
  %v41 = vld [vmem:[%s0 + $0x50] sm:$0xf]
  %v42 = vld [vmem:[%s0 + $0x54] sm:$0xf]
  %v43 = vld [vmem:[%s0 + $0x58] sm:$0xf]
  %v44 = vld [vmem:[%s0 + $0x5c] sm:$0xf]
  %v45 = vld [vmem:[%s0 + $0x60] sm:$0xf]
  %v46 = vld [vmem:[%s0 + $0x64] sm:$0xf]
  %v47 = vld [vmem:[%s0 + $0x68] sm:$0xf]
  %v48 = vld [vmem:[%s0 + $0x6c] sm:$0xf]
  %v49 = vld [vmem:[%s0 + $0x70] sm:$0xf]
  %v50 = vld [vmem:[%s0 + $0x74] sm:$0xf]
  %v51 = vld [vmem:[%s0 + $0x78] sm:$0xf]
  %v52 = vld [vmem:[%s0 + $0x7c] sm:$0xf]
  %v53 = vld [vmem:[%s0 + $0x80] sm:$0xf]
  %v54 = vld [vmem:[%s0 + $0x84] sm:$0xf]
  %v55 = vld [vmem:[%s0 + $0x88] sm:$0xf]
  %v56 = vld [vmem:[%s0 + $0x8c] sm:$0xf]
  %v57 = vld [vmem:[%s0 + $0x90] sm:$0xf]
  %v58 = vld [vmem:[%s0 + $0x94] sm:$0xf]
  %v59 = vld [vmem:[%s0 + $0x98] sm:$0xf]
  %v60 = vld [vmem:[%s0 + $0x9c] sm:$0xf]
  %v61 = vld [vmem:[%s0 + $0xa0] sm:$0xf]
  %v62 = vld [vmem:[%s0 + $0xa4] sm:$0xf]
  %v63 = vld [vmem:[%s0 + $0xa8] sm:$0xf]
  %v64 = vld [vmem:[%s0 + $0xac] sm:$0xf]
  %v65 = vld [vmem:[%s0 + $0xb0] sm:$0xf]
  %v66 = vld [vmem:[%s0 + $0xb4] sm:$0xf]
  %v67 = vld [vmem:[%s0 + $0xb8] sm:$0xf]
  %v68 = vld [vmem:[%s0 + $0xbc] sm:$0xf]
  %v69 = vld [vmem:[%s0 + $0xc0] sm:$0xf]
  %v70 = vld [vmem:[%s0 + $0xc4] sm:$0xf]
  %v71 = vld [vmem:[%s0 + $0xc8] sm:$0xf]
  %v72 = vld [vmem:[%s0 + $0xcc] sm:$0xf]
  %v73 = vld [vmem:[%s0 + $0xd0] sm:$0xf]
  %v74 = vld [vmem:[%s0 + $0xd4] sm:$0xf]
  %v75 = vld [vmem:[%s0 + $0xd8] sm:$0xf]
  %v76 = vld [vmem:[%s0 + $0xdc] sm:$0xf]
  %v77 = vld [vmem:[%s0 + $0xe0] sm:$0xf]
  %v78 = vld [vmem:[%s0 + $0xe4] sm:$0xf]
  %v79 = vld [vmem:[%s0 + $0xe8] sm:$0xf]
  %v80 = vld [vmem:[%s0 + $0xec] sm:$0xf]
  %v81 = vld [vmem:[%s0 + $0xf0] sm:$0xf]
  %v82 = vld [vmem:[%s0 + $0xf4] sm:$0xf]
  %v83 = vld [vmem:[%s0 + $0xf8] sm:$0xf]
  %v84 = vld [vmem:[%s0 + $0xfc] sm:$0xf]
  %v85 = vld [vmem:[%s2] sm:$0xf]
  %v86 = vld [vmem:[%s2 + $0x4] sm:$0xf]
  %v87 = vld [vmem:[%s2 + $0x8] sm:$0xf]
  %v88 = vld [vmem:[%s2 + $0xc] sm:$0xf]
  %v89 = vld [vmem:[%s2 + $0x10] sm:$0xf]
  %v90 = vld [vmem:[%s2 + $0x14] sm:$0xf]
  %v91 = vld [vmem:[%s2 + $0x18] sm:$0xf]
  %v92 = vld [vmem:[%s2 + $0x1c] sm:$0xf]
  %v93 = vld [vmem:[%s2 + $0x20] sm:$0xf]
  %v94 = vld [vmem:[%s1] sm:$0xf]
  %v95 = vld [vmem:[%s1 + $0x4] sm:$0xf]
  %v96 = vld [vmem:[%s1 + $0x8] sm:$0xf]
  %v97 = vld [vmem:[%s1 + $0xc] sm:$0xf]
  %v98 = vld [vmem:[%s1 + $0x10] sm:$0xf]
  %v99 = vld [vmem:[%s1 + $0x14] sm:$0xf]
  %v100 = vld [vmem:[%s1 + $0x18] sm:$0xf]
  %v101 = vld [vmem:[%s1 + $0x1c] sm:$0xf]
  %v102 = vld [vmem:[%s1 + $0x20] sm:$0xf]
  %v103 = vld [vmem:[%s1 + $0x24] sm:$0xf]
  %v104 = vld [vmem:[%s1 + $0x28] sm:$0xf]
  %v105 = vld [vmem:[%s1 + $0x2c] sm:$0xf]
  %v106 = vld [vmem:[%s1 + $0x30] sm:$0xf]
  %v107 = vld [vmem:[%s1 + $0x34] sm:$0xf]
  %v108 = vld [vmem:[%s1 + $0x38] sm:$0xf]
  %v109 = vld [vmem:[%s1 + $0x3c] sm:$0xf]
  %v110 = vld [vmem:[%s1 + $0x40] sm:$0xf]
  %v111 = vld [vmem:[%s1 + $0x44] sm:$0xf]
  %v112 = vld [vmem:[%s1 + $0x48] sm:$0xf]
  %v113 = vld [vmem:[%s1 + $0x4c] sm:$0xf]
  %v114 = vld [vmem:[%s1 + $0x50] sm:$0xf]
  %v115 = vld [vmem:[%s1 + $0x54] sm:$0xf]
  %v116 = vld [vmem:[%s1 + $0x58] sm:$0xf]
  %v117 = vld [vmem:[%s1 + $0x5c] sm:$0xf]
  %v118 = vld [vmem:[%s1 + $0x60] sm:$0xf]
  %v119 = vld [vmem:[%s1 + $0x64] sm:$0xf]
  %v120 = vld [vmem:[%s1 + $0x68] sm:$0xf]
  %v121 = vld [vmem:[%s1 + $0x6c] sm:$0xf]
  %v122 = vld [vmem:[%s1 + $0x70] sm:$0xf]
  %v123 = vld [vmem:[%s1 + $0x74] sm:$0xf]
  %v124 = vld [vmem:[%s1 + $0x78] sm:$0xf]
  %v125 = vld [vmem:[%s1 + $0x7c] sm:$0xf]
  %v126 = vld [vmem:[%s1 + $0x80] sm:$0xf]
  %v127 = vld [vmem:[%s1 + $0x84] sm:$0xf]
  %v128 = vld [vmem:[%s1 + $0x88] sm:$0xf]
  %v129 = vld [vmem:[%s1 + $0x8c] sm:$0xf]
  %v130 = vld [vmem:[%s1 + $0x90] sm:$0xf]
  %v131 = vld [vmem:[%s1 + $0x94] sm:$0xf]
  %v132 = vld [vmem:[%s1 + $0x98] sm:$0xf]
  %v133 = vld [vmem:[%s1 + $0x9c] sm:$0xf]
  %v134 = vld [vmem:[%s1 + $0xa0] sm:$0xf]
  %v135 = vld [vmem:[%s1 + $0xa4] sm:$0xf]
  %v136 = vld [vmem:[%s1 + $0xa8] sm:$0xf]
  %v137 = vld [vmem:[%s1 + $0xac] sm:$0xf]
  %v138 = vld [vmem:[%s1 + $0xb0] sm:$0xf]
  %v139 = vld [vmem:[%s1 + $0xb4] sm:$0xf]
  %v140 = vld [vmem:[%s1 + $0xb8] sm:$0xf]
  %v141 = vld [vmem:[%s1 + $0xbc] sm:$0xf]
  %v142 = vld [vmem:[%s1 + $0xc0] sm:$0xf]
  %v143 = vld [vmem:[%s1 + $0xc4] sm:$0xf]
  %v144 = vld [vmem:[%s1 + $0xc8] sm:$0xf]
  %v145 = vld [vmem:[%s1 + $0xcc] sm:$0xf]
  %v146 = vld [vmem:[%s1 + $0xd0] sm:$0xf]
  %v147 = vld [vmem:[%s1 + $0xd4] sm:$0xf]
  %v148 = vld [vmem:[%s1 + $0xd8] sm:$0xf]
  %v149 = vld [vmem:[%s1 + $0xdc] sm:$0xf]
  %v150 = vld [vmem:[%s1 + $0xe0] sm:$0xf]
  %v151 = vld [vmem:[%s1 + $0xe4] sm:$0xf]
  %v152 = vld [vmem:[%s1 + $0xe8] sm:$0xf]
  %v153 = vld [vmem:[%s1 + $0xec] sm:$0xf]
  %v154 = vld [vmem:[%s1 + $0xf0] sm:$0xf]
  %v155 = vld [vmem:[%s1 + $0xf4] sm:$0xf]
  %v156 = vld [vmem:[%s1 + $0xf8] sm:$0xf]
  %v157 = vld [vmem:[%s1 + $0xfc] sm:$0xf]
  %v158 = vld [vmem:[%s3] sm:$0xf]
  %v159 = vld [vmem:[%s3 + $0x4] sm:$0xf]
  %v160 = vld [vmem:[%s3 + $0x8] sm:$0xf]
  %v161 = vld [vmem:[%s3 + $0xc] sm:$0xf]
  %v162 = vld [vmem:[%s3 + $0x10] sm:$0xf]
  %v163 = vld [vmem:[%s3 + $0x14] sm:$0xf]
  %v164 = vld [vmem:[%s3 + $0x18] sm:$0xf]
  %v165 = vld [vmem:[%s3 + $0x1c] sm:$0xf]
  %v166 = vld [vmem:[%s3 + $0x20] sm:$0xf]
  %v231 = vunpack.c.l.b16 %v94
  %v232 = vunpack.c.l.b16 %v95
  %v233 = vunpack.c.l.b16 %v96
  %v234 = vunpack.c.l.b16 %v97
  %v235 = vunpack.c.l.b16 %v98
  %v236 = vunpack.c.l.b16 %v99
  %v237 = vunpack.c.l.b16 %v100
  %v238 = vunpack.c.l.b16 %v101
  %v239 = vunpack.c.l.b16 %v102
  %v240 = vunpack.c.l.b16 %v103
  %v241 = vunpack.c.l.b16 %v104
  %v242 = vunpack.c.l.b16 %v105
  %v243 = vunpack.c.l.b16 %v106
  %v244 = vunpack.c.l.b16 %v107
  %v245 = vunpack.c.l.b16 %v108
  %v246 = vunpack.c.l.b16 %v109
  %v247 = vunpack.c.l.b16 %v110
  %v248 = vunpack.c.l.b16 %v111
  %v249 = vunpack.c.l.b16 %v112
  %v250 = vunpack.c.l.b16 %v113
  %v251 = vunpack.c.l.b16 %v114
  %v252 = vunpack.c.l.b16 %v115
  %v253 = vunpack.c.l.b16 %v116
  %v254 = vunpack.c.l.b16 %v117
  %v255 = vunpack.c.l.b16 %v118
  %v256 = vunpack.c.l.b16 %v119
  %v257 = vunpack.c.l.b16 %v120
  %v258 = vunpack.c.l.b16 %v121
  %v259 = vunpack.c.l.b16 %v122
  %v260 = vunpack.c.l.b16 %v123
  %v261 = vunpack.c.l.b16 %v124
  %v262 = vunpack.c.l.b16 %v125
  %v263 = vunpack.c.l.b16 %v126
  %v264 = vunpack.c.l.b16 %v127
  %v265 = vunpack.c.l.b16 %v128
  %v266 = vunpack.c.l.b16 %v129
  %v267 = vunpack.c.l.b16 %v130
  %v268 = vunpack.c.l.b16 %v131
  %v269 = vunpack.c.l.b16 %v132
  %v270 = vunpack.c.l.b16 %v133
  %v271 = vunpack.c.l.b16 %v134
  %v272 = vunpack.c.l.b16 %v135
  %v273 = vunpack.c.l.b16 %v136
  %v274 = vunpack.c.l.b16 %v137
  %v275 = vunpack.c.l.b16 %v138
  %v276 = vunpack.c.l.b16 %v139
  %v277 = vunpack.c.l.b16 %v140
  %v278 = vunpack.c.l.b16 %v141
  %v279 = vunpack.c.l.b16 %v142
  %v280 = vunpack.c.l.b16 %v143
  %v281 = vunpack.c.l.b16 %v144
  %v282 = vunpack.c.l.b16 %v145
  %v283 = vunpack.c.l.b16 %v146
  %v284 = vunpack.c.l.b16 %v147
  %v285 = vunpack.c.l.b16 %v148
  %v286 = vunpack.c.l.b16 %v149
  %v287 = vunpack.c.l.b16 %v150
  %v288 = vunpack.c.l.b16 %v151
  %v289 = vunpack.c.l.b16 %v152
  %v290 = vunpack.c.l.b16 %v153
  %v291 = vunpack.c.l.b16 %v154
  %v292 = vunpack.c.l.b16 %v155
  %v293 = vunpack.c.l.b16 %v156
  %v294 = vunpack.c.l.b16 %v157
  %v295 = vpack.c.b16 %v232, %v231
  %v296 = vpack.c.b16 %v234, %v233
  %v297 = vpack.c.b16 %v236, %v235
  %v298 = vpack.c.b16 %v238, %v237
  %v299 = vpack.c.b16 %v240, %v239
  %v300 = vpack.c.b16 %v242, %v241
  %v301 = vpack.c.b16 %v244, %v243
  %v302 = vpack.c.b16 %v246, %v245
  %v303 = vpack.c.b16 %v248, %v247
  %v304 = vpack.c.b16 %v250, %v249
  %v305 = vpack.c.b16 %v252, %v251
  %v306 = vpack.c.b16 %v254, %v253
  %v307 = vpack.c.b16 %v256, %v255
  %v308 = vpack.c.b16 %v258, %v257
  %v309 = vpack.c.b16 %v260, %v259
  %v310 = vpack.c.b16 %v262, %v261
  %v311 = vpack.c.b16 %v264, %v263
  %v312 = vpack.c.b16 %v266, %v265
  %v313 = vpack.c.b16 %v268, %v267
  %v314 = vpack.c.b16 %v270, %v269
  %v315 = vpack.c.b16 %v272, %v271
  %v316 = vpack.c.b16 %v274, %v273
  %v317 = vpack.c.b16 %v276, %v275
  %v318 = vpack.c.b16 %v278, %v277
  %v319 = vpack.c.b16 %v280, %v279
  %v320 = vpack.c.b16 %v282, %v281
  %v321 = vpack.c.b16 %v284, %v283
  %v322 = vpack.c.b16 %v286, %v285
  %v323 = vpack.c.b16 %v288, %v287
  %v324 = vpack.c.b16 %v290, %v289
  %v325 = vpack.c.b16 %v292, %v291
  %v326 = vpack.c.b16 %v294, %v293
  %v336 = vunpack.c.l.b16 %v158
  %v337 = vunpack.c.l.b16 %v159
  %v338 = vunpack.c.l.b16 %v160
  %v339 = vunpack.c.l.b16 %v161
  %v340 = vunpack.c.l.b16 %v162
  %v341 = vunpack.c.l.b16 %v163
  %v342 = vunpack.c.l.b16 %v164
  %v343 = vunpack.c.l.b16 %v165
  %v344 = vunpack.c.l.b16 %v166
  %v345 = vpack.c.b16 %v337, %v336
  %v346 = vpack.c.b16 %v339, %v338
  %v347 = vpack.c.b16 %v341, %v340
  %v348 = vpack.c.b16 %v343, %v342
  %v349 = vpack.c.b16 %v344, %v344
  %vm354 = vcmask 588800
  %v356 = vsel %vm354, %v295, 0
  %v359 = vsel %vm354, %v296, 0
  %v362 = vsel %vm354, %v297, 0
  %v365 = vsel %vm354, %v298, 0
  %v368 = vsel %vm354, %v299, 0
  %v371 = vsel %vm354, %v300, 0
  %v374 = vsel %vm354, %v301, 0
  %v377 = vsel %vm354, %v302, 0
  %v380 = vsel %vm354, %v303, 0
  %v383 = vsel %vm354, %v304, 0
  %v386 = vsel %vm354, %v305, 0
  %v389 = vsel %vm354, %v306, 0
  %v392 = vsel %vm354, %v307, 0
  %v395 = vsel %vm354, %v308, 0
  %v398 = vsel %vm354, %v309, 0
  %v401 = vsel %vm354, %v310, 0
  %v404 = vsel %vm354, %v311, 0
  %v407 = vsel %vm354, %v312, 0
  %v410 = vsel %vm354, %v313, 0
  %v413 = vsel %vm354, %v314, 0
  %v416 = vsel %vm354, %v315, 0
  %v419 = vsel %vm354, %v316, 0
  %v422 = vsel %vm354, %v317, 0
  %v425 = vsel %vm354, %v318, 0
  %v428 = vsel %vm354, %v319, 0
  %v431 = vsel %vm354, %v320, 0
  %v434 = vsel %vm354, %v321, 0
  %v437 = vsel %vm354, %v322, 0
  %v440 = vsel %vm354, %v323, 0
  %v443 = vsel %vm354, %v324, 0
  %v446 = vsel %vm354, %v325, 0
  %v449 = vsel %vm354, %v326, 0
  %vm451 = vcmask 1043456
  %v453 = vsel %vm451, %v349, 0
  %455 = vmatprep.subr.bf16.mxu0 0
  %456 = vmatpush1.bf16.msra.mxu0 0
  %457 = vmatprep.subr.bf16.mxu0 0
  %458 = vmatpush1.bf16.msra.mxu0 0
  %459 = vmatprep.subr.bf16.mxu0 0
  %460 = vmatpush1.bf16.msra.mxu0 0
  %461 = vmatprep.subr.bf16.mxu0 0
  %462 = vmatpush1.bf16.msra.mxu0 %v453
  %463 = vmatprep.subr.bf16.mxu0 0
  %464 = vmatpush1.bf16.msra.mxu0 %v348
  %465 = vmatprep.subr.bf16.mxu0 0
  %466 = vmatpush1.bf16.msra.mxu0 %v347
  %467 = vmatprep.subr.bf16.mxu0 0
  %468 = vmatpush1.bf16.msra.mxu0 %v346
  %469 = vmatprep.subr.bf16.mxu0 0
  %470 = vmatpush1.bf16.msra.mxu0 %v345
  %471 = vmatprep.subr.bf16.mxu0 0
  %472 = vmatpush2.bf16.msra.mxu0 0
  %473 = vmatprep.subr.bf16.mxu0 0
  %474 = vmatpush2.bf16.msra.mxu0 0
  %475 = vmatprep.subr.bf16.mxu0 0
  %476 = vmatpush2.bf16.msra.mxu0 0
  %477 = vmatprep.subr.bf16.mxu0 0
  %478 = vmatpush2.bf16.msra.mxu0 0
  %479 = vmatprep.subr.bf16.mxu0 0
  %480 = vmatpush2.bf16.msra.mxu0 0
  %481 = vmatprep.subr.bf16.mxu0 0
  %482 = vmatpush2.bf16.msra.mxu0 0
  %483 = vmatprep.subr.bf16.mxu0 0
  %484 = vmatpush2.bf16.msra.mxu0 0
  %485 = vmatprep.subr.bf16.mxu0 0
  %486 = vmatpush2.bf16.msra.mxu0 0
  %487 = vmatprep.mubr.bf16.mxu0 0
  %488 = vmatmul.mubr.bf16.gmra.mxu0 %v356
  %v489 = vpop.f32.mrf.mxu0
  %v490 = vadd.f32 0.0, %v489
  %v491 = vpop.f32.mrf.mxu0
  %v492 = vpop.f32.mrf.mxu0
  %v493 = vadd.f32 0.0, %v492
  %v494 = vpop.f32.mrf.mxu0
  %495 = vmatprep.mubr.bf16.mxu0 0
  %496 = vmatmul.mubr.bf16.gmra.mxu0 %v359
  %v497 = vpop.f32.mrf.mxu0
  %v498 = vadd.f32 0.0, %v497
  %v499 = vpop.f32.mrf.mxu0
  %v500 = vpop.f32.mrf.mxu0
  %v501 = vadd.f32 0.0, %v500
  %v502 = vpop.f32.mrf.mxu0
  %503 = vmatprep.mubr.bf16.mxu0 0
  %504 = vmatmul.mubr.bf16.gmra.mxu0 %v362
  %v505 = vpop.f32.mrf.mxu0
  %v506 = vadd.f32 0.0, %v505
  %v507 = vpop.f32.mrf.mxu0
  %v508 = vpop.f32.mrf.mxu0
  %v509 = vadd.f32 0.0, %v508
  %v510 = vpop.f32.mrf.mxu0
  %511 = vmatprep.mubr.bf16.mxu0 0
  %512 = vmatmul.mubr.bf16.gmra.mxu0 %v365
  %v513 = vpop.f32.mrf.mxu0
  %v514 = vadd.f32 0.0, %v513
  %v515 = vpop.f32.mrf.mxu0
  %v516 = vpop.f32.mrf.mxu0
  %v517 = vadd.f32 0.0, %v516
  %v518 = vpop.f32.mrf.mxu0
  %519 = vmatprep.mubr.bf16.mxu0 0
  %520 = vmatmul.mubr.bf16.gmra.mxu0 %v368
  %v521 = vpop.f32.mrf.mxu0
  %v522 = vadd.f32 0.0, %v521
  %v523 = vpop.f32.mrf.mxu0
  %v524 = vpop.f32.mrf.mxu0
  %v525 = vadd.f32 0.0, %v524
  %v526 = vpop.f32.mrf.mxu0
  %527 = vmatprep.mubr.bf16.mxu0 0
  %528 = vmatmul.mubr.bf16.gmra.mxu0 %v371
  %v529 = vpop.f32.mrf.mxu0
  %v530 = vadd.f32 0.0, %v529
  %v531 = vpop.f32.mrf.mxu0
  %v532 = vpop.f32.mrf.mxu0
  %v533 = vadd.f32 0.0, %v532
  %v534 = vpop.f32.mrf.mxu0
  %535 = vmatprep.mubr.bf16.mxu0 0
  %536 = vmatmul.mubr.bf16.gmra.mxu0 %v374
  %v537 = vpop.f32.mrf.mxu0
  %v538 = vadd.f32 0.0, %v537
  %v539 = vpop.f32.mrf.mxu0
  %v540 = vpop.f32.mrf.mxu0
  %v541 = vadd.f32 0.0, %v540
  %v542 = vpop.f32.mrf.mxu0
  %543 = vmatprep.mubr.bf16.mxu0 0
  %544 = vmatmul.mubr.bf16.gmra.mxu0 %v377
  %v545 = vpop.f32.mrf.mxu0
  %v546 = vadd.f32 0.0, %v545
  %v547 = vpop.f32.mrf.mxu0
  %v548 = vpop.f32.mrf.mxu0
  %v549 = vadd.f32 0.0, %v548
  %v550 = vpop.f32.mrf.mxu0
  %551 = vmatprep.mubr.bf16.mxu0 0
  %552 = vmatmul.mubr.bf16.gmra.mxu0 %v380
  %v553 = vpop.f32.mrf.mxu0
  %v554 = vadd.f32 0.0, %v553
  %v555 = vpop.f32.mrf.mxu0
  %v556 = vpop.f32.mrf.mxu0
  %v557 = vadd.f32 0.0, %v556
  %v558 = vpop.f32.mrf.mxu0
  %559 = vmatprep.mubr.bf16.mxu0 0
  %560 = vmatmul.mubr.bf16.gmra.mxu0 %v383
  %v561 = vpop.f32.mrf.mxu0
  %v562 = vadd.f32 0.0, %v561
  %v563 = vpop.f32.mrf.mxu0
  %v564 = vpop.f32.mrf.mxu0
  %v565 = vadd.f32 0.0, %v564
  %v566 = vpop.f32.mrf.mxu0
  %567 = vmatprep.mubr.bf16.mxu0 0
  %568 = vmatmul.mubr.bf16.gmra.mxu0 %v386
  %v569 = vpop.f32.mrf.mxu0
  %v570 = vadd.f32 0.0, %v569
  %v571 = vpop.f32.mrf.mxu0
  %v572 = vpop.f32.mrf.mxu0
  %v573 = vadd.f32 0.0, %v572
  %v574 = vpop.f32.mrf.mxu0
  %575 = vmatprep.mubr.bf16.mxu0 0
  %576 = vmatmul.mubr.bf16.gmra.mxu0 %v389
  %v577 = vpop.f32.mrf.mxu0
  %v578 = vadd.f32 0.0, %v577
  %v579 = vpop.f32.mrf.mxu0
  %v580 = vpop.f32.mrf.mxu0
  %v581 = vadd.f32 0.0, %v580
  %v582 = vpop.f32.mrf.mxu0
  %583 = vmatprep.mubr.bf16.mxu0 0
  %584 = vmatmul.mubr.bf16.gmra.mxu0 %v392
  %v585 = vpop.f32.mrf.mxu0
  %v586 = vadd.f32 0.0, %v585
  %v587 = vpop.f32.mrf.mxu0
  %v588 = vpop.f32.mrf.mxu0
  %v589 = vadd.f32 0.0, %v588
  %v590 = vpop.f32.mrf.mxu0
  %591 = vmatprep.mubr.bf16.mxu0 0
  %592 = vmatmul.mubr.bf16.gmra.mxu0 %v395
  %v593 = vpop.f32.mrf.mxu0
  %v594 = vadd.f32 0.0, %v593
  %v595 = vpop.f32.mrf.mxu0
  %v596 = vpop.f32.mrf.mxu0
  %v597 = vadd.f32 0.0, %v596
  %v598 = vpop.f32.mrf.mxu0
  %599 = vmatprep.mubr.bf16.mxu0 0
  %600 = vmatmul.mubr.bf16.gmra.mxu0 %v398
  %v601 = vpop.f32.mrf.mxu0
  %v602 = vadd.f32 0.0, %v601
  %v603 = vpop.f32.mrf.mxu0
  %v604 = vpop.f32.mrf.mxu0
  %v605 = vadd.f32 0.0, %v604
  %v606 = vpop.f32.mrf.mxu0
  %607 = vmatprep.mubr.bf16.mxu0 0
  %608 = vmatmul.mubr.bf16.gmra.mxu0 %v401
  %v609 = vpop.f32.mrf.mxu0
  %v610 = vadd.f32 0.0, %v609
  %v611 = vpop.f32.mrf.mxu0
  %v612 = vpop.f32.mrf.mxu0
  %v613 = vadd.f32 0.0, %v612
  %v614 = vpop.f32.mrf.mxu0
  %615 = vmatprep.mubr.bf16.mxu0 0
  %616 = vmatmul.mubr.bf16.gmra.mxu0 %v404
  %v617 = vpop.f32.mrf.mxu0
  %v618 = vadd.f32 0.0, %v617
  %v619 = vpop.f32.mrf.mxu0
  %v620 = vpop.f32.mrf.mxu0
  %v621 = vadd.f32 0.0, %v620
  %v622 = vpop.f32.mrf.mxu0
  %623 = vmatprep.mubr.bf16.mxu0 0
  %624 = vmatmul.mubr.bf16.gmra.mxu0 %v407
  %v625 = vpop.f32.mrf.mxu0
  %v626 = vadd.f32 0.0, %v625
  %v627 = vpop.f32.mrf.mxu0
  %v628 = vpop.f32.mrf.mxu0
  %v629 = vadd.f32 0.0, %v628
  %v630 = vpop.f32.mrf.mxu0
  %631 = vmatprep.mubr.bf16.mxu0 0
  %632 = vmatmul.mubr.bf16.gmra.mxu0 %v410
  %v633 = vpop.f32.mrf.mxu0
  %v634 = vadd.f32 0.0, %v633
  %v635 = vpop.f32.mrf.mxu0
  %v636 = vpop.f32.mrf.mxu0
  %v637 = vadd.f32 0.0, %v636
  %v638 = vpop.f32.mrf.mxu0
  %639 = vmatprep.mubr.bf16.mxu0 0
  %640 = vmatmul.mubr.bf16.gmra.mxu0 %v413
  %v641 = vpop.f32.mrf.mxu0
  %v642 = vadd.f32 0.0, %v641
  %v643 = vpop.f32.mrf.mxu0
  %v644 = vpop.f32.mrf.mxu0
  %v645 = vadd.f32 0.0, %v644
  %v646 = vpop.f32.mrf.mxu0
  %647 = vmatprep.mubr.bf16.mxu0 0
  %648 = vmatmul.mubr.bf16.gmra.mxu0 %v416
  %v649 = vpop.f32.mrf.mxu0
  %v650 = vadd.f32 0.0, %v649
  %v651 = vpop.f32.mrf.mxu0
  %v652 = vpop.f32.mrf.mxu0
  %v653 = vadd.f32 0.0, %v652
  %v654 = vpop.f32.mrf.mxu0
  %655 = vmatprep.mubr.bf16.mxu0 0
  %656 = vmatmul.mubr.bf16.gmra.mxu0 %v419
  %v657 = vpop.f32.mrf.mxu0
  %v658 = vadd.f32 0.0, %v657
  %v659 = vpop.f32.mrf.mxu0
  %v660 = vpop.f32.mrf.mxu0
  %v661 = vadd.f32 0.0, %v660
  %v662 = vpop.f32.mrf.mxu0
  %663 = vmatprep.mubr.bf16.mxu0 0
  %664 = vmatmul.mubr.bf16.gmra.mxu0 %v422
  %v665 = vpop.f32.mrf.mxu0
  %v666 = vadd.f32 0.0, %v665
  %v667 = vpop.f32.mrf.mxu0
  %v668 = vpop.f32.mrf.mxu0
  %v669 = vadd.f32 0.0, %v668
  %v670 = vpop.f32.mrf.mxu0
  %671 = vmatprep.mubr.bf16.mxu0 0
  %672 = vmatmul.mubr.bf16.gmra.mxu0 %v425
  %v673 = vpop.f32.mrf.mxu0
  %v674 = vadd.f32 0.0, %v673
  %v675 = vpop.f32.mrf.mxu0
  %v676 = vpop.f32.mrf.mxu0
  %v677 = vadd.f32 0.0, %v676
  %v678 = vpop.f32.mrf.mxu0
  %679 = vmatprep.mubr.bf16.mxu0 0
  %680 = vmatmul.mubr.bf16.gmra.mxu0 %v428
  %v681 = vpop.f32.mrf.mxu0
  %v682 = vadd.f32 0.0, %v681
  %v683 = vpop.f32.mrf.mxu0
  %v684 = vpop.f32.mrf.mxu0
  %v685 = vadd.f32 0.0, %v684
  %v686 = vpop.f32.mrf.mxu0
  %687 = vmatprep.mubr.bf16.mxu0 0
  %688 = vmatmul.mubr.bf16.gmra.mxu0 %v431
  %v689 = vpop.f32.mrf.mxu0
  %v690 = vadd.f32 0.0, %v689
  %v691 = vpop.f32.mrf.mxu0
  %v692 = vpop.f32.mrf.mxu0
  %v693 = vadd.f32 0.0, %v692
  %v694 = vpop.f32.mrf.mxu0
  %695 = vmatprep.mubr.bf16.mxu0 0
  %696 = vmatmul.mubr.bf16.gmra.mxu0 %v434
  %v697 = vpop.f32.mrf.mxu0
  %v698 = vadd.f32 0.0, %v697
  %v699 = vpop.f32.mrf.mxu0
  %v700 = vpop.f32.mrf.mxu0
  %v701 = vadd.f32 0.0, %v700
  %v702 = vpop.f32.mrf.mxu0
  %703 = vmatprep.mubr.bf16.mxu0 0
  %704 = vmatmul.mubr.bf16.gmra.mxu0 %v437
  %v705 = vpop.f32.mrf.mxu0
  %v706 = vadd.f32 0.0, %v705
  %v707 = vpop.f32.mrf.mxu0
  %v708 = vpop.f32.mrf.mxu0
  %v709 = vadd.f32 0.0, %v708
  %v710 = vpop.f32.mrf.mxu0
  %711 = vmatprep.mubr.bf16.mxu0 0
  %712 = vmatmul.mubr.bf16.gmra.mxu0 %v440
  %v713 = vpop.f32.mrf.mxu0
  %v714 = vadd.f32 0.0, %v713
  %v715 = vpop.f32.mrf.mxu0
  %v716 = vpop.f32.mrf.mxu0
  %v717 = vadd.f32 0.0, %v716
  %v718 = vpop.f32.mrf.mxu0
  %719 = vmatprep.mubr.bf16.mxu0 0
  %720 = vmatmul.mubr.bf16.gmra.mxu0 %v443
  %v721 = vpop.f32.mrf.mxu0
  %v722 = vadd.f32 0.0, %v721
  %v723 = vpop.f32.mrf.mxu0
  %v724 = vpop.f32.mrf.mxu0
  %v725 = vadd.f32 0.0, %v724
  %v726 = vpop.f32.mrf.mxu0
  %727 = vmatprep.mubr.bf16.mxu0 0
  %728 = vmatmul.mubr.bf16.gmra.mxu0 %v446
  %v729 = vpop.f32.mrf.mxu0
  %v730 = vadd.f32 0.0, %v729
  %v731 = vpop.f32.mrf.mxu0
  %v732 = vpop.f32.mrf.mxu0
  %v733 = vadd.f32 0.0, %v732
  %v734 = vpop.f32.mrf.mxu0
  %735 = vmatprep.mubr.bf16.mxu0 0
  %736 = vmatmul.mubr.bf16.gmra.mxu0 %v449
  %v737 = vpop.f32.mrf.mxu0
  %v738 = vadd.f32 0.0, %v737
  %v739 = vpop.f32.mrf.mxu0
  %v740 = vpop.f32.mrf.mxu0
  %v741 = vadd.f32 0.0, %v740
  %v742 = vpop.f32.mrf.mxu0
  %743 = vdwg.mxu0
  %v808 = vunpack.c.l.b16 %v21
  %v809 = vunpack.c.l.b16 %v22
  %v810 = vunpack.c.l.b16 %v23
  %v811 = vunpack.c.l.b16 %v24
  %v812 = vunpack.c.l.b16 %v25
  %v813 = vunpack.c.l.b16 %v26
  %v814 = vunpack.c.l.b16 %v27
  %v815 = vunpack.c.l.b16 %v28
  %v816 = vunpack.c.l.b16 %v29
  %v817 = vunpack.c.l.b16 %v30
  %v818 = vunpack.c.l.b16 %v31
  %v819 = vunpack.c.l.b16 %v32
  %v820 = vunpack.c.l.b16 %v33
  %v821 = vunpack.c.l.b16 %v34
  %v822 = vunpack.c.l.b16 %v35
  %v823 = vunpack.c.l.b16 %v36
  %v824 = vunpack.c.l.b16 %v37
  %v825 = vunpack.c.l.b16 %v38
  %v826 = vunpack.c.l.b16 %v39
  %v827 = vunpack.c.l.b16 %v40
  %v828 = vunpack.c.l.b16 %v41
  %v829 = vunpack.c.l.b16 %v42
  %v830 = vunpack.c.l.b16 %v43
  %v831 = vunpack.c.l.b16 %v44
  %v832 = vunpack.c.l.b16 %v45
  %v833 = vunpack.c.l.b16 %v46
  %v834 = vunpack.c.l.b16 %v47
  %v835 = vunpack.c.l.b16 %v48
  %v836 = vunpack.c.l.b16 %v49
  %v837 = vunpack.c.l.b16 %v50
  %v838 = vunpack.c.l.b16 %v51
  %v839 = vunpack.c.l.b16 %v52
  %v840 = vunpack.c.l.b16 %v53
  %v841 = vunpack.c.l.b16 %v54
  %v842 = vunpack.c.l.b16 %v55
  %v843 = vunpack.c.l.b16 %v56
  %v844 = vunpack.c.l.b16 %v57
  %v845 = vunpack.c.l.b16 %v58
  %v846 = vunpack.c.l.b16 %v59
  %v847 = vunpack.c.l.b16 %v60
  %v848 = vunpack.c.l.b16 %v61
  %v849 = vunpack.c.l.b16 %v62
  %v850 = vunpack.c.l.b16 %v63
  %v851 = vunpack.c.l.b16 %v64
  %v852 = vunpack.c.l.b16 %v65
  %v853 = vunpack.c.l.b16 %v66
  %v854 = vunpack.c.l.b16 %v67
  %v855 = vunpack.c.l.b16 %v68
  %v856 = vunpack.c.l.b16 %v69
  %v857 = vunpack.c.l.b16 %v70
  %v858 = vunpack.c.l.b16 %v71
  %v859 = vunpack.c.l.b16 %v72
  %v860 = vunpack.c.l.b16 %v73
  %v861 = vunpack.c.l.b16 %v74
  %v862 = vunpack.c.l.b16 %v75
  %v863 = vunpack.c.l.b16 %v76
  %v864 = vunpack.c.l.b16 %v77
  %v865 = vunpack.c.l.b16 %v78
  %v866 = vunpack.c.l.b16 %v79
  %v867 = vunpack.c.l.b16 %v80
  %v868 = vunpack.c.l.b16 %v81
  %v869 = vunpack.c.l.b16 %v82
  %v870 = vunpack.c.l.b16 %v83
  %v871 = vunpack.c.l.b16 %v84
  %v872 = vpack.c.b16 %v809, %v808
  %v873 = vpack.c.b16 %v811, %v810
  %v874 = vpack.c.b16 %v813, %v812
  %v875 = vpack.c.b16 %v815, %v814
  %v876 = vpack.c.b16 %v817, %v816
  %v877 = vpack.c.b16 %v819, %v818
  %v878 = vpack.c.b16 %v821, %v820
  %v879 = vpack.c.b16 %v823, %v822
  %v880 = vpack.c.b16 %v825, %v824
  %v881 = vpack.c.b16 %v827, %v826
  %v882 = vpack.c.b16 %v829, %v828
  %v883 = vpack.c.b16 %v831, %v830
  %v884 = vpack.c.b16 %v833, %v832
  %v885 = vpack.c.b16 %v835, %v834
  %v886 = vpack.c.b16 %v837, %v836
  %v887 = vpack.c.b16 %v839, %v838
  %v888 = vpack.c.b16 %v841, %v840
  %v889 = vpack.c.b16 %v843, %v842
  %v890 = vpack.c.b16 %v845, %v844
  %v891 = vpack.c.b16 %v847, %v846
  %v892 = vpack.c.b16 %v849, %v848
  %v893 = vpack.c.b16 %v851, %v850
  %v894 = vpack.c.b16 %v853, %v852
  %v895 = vpack.c.b16 %v855, %v854
  %v896 = vpack.c.b16 %v857, %v856
  %v897 = vpack.c.b16 %v859, %v858
  %v898 = vpack.c.b16 %v861, %v860
  %v899 = vpack.c.b16 %v863, %v862
  %v900 = vpack.c.b16 %v865, %v864
  %v901 = vpack.c.b16 %v867, %v866
  %v902 = vpack.c.b16 %v869, %v868
  %v903 = vpack.c.b16 %v871, %v870
  %v913 = vunpack.c.l.b16 %v85
  %v914 = vunpack.c.l.b16 %v86
  %v915 = vunpack.c.l.b16 %v87
  %v916 = vunpack.c.l.b16 %v88
  %v917 = vunpack.c.l.b16 %v89
  %v918 = vunpack.c.l.b16 %v90
  %v919 = vunpack.c.l.b16 %v91
  %v920 = vunpack.c.l.b16 %v92
  %v921 = vunpack.c.l.b16 %v93
  %v922 = vpack.c.b16 %v914, %v913
  %v923 = vpack.c.b16 %v916, %v915
  %v924 = vpack.c.b16 %v918, %v917
  %v925 = vpack.c.b16 %v920, %v919
  %v926 = vpack.c.b16 %v921, %v921
  %v932 = vsel %vm354, %v872, 0
  %v935 = vsel %vm354, %v873, 0
  %v938 = vsel %vm354, %v874, 0
  %v941 = vsel %vm354, %v875, 0
  %v944 = vsel %vm354, %v876, 0
  %v947 = vsel %vm354, %v877, 0
  %v950 = vsel %vm354, %v878, 0
  %v953 = vsel %vm354, %v879, 0
  %v956 = vsel %vm354, %v880, 0
  %v959 = vsel %vm354, %v881, 0
  %v962 = vsel %vm354, %v882, 0
  %v965 = vsel %vm354, %v883, 0
  %v968 = vsel %vm354, %v884, 0
  %v971 = vsel %vm354, %v885, 0
  %v974 = vsel %vm354, %v886, 0
  %v977 = vsel %vm354, %v887, 0
  %v980 = vsel %vm354, %v888, 0
  %v983 = vsel %vm354, %v889, 0
  %v986 = vsel %vm354, %v890, 0
  %v989 = vsel %vm354, %v891, 0
  %v992 = vsel %vm354, %v892, 0
  %v995 = vsel %vm354, %v893, 0
  %v998 = vsel %vm354, %v894, 0
  %v1001 = vsel %vm354, %v895, 0
  %v1004 = vsel %vm354, %v896, 0
  %v1007 = vsel %vm354, %v897, 0
  %v1010 = vsel %vm354, %v898, 0
  %v1013 = vsel %vm354, %v899, 0
  %v1016 = vsel %vm354, %v900, 0
  %v1019 = vsel %vm354, %v901, 0
  %v1022 = vsel %vm354, %v902, 0
  %v1025 = vsel %vm354, %v903, 0
  %v1028 = vsel %vm451, %v926, 0
  %1030 = vmatprep.subr.bf16.mxu0 0
  %1031 = vmatpush1.bf16.msra.mxu0 0
  %1032 = vmatprep.subr.bf16.mxu0 0
  %1033 = vmatpush1.bf16.msra.mxu0 0
  %1034 = vmatprep.subr.bf16.mxu0 0
  %1035 = vmatpush1.bf16.msra.mxu0 0
  %1036 = vmatprep.subr.bf16.mxu0 0
  %1037 = vmatpush1.bf16.msra.mxu0 %v1028
  %1038 = vmatprep.subr.bf16.mxu0 0
  %1039 = vmatpush1.bf16.msra.mxu0 %v925
  %1040 = vmatprep.subr.bf16.mxu0 0
  %1041 = vmatpush1.bf16.msra.mxu0 %v924
  %1042 = vmatprep.subr.bf16.mxu0 0
  %1043 = vmatpush1.bf16.msra.mxu0 %v923
  %1044 = vmatprep.subr.bf16.mxu0 0
  %1045 = vmatpush1.bf16.msra.mxu0 %v922
  %1046 = vmatprep.subr.bf16.mxu0 0
  %1047 = vmatpush2.bf16.msra.mxu0 0
  %1048 = vmatprep.subr.bf16.mxu0 0
  %1049 = vmatpush2.bf16.msra.mxu0 0
  %1050 = vmatprep.subr.bf16.mxu0 0
  %1051 = vmatpush2.bf16.msra.mxu0 0
  %1052 = vmatprep.subr.bf16.mxu0 0
  %1053 = vmatpush2.bf16.msra.mxu0 0
  %1054 = vmatprep.subr.bf16.mxu0 0
  %1055 = vmatpush2.bf16.msra.mxu0 0
  %1056 = vmatprep.subr.bf16.mxu0 0
  %1057 = vmatpush2.bf16.msra.mxu0 0
  %1058 = vmatprep.subr.bf16.mxu0 0
  %1059 = vmatpush2.bf16.msra.mxu0 0
  %1060 = vmatprep.subr.bf16.mxu0 0
  %1061 = vmatpush2.bf16.msra.mxu0 0
  %1062 = vmatprep.mubr.bf16.mxu0 0
  %1063 = vmatmul.mubr.bf16.gmra.mxu0 %v932
  %v1064 = vpop.f32.mrf.mxu0
  %v1065 = vadd.f32 %v490, %v1064
  %v1066 = vpop.f32.mrf.mxu0
  %v1067 = vpop.f32.mrf.mxu0
  %v1068 = vadd.f32 %v493, %v1067
  %v1069 = vpop.f32.mrf.mxu0
  %1070 = vmatprep.mubr.bf16.mxu0 0
  %1071 = vmatmul.mubr.bf16.gmra.mxu0 %v935
  %v1072 = vpop.f32.mrf.mxu0
  %v1073 = vadd.f32 %v498, %v1072
  %v1074 = vpop.f32.mrf.mxu0
  %v1075 = vpop.f32.mrf.mxu0
  %v1076 = vadd.f32 %v501, %v1075
  %v1077 = vpop.f32.mrf.mxu0
  %1078 = vmatprep.mubr.bf16.mxu0 0
  %1079 = vmatmul.mubr.bf16.gmra.mxu0 %v938
  %v1080 = vpop.f32.mrf.mxu0
  %v1081 = vadd.f32 %v506, %v1080
  %v1082 = vpop.f32.mrf.mxu0
  %v1083 = vpop.f32.mrf.mxu0
  %v1084 = vadd.f32 %v509, %v1083
  %v1085 = vpop.f32.mrf.mxu0
  %1086 = vmatprep.mubr.bf16.mxu0 0
  %1087 = vmatmul.mubr.bf16.gmra.mxu0 %v941
  %v1088 = vpop.f32.mrf.mxu0
  %v1089 = vadd.f32 %v514, %v1088
  %v1090 = vpop.f32.mrf.mxu0
  %v1091 = vpop.f32.mrf.mxu0
  %v1092 = vadd.f32 %v517, %v1091
  %v1093 = vpop.f32.mrf.mxu0
  %1094 = vmatprep.mubr.bf16.mxu0 0
  %1095 = vmatmul.mubr.bf16.gmra.mxu0 %v944
  %v1096 = vpop.f32.mrf.mxu0
  %v1097 = vadd.f32 %v522, %v1096
  %v1098 = vpop.f32.mrf.mxu0
  %v1099 = vpop.f32.mrf.mxu0
  %v1100 = vadd.f32 %v525, %v1099
  %v1101 = vpop.f32.mrf.mxu0
  %1102 = vmatprep.mubr.bf16.mxu0 0
  %1103 = vmatmul.mubr.bf16.gmra.mxu0 %v947
  %v1104 = vpop.f32.mrf.mxu0
  %v1105 = vadd.f32 %v530, %v1104
  %v1106 = vpop.f32.mrf.mxu0
  %v1107 = vpop.f32.mrf.mxu0
  %v1108 = vadd.f32 %v533, %v1107
  %v1109 = vpop.f32.mrf.mxu0
  %1110 = vmatprep.mubr.bf16.mxu0 0
  %1111 = vmatmul.mubr.bf16.gmra.mxu0 %v950
  %v1112 = vpop.f32.mrf.mxu0
  %v1113 = vadd.f32 %v538, %v1112
  %v1114 = vpop.f32.mrf.mxu0
  %v1115 = vpop.f32.mrf.mxu0
  %v1116 = vadd.f32 %v541, %v1115
  %v1117 = vpop.f32.mrf.mxu0
  %1118 = vmatprep.mubr.bf16.mxu0 0
  %1119 = vmatmul.mubr.bf16.gmra.mxu0 %v953
  %v1120 = vpop.f32.mrf.mxu0
  %v1121 = vadd.f32 %v546, %v1120
  %v1122 = vpop.f32.mrf.mxu0
  %v1123 = vpop.f32.mrf.mxu0
  %v1124 = vadd.f32 %v549, %v1123
  %v1125 = vpop.f32.mrf.mxu0
  %1126 = vmatprep.mubr.bf16.mxu0 0
  %1127 = vmatmul.mubr.bf16.gmra.mxu0 %v956
  %v1128 = vpop.f32.mrf.mxu0
  %v1129 = vadd.f32 %v554, %v1128
  %v1130 = vpop.f32.mrf.mxu0
  %v1131 = vpop.f32.mrf.mxu0
  %v1132 = vadd.f32 %v557, %v1131
  %v1133 = vpop.f32.mrf.mxu0
  %1134 = vmatprep.mubr.bf16.mxu0 0
  %1135 = vmatmul.mubr.bf16.gmra.mxu0 %v959
  %v1136 = vpop.f32.mrf.mxu0
  %v1137 = vadd.f32 %v562, %v1136
  %v1138 = vpop.f32.mrf.mxu0
  %v1139 = vpop.f32.mrf.mxu0
  %v1140 = vadd.f32 %v565, %v1139
  %v1141 = vpop.f32.mrf.mxu0
  %1142 = vmatprep.mubr.bf16.mxu0 0
  %1143 = vmatmul.mubr.bf16.gmra.mxu0 %v962
  %v1144 = vpop.f32.mrf.mxu0
  %v1145 = vadd.f32 %v570, %v1144
  %v1146 = vpop.f32.mrf.mxu0
  %v1147 = vpop.f32.mrf.mxu0
  %v1148 = vadd.f32 %v573, %v1147
  %v1149 = vpop.f32.mrf.mxu0
  %1150 = vmatprep.mubr.bf16.mxu0 0
  %1151 = vmatmul.mubr.bf16.gmra.mxu0 %v965
  %v1152 = vpop.f32.mrf.mxu0
  %v1153 = vadd.f32 %v578, %v1152
  %v1154 = vpop.f32.mrf.mxu0
  %v1155 = vpop.f32.mrf.mxu0
  %v1156 = vadd.f32 %v581, %v1155
  %v1157 = vpop.f32.mrf.mxu0
  %1158 = vmatprep.mubr.bf16.mxu0 0
  %1159 = vmatmul.mubr.bf16.gmra.mxu0 %v968
  %v1160 = vpop.f32.mrf.mxu0
  %v1161 = vadd.f32 %v586, %v1160
  %v1162 = vpop.f32.mrf.mxu0
  %v1163 = vpop.f32.mrf.mxu0
  %v1164 = vadd.f32 %v589, %v1163
  %v1165 = vpop.f32.mrf.mxu0
  %1166 = vmatprep.mubr.bf16.mxu0 0
  %1167 = vmatmul.mubr.bf16.gmra.mxu0 %v971
  %v1168 = vpop.f32.mrf.mxu0
  %v1169 = vadd.f32 %v594, %v1168
  %v1170 = vpop.f32.mrf.mxu0
  %v1171 = vpop.f32.mrf.mxu0
  %v1172 = vadd.f32 %v597, %v1171
  %v1173 = vpop.f32.mrf.mxu0
  %1174 = vmatprep.mubr.bf16.mxu0 0
  %1175 = vmatmul.mubr.bf16.gmra.mxu0 %v974
  %v1176 = vpop.f32.mrf.mxu0
  %v1177 = vadd.f32 %v602, %v1176
  %v1178 = vpop.f32.mrf.mxu0
  %v1179 = vpop.f32.mrf.mxu0
  %v1180 = vadd.f32 %v605, %v1179
  %v1181 = vpop.f32.mrf.mxu0
  %1182 = vmatprep.mubr.bf16.mxu0 0
  %1183 = vmatmul.mubr.bf16.gmra.mxu0 %v977
  %v1184 = vpop.f32.mrf.mxu0
  %v1185 = vadd.f32 %v610, %v1184
  %v1186 = vpop.f32.mrf.mxu0
  %v1187 = vpop.f32.mrf.mxu0
  %v1188 = vadd.f32 %v613, %v1187
  %v1189 = vpop.f32.mrf.mxu0
  %1190 = vmatprep.mubr.bf16.mxu0 0
  %1191 = vmatmul.mubr.bf16.gmra.mxu0 %v980
  %v1192 = vpop.f32.mrf.mxu0
  %v1193 = vadd.f32 %v618, %v1192
  %v1194 = vpop.f32.mrf.mxu0
  %v1195 = vpop.f32.mrf.mxu0
  %v1196 = vadd.f32 %v621, %v1195
  %v1197 = vpop.f32.mrf.mxu0
  %1198 = vmatprep.mubr.bf16.mxu0 0
  %1199 = vmatmul.mubr.bf16.gmra.mxu0 %v983
  %v1200 = vpop.f32.mrf.mxu0
  %v1201 = vadd.f32 %v626, %v1200
  %v1202 = vpop.f32.mrf.mxu0
  %v1203 = vpop.f32.mrf.mxu0
  %v1204 = vadd.f32 %v629, %v1203
  %v1205 = vpop.f32.mrf.mxu0
  %1206 = vmatprep.mubr.bf16.mxu0 0
  %1207 = vmatmul.mubr.bf16.gmra.mxu0 %v986
  %v1208 = vpop.f32.mrf.mxu0
  %v1209 = vadd.f32 %v634, %v1208
  %v1210 = vpop.f32.mrf.mxu0
  %v1211 = vpop.f32.mrf.mxu0
  %v1212 = vadd.f32 %v637, %v1211
  %v1213 = vpop.f32.mrf.mxu0
  %1214 = vmatprep.mubr.bf16.mxu0 0
  %1215 = vmatmul.mubr.bf16.gmra.mxu0 %v989
  %v1216 = vpop.f32.mrf.mxu0
  %v1217 = vadd.f32 %v642, %v1216
  %v1218 = vpop.f32.mrf.mxu0
  %v1219 = vpop.f32.mrf.mxu0
  %v1220 = vadd.f32 %v645, %v1219
  %v1221 = vpop.f32.mrf.mxu0
  %1222 = vmatprep.mubr.bf16.mxu0 0
  %1223 = vmatmul.mubr.bf16.gmra.mxu0 %v992
  %v1224 = vpop.f32.mrf.mxu0
  %v1225 = vadd.f32 %v650, %v1224
  %v1226 = vpop.f32.mrf.mxu0
  %v1227 = vpop.f32.mrf.mxu0
  %v1228 = vadd.f32 %v653, %v1227
  %v1229 = vpop.f32.mrf.mxu0
  %1230 = vmatprep.mubr.bf16.mxu0 0
  %1231 = vmatmul.mubr.bf16.gmra.mxu0 %v995
  %v1232 = vpop.f32.mrf.mxu0
  %v1233 = vadd.f32 %v658, %v1232
  %v1234 = vpop.f32.mrf.mxu0
  %v1235 = vpop.f32.mrf.mxu0
  %v1236 = vadd.f32 %v661, %v1235
  %v1237 = vpop.f32.mrf.mxu0
  %1238 = vmatprep.mubr.bf16.mxu0 0
  %1239 = vmatmul.mubr.bf16.gmra.mxu0 %v998
  %v1240 = vpop.f32.mrf.mxu0
  %v1241 = vadd.f32 %v666, %v1240
  %v1242 = vpop.f32.mrf.mxu0
  %v1243 = vpop.f32.mrf.mxu0
  %v1244 = vadd.f32 %v669, %v1243
  %v1245 = vpop.f32.mrf.mxu0
  %1246 = vmatprep.mubr.bf16.mxu0 0
  %1247 = vmatmul.mubr.bf16.gmra.mxu0 %v1001
  %v1248 = vpop.f32.mrf.mxu0
  %v1249 = vadd.f32 %v674, %v1248
  %v1250 = vpop.f32.mrf.mxu0
  %v1251 = vpop.f32.mrf.mxu0
  %v1252 = vadd.f32 %v677, %v1251
  %v1253 = vpop.f32.mrf.mxu0
  %1254 = vmatprep.mubr.bf16.mxu0 0
  %1255 = vmatmul.mubr.bf16.gmra.mxu0 %v1004
  %v1256 = vpop.f32.mrf.mxu0
  %v1257 = vadd.f32 %v682, %v1256
  %v1258 = vpop.f32.mrf.mxu0
  %v1259 = vpop.f32.mrf.mxu0
  %v1260 = vadd.f32 %v685, %v1259
  %v1261 = vpop.f32.mrf.mxu0
  %1262 = vmatprep.mubr.bf16.mxu0 0
  %1263 = vmatmul.mubr.bf16.gmra.mxu0 %v1007
  %v1264 = vpop.f32.mrf.mxu0
  %v1265 = vadd.f32 %v690, %v1264
  %v1266 = vpop.f32.mrf.mxu0
  %v1267 = vpop.f32.mrf.mxu0
  %v1268 = vadd.f32 %v693, %v1267
  %v1269 = vpop.f32.mrf.mxu0
  %1270 = vmatprep.mubr.bf16.mxu0 0
  %1271 = vmatmul.mubr.bf16.gmra.mxu0 %v1010
  %v1272 = vpop.f32.mrf.mxu0
  %v1273 = vadd.f32 %v698, %v1272
  %v1274 = vpop.f32.mrf.mxu0
  %v1275 = vpop.f32.mrf.mxu0
  %v1276 = vadd.f32 %v701, %v1275
  %v1277 = vpop.f32.mrf.mxu0
  %1278 = vmatprep.mubr.bf16.mxu0 0
  %1279 = vmatmul.mubr.bf16.gmra.mxu0 %v1013
  %v1280 = vpop.f32.mrf.mxu0
  %v1281 = vadd.f32 %v706, %v1280
  %v1282 = vpop.f32.mrf.mxu0
  %v1283 = vpop.f32.mrf.mxu0
  %v1284 = vadd.f32 %v709, %v1283
  %v1285 = vpop.f32.mrf.mxu0
  %1286 = vmatprep.mubr.bf16.mxu0 0
  %1287 = vmatmul.mubr.bf16.gmra.mxu0 %v1016
  %v1288 = vpop.f32.mrf.mxu0
  %v1289 = vadd.f32 %v714, %v1288
  %v1290 = vpop.f32.mrf.mxu0
  %v1291 = vpop.f32.mrf.mxu0
  %v1292 = vadd.f32 %v717, %v1291
  %v1293 = vpop.f32.mrf.mxu0
  %1294 = vmatprep.mubr.bf16.mxu0 0
  %1295 = vmatmul.mubr.bf16.gmra.mxu0 %v1019
  %v1296 = vpop.f32.mrf.mxu0
  %v1297 = vadd.f32 %v722, %v1296
  %v1298 = vpop.f32.mrf.mxu0
  %v1299 = vpop.f32.mrf.mxu0
  %v1300 = vadd.f32 %v725, %v1299
  %v1301 = vpop.f32.mrf.mxu0
  %1302 = vmatprep.mubr.bf16.mxu0 0
  %1303 = vmatmul.mubr.bf16.gmra.mxu0 %v1022
  %v1304 = vpop.f32.mrf.mxu0
  %v1305 = vadd.f32 %v730, %v1304
  %v1306 = vpop.f32.mrf.mxu0
  %v1307 = vpop.f32.mrf.mxu0
  %v1308 = vadd.f32 %v733, %v1307
  %v1309 = vpop.f32.mrf.mxu0
  %1310 = vmatprep.mubr.bf16.mxu0 0
  %1311 = vmatmul.mubr.bf16.gmra.mxu0 %v1025
  %v1312 = vpop.f32.mrf.mxu0
  %v1313 = vadd.f32 %v738, %v1312
  %v1314 = vpop.f32.mrf.mxu0
  %v1315 = vpop.f32.mrf.mxu0
  %v1316 = vadd.f32 %v741, %v1315
  %v1317 = vpop.f32.mrf.mxu0
  %1318 = vdwg.mxu0
  %v1319 = vld [vmem:[%s4] sm:$0x1]
  %v1321 = vlaneseq
  %v1322 = vshrl.u32 %v1321, 7
  %v1323 = vsub.s32 0, %v1322
  %v1324 = vrot.slane %v1319, %v1323
  %v1326 = vadd.f32 %v1065, %v1324
  %v1327 = vadd.f32 %v1068, %v1324
  %v1328 = vadd.f32 %v1073, %v1324
  %v1329 = vadd.f32 %v1076, %v1324
  %v1330 = vadd.f32 %v1081, %v1324
  %v1331 = vadd.f32 %v1084, %v1324
  %v1332 = vadd.f32 %v1089, %v1324
  %v1333 = vadd.f32 %v1092, %v1324
  %v1334 = vadd.f32 %v1097, %v1324
  %v1335 = vadd.f32 %v1100, %v1324
  %v1336 = vadd.f32 %v1105, %v1324
  %v1337 = vadd.f32 %v1108, %v1324
  %v1338 = vadd.f32 %v1113, %v1324
  %v1339 = vadd.f32 %v1116, %v1324
  %v1340 = vadd.f32 %v1121, %v1324
  %v1341 = vadd.f32 %v1124, %v1324
  %v1342 = vadd.f32 %v1129, %v1324
  %v1343 = vadd.f32 %v1132, %v1324
  %v1344 = vadd.f32 %v1137, %v1324
  %v1345 = vadd.f32 %v1140, %v1324
  %v1346 = vadd.f32 %v1145, %v1324
  %v1347 = vadd.f32 %v1148, %v1324
  %v1348 = vadd.f32 %v1153, %v1324
  %v1349 = vadd.f32 %v1156, %v1324
  %v1350 = vadd.f32 %v1161, %v1324
  %v1351 = vadd.f32 %v1164, %v1324
  %v1352 = vadd.f32 %v1169, %v1324
  %v1353 = vadd.f32 %v1172, %v1324
  %v1354 = vadd.f32 %v1177, %v1324
  %v1355 = vadd.f32 %v1180, %v1324
  %v1356 = vadd.f32 %v1185, %v1324
  %v1357 = vadd.f32 %v1188, %v1324
  %v1358 = vadd.f32 %v1193, %v1324
  %v1359 = vadd.f32 %v1196, %v1324
  %v1360 = vadd.f32 %v1201, %v1324
  %v1361 = vadd.f32 %v1204, %v1324
  %v1362 = vadd.f32 %v1209, %v1324
  %v1363 = vadd.f32 %v1212, %v1324
  %v1364 = vadd.f32 %v1217, %v1324
  %v1365 = vadd.f32 %v1220, %v1324
  %v1366 = vadd.f32 %v1225, %v1324
  %v1367 = vadd.f32 %v1228, %v1324
  %v1368 = vadd.f32 %v1233, %v1324
  %v1369 = vadd.f32 %v1236, %v1324
  %v1370 = vadd.f32 %v1241, %v1324
  %v1371 = vadd.f32 %v1244, %v1324
  %v1372 = vadd.f32 %v1249, %v1324
  %v1373 = vadd.f32 %v1252, %v1324
  %v1374 = vadd.f32 %v1257, %v1324
  %v1375 = vadd.f32 %v1260, %v1324
  %v1376 = vadd.f32 %v1265, %v1324
  %v1377 = vadd.f32 %v1268, %v1324
  %v1378 = vadd.f32 %v1273, %v1324
  %v1379 = vadd.f32 %v1276, %v1324
  %v1380 = vadd.f32 %v1281, %v1324
  %v1381 = vadd.f32 %v1284, %v1324
  %v1382 = vadd.f32 %v1289, %v1324
  %v1383 = vadd.f32 %v1292, %v1324
  %v1384 = vadd.f32 %v1297, %v1324
  %v1385 = vadd.f32 %v1300, %v1324
  %v1386 = vadd.f32 %v1305, %v1324
  %v1387 = vadd.f32 %v1308, %v1324
  %v1388 = vadd.f32 %v1313, %v1324
  %v1389 = vadd.f32 %v1316, %v1324
  %v1390 = vtanh.pop %v1326
  %v1391 = vtanh.pop %v1327
  %v1392 = vtanh.pop %v1328
  %v1393 = vtanh.pop %v1329
  %v1394 = vtanh.pop %v1330
  %v1395 = vtanh.pop %v1331
  %v1396 = vtanh.pop %v1332
  %v1397 = vtanh.pop %v1333
  %v1398 = vtanh.pop %v1334
  %v1399 = vtanh.pop %v1335
  %v1400 = vtanh.pop %v1336
  %v1401 = vtanh.pop %v1337
  %v1402 = vtanh.pop %v1338
  %v1403 = vtanh.pop %v1339
  %v1404 = vtanh.pop %v1340
  %v1405 = vtanh.pop %v1341
  %v1406 = vtanh.pop %v1342
  %v1407 = vtanh.pop %v1343
  %v1408 = vtanh.pop %v1344
  %v1409 = vtanh.pop %v1345
  %v1410 = vtanh.pop %v1346
  %v1411 = vtanh.pop %v1347
  %v1412 = vtanh.pop %v1348
  %v1413 = vtanh.pop %v1349
  %v1414 = vtanh.pop %v1350
  %v1415 = vtanh.pop %v1351
  %v1416 = vtanh.pop %v1352
  %v1417 = vtanh.pop %v1353
  %v1418 = vtanh.pop %v1354
  %v1419 = vtanh.pop %v1355
  %v1420 = vtanh.pop %v1356
  %v1421 = vtanh.pop %v1357
  %v1422 = vtanh.pop %v1358
  %v1423 = vtanh.pop %v1359
  %v1424 = vtanh.pop %v1360
  %v1425 = vtanh.pop %v1361
  %v1426 = vtanh.pop %v1362
  %v1427 = vtanh.pop %v1363
  %v1428 = vtanh.pop %v1364
  %v1429 = vtanh.pop %v1365
  %v1430 = vtanh.pop %v1366
  %v1431 = vtanh.pop %v1367
  %v1432 = vtanh.pop %v1368
  %v1433 = vtanh.pop %v1369
  %v1434 = vtanh.pop %v1370
  %v1435 = vtanh.pop %v1371
  %v1436 = vtanh.pop %v1372
  %v1437 = vtanh.pop %v1373
  %v1438 = vtanh.pop %v1374
  %v1439 = vtanh.pop %v1375
  %v1440 = vtanh.pop %v1376
  %v1441 = vtanh.pop %v1377
  %v1442 = vtanh.pop %v1378
  %v1443 = vtanh.pop %v1379
  %v1444 = vtanh.pop %v1380
  %v1445 = vtanh.pop %v1381
  %v1446 = vtanh.pop %v1382
  %v1447 = vtanh.pop %v1383
  %v1448 = vtanh.pop %v1384
  %v1449 = vtanh.pop %v1385
  %v1450 = vtanh.pop %v1386
  %v1451 = vtanh.pop %v1387
  %v1452 = vtanh.pop %v1388
  %v1453 = vtanh.pop %v1389
  %1454 = vst [vmem:[%s5] sm:$0xff] %v1390
  %1455 = vst [vmem:[%s5 + $0x8] sm:$0xff] %v1391
  %1456 = vst [vmem:[%s5 + $0x10] sm:$0xff] %v1392
  %1457 = vst [vmem:[%s5 + $0x18] sm:$0xff] %v1393
  %1458 = vst [vmem:[%s5 + $0x20] sm:$0xff] %v1394
  %1459 = vst [vmem:[%s5 + $0x28] sm:$0xff] %v1395
  %1460 = vst [vmem:[%s5 + $0x30] sm:$0xff] %v1396
  %1461 = vst [vmem:[%s5 + $0x38] sm:$0xff] %v1397
  %1462 = vst [vmem:[%s5 + $0x40] sm:$0xff] %v1398
  %1463 = vst [vmem:[%s5 + $0x48] sm:$0xff] %v1399
  %1464 = vst [vmem:[%s5 + $0x50] sm:$0xff] %v1400
  %1465 = vst [vmem:[%s5 + $0x58] sm:$0xff] %v1401
  %1466 = vst [vmem:[%s5 + $0x60] sm:$0xff] %v1402
  %1467 = vst [vmem:[%s5 + $0x68] sm:$0xff] %v1403
  %1468 = vst [vmem:[%s5 + $0x70] sm:$0xff] %v1404
  %1469 = vst [vmem:[%s5 + $0x78] sm:$0xff] %v1405
  %1470 = vst [vmem:[%s5 + $0x80] sm:$0xff] %v1406
  %1471 = vst [vmem:[%s5 + $0x88] sm:$0xff] %v1407
  %1472 = vst [vmem:[%s5 + $0x90] sm:$0xff] %v1408
  %1473 = vst [vmem:[%s5 + $0x98] sm:$0xff] %v1409
  %1474 = vst [vmem:[%s5 + $0xa0] sm:$0xff] %v1410
  %1475 = vst [vmem:[%s5 + $0xa8] sm:$0xff] %v1411
  %1476 = vst [vmem:[%s5 + $0xb0] sm:$0xff] %v1412
  %1477 = vst [vmem:[%s5 + $0xb8] sm:$0xff] %v1413
  %1478 = vst [vmem:[%s5 + $0xc0] sm:$0xff] %v1414
  %1479 = vst [vmem:[%s5 + $0xc8] sm:$0xff] %v1415
  %1480 = vst [vmem:[%s5 + $0xd0] sm:$0xff] %v1416
  %1481 = vst [vmem:[%s5 + $0xd8] sm:$0xff] %v1417
  %1482 = vst [vmem:[%s5 + $0xe0] sm:$0xff] %v1418
  %1483 = vst [vmem:[%s5 + $0xe8] sm:$0xff] %v1419
  %1484 = vst [vmem:[%s5 + $0xf0] sm:$0xff] %v1420
  %1485 = vst [vmem:[%s5 + $0xf8] sm:$0xff] %v1421
  %1486 = vst [vmem:[%s5 + $0x100] sm:$0xff] %v1422
  %1487 = vst [vmem:[%s5 + $0x108] sm:$0xff] %v1423
  %1488 = vst [vmem:[%s5 + $0x110] sm:$0xff] %v1424
  %1489 = vst [vmem:[%s5 + $0x118] sm:$0xff] %v1425
  %1490 = vst [vmem:[%s5 + $0x120] sm:$0xff] %v1426
  %1491 = vst [vmem:[%s5 + $0x128] sm:$0xff] %v1427
  %1492 = vst [vmem:[%s5 + $0x130] sm:$0xff] %v1428
  %1493 = vst [vmem:[%s5 + $0x138] sm:$0xff] %v1429
  %1494 = vst [vmem:[%s5 + $0x140] sm:$0xff] %v1430
  %1495 = vst [vmem:[%s5 + $0x148] sm:$0xff] %v1431
  %1496 = vst [vmem:[%s5 + $0x150] sm:$0xff] %v1432
  %1497 = vst [vmem:[%s5 + $0x158] sm:$0xff] %v1433
  %1498 = vst [vmem:[%s5 + $0x160] sm:$0xff] %v1434
  %1499 = vst [vmem:[%s5 + $0x168] sm:$0xff] %v1435
  %1500 = vst [vmem:[%s5 + $0x170] sm:$0xff] %v1436
  %1501 = vst [vmem:[%s5 + $0x178] sm:$0xff] %v1437
  %1502 = vst [vmem:[%s5 + $0x180] sm:$0xff] %v1438
  %1503 = vst [vmem:[%s5 + $0x188] sm:$0xff] %v1439
  %1504 = vst [vmem:[%s5 + $0x190] sm:$0xff] %v1440
  %1505 = vst [vmem:[%s5 + $0x198] sm:$0xff] %v1441
  %1506 = vst [vmem:[%s5 + $0x1a0] sm:$0xff] %v1442
  %1507 = vst [vmem:[%s5 + $0x1a8] sm:$0xff] %v1443
  %1508 = vst [vmem:[%s5 + $0x1b0] sm:$0xff] %v1444
  %1509 = vst [vmem:[%s5 + $0x1b8] sm:$0xff] %v1445
  %1510 = vst [vmem:[%s5 + $0x1c0] sm:$0xff] %v1446
  %1511 = vst [vmem:[%s5 + $0x1c8] sm:$0xff] %v1447
  %1512 = vst [vmem:[%s5 + $0x1d0] sm:$0xff] %v1448
  %1513 = vst [vmem:[%s5 + $0x1d8] sm:$0xff] %v1449
  %1514 = vst [vmem:[%s5 + $0x1e0] sm:$0xff] %v1450
  %1515 = vst [vmem:[%s5 + $0x1e8] sm:$0xff] %v1451
  %1516 = vst [vmem:[%s5 + $0x1f0] sm:$0xff] %v1452
  %1517 = vst [vmem:[%s5 + $0x1f8] sm:$0xff] %v1453
  // Predicated region
  $region22: #{forward.21} parent=0 // pred_check
    _
  $region23: #{forward.21} parent=0 // pred_check_branch
    %1519 = sbr.rel (0) target = $region25
  $region24: #{forward.21} parent=0 // pred_region
    _
  $region25: #{forward.21} parent=0 // pred_fallthru
    _
  // Predicated region
  $region26: #{forward.21} parent=0 // pred_check
    _
  $region27: #{forward.21} parent=0 // pred_check_branch
    %1521 = sbr.rel (0) target = $region29
  $region28: #{forward.21} parent=0 // pred_region
    _
  $region29: #{forward.21} parent=0 // pred_fallthru
    _

</llo_original>
